<compile_context>
chip_gen: v5e
topology: v5e:2x2
jax: 0.10.0
libtpu: 0.0.40
codegen_flags: <defaults>
</compile_context>

<pallas_src>
import functools

import jax
import jax.numpy as jnp
import numpy as np
from jax.experimental import pallas as pl
from jax.experimental.pallas import tpu as pltpu

CH_IN = 2
CH_OUT = 16
KSIZE = 3
HIDDEN = 232
H_PAD = 256          # hidden padded to a lane-aligned width (232 -> 256)


def _round_up(x, m):
    return ((x + m - 1) // m) * m


def _vmem_capacity_bytes():
    """Generation-aware VMEM capacity; conservative fallback if query fails."""
    try:
        return int(pltpu.get_tpu_info().vmem_capacity_bytes)
    except Exception:
        return 64 << 20   # v7x physical per-core VMEM (smallest of v5e/v6e/v7x)


def _pick_b_block(B, T, xproj_itemsize, vmem_budget):
    """Batch tile: multiple of 8 in [8, 256]; >=2 grid blocks when B>=16; fits VMEM."""
    b_up = max(8, _round_up(B, 8))
    bb = min(256, b_up)
    if B >= 16:
        # guarantee at least two grid blocks so ("parallel",) shards across v7x's 2 TCs
        half = max(8, (b_up // 2) // 8 * 8)
        bb = min(bb, half)
    # per-element cost ~ f32 matmul temporary + stored (bf16/f32) x_proj copy
    per_elem = 4 + xproj_itemsize
    while bb > 8 and T * bb * 4 * H_PAD * per_elem > vmem_budget // 2:
        bb = max(8, bb // 2)
    return bb


def st_encoder_future_kernel(x_ref, wconv_ref, bconv_ref, wih_ref, whh_ref,
                             blstm_ref, out_ref, xproj_ref, *, unroll):
    """One grid step == one block of Bb sequences (time-major rows).

    x_ref    : (1, T*Bb, 6)      im2col'd input, row = t*Bb + b_local
    wconv_ref: (6, 16)           conv weights, row = k*2 + c_in
    bconv_ref: (1, 16)           conv bias
    wih_ref  : (16, 4*256)       LSTM input weights, gate blocks [i|f|g|o] padded to 256
    whh_ref  : (256, 4*256)      LSTM hidden weights, rows & gate blocks padded
    blstm_ref: (1, 4*256)        b_ih + b_hh, padded (f32)
    out_ref  : (1, Bb, 256)      final hidden state h_T (padded)
    xproj_ref: (T, Bb, 4*256)    VMEM scratch: hoisted input projection (weights dtype)
    """
    hp = whh_ref.shape[0]                           # 256
    b_block = out_ref.shape[1]
    t_steps = xproj_ref.shape[0]
    w_dtype = wih_ref.dtype

    # --- Conv1d(k=3, pad=1) + ReLU as a single matmul over all (t, b) rows ---
    x2d = x_ref[0]                                  # (T*Bb, 6) f32
    emb = jnp.maximum(
        jnp.dot(x2d, wconv_ref[...], preferred_element_type=jnp.float32)
        + bconv_ref[...], 0.0)                      # (T*Bb, 16) f32

    # --- Hoisted LSTM input projection (one big MXU matmul for all T) ---
    xproj = (jnp.dot(emb.astype(w_dtype), wih_ref[...],
                     preferred_element_type=jnp.float32)
             + blstm_ref[...])                      # (T*Bb, 4*256) f32
    xproj_ref[...] = xproj.reshape(t_steps, b_block, 4 * hp).astype(xproj_ref.dtype)

    whh = whh_ref[...]                              # (256, 1024), bf16 by default

    def sigmoid(z):
        # single EUP pass (tanh) + cheap VPU ops, instead of exp + reciprocal
        return 0.5 * jnp.tanh(0.5 * z) + 0.5

    def step(t, carry):
        h, c = carry                                # (Bb, 256) f32 each
        xp = xproj_ref[t].astype(jnp.float32)       # (Bb, 1024)
        gates = xp + jnp.dot(h.astype(w_dtype), whh,
                             preferred_element_type=jnp.float32)
        i = sigmoid(gates[:, 0:hp])
        f = sigmoid(gates[:, hp:2 * hp])
        g = jnp.tanh(gates[:, 2 * hp:3 * hp])
        o = sigmoid(gates[:, 3 * hp:4 * hp])
        c = f * c + i * g
        h = o * jnp.tanh(c)
        return (h, c)

    h0 = jnp.zeros((b_block, hp), jnp.float32)
    c0 = jnp.zeros((b_block, hp), jnp.float32)
    h, _ = jax.lax.fori_loop(0, t_steps, step, (h0, c0), unroll=unroll)
    out_ref[...] = h[None]


def _build_pallas_fn(T, b_block, num_blocks, xproj_dtype, vmem_limit, unroll,
                     single_buffer_weights):
    HP = H_PAD

    def const_spec(shape):
        # grid-constant block: index_map never changes; single-buffer if supported
        if single_buffer_weights:
            return pl.BlockSpec(shape, lambda g: (0, 0),
                                pipeline_mode=pl.Buffered(1))
        return pl.BlockSpec(shape, lambda g: (0, 0))

    grid_spec = pltpu.PrefetchScalarGridSpec(
        num_scalar_prefetch=0,
        grid=(num_blocks,),
        in_specs=[
            pl.BlockSpec((1, T * b_block, KSIZE * CH_IN), lambda g: (g, 0, 0)),
            const_spec((KSIZE * CH_IN, CH_OUT)),
            const_spec((1, CH_OUT)),
            const_spec((CH_OUT, 4 * HP)),
            const_spec((HP, 4 * HP)),
            const_spec((1, 4 * HP)),
        ],
        out_specs=pl.BlockSpec((1, b_block, HP), lambda g: (g, 0, 0)),
        scratch_shapes=[pltpu.VMEM((T, b_block, 4 * HP), xproj_dtype)],
    )
    return pl.pallas_call(
        functools.partial(st_encoder_future_kernel, unroll=unroll),
        out_shape=jax.ShapeDtypeStruct((num_blocks, b_block, HP), jnp.float32),
        grid_spec=grid_spec,
        compiler_params=pltpu.CompilerParams(
            dimension_semantics=("parallel",),
            vmem_limit_bytes=vmem_limit),
    )


def st_encoder_future_forward(X, params, weights_dtype=jnp.bfloat16):
    """X: (B, T, 2) float32 -> (B, 232) float32."""
    B, T, _ = X.shape
    H, HP = HIDDEN, H_PAD

    cap = _vmem_capacity_bytes()
    vmem_limit = int(min(cap * 3 // 4, 96 << 20))

    itemsize = int(np.dtype(weights_dtype).itemsize)
    b_block = _pick_b_block(B, T, itemsize, vmem_limit)
    B_pad = _round_up(B, b_block)
    num_blocks = B_pad // b_block

    # ---------------- wrapper-side data plumbing (XLA) ----------------
    Xb = jnp.pad(X, ((0, B_pad - B), (0, 0), (0, 0)))          # (B_pad, T, 2)
    Xt = jnp.pad(Xb, ((0, 0), (1, 1), (0, 0)))                 # (B_pad, T+2, 2)
    x_im2col = jnp.concatenate(
        [Xt[:, 0:T, :], Xt[:, 1:T + 1, :], Xt[:, 2:T + 2, :]], axis=-1)  # (B_pad,T,6)
    # time-major rows inside each batch block: row = t*b_block + b_local
    x_tm = (x_im2col.reshape(num_blocks, b_block, T, KSIZE * CH_IN)
            .transpose(0, 2, 1, 3)
            .reshape(num_blocks, T * b_block, KSIZE * CH_IN))

    # Conv weights (C_out, C_in, K) -> (K*C_in, C_out), matching im2col column order.
    w_conv6 = jnp.transpose(params["w_conv"], (2, 1, 0)).reshape(KSIZE * CH_IN, CH_OUT)
    b_conv_2d = params["b_conv"][None, :]                      # (1, 16)

    # LSTM weights: transpose, split gates [i|f|g|o], pad each gate 232->256
    # (padded rows/cols & bias are exactly zero => padded hidden units stay 0).
    w_ih_t = params["w_ih"].T.reshape(CH_OUT, 4, H)            # (16, 4, 232)
    w_ih_p = jnp.pad(w_ih_t, ((0, 0), (0, 0), (0, HP - H))).reshape(CH_OUT, 4 * HP)
    w_hh_t = params["w_hh"].T.reshape(H, 4, H)                 # (232, 4, 232)
    w_hh_p = jnp.pad(w_hh_t, ((0, HP - H), (0, 0), (0, HP - H))).reshape(HP, 4 * HP)
    b_lstm = (params["b_ih"] + params["b_hh"]).reshape(4, H)
    b_lstm = jnp.pad(b_lstm, ((0, 0), (0, HP - H))).reshape(1, 4 * HP)

    w_ih_p = w_ih_p.astype(weights_dtype)                      # bf16 by default
    w_hh_p = w_hh_p.astype(weights_dtype)

    unroll = True if (T <= 16 and b_block <= 128) else min(4, max(1, T))

    args = (x_tm, w_conv6, b_conv_2d, w_ih_p, w_hh_p, b_lstm)
    try:
        fn = _build_pallas_fn(T, b_block, num_blocks, weights_dtype,
                              vmem_limit, unroll, single_buffer_weights=True)
        h_out = fn(*args)
    except Exception:
        # Fallback if pipeline_mode=pl.Buffered(1) is unsupported in this jax build.
        fn = _build_pallas_fn(T, b_block, num_blocks, weights_dtype,
                              vmem_limit, unroll, single_buffer_weights=False)
        h_out = fn(*args)

    return h_out.reshape(B_pad, HP)[:B, :H]


def init_params(key):
    """Deterministic synthetic params matching the PyTorch __init__ shapes."""
    k1, k2, k3 = jax.random.split(key, 3)
    w_conv = jax.random.normal(k1, (CH_OUT, CH_IN, KSIZE), jnp.float32) * np.sqrt(
        2.0 / (CH_IN * KSIZE))
    b_conv = jnp.zeros((CH_OUT,), jnp.float32)
    w_ih = jax.random.normal(k2, (4 * HIDDEN, CH_OUT), jnp.float32) * np.sqrt(
        2.0 / CH_OUT)
    w_hh = jax.random.normal(k3, (4 * HIDDEN, HIDDEN), jnp.float32) * np.sqrt(
        2.0 / HIDDEN)
    b_ih = jnp.zeros((4 * HIDDEN,), jnp.float32)
    b_hh = jnp.zeros((4 * HIDDEN,), jnp.float32)
    return dict(w_conv=w_conv, b_conv=b_conv, w_ih=w_ih, w_hh=w_hh,
                b_ih=b_ih, b_hh=b_hh)


def reference_forward(X, params):
    """Pure-JAX reference (same math as the PyTorch module, past=False)."""
    B, T, _ = X.shape
    Xt = jnp.transpose(X, (0, 2, 1))                           # (B, 2, T)
    conv = jax.lax.conv_general_dilated(
        Xt, params["w_conv"], window_strides=(1,), padding=[(1, 1)],
        dimension_numbers=("NCH", "OIH", "NCH"))
    conv = conv + params["b_conv"][None, :, None]
    emb = jnp.transpose(jnp.maximum(conv, 0.0), (0, 2, 1))     # (B, T, 16)

    H = HIDDEN
    w_ih_t = params["w_ih"].T
    w_hh_t = params["w_hh"].T
    bias = params["b_ih"] + params["b_hh"]

    def step(carry, x_t):
        h, c = carry
        gates = x_t @ w_ih_t + h @ w_hh_t + bias
        i = jax.nn.sigmoid(gates[:, 0:H])
        f = jax.nn.sigmoid(gates[:, H:2 * H])
        g = jnp.tanh(gates[:, 2 * H:3 * H])
        o = jax.nn.sigmoid(gates[:, 3 * H:4 * H])
        c = f * c + i * g
        h = o * jnp.tanh(c)
        return (h, c), None

    h0 = jnp.zeros((B, H), jnp.float32)
    c0 = jnp.zeros((B, H), jnp.float32)
    (h, _), _ = jax.lax.scan(step, (h0, c0), jnp.transpose(emb, (1, 0, 2)))
    return h


if __name__ == "__main__":
    key = jax.random.PRNGKey(0)
    k_param, k_x = jax.random.split(key)
    B, T = 2, 8
    X = jax.random.normal(k_x, (B, T, CH_IN), jnp.float32)

    params = init_params(k_param)
    ref = jax.block_until_ready(reference_forward(X, params))

    # f32 weights: tight check of kernel structure / indexing / padding.
    out_f32 = jax.block_until_ready(
        st_encoder_future_forward(X, params, weights_dtype=jnp.float32))
    assert out_f32.shape == (B, HIDDEN)
    np.testing.assert_allclose(np.asarray(out_f32), np.asarray(ref),
                               rtol=1e-3, atol=1e-4)

    # default bf16 recurrence weights: looser tolerance for bf16 rounding over T steps.
    out_bf16 = jax.block_until_ready(st_encoder_future_forward(X, params))
    assert out_bf16.shape == (B, HIDDEN)
    np.testing.assert_allclose(np.asarray(out_bf16), np.asarray(ref),
                               rtol=5e-2, atol=2e-2)

    print("KERNEL_OK")
</pallas_src>

<mosaic_0001>
module attributes {stable_mosaic.version = 11 : i64} {
  func.func @st_encoder_future_kernel(%arg0: i32, %arg1: memref<1x64x6xf32, #tpu.memory_space<vmem>>, %arg2: memref<6x16xf32, #tpu.memory_space<vmem>>, %arg3: memref<1x16xf32, #tpu.memory_space<vmem>>, %arg4: memref<16x1024xf32, #tpu.memory_space<vmem>>, %arg5: memref<256x1024xf32, #tpu.memory_space<vmem>>, %arg6: memref<1x1024xf32, #tpu.memory_space<vmem>>, %arg7: memref<1x8x256xf32, #tpu.memory_space<vmem>>, %arg8: memref<8x8x1024xf32, #tpu.memory_space<vmem>>) attributes {dimension_semantics = [#tpu.dimension_semantics<parallel>], iteration_bounds = array<i64: 1>, scalar_prefetch = 0 : i64, scratch_operands = 1 : i64, tpu.core_type = #tpu.core_type<tc>, window_params = [{transform_indices = @transform_0, window_bounds = array<i64: 1, 64, 6>}, {pipeline_mode = #tpu.pipeline_mode<synchronous>, transform_indices = @transform_1, window_bounds = array<i64: 6, 16>}, {pipeline_mode = #tpu.pipeline_mode<synchronous>, transform_indices = @transform_2, window_bounds = array<i64: 1, 16>}, {pipeline_mode = #tpu.pipeline_mode<synchronous>, transform_indices = @transform_3, window_bounds = array<i64: 16, 1024>}, {pipeline_mode = #tpu.pipeline_mode<synchronous>, transform_indices = @transform_4, window_bounds = array<i64: 256, 1024>}, {pipeline_mode = #tpu.pipeline_mode<synchronous>, transform_indices = @transform_5, window_bounds = array<i64: 1, 1024>}, {transform_indices = @transform_6, window_bounds = array<i64: 1, 8, 256>}]} {
    %c0 = arith.constant 0 : index
    %c0_0 = arith.constant 0 : index
    %c0_1 = arith.constant 0 : index
    %0 = vector.load %arg1[%c0, %c0_0, %c0_1] : memref<1x64x6xf32, #tpu.memory_space<vmem>>, vector<1x64x6xf32>
    %1 = vector.shape_cast %0 : vector<1x64x6xf32> to vector<64x6xf32>
    %c0_2 = arith.constant 0 : index
    %c0_3 = arith.constant 0 : index
    %2 = vector.load %arg2[%c0_2, %c0_3] : memref<6x16xf32, #tpu.memory_space<vmem>>, vector<6x16xf32>
    %cst = arith.constant dense<0.000000e+00> : vector<64x16xf32>
    %3 = tpu.matmul %1, %2, %cst {dimension_numbers = #tpu.dot_dimension_numbers<[1], [0], [0], [1], [0, 0, 1, 1], [], []>} : vector<64x6xf32>, vector<6x16xf32>, vector<64x16xf32> -> vector<64x16xf32>
    %c0_4 = arith.constant 0 : index
    %c0_5 = arith.constant 0 : index
    %4 = vector.load %arg3[%c0_4, %c0_5] : memref<1x16xf32, #tpu.memory_space<vmem>>, vector<1x16xf32>
    %5 = vector.broadcast %4 : vector<1x16xf32> to vector<64x16xf32>
    %6 = arith.addf %3, %5 : vector<64x16xf32>
    %cst_6 = arith.constant 0.000000e+00 : f32
    %7 = vector.broadcast %cst_6 : f32 to vector<64x16xf32>
    %8 = arith.maximumf %6, %7 : vector<64x16xf32>
    %c0_7 = arith.constant 0 : index
    %c0_8 = arith.constant 0 : index
    %9 = vector.load %arg4[%c0_7, %c0_8] : memref<16x1024xf32, #tpu.memory_space<vmem>>, vector<16x1024xf32>
    %cst_9 = arith.constant dense<0.000000e+00> : vector<64x1024xf32>
    %10 = tpu.matmul %8, %9, %cst_9 {dimension_numbers = #tpu.dot_dimension_numbers<[1], [0], [0], [1], [0, 0, 1, 1], [], []>} : vector<64x16xf32>, vector<16x1024xf32>, vector<64x1024xf32> -> vector<64x1024xf32>
    %c0_10 = arith.constant 0 : index
    %c0_11 = arith.constant 0 : index
    %11 = vector.load %arg6[%c0_10, %c0_11] : memref<1x1024xf32, #tpu.memory_space<vmem>>, vector<1x1024xf32>
    %12 = vector.broadcast %11 : vector<1x1024xf32> to vector<64x1024xf32>
    %13 = arith.addf %10, %12 : vector<64x1024xf32>
    %14 = vector.shape_cast %13 : vector<64x1024xf32> to vector<8x8x1024xf32>
    %c0_12 = arith.constant 0 : index
    %c0_13 = arith.constant 0 : index
    %c0_14 = arith.constant 0 : index
    %15 = vector.load %arg8[%c0_12, %c0_13, %c0_14] : memref<8x8x1024xf32, #tpu.memory_space<vmem>>, vector<8x8x1024xf32>
    tpu.vector_store %arg8[%c0_12, %c0_13, %c0_14], %14 {strides = array<i32>} : memref<8x8x1024xf32, #tpu.memory_space<vmem>>, vector<8x8x1024xf32>,
    %c0_15 = arith.constant 0 : index
    %c0_16 = arith.constant 0 : index
    %16 = vector.load %arg5[%c0_15, %c0_16] : memref<256x1024xf32, #tpu.memory_space<vmem>>, vector<256x1024xf32>
    %cst_17 = arith.constant 0.000000e+00 : f32
    %17 = vector.broadcast %cst_17 : f32 to vector<8x256xf32>
    %cst_18 = arith.constant 0.000000e+00 : f32
    %18 = vector.broadcast %cst_18 : f32 to vector<8x256xf32>
    %c0_i32 = arith.constant 0 : i32
    %19 = arith.index_cast %c0_i32 : i32 to index
    %c0_19 = arith.constant 0 : index
    %c0_20 = arith.constant 0 : index
    %20 = vector.load %arg8[%19, %c0_19, %c0_20] : memref<8x8x1024xf32, #tpu.memory_space<vmem>>, vector<1x8x1024xf32>
    %21 = vector.shape_cast %20 : vector<1x8x1024xf32> to vector<8x1024xf32>
    %cst_21 = arith.constant dense<0.000000e+00> : vector<8x1024xf32>
    %22 = tpu.matmul %17, %16, %cst_21 {dimension_numbers = #tpu.dot_dimension_numbers<[1], [0], [0], [1], [0, 0, 1, 1], [], []>} : vector<8x256xf32>, vector<256x1024xf32>, vector<8x1024xf32> -> vector<8x1024xf32>
    %23 = arith.addf %21, %22 : vector<8x1024xf32>
    %24 = vector.extract_strided_slice %23 {offsets = [0, 0], sizes = [8, 256], strides = [1, 1]} : vector<8x1024xf32> to vector<8x256xf32>
    %cst_22 = arith.constant 5.000000e-01 : f32
    %25 = vector.broadcast %cst_22 : f32 to vector<8x256xf32>
    %26 = arith.mulf %25, %24 : vector<8x256xf32>
    %27 = math.tanh %26 : vector<8x256xf32>
    %cst_23 = arith.constant 5.000000e-01 : f32
    %28 = vector.broadcast %cst_23 : f32 to vector<8x256xf32>
    %29 = arith.mulf %28, %27 : vector<8x256xf32>
    %cst_24 = arith.constant 5.000000e-01 : f32
    %30 = vector.broadcast %cst_24 : f32 to vector<8x256xf32>
    %31 = arith.addf %29, %30 : vector<8x256xf32>
    %32 = vector.extract_strided_slice %23 {offsets = [0, 256], sizes = [8, 256], strides = [1, 1]} : vector<8x1024xf32> to vector<8x256xf32>
    %cst_25 = arith.constant 5.000000e-01 : f32
    %33 = vector.broadcast %cst_25 : f32 to vector<8x256xf32>
    %34 = arith.mulf %33, %32 : vector<8x256xf32>
    %35 = math.tanh %34 : vector<8x256xf32>
    %cst_26 = arith.constant 5.000000e-01 : f32
    %36 = vector.broadcast %cst_26 : f32 to vector<8x256xf32>
    %37 = arith.mulf %36, %35 : vector<8x256xf32>
    %cst_27 = arith.constant 5.000000e-01 : f32
    %38 = vector.broadcast %cst_27 : f32 to vector<8x256xf32>
    %39 = arith.addf %37, %38 : vector<8x256xf32>
    %40 = vector.extract_strided_slice %23 {offsets = [0, 512], sizes = [8, 256], strides = [1, 1]} : vector<8x1024xf32> to vector<8x256xf32>
    %41 = math.tanh %40 : vector<8x256xf32>
    %42 = vector.extract_strided_slice %23 {offsets = [0, 768], sizes = [8, 256], strides = [1, 1]} : vector<8x1024xf32> to vector<8x256xf32>
    %cst_28 = arith.constant 5.000000e-01 : f32
    %43 = vector.broadcast %cst_28 : f32 to vector<8x256xf32>
    %44 = arith.mulf %43, %42 : vector<8x256xf32>
    %45 = math.tanh %44 : vector<8x256xf32>
    %cst_29 = arith.constant 5.000000e-01 : f32
    %46 = vector.broadcast %cst_29 : f32 to vector<8x256xf32>
    %47 = arith.mulf %46, %45 : vector<8x256xf32>
    %cst_30 = arith.constant 5.000000e-01 : f32
    %48 = vector.broadcast %cst_30 : f32 to vector<8x256xf32>
    %49 = arith.addf %47, %48 : vector<8x256xf32>
    %50 = arith.mulf %39, %18 : vector<8x256xf32>
    %51 = arith.mulf %31, %41 : vector<8x256xf32>
    %52 = arith.addf %50, %51 : vector<8x256xf32>
    %53 = math.tanh %52 : vector<8x256xf32>
    %54 = arith.mulf %49, %53 : vector<8x256xf32>
    %c1_i32 = arith.constant 1 : i32
    %55 = arith.index_cast %c1_i32 : i32 to index
    %c0_31 = arith.constant 0 : index
    %c0_32 = arith.constant 0 : index
    %56 = vector.load %arg8[%55, %c0_31, %c0_32] : memref<8x8x1024xf32, #tpu.memory_space<vmem>>, vector<1x8x1024xf32>
    %57 = vector.shape_cast %56 : vector<1x8x1024xf32> to vector<8x1024xf32>
    %cst_33 = arith.constant dense<0.000000e+00> : vector<8x1024xf32>
    %58 = tpu.matmul %54, %16, %cst_33 {dimension_numbers = #tpu.dot_dimension_numbers<[1], [0], [0], [1], [0, 0, 1, 1], [], []>} : vector<8x256xf32>, vector<256x1024xf32>, vector<8x1024xf32> -> vector<8x1024xf32>
    %59 = arith.addf %57, %58 : vector<8x1024xf32>
    %60 = vector.extract_strided_slice %59 {offsets = [0, 0], sizes = [8, 256], strides = [1, 1]} : vector<8x1024xf32> to vector<8x256xf32>
    %cst_34 = arith.constant 5.000000e-01 : f32
    %61 = vector.broadcast %cst_34 : f32 to vector<8x256xf32>
    %62 = arith.mulf %61, %60 : vector<8x256xf32>
    %63 = math.tanh %62 : vector<8x256xf32>
    %cst_35 = arith.constant 5.000000e-01 : f32
    %64 = vector.broadcast %cst_35 : f32 to vector<8x256xf32>
    %65 = arith.mulf %64, %63 : vector<8x256xf32>
    %cst_36 = arith.constant 5.000000e-01 : f32
    %66 = vector.broadcast %cst_36 : f32 to vector<8x256xf32>
    %67 = arith.addf %65, %66 : vector<8x256xf32>
    %68 = vector.extract_strided_slice %59 {offsets = [0, 256], sizes = [8, 256], strides = [1, 1]} : vector<8x1024xf32> to vector<8x256xf32>
    %cst_37 = arith.constant 5.000000e-01 : f32
    %69 = vector.broadcast %cst_37 : f32 to vector<8x256xf32>
    %70 = arith.mulf %69, %68 : vector<8x256xf32>
    %71 = math.tanh %70 : vector<8x256xf32>
    %cst_38 = arith.constant 5.000000e-01 : f32
    %72 = vector.broadcast %cst_38 : f32 to vector<8x256xf32>
    %73 = arith.mulf %72, %71 : vector<8x256xf32>
    %cst_39 = arith.constant 5.000000e-01 : f32
    %74 = vector.broadcast %cst_39 : f32 to vector<8x256xf32>
    %75 = arith.addf %73, %74 : vector<8x256xf32>
    %76 = vector.extract_strided_slice %59 {offsets = [0, 512], sizes = [8, 256], strides = [1, 1]} : vector<8x1024xf32> to vector<8x256xf32>
    %77 = math.tanh %76 : vector<8x256xf32>
    %78 = vector.extract_strided_slice %59 {offsets = [0, 768], sizes = [8, 256], strides = [1, 1]} : vector<8x1024xf32> to vector<8x256xf32>
    %cst_40 = arith.constant 5.000000e-01 : f32
    %79 = vector.broadcast %cst_40 : f32 to vector<8x256xf32>
    %80 = arith.mulf %79, %78 : vector<8x256xf32>
    %81 = math.tanh %80 : vector<8x256xf32>
    %cst_41 = arith.constant 5.000000e-01 : f32
    %82 = vector.broadcast %cst_41 : f32 to vector<8x256xf32>
    %83 = arith.mulf %82, %81 : vector<8x256xf32>
    %cst_42 = arith.constant 5.000000e-01 : f32
    %84 = vector.broadcast %cst_42 : f32 to vector<8x256xf32>
    %85 = arith.addf %83, %84 : vector<8x256xf32>
    %86 = arith.mulf %75, %52 : vector<8x256xf32>
    %87 = arith.mulf %67, %77 : vector<8x256xf32>
    %88 = arith.addf %86, %87 : vector<8x256xf32>
    %89 = math.tanh %88 : vector<8x256xf32>
    %90 = arith.mulf %85, %89 : vector<8x256xf32>
    %c2_i32 = arith.constant 2 : i32
    %91 = arith.index_cast %c2_i32 : i32 to index
    %c0_43 = arith.constant 0 : index
    %c0_44 = arith.constant 0 : index
    %92 = vector.load %arg8[%91, %c0_43, %c0_44] : memref<8x8x1024xf32, #tpu.memory_space<vmem>>, vector<1x8x1024xf32>
    %93 = vector.shape_cast %92 : vector<1x8x1024xf32> to vector<8x1024xf32>
    %cst_45 = arith.constant dense<0.000000e+00> : vector<8x1024xf32>
    %94 = tpu.matmul %90, %16, %cst_45 {dimension_numbers = #tpu.dot_dimension_numbers<[1], [0], [0], [1], [0, 0, 1, 1], [], []>} : vector<8x256xf32>, vector<256x1024xf32>, vector<8x1024xf32> -> vector<8x1024xf32>
    %95 = arith.addf %93, %94 : vector<8x1024xf32>
    %96 = vector.extract_strided_slice %95 {offsets = [0, 0], sizes = [8, 256], strides = [1, 1]} : vector<8x1024xf32> to vector<8x256xf32>
    %cst_46 = arith.constant 5.000000e-01 : f32
    %97 = vector.broadcast %cst_46 : f32 to vector<8x256xf32>
    %98 = arith.mulf %97, %96 : vector<8x256xf32>
    %99 = math.tanh %98 : vector<8x256xf32>
    %cst_47 = arith.constant 5.000000e-01 : f32
    %100 = vector.broadcast %cst_47 : f32 to vector<8x256xf32>
    %101 = arith.mulf %100, %99 : vector<8x256xf32>
    %cst_48 = arith.constant 5.000000e-01 : f32
    %102 = vector.broadcast %cst_48 : f32 to vector<8x256xf32>
    %103 = arith.addf %101, %102 : vector<8x256xf32>
    %104 = vector.extract_strided_slice %95 {offsets = [0, 256], sizes = [8, 256], strides = [1, 1]} : vector<8x1024xf32> to vector<8x256xf32>
    %cst_49 = arith.constant 5.000000e-01 : f32
    %105 = vector.broadcast %cst_49 : f32 to vector<8x256xf32>
    %106 = arith.mulf %105, %104 : vector<8x256xf32>
    %107 = math.tanh %106 : vector<8x256xf32>
    %cst_50 = arith.constant 5.000000e-01 : f32
    %108 = vector.broadcast %cst_50 : f32 to vector<8x256xf32>
    %109 = arith.mulf %108, %107 : vector<8x256xf32>
    %cst_51 = arith.constant 5.000000e-01 : f32
    %110 = vector.broadcast %cst_51 : f32 to vector<8x256xf32>
    %111 = arith.addf %109, %110 : vector<8x256xf32>
    %112 = vector.extract_strided_slice %95 {offsets = [0, 512], sizes = [8, 256], strides = [1, 1]} : vector<8x1024xf32> to vector<8x256xf32>
    %113 = math.tanh %112 : vector<8x256xf32>
    %114 = vector.extract_strided_slice %95 {offsets = [0, 768], sizes = [8, 256], strides = [1, 1]} : vector<8x1024xf32> to vector<8x256xf32>
    %cst_52 = arith.constant 5.000000e-01 : f32
    %115 = vector.broadcast %cst_52 : f32 to vector<8x256xf32>
    %116 = arith.mulf %115, %114 : vector<8x256xf32>
    %117 = math.tanh %116 : vector<8x256xf32>
    %cst_53 = arith.constant 5.000000e-01 : f32
    %118 = vector.broadcast %cst_53 : f32 to vector<8x256xf32>
    %119 = arith.mulf %118, %117 : vector<8x256xf32>
    %cst_54 = arith.constant 5.000000e-01 : f32
    %120 = vector.broadcast %cst_54 : f32 to vector<8x256xf32>
    %121 = arith.addf %119, %120 : vector<8x256xf32>
    %122 = arith.mulf %111, %88 : vector<8x256xf32>
    %123 = arith.mulf %103, %113 : vector<8x256xf32>
    %124 = arith.addf %122, %123 : vector<8x256xf32>
    %125 = math.tanh %124 : vector<8x256xf32>
    %126 = arith.mulf %121, %125 : vector<8x256xf32>
    %c3_i32 = arith.constant 3 : i32
    %127 = arith.index_cast %c3_i32 : i32 to index
    %c0_55 = arith.constant 0 : index
    %c0_56 = arith.constant 0 : index
    %128 = vector.load %arg8[%127, %c0_55, %c0_56] : memref<8x8x1024xf32, #tpu.memory_space<vmem>>, vector<1x8x1024xf32>
    %129 = vector.shape_cast %128 : vector<1x8x1024xf32> to vector<8x1024xf32>
    %cst_57 = arith.constant dense<0.000000e+00> : vector<8x1024xf32>
    %130 = tpu.matmul %126, %16, %cst_57 {dimension_numbers = #tpu.dot_dimension_numbers<[1], [0], [0], [1], [0, 0, 1, 1], [], []>} : vector<8x256xf32>, vector<256x1024xf32>, vector<8x1024xf32> -> vector<8x1024xf32>
    %131 = arith.addf %129, %130 : vector<8x1024xf32>
    %132 = vector.extract_strided_slice %131 {offsets = [0, 0], sizes = [8, 256], strides = [1, 1]} : vector<8x1024xf32> to vector<8x256xf32>
    %cst_58 = arith.constant 5.000000e-01 : f32
    %133 = vector.broadcast %cst_58 : f32 to vector<8x256xf32>
    %134 = arith.mulf %133, %132 : vector<8x256xf32>
    %135 = math.tanh %134 : vector<8x256xf32>
    %cst_59 = arith.constant 5.000000e-01 : f32
    %136 = vector.broadcast %cst_59 : f32 to vector<8x256xf32>
    %137 = arith.mulf %136, %135 : vector<8x256xf32>
    %cst_60 = arith.constant 5.000000e-01 : f32
    %138 = vector.broadcast %cst_60 : f32 to vector<8x256xf32>
    %139 = arith.addf %137, %138 : vector<8x256xf32>
    %140 = vector.extract_strided_slice %131 {offsets = [0, 256], sizes = [8, 256], strides = [1, 1]} : vector<8x1024xf32> to vector<8x256xf32>
    %cst_61 = arith.constant 5.000000e-01 : f32
    %141 = vector.broadcast %cst_61 : f32 to vector<8x256xf32>
    %142 = arith.mulf %141, %140 : vector<8x256xf32>
    %143 = math.tanh %142 : vector<8x256xf32>
    %cst_62 = arith.constant 5.000000e-01 : f32
    %144 = vector.broadcast %cst_62 : f32 to vector<8x256xf32>
    %145 = arith.mulf %144, %143 : vector<8x256xf32>
    %cst_63 = arith.constant 5.000000e-01 : f32
    %146 = vector.broadcast %cst_63 : f32 to vector<8x256xf32>
    %147 = arith.addf %145, %146 : vector<8x256xf32>
    %148 = vector.extract_strided_slice %131 {offsets = [0, 512], sizes = [8, 256], strides = [1, 1]} : vector<8x1024xf32> to vector<8x256xf32>
    %149 = math.tanh %148 : vector<8x256xf32>
    %150 = vector.extract_strided_slice %131 {offsets = [0, 768], sizes = [8, 256], strides = [1, 1]} : vector<8x1024xf32> to vector<8x256xf32>
    %cst_64 = arith.constant 5.000000e-01 : f32
    %151 = vector.broadcast %cst_64 : f32 to vector<8x256xf32>
    %152 = arith.mulf %151, %150 : vector<8x256xf32>
    %153 = math.tanh %152 : vector<8x256xf32>
    %cst_65 = arith.constant 5.000000e-01 : f32
    %154 = vector.broadcast %cst_65 : f32 to vector<8x256xf32>
    %155 = arith.mulf %154, %153 : vector<8x256xf32>
    %cst_66 = arith.constant 5.000000e-01 : f32
    %156 = vector.broadcast %cst_66 : f32 to vector<8x256xf32>
    %157 = arith.addf %155, %156 : vector<8x256xf32>
    %158 = arith.mulf %147, %124 : vector<8x256xf32>
    %159 = arith.mulf %139, %149 : vector<8x256xf32>
    %160 = arith.addf %158, %159 : vector<8x256xf32>
    %161 = math.tanh %160 : vector<8x256xf32>
    %162 = arith.mulf %157, %161 : vector<8x256xf32>
    %c4_i32 = arith.constant 4 : i32
    %163 = arith.index_cast %c4_i32 : i32 to index
    %c0_67 = arith.constant 0 : index
    %c0_68 = arith.constant 0 : index
    %164 = vector.load %arg8[%163, %c0_67, %c0_68] : memref<8x8x1024xf32, #tpu.memory_space<vmem>>, vector<1x8x1024xf32>
    %165 = vector.shape_cast %164 : vector<1x8x1024xf32> to vector<8x1024xf32>
    %cst_69 = arith.constant dense<0.000000e+00> : vector<8x1024xf32>
    %166 = tpu.matmul %162, %16, %cst_69 {dimension_numbers = #tpu.dot_dimension_numbers<[1], [0], [0], [1], [0, 0, 1, 1], [], []>} : vector<8x256xf32>, vector<256x1024xf32>, vector<8x1024xf32> -> vector<8x1024xf32>
    %167 = arith.addf %165, %166 : vector<8x1024xf32>
    %168 = vector.extract_strided_slice %167 {offsets = [0, 0], sizes = [8, 256], strides = [1, 1]} : vector<8x1024xf32> to vector<8x256xf32>
    %cst_70 = arith.constant 5.000000e-01 : f32
    %169 = vector.broadcast %cst_70 : f32 to vector<8x256xf32>
    %170 = arith.mulf %169, %168 : vector<8x256xf32>
    %171 = math.tanh %170 : vector<8x256xf32>
    %cst_71 = arith.constant 5.000000e-01 : f32
    %172 = vector.broadcast %cst_71 : f32 to vector<8x256xf32>
    %173 = arith.mulf %172, %171 : vector<8x256xf32>
    %cst_72 = arith.constant 5.000000e-01 : f32
    %174 = vector.broadcast %cst_72 : f32 to vector<8x256xf32>
    %175 = arith.addf %173, %174 : vector<8x256xf32>
    %176 = vector.extract_strided_slice %167 {offsets = [0, 256], sizes = [8, 256], strides = [1, 1]} : vector<8x1024xf32> to vector<8x256xf32>
    %cst_73 = arith.constant 5.000000e-01 : f32
    %177 = vector.broadcast %cst_73 : f32 to vector<8x256xf32>
    %178 = arith.mulf %177, %176 : vector<8x256xf32>
    %179 = math.tanh %178 : vector<8x256xf32>
    %cst_74 = arith.constant 5.000000e-01 : f32
    %180 = vector.broadcast %cst_74 : f32 to vector<8x256xf32>
    %181 = arith.mulf %180, %179 : vector<8x256xf32>
    %cst_75 = arith.constant 5.000000e-01 : f32
    %182 = vector.broadcast %cst_75 : f32 to vector<8x256xf32>
    %183 = arith.addf %181, %182 : vector<8x256xf32>
    %184 = vector.extract_strided_slice %167 {offsets = [0, 512], sizes = [8, 256], strides = [1, 1]} : vector<8x1024xf32> to vector<8x256xf32>
    %185 = math.tanh %184 : vector<8x256xf32>
    %186 = vector.extract_strided_slice %167 {offsets = [0, 768], sizes = [8, 256], strides = [1, 1]} : vector<8x1024xf32> to vector<8x256xf32>
    %cst_76 = arith.constant 5.000000e-01 : f32
    %187 = vector.broadcast %cst_76 : f32 to vector<8x256xf32>
    %188 = arith.mulf %187, %186 : vector<8x256xf32>
    %189 = math.tanh %188 : vector<8x256xf32>
    %cst_77 = arith.constant 5.000000e-01 : f32
    %190 = vector.broadcast %cst_77 : f32 to vector<8x256xf32>
    %191 = arith.mulf %190, %189 : vector<8x256xf32>
    %cst_78 = arith.constant 5.000000e-01 : f32
    %192 = vector.broadcast %cst_78 : f32 to vector<8x256xf32>
    %193 = arith.addf %191, %192 : vector<8x256xf32>
    %194 = arith.mulf %183, %160 : vector<8x256xf32>
    %195 = arith.mulf %175, %185 : vector<8x256xf32>
    %196 = arith.addf %194, %195 : vector<8x256xf32>
    %197 = math.tanh %196 : vector<8x256xf32>
    %198 = arith.mulf %193, %197 : vector<8x256xf32>
    %c5_i32 = arith.constant 5 : i32
    %199 = arith.index_cast %c5_i32 : i32 to index
    %c0_79 = arith.constant 0 : index
    %c0_80 = arith.constant 0 : index
    %200 = vector.load %arg8[%199, %c0_79, %c0_80] : memref<8x8x1024xf32, #tpu.memory_space<vmem>>, vector<1x8x1024xf32>
    %201 = vector.shape_cast %200 : vector<1x8x1024xf32> to vector<8x1024xf32>
    %cst_81 = arith.constant dense<0.000000e+00> : vector<8x1024xf32>
    %202 = tpu.matmul %198, %16, %cst_81 {dimension_numbers = #tpu.dot_dimension_numbers<[1], [0], [0], [1], [0, 0, 1, 1], [], []>} : vector<8x256xf32>, vector<256x1024xf32>, vector<8x1024xf32> -> vector<8x1024xf32>
    %203 = arith.addf %201, %202 : vector<8x1024xf32>
    %204 = vector.extract_strided_slice %203 {offsets = [0, 0], sizes = [8, 256], strides = [1, 1]} : vector<8x1024xf32> to vector<8x256xf32>
    %cst_82 = arith.constant 5.000000e-01 : f32
    %205 = vector.broadcast %cst_82 : f32 to vector<8x256xf32>
    %206 = arith.mulf %205, %204 : vector<8x256xf32>
    %207 = math.tanh %206 : vector<8x256xf32>
    %cst_83 = arith.constant 5.000000e-01 : f32
    %208 = vector.broadcast %cst_83 : f32 to vector<8x256xf32>
    %209 = arith.mulf %208, %207 : vector<8x256xf32>
    %cst_84 = arith.constant 5.000000e-01 : f32
    %210 = vector.broadcast %cst_84 : f32 to vector<8x256xf32>
    %211 = arith.addf %209, %210 : vector<8x256xf32>
    %212 = vector.extract_strided_slice %203 {offsets = [0, 256], sizes = [8, 256], strides = [1, 1]} : vector<8x1024xf32> to vector<8x256xf32>
    %cst_85 = arith.constant 5.000000e-01 : f32
    %213 = vector.broadcast %cst_85 : f32 to vector<8x256xf32>
    %214 = arith.mulf %213, %212 : vector<8x256xf32>
    %215 = math.tanh %214 : vector<8x256xf32>
    %cst_86 = arith.constant 5.000000e-01 : f32
    %216 = vector.broadcast %cst_86 : f32 to vector<8x256xf32>
    %217 = arith.mulf %216, %215 : vector<8x256xf32>
    %cst_87 = arith.constant 5.000000e-01 : f32
    %218 = vector.broadcast %cst_87 : f32 to vector<8x256xf32>
    %219 = arith.addf %217, %218 : vector<8x256xf32>
    %220 = vector.extract_strided_slice %203 {offsets = [0, 512], sizes = [8, 256], strides = [1, 1]} : vector<8x1024xf32> to vector<8x256xf32>
    %221 = math.tanh %220 : vector<8x256xf32>
    %222 = vector.extract_strided_slice %203 {offsets = [0, 768], sizes = [8, 256], strides = [1, 1]} : vector<8x1024xf32> to vector<8x256xf32>
    %cst_88 = arith.constant 5.000000e-01 : f32
    %223 = vector.broadcast %cst_88 : f32 to vector<8x256xf32>
    %224 = arith.mulf %223, %222 : vector<8x256xf32>
    %225 = math.tanh %224 : vector<8x256xf32>
    %cst_89 = arith.constant 5.000000e-01 : f32
    %226 = vector.broadcast %cst_89 : f32 to vector<8x256xf32>
    %227 = arith.mulf %226, %225 : vector<8x256xf32>
    %cst_90 = arith.constant 5.000000e-01 : f32
    %228 = vector.broadcast %cst_90 : f32 to vector<8x256xf32>
    %229 = arith.addf %227, %228 : vector<8x256xf32>
    %230 = arith.mulf %219, %196 : vector<8x256xf32>
    %231 = arith.mulf %211, %221 : vector<8x256xf32>
    %232 = arith.addf %230, %231 : vector<8x256xf32>
    %233 = math.tanh %232 : vector<8x256xf32>
    %234 = arith.mulf %229, %233 : vector<8x256xf32>
    %c6_i32 = arith.constant 6 : i32
    %235 = arith.index_cast %c6_i32 : i32 to index
    %c0_91 = arith.constant 0 : index
    %c0_92 = arith.constant 0 : index
    %236 = vector.load %arg8[%235, %c0_91, %c0_92] : memref<8x8x1024xf32, #tpu.memory_space<vmem>>, vector<1x8x1024xf32>
    %237 = vector.shape_cast %236 : vector<1x8x1024xf32> to vector<8x1024xf32>
    %cst_93 = arith.constant dense<0.000000e+00> : vector<8x1024xf32>
    %238 = tpu.matmul %234, %16, %cst_93 {dimension_numbers = #tpu.dot_dimension_numbers<[1], [0], [0], [1], [0, 0, 1, 1], [], []>} : vector<8x256xf32>, vector<256x1024xf32>, vector<8x1024xf32> -> vector<8x1024xf32>
    %239 = arith.addf %237, %238 : vector<8x1024xf32>
    %240 = vector.extract_strided_slice %239 {offsets = [0, 0], sizes = [8, 256], strides = [1, 1]} : vector<8x1024xf32> to vector<8x256xf32>
    %cst_94 = arith.constant 5.000000e-01 : f32
    %241 = vector.broadcast %cst_94 : f32 to vector<8x256xf32>
    %242 = arith.mulf %241, %240 : vector<8x256xf32>
    %243 = math.tanh %242 : vector<8x256xf32>
    %cst_95 = arith.constant 5.000000e-01 : f32
    %244 = vector.broadcast %cst_95 : f32 to vector<8x256xf32>
    %245 = arith.mulf %244, %243 : vector<8x256xf32>
    %cst_96 = arith.constant 5.000000e-01 : f32
    %246 = vector.broadcast %cst_96 : f32 to vector<8x256xf32>
    %247 = arith.addf %245, %246 : vector<8x256xf32>
    %248 = vector.extract_strided_slice %239 {offsets = [0, 256], sizes = [8, 256], strides = [1, 1]} : vector<8x1024xf32> to vector<8x256xf32>
    %cst_97 = arith.constant 5.000000e-01 : f32
    %249 = vector.broadcast %cst_97 : f32 to vector<8x256xf32>
    %250 = arith.mulf %249, %248 : vector<8x256xf32>
    %251 = math.tanh %250 : vector<8x256xf32>
    %cst_98 = arith.constant 5.000000e-01 : f32
    %252 = vector.broadcast %cst_98 : f32 to vector<8x256xf32>
    %253 = arith.mulf %252, %251 : vector<8x256xf32>
    %cst_99 = arith.constant 5.000000e-01 : f32
    %254 = vector.broadcast %cst_99 : f32 to vector<8x256xf32>
    %255 = arith.addf %253, %254 : vector<8x256xf32>
    %256 = vector.extract_strided_slice %239 {offsets = [0, 512], sizes = [8, 256], strides = [1, 1]} : vector<8x1024xf32> to vector<8x256xf32>
    %257 = math.tanh %256 : vector<8x256xf32>
    %258 = vector.extract_strided_slice %239 {offsets = [0, 768], sizes = [8, 256], strides = [1, 1]} : vector<8x1024xf32> to vector<8x256xf32>
    %cst_100 = arith.constant 5.000000e-01 : f32
    %259 = vector.broadcast %cst_100 : f32 to vector<8x256xf32>
    %260 = arith.mulf %259, %258 : vector<8x256xf32>
    %261 = math.tanh %260 : vector<8x256xf32>
    %cst_101 = arith.constant 5.000000e-01 : f32
    %262 = vector.broadcast %cst_101 : f32 to vector<8x256xf32>
    %263 = arith.mulf %262, %261 : vector<8x256xf32>
    %cst_102 = arith.constant 5.000000e-01 : f32
    %264 = vector.broadcast %cst_102 : f32 to vector<8x256xf32>
    %265 = arith.addf %263, %264 : vector<8x256xf32>
    %266 = arith.mulf %255, %232 : vector<8x256xf32>
    %267 = arith.mulf %247, %257 : vector<8x256xf32>
    %268 = arith.addf %266, %267 : vector<8x256xf32>
    %269 = math.tanh %268 : vector<8x256xf32>
    %270 = arith.mulf %265, %269 : vector<8x256xf32>
    %c7_i32 = arith.constant 7 : i32
    %271 = arith.index_cast %c7_i32 : i32 to index
    %c0_103 = arith.constant 0 : index
    %c0_104 = arith.constant 0 : index
    %272 = vector.load %arg8[%271, %c0_103, %c0_104] : memref<8x8x1024xf32, #tpu.memory_space<vmem>>, vector<1x8x1024xf32>
    %273 = vector.shape_cast %272 : vector<1x8x1024xf32> to vector<8x1024xf32>
    %cst_105 = arith.constant dense<0.000000e+00> : vector<8x1024xf32>
    %274 = tpu.matmul %270, %16, %cst_105 {dimension_numbers = #tpu.dot_dimension_numbers<[1], [0], [0], [1], [0, 0, 1, 1], [], []>} : vector<8x256xf32>, vector<256x1024xf32>, vector<8x1024xf32> -> vector<8x1024xf32>
    %275 = arith.addf %273, %274 : vector<8x1024xf32>
    %276 = vector.extract_strided_slice %275 {offsets = [0, 0], sizes = [8, 256], strides = [1, 1]} : vector<8x1024xf32> to vector<8x256xf32>
    %cst_106 = arith.constant 5.000000e-01 : f32
    %277 = vector.broadcast %cst_106 : f32 to vector<8x256xf32>
    %278 = arith.mulf %277, %276 : vector<8x256xf32>
    %279 = math.tanh %278 : vector<8x256xf32>
    %cst_107 = arith.constant 5.000000e-01 : f32
    %280 = vector.broadcast %cst_107 : f32 to vector<8x256xf32>
    %281 = arith.mulf %280, %279 : vector<8x256xf32>
    %cst_108 = arith.constant 5.000000e-01 : f32
    %282 = vector.broadcast %cst_108 : f32 to vector<8x256xf32>
    %283 = arith.addf %281, %282 : vector<8x256xf32>
    %284 = vector.extract_strided_slice %275 {offsets = [0, 256], sizes = [8, 256], strides = [1, 1]} : vector<8x1024xf32> to vector<8x256xf32>
    %cst_109 = arith.constant 5.000000e-01 : f32
    %285 = vector.broadcast %cst_109 : f32 to vector<8x256xf32>
    %286 = arith.mulf %285, %284 : vector<8x256xf32>
    %287 = math.tanh %286 : vector<8x256xf32>
    %cst_110 = arith.constant 5.000000e-01 : f32
    %288 = vector.broadcast %cst_110 : f32 to vector<8x256xf32>
    %289 = arith.mulf %288, %287 : vector<8x256xf32>
    %cst_111 = arith.constant 5.000000e-01 : f32
    %290 = vector.broadcast %cst_111 : f32 to vector<8x256xf32>
    %291 = arith.addf %289, %290 : vector<8x256xf32>
    %292 = vector.extract_strided_slice %275 {offsets = [0, 512], sizes = [8, 256], strides = [1, 1]} : vector<8x1024xf32> to vector<8x256xf32>
    %293 = math.tanh %292 : vector<8x256xf32>
    %294 = vector.extract_strided_slice %275 {offsets = [0, 768], sizes = [8, 256], strides = [1, 1]} : vector<8x1024xf32> to vector<8x256xf32>
    %cst_112 = arith.constant 5.000000e-01 : f32
    %295 = vector.broadcast %cst_112 : f32 to vector<8x256xf32>
    %296 = arith.mulf %295, %294 : vector<8x256xf32>
    %297 = math.tanh %296 : vector<8x256xf32>
    %cst_113 = arith.constant 5.000000e-01 : f32
    %298 = vector.broadcast %cst_113 : f32 to vector<8x256xf32>
    %299 = arith.mulf %298, %297 : vector<8x256xf32>
    %cst_114 = arith.constant 5.000000e-01 : f32
    %300 = vector.broadcast %cst_114 : f32 to vector<8x256xf32>
    %301 = arith.addf %299, %300 : vector<8x256xf32>
    %302 = arith.mulf %291, %268 : vector<8x256xf32>
    %303 = arith.mulf %283, %293 : vector<8x256xf32>
    %304 = arith.addf %302, %303 : vector<8x256xf32>
    %305 = math.tanh %304 : vector<8x256xf32>
    %306 = arith.mulf %301, %305 : vector<8x256xf32>
    %c8_i32 = arith.constant 8 : i32
    %307 = vector.shape_cast %306 : vector<8x256xf32> to vector<1x8x256xf32>
    %c0_115 = arith.constant 0 : index
    %c0_116 = arith.constant 0 : index
    %c0_117 = arith.constant 0 : index
    %308 = vector.load %arg7[%c0_115, %c0_116, %c0_117] : memref<1x8x256xf32, #tpu.memory_space<vmem>>, vector<1x8x256xf32>
    tpu.vector_store %arg7[%c0_115, %c0_116, %c0_117], %307 {strides = array<i32>} : memref<1x8x256xf32, #tpu.memory_space<vmem>>, vector<1x8x256xf32>,
    return
  }
  func.func @transform_0(%arg0: i32) -> (i32, i32, i32) {
    %c0_i32 = arith.constant 0 : i32
    %c0_i32_0 = arith.constant 0 : i32
    %c0_i32_1 = arith.constant 0 : i32
    return %arg0, %c0_i32, %c0_i32_0 : i32, i32, i32
  }
  func.func @transform_1(%arg0: i32) -> (i32, i32) {
    %c0_i32 = arith.constant 0 : i32
    %c0_i32_0 = arith.constant 0 : i32
    %c0_i32_1 = arith.constant 0 : i32
    return %c0_i32, %c0_i32_0 : i32, i32
  }
  func.func @transform_2(%arg0: i32) -> (i32, i32) {
    %c0_i32 = arith.constant 0 : i32
    %c0_i32_0 = arith.constant 0 : i32
    %c0_i32_1 = arith.constant 0 : i32
    return %c0_i32, %c0_i32_0 : i32, i32
  }
  func.func @transform_3(%arg0: i32) -> (i32, i32) {
    %c0_i32 = arith.constant 0 : i32
    %c0_i32_0 = arith.constant 0 : i32
    %c0_i32_1 = arith.constant 0 : i32
    return %c0_i32, %c0_i32_0 : i32, i32
  }
  func.func @transform_4(%arg0: i32) -> (i32, i32) {
    %c0_i32 = arith.constant 0 : i32
    %c0_i32_0 = arith.constant 0 : i32
    %c0_i32_1 = arith.constant 0 : i32
    return %c0_i32, %c0_i32_0 : i32, i32
  }
  func.func @transform_5(%arg0: i32) -> (i32, i32) {
    %c0_i32 = arith.constant 0 : i32
    %c0_i32_0 = arith.constant 0 : i32
    %c0_i32_1 = arith.constant 0 : i32
    return %c0_i32, %c0_i32_0 : i32, i32
  }
  func.func @transform_6(%arg0: i32) -> (i32, i32, i32) {
    %c0_i32 = arith.constant 0 : i32
    %c0_i32_0 = arith.constant 0 : i32
    %c0_i32_1 = arith.constant 0 : i32
    return %arg0, %c0_i32, %c0_i32_0 : i32, i32, i32
  }
}

module attributes {stable_mosaic.version = 11 : i64} {
  func.func @st_encoder_future_kernel(%arg0: i32, %arg1: memref<1x64x6xf32, #tpu.memory_space<vmem>>, %arg2: memref<6x16xf32, #tpu.memory_space<vmem>>, %arg3: memref<1x16xf32, #tpu.memory_space<vmem>>, %arg4: memref<16x1024xf32, #tpu.memory_space<vmem>>, %arg5: memref<256x1024xf32, #tpu.memory_space<vmem>>, %arg6: memref<1x1024xf32, #tpu.memory_space<vmem>>, %arg7: memref<1x8x256xf32, #tpu.memory_space<vmem>>, %arg8: memref<8x8x1024xf32, #tpu.memory_space<vmem>>) attributes {dimension_semantics = [#tpu.dimension_semantics<parallel>], iteration_bounds = array<i64: 1>, scalar_prefetch = 0 : i64, scratch_operands = 1 : i64, tpu.core_type = #tpu.core_type<tc>, window_params = [{transform_indices = @transform_0, window_bounds = array<i64: 1, 64, 6>}, {pipeline_mode = #tpu.pipeline_mode<synchronous>, transform_indices = @transform_1, window_bounds = array<i64: 6, 16>}, {pipeline_mode = #tpu.pipeline_mode<synchronous>, transform_indices = @transform_2, window_bounds = array<i64: 1, 16>}, {pipeline_mode = #tpu.pipeline_mode<synchronous>, transform_indices = @transform_3, window_bounds = array<i64: 16, 1024>}, {pipeline_mode = #tpu.pipeline_mode<synchronous>, transform_indices = @transform_4, window_bounds = array<i64: 256, 1024>}, {pipeline_mode = #tpu.pipeline_mode<synchronous>, transform_indices = @transform_5, window_bounds = array<i64: 1, 1024>}, {transform_indices = @transform_6, window_bounds = array<i64: 1, 8, 256>}]} {
    %c0 = arith.constant 0 : index
    %c0_0 = arith.constant 0 : index
    %c0_1 = arith.constant 0 : index
    %0 = vector.load %arg1[%c0, %c0_0, %c0_1] : memref<1x64x6xf32, #tpu.memory_space<vmem>>, vector<1x64x6xf32>
    %1 = vector.shape_cast %0 : vector<1x64x6xf32> to vector<64x6xf32>
    %c0_2 = arith.constant 0 : index
    %c0_3 = arith.constant 0 : index
    %2 = vector.load %arg2[%c0_2, %c0_3] : memref<6x16xf32, #tpu.memory_space<vmem>>, vector<6x16xf32>
    %cst = arith.constant dense<0.000000e+00> : vector<64x16xf32>
    %3 = tpu.matmul %1, %2, %cst {dimension_numbers = #tpu.dot_dimension_numbers<[1], [0], [0], [1], [0, 0, 1, 1], [], []>} : vector<64x6xf32>, vector<6x16xf32>, vector<64x16xf32> -> vector<64x16xf32>
    %c0_4 = arith.constant 0 : index
    %c0_5 = arith.constant 0 : index
    %4 = vector.load %arg3[%c0_4, %c0_5] : memref<1x16xf32, #tpu.memory_space<vmem>>, vector<1x16xf32>
    %5 = vector.broadcast %4 : vector<1x16xf32> to vector<64x16xf32>
    %6 = arith.addf %3, %5 : vector<64x16xf32>
    %cst_6 = arith.constant 0.000000e+00 : f32
    %7 = vector.broadcast %cst_6 : f32 to vector<64x16xf32>
    %8 = arith.maximumf %6, %7 : vector<64x16xf32>
    %c0_7 = arith.constant 0 : index
    %c0_8 = arith.constant 0 : index
    %9 = vector.load %arg4[%c0_7, %c0_8] : memref<16x1024xf32, #tpu.memory_space<vmem>>, vector<16x1024xf32>
    %cst_9 = arith.constant dense<0.000000e+00> : vector<64x1024xf32>
    %10 = tpu.matmul %8, %9, %cst_9 {dimension_numbers = #tpu.dot_dimension_numbers<[1], [0], [0], [1], [0, 0, 1, 1], [], []>} : vector<64x16xf32>, vector<16x1024xf32>, vector<64x1024xf32> -> vector<64x1024xf32>
    %c0_10 = arith.constant 0 : index
    %c0_11 = arith.constant 0 : index
    %11 = vector.load %arg6[%c0_10, %c0_11] : memref<1x1024xf32, #tpu.memory_space<vmem>>, vector<1x1024xf32>
    %12 = vector.broadcast %11 : vector<1x1024xf32> to vector<64x1024xf32>
    %13 = arith.addf %10, %12 : vector<64x1024xf32>
    %14 = vector.shape_cast %13 : vector<64x1024xf32> to vector<8x8x1024xf32>
    %c0_12 = arith.constant 0 : index
    %c0_13 = arith.constant 0 : index
    %c0_14 = arith.constant 0 : index
    %15 = vector.load %arg8[%c0_12, %c0_13, %c0_14] : memref<8x8x1024xf32, #tpu.memory_space<vmem>>, vector<8x8x1024xf32>
    tpu.vector_store %arg8[%c0_12, %c0_13, %c0_14], %14 {strides = array<i32>} : memref<8x8x1024xf32, #tpu.memory_space<vmem>>, vector<8x8x1024xf32>,
    %c0_15 = arith.constant 0 : index
    %c0_16 = arith.constant 0 : index
    %16 = vector.load %arg5[%c0_15, %c0_16] : memref<256x1024xf32, #tpu.memory_space<vmem>>, vector<256x1024xf32>
    %cst_17 = arith.constant 0.000000e+00 : f32
    %17 = vector.broadcast %cst_17 : f32 to vector<8x256xf32>
    %cst_18 = arith.constant 0.000000e+00 : f32
    %18 = vector.broadcast %cst_18 : f32 to vector<8x256xf32>
    %c0_i32 = arith.constant 0 : i32
    %19 = arith.index_cast %c0_i32 : i32 to index
    %c0_19 = arith.constant 0 : index
    %c0_20 = arith.constant 0 : index
    %20 = vector.load %arg8[%19, %c0_19, %c0_20] : memref<8x8x1024xf32, #tpu.memory_space<vmem>>, vector<1x8x1024xf32>
    %21 = vector.shape_cast %20 : vector<1x8x1024xf32> to vector<8x1024xf32>
    %cst_21 = arith.constant dense<0.000000e+00> : vector<8x1024xf32>
    %22 = tpu.matmul %17, %16, %cst_21 {dimension_numbers = #tpu.dot_dimension_numbers<[1], [0], [0], [1], [0, 0, 1, 1], [], []>} : vector<8x256xf32>, vector<256x1024xf32>, vector<8x1024xf32> -> vector<8x1024xf32>
    %23 = arith.addf %21, %22 : vector<8x1024xf32>
    %24 = vector.extract_strided_slice %23 {offsets = [0, 0], sizes = [8, 256], strides = [1, 1]} : vector<8x1024xf32> to vector<8x256xf32>
    %cst_22 = arith.constant 5.000000e-01 : f32
    %25 = vector.broadcast %cst_22 : f32 to vector<8x256xf32>
    %26 = arith.mulf %25, %24 : vector<8x256xf32>
    %27 = math.tanh %26 : vector<8x256xf32>
    %cst_23 = arith.constant 5.000000e-01 : f32
    %28 = vector.broadcast %cst_23 : f32 to vector<8x256xf32>
    %29 = arith.mulf %28, %27 : vector<8x256xf32>
    %cst_24 = arith.constant 5.000000e-01 : f32
    %30 = vector.broadcast %cst_24 : f32 to vector<8x256xf32>
    %31 = arith.addf %29, %30 : vector<8x256xf32>
    %32 = vector.extract_strided_slice %23 {offsets = [0, 256], sizes = [8, 256], strides = [1, 1]} : vector<8x1024xf32> to vector<8x256xf32>
    %cst_25 = arith.constant 5.000000e-01 : f32
    %33 = vector.broadcast %cst_25 : f32 to vector<8x256xf32>
    %34 = arith.mulf %33, %32 : vector<8x256xf32>
    %35 = math.tanh %34 : vector<8x256xf32>
    %cst_26 = arith.constant 5.000000e-01 : f32
    %36 = vector.broadcast %cst_26 : f32 to vector<8x256xf32>
    %37 = arith.mulf %36, %35 : vector<8x256xf32>
    %cst_27 = arith.constant 5.000000e-01 : f32
    %38 = vector.broadcast %cst_27 : f32 to vector<8x256xf32>
    %39 = arith.addf %37, %38 : vector<8x256xf32>
    %40 = vector.extract_strided_slice %23 {offsets = [0, 512], sizes = [8, 256], strides = [1, 1]} : vector<8x1024xf32> to vector<8x256xf32>
    %41 = math.tanh %40 : vector<8x256xf32>
    %42 = vector.extract_strided_slice %23 {offsets = [0, 768], sizes = [8, 256], strides = [1, 1]} : vector<8x1024xf32> to vector<8x256xf32>
    %cst_28 = arith.constant 5.000000e-01 : f32
    %43 = vector.broadcast %cst_28 : f32 to vector<8x256xf32>
    %44 = arith.mulf %43, %42 : vector<8x256xf32>
    %45 = math.tanh %44 : vector<8x256xf32>
    %cst_29 = arith.constant 5.000000e-01 : f32
    %46 = vector.broadcast %cst_29 : f32 to vector<8x256xf32>
    %47 = arith.mulf %46, %45 : vector<8x256xf32>
    %cst_30 = arith.constant 5.000000e-01 : f32
    %48 = vector.broadcast %cst_30 : f32 to vector<8x256xf32>
    %49 = arith.addf %47, %48 : vector<8x256xf32>
    %50 = arith.mulf %39, %18 : vector<8x256xf32>
    %51 = arith.mulf %31, %41 : vector<8x256xf32>
    %52 = arith.addf %50, %51 : vector<8x256xf32>
    %53 = math.tanh %52 : vector<8x256xf32>
    %54 = arith.mulf %49, %53 : vector<8x256xf32>
    %c1_i32 = arith.constant 1 : i32
    %55 = arith.index_cast %c1_i32 : i32 to index
    %c0_31 = arith.constant 0 : index
    %c0_32 = arith.constant 0 : index
    %56 = vector.load %arg8[%55, %c0_31, %c0_32] : memref<8x8x1024xf32, #tpu.memory_space<vmem>>, vector<1x8x1024xf32>
    %57 = vector.shape_cast %56 : vector<1x8x1024xf32> to vector<8x1024xf32>
    %cst_33 = arith.constant dense<0.000000e+00> : vector<8x1024xf32>
    %58 = tpu.matmul %54, %16, %cst_33 {dimension_numbers = #tpu.dot_dimension_numbers<[1], [0], [0], [1], [0, 0, 1, 1], [], []>} : vector<8x256xf32>, vector<256x1024xf32>, vector<8x1024xf32> -> vector<8x1024xf32>
    %59 = arith.addf %57, %58 : vector<8x1024xf32>
    %60 = vector.extract_strided_slice %59 {offsets = [0, 0], sizes = [8, 256], strides = [1, 1]} : vector<8x1024xf32> to vector<8x256xf32>
    %cst_34 = arith.constant 5.000000e-01 : f32
    %61 = vector.broadcast %cst_34 : f32 to vector<8x256xf32>
    %62 = arith.mulf %61, %60 : vector<8x256xf32>
    %63 = math.tanh %62 : vector<8x256xf32>
    %cst_35 = arith.constant 5.000000e-01 : f32
    %64 = vector.broadcast %cst_35 : f32 to vector<8x256xf32>
    %65 = arith.mulf %64, %63 : vector<8x256xf32>
    %cst_36 = arith.constant 5.000000e-01 : f32
    %66 = vector.broadcast %cst_36 : f32 to vector<8x256xf32>
    %67 = arith.addf %65, %66 : vector<8x256xf32>
    %68 = vector.extract_strided_slice %59 {offsets = [0, 256], sizes = [8, 256], strides = [1, 1]} : vector<8x1024xf32> to vector<8x256xf32>
    %cst_37 = arith.constant 5.000000e-01 : f32
    %69 = vector.broadcast %cst_37 : f32 to vector<8x256xf32>
    %70 = arith.mulf %69, %68 : vector<8x256xf32>
    %71 = math.tanh %70 : vector<8x256xf32>
    %cst_38 = arith.constant 5.000000e-01 : f32
    %72 = vector.broadcast %cst_38 : f32 to vector<8x256xf32>
    %73 = arith.mulf %72, %71 : vector<8x256xf32>
    %cst_39 = arith.constant 5.000000e-01 : f32
    %74 = vector.broadcast %cst_39 : f32 to vector<8x256xf32>
    %75 = arith.addf %73, %74 : vector<8x256xf32>
    %76 = vector.extract_strided_slice %59 {offsets = [0, 512], sizes = [8, 256], strides = [1, 1]} : vector<8x1024xf32> to vector<8x256xf32>
    %77 = math.tanh %76 : vector<8x256xf32>
    %78 = vector.extract_strided_slice %59 {offsets = [0, 768], sizes = [8, 256], strides = [1, 1]} : vector<8x1024xf32> to vector<8x256xf32>
    %cst_40 = arith.constant 5.000000e-01 : f32
    %79 = vector.broadcast %cst_40 : f32 to vector<8x256xf32>
    %80 = arith.mulf %79, %78 : vector<8x256xf32>
    %81 = math.tanh %80 : vector<8x256xf32>
    %cst_41 = arith.constant 5.000000e-01 : f32
    %82 = vector.broadcast %cst_41 : f32 to vector<8x256xf32>
    %83 = arith.mulf %82, %81 : vector<8x256xf32>
    %cst_42 = arith.constant 5.000000e-01 : f32
    %84 = vector.broadcast %cst_42 : f32 to vector<8x256xf32>
    %85 = arith.addf %83, %84 : vector<8x256xf32>
    %86 = arith.mulf %75, %52 : vector<8x256xf32>
    %87 = arith.mulf %67, %77 : vector<8x256xf32>
    %88 = arith.addf %86, %87 : vector<8x256xf32>
    %89 = math.tanh %88 : vector<8x256xf32>
    %90 = arith.mulf %85, %89 : vector<8x256xf32>
    %c2_i32 = arith.constant 2 : i32
    %91 = arith.index_cast %c2_i32 : i32 to index
    %c0_43 = arith.constant 0 : index
    %c0_44 = arith.constant 0 : index
    %92 = vector.load %arg8[%91, %c0_43, %c0_44] : memref<8x8x1024xf32, #tpu.memory_space<vmem>>, vector<1x8x1024xf32>
    %93 = vector.shape_cast %92 : vector<1x8x1024xf32> to vector<8x1024xf32>
    %cst_45 = arith.constant dense<0.000000e+00> : vector<8x1024xf32>
    %94 = tpu.matmul %90, %16, %cst_45 {dimension_numbers = #tpu.dot_dimension_numbers<[1], [0], [0], [1], [0, 0, 1, 1], [], []>} : vector<8x256xf32>, vector<256x1024xf32>, vector<8x1024xf32> -> vector<8x1024xf32>
    %95 = arith.addf %93, %94 : vector<8x1024xf32>
    %96 = vector.extract_strided_slice %95 {offsets = [0, 0], sizes = [8, 256], strides = [1, 1]} : vector<8x1024xf32> to vector<8x256xf32>
    %cst_46 = arith.constant 5.000000e-01 : f32
    %97 = vector.broadcast %cst_46 : f32 to vector<8x256xf32>
    %98 = arith.mulf %97, %96 : vector<8x256xf32>
    %99 = math.tanh %98 : vector<8x256xf32>
    %cst_47 = arith.constant 5.000000e-01 : f32
    %100 = vector.broadcast %cst_47 : f32 to vector<8x256xf32>
    %101 = arith.mulf %100, %99 : vector<8x256xf32>
    %cst_48 = arith.constant 5.000000e-01 : f32
    %102 = vector.broadcast %cst_48 : f32 to vector<8x256xf32>
    %103 = arith.addf %101, %102 : vector<8x256xf32>
    %104 = vector.extract_strided_slice %95 {offsets = [0, 256], sizes = [8, 256], strides = [1, 1]} : vector<8x1024xf32> to vector<8x256xf32>
    %cst_49 = arith.constant 5.000000e-01 : f32
    %105 = vector.broadcast %cst_49 : f32 to vector<8x256xf32>
    %106 = arith.mulf %105, %104 : vector<8x256xf32>
    %107 = math.tanh %106 : vector<8x256xf32>
    %cst_50 = arith.constant 5.000000e-01 : f32
    %108 = vector.broadcast %cst_50 : f32 to vector<8x256xf32>
    %109 = arith.mulf %108, %107 : vector<8x256xf32>
    %cst_51 = arith.constant 5.000000e-01 : f32
    %110 = vector.broadcast %cst_51 : f32 to vector<8x256xf32>
    %111 = arith.addf %109, %110 : vector<8x256xf32>
    %112 = vector.extract_strided_slice %95 {offsets = [0, 512], sizes = [8, 256], strides = [1, 1]} : vector<8x1024xf32> to vector<8x256xf32>
    %113 = math.tanh %112 : vector<8x256xf32>
    %114 = vector.extract_strided_slice %95 {offsets = [0, 768], sizes = [8, 256], strides = [1, 1]} : vector<8x1024xf32> to vector<8x256xf32>
    %cst_52 = arith.constant 5.000000e-01 : f32
    %115 = vector.broadcast %cst_52 : f32 to vector<8x256xf32>
    %116 = arith.mulf %115, %114 : vector<8x256xf32>
    %117 = math.tanh %116 : vector<8x256xf32>
    %cst_53 = arith.constant 5.000000e-01 : f32
    %118 = vector.broadcast %cst_53 : f32 to vector<8x256xf32>
    %119 = arith.mulf %118, %117 : vector<8x256xf32>
    %cst_54 = arith.constant 5.000000e-01 : f32
    %120 = vector.broadcast %cst_54 : f32 to vector<8x256xf32>
    %121 = arith.addf %119, %120 : vector<8x256xf32>
    %122 = arith.mulf %111, %88 : vector<8x256xf32>
    %123 = arith.mulf %103, %113 : vector<8x256xf32>
    %124 = arith.addf %122, %123 : vector<8x256xf32>
    %125 = math.tanh %124 : vector<8x256xf32>
    %126 = arith.mulf %121, %125 : vector<8x256xf32>
    %c3_i32 = arith.constant 3 : i32
    %127 = arith.index_cast %c3_i32 : i32 to index
    %c0_55 = arith.constant 0 : index
    %c0_56 = arith.constant 0 : index
    %128 = vector.load %arg8[%127, %c0_55, %c0_56] : memref<8x8x1024xf32, #tpu.memory_space<vmem>>, vector<1x8x1024xf32>
    %129 = vector.shape_cast %128 : vector<1x8x1024xf32> to vector<8x1024xf32>
    %cst_57 = arith.constant dense<0.000000e+00> : vector<8x1024xf32>
    %130 = tpu.matmul %126, %16, %cst_57 {dimension_numbers = #tpu.dot_dimension_numbers<[1], [0], [0], [1], [0, 0, 1, 1], [], []>} : vector<8x256xf32>, vector<256x1024xf32>, vector<8x1024xf32> -> vector<8x1024xf32>
    %131 = arith.addf %129, %130 : vector<8x1024xf32>
    %132 = vector.extract_strided_slice %131 {offsets = [0, 0], sizes = [8, 256], strides = [1, 1]} : vector<8x1024xf32> to vector<8x256xf32>
    %cst_58 = arith.constant 5.000000e-01 : f32
    %133 = vector.broadcast %cst_58 : f32 to vector<8x256xf32>
    %134 = arith.mulf %133, %132 : vector<8x256xf32>
    %135 = math.tanh %134 : vector<8x256xf32>
    %cst_59 = arith.constant 5.000000e-01 : f32
    %136 = vector.broadcast %cst_59 : f32 to vector<8x256xf32>
    %137 = arith.mulf %136, %135 : vector<8x256xf32>
    %cst_60 = arith.constant 5.000000e-01 : f32
    %138 = vector.broadcast %cst_60 : f32 to vector<8x256xf32>
    %139 = arith.addf %137, %138 : vector<8x256xf32>
    %140 = vector.extract_strided_slice %131 {offsets = [0, 256], sizes = [8, 256], strides = [1, 1]} : vector<8x1024xf32> to vector<8x256xf32>
    %cst_61 = arith.constant 5.000000e-01 : f32
    %141 = vector.broadcast %cst_61 : f32 to vector<8x256xf32>
    %142 = arith.mulf %141, %140 : vector<8x256xf32>
    %143 = math.tanh %142 : vector<8x256xf32>
    %cst_62 = arith.constant 5.000000e-01 : f32
    %144 = vector.broadcast %cst_62 : f32 to vector<8x256xf32>
    %145 = arith.mulf %144, %143 : vector<8x256xf32>
    %cst_63 = arith.constant 5.000000e-01 : f32
    %146 = vector.broadcast %cst_63 : f32 to vector<8x256xf32>
    %147 = arith.addf %145, %146 : vector<8x256xf32>
    %148 = vector.extract_strided_slice %131 {offsets = [0, 512], sizes = [8, 256], strides = [1, 1]} : vector<8x1024xf32> to vector<8x256xf32>
    %149 = math.tanh %148 : vector<8x256xf32>
    %150 = vector.extract_strided_slice %131 {offsets = [0, 768], sizes = [8, 256], strides = [1, 1]} : vector<8x1024xf32> to vector<8x256xf32>
    %cst_64 = arith.constant 5.000000e-01 : f32
    %151 = vector.broadcast %cst_64 : f32 to vector<8x256xf32>
    %152 = arith.mulf %151, %150 : vector<8x256xf32>
    %153 = math.tanh %152 : vector<8x256xf32>
    %cst_65 = arith.constant 5.000000e-01 : f32
    %154 = vector.broadcast %cst_65 : f32 to vector<8x256xf32>
    %155 = arith.mulf %154, %153 : vector<8x256xf32>
    %cst_66 = arith.constant 5.000000e-01 : f32
    %156 = vector.broadcast %cst_66 : f32 to vector<8x256xf32>
    %157 = arith.addf %155, %156 : vector<8x256xf32>
    %158 = arith.mulf %147, %124 : vector<8x256xf32>
    %159 = arith.mulf %139, %149 : vector<8x256xf32>
    %160 = arith.addf %158, %159 : vector<8x256xf32>
    %161 = math.tanh %160 : vector<8x256xf32>
    %162 = arith.mulf %157, %161 : vector<8x256xf32>
    %c4_i32 = arith.constant 4 : i32
    %163 = arith.index_cast %c4_i32 : i32 to index
    %c0_67 = arith.constant 0 : index
    %c0_68 = arith.constant 0 : index
    %164 = vector.load %arg8[%163, %c0_67, %c0_68] : memref<8x8x1024xf32, #tpu.memory_space<vmem>>, vector<1x8x1024xf32>
    %165 = vector.shape_cast %164 : vector<1x8x1024xf32> to vector<8x1024xf32>
    %cst_69 = arith.constant dense<0.000000e+00> : vector<8x1024xf32>
    %166 = tpu.matmul %162, %16, %cst_69 {dimension_numbers = #tpu.dot_dimension_numbers<[1], [0], [0], [1], [0, 0, 1, 1], [], []>} : vector<8x256xf32>, vector<256x1024xf32>, vector<8x1024xf32> -> vector<8x1024xf32>
    %167 = arith.addf %165, %166 : vector<8x1024xf32>
    %168 = vector.extract_strided_slice %167 {offsets = [0, 0], sizes = [8, 256], strides = [1, 1]} : vector<8x1024xf32> to vector<8x256xf32>
    %cst_70 = arith.constant 5.000000e-01 : f32
    %169 = vector.broadcast %cst_70 : f32 to vector<8x256xf32>
    %170 = arith.mulf %169, %168 : vector<8x256xf32>
    %171 = math.tanh %170 : vector<8x256xf32>
    %cst_71 = arith.constant 5.000000e-01 : f32
    %172 = vector.broadcast %cst_71 : f32 to vector<8x256xf32>
    %173 = arith.mulf %172, %171 : vector<8x256xf32>
    %cst_72 = arith.constant 5.000000e-01 : f32
    %174 = vector.broadcast %cst_72 : f32 to vector<8x256xf32>
    %175 = arith.addf %173, %174 : vector<8x256xf32>
    %176 = vector.extract_strided_slice %167 {offsets = [0, 256], sizes = [8, 256], strides = [1, 1]} : vector<8x1024xf32> to vector<8x256xf32>
    %cst_73 = arith.constant 5.000000e-01 : f32
    %177 = vector.broadcast %cst_73 : f32 to vector<8x256xf32>
    %178 = arith.mulf %177, %176 : vector<8x256xf32>
    %179 = math.tanh %178 : vector<8x256xf32>
    %cst_74 = arith.constant 5.000000e-01 : f32
    %180 = vector.broadcast %cst_74 : f32 to vector<8x256xf32>
    %181 = arith.mulf %180, %179 : vector<8x256xf32>
    %cst_75 = arith.constant 5.000000e-01 : f32
    %182 = vector.broadcast %cst_75 : f32 to vector<8x256xf32>
    %183 = arith.addf %181, %182 : vector<8x256xf32>
    %184 = vector.extract_strided_slice %167 {offsets = [0, 512], sizes = [8, 256], strides = [1, 1]} : vector<8x1024xf32> to vector<8x256xf32>
    %185 = math.tanh %184 : vector<8x256xf32>
    %186 = vector.extract_strided_slice %167 {offsets = [0, 768], sizes = [8, 256], strides = [1, 1]} : vector<8x1024xf32> to vector<8x256xf32>
    %cst_76 = arith.constant 5.000000e-01 : f32
    %187 = vector.broadcast %cst_76 : f32 to vector<8x256xf32>
    %188 = arith.mulf %187, %186 : vector<8x256xf32>
    %189 = math.tanh %188 : vector<8x256xf32>
    %cst_77 = arith.constant 5.000000e-01 : f32
    %190 = vector.broadcast %cst_77 : f32 to vector<8x256xf32>
    %191 = arith.mulf %190, %189 : vector<8x256xf32>
    %cst_78 = arith.constant 5.000000e-01 : f32
    %192 = vector.broadcast %cst_78 : f32 to vector<8x256xf32>
    %193 = arith.addf %191, %192 : vector<8x256xf32>
    %194 = arith.mulf %183, %160 : vector<8x256xf32>
    %195 = arith.mulf %175, %185 : vector<8x256xf32>
    %196 = arith.addf %194, %195 : vector<8x256xf32>
    %197 = math.tanh %196 : vector<8x256xf32>
    %198 = arith.mulf %193, %197 : vector<8x256xf32>
    %c5_i32 = arith.constant 5 : i32
    %199 = arith.index_cast %c5_i32 : i32 to index
    %c0_79 = arith.constant 0 : index
    %c0_80 = arith.constant 0 : index
    %200 = vector.load %arg8[%199, %c0_79, %c0_80] : memref<8x8x1024xf32, #tpu.memory_space<vmem>>, vector<1x8x1024xf32>
    %201 = vector.shape_cast %200 : vector<1x8x1024xf32> to vector<8x1024xf32>
    %cst_81 = arith.constant dense<0.000000e+00> : vector<8x1024xf32>
    %202 = tpu.matmul %198, %16, %cst_81 {dimension_numbers = #tpu.dot_dimension_numbers<[1], [0], [0], [1], [0, 0, 1, 1], [], []>} : vector<8x256xf32>, vector<256x1024xf32>, vector<8x1024xf32> -> vector<8x1024xf32>
    %203 = arith.addf %201, %202 : vector<8x1024xf32>
    %204 = vector.extract_strided_slice %203 {offsets = [0, 0], sizes = [8, 256], strides = [1, 1]} : vector<8x1024xf32> to vector<8x256xf32>
    %cst_82 = arith.constant 5.000000e-01 : f32
    %205 = vector.broadcast %cst_82 : f32 to vector<8x256xf32>
    %206 = arith.mulf %205, %204 : vector<8x256xf32>
    %207 = math.tanh %206 : vector<8x256xf32>
    %cst_83 = arith.constant 5.000000e-01 : f32
    %208 = vector.broadcast %cst_83 : f32 to vector<8x256xf32>
    %209 = arith.mulf %208, %207 : vector<8x256xf32>
    %cst_84 = arith.constant 5.000000e-01 : f32
    %210 = vector.broadcast %cst_84 : f32 to vector<8x256xf32>
    %211 = arith.addf %209, %210 : vector<8x256xf32>
    %212 = vector.extract_strided_slice %203 {offsets = [0, 256], sizes = [8, 256], strides = [1, 1]} : vector<8x1024xf32> to vector<8x256xf32>
    %cst_85 = arith.constant 5.000000e-01 : f32
    %213 = vector.broadcast %cst_85 : f32 to vector<8x256xf32>
    %214 = arith.mulf %213, %212 : vector<8x256xf32>
    %215 = math.tanh %214 : vector<8x256xf32>
    %cst_86 = arith.constant 5.000000e-01 : f32
    %216 = vector.broadcast %cst_86 : f32 to vector<8x256xf32>
    %217 = arith.mulf %216, %215 : vector<8x256xf32>
    %cst_87 = arith.constant 5.000000e-01 : f32
    %218 = vector.broadcast %cst_87 : f32 to vector<8x256xf32>
    %219 = arith.addf %217, %218 : vector<8x256xf32>
    %220 = vector.extract_strided_slice %203 {offsets = [0, 512], sizes = [8, 256], strides = [1, 1]} : vector<8x1024xf32> to vector<8x256xf32>
    %221 = math.tanh %220 : vector<8x256xf32>
    %222 = vector.extract_strided_slice %203 {offsets = [0, 768], sizes = [8, 256], strides = [1, 1]} : vector<8x1024xf32> to vector<8x256xf32>
    %cst_88 = arith.constant 5.000000e-01 : f32
    %223 = vector.broadcast %cst_88 : f32 to vector<8x256xf32>
    %224 = arith.mulf %223, %222 : vector<8x256xf32>
    %225 = math.tanh %224 : vector<8x256xf32>
    %cst_89 = arith.constant 5.000000e-01 : f32
    %226 = vector.broadcast %cst_89 : f32 to vector<8x256xf32>
    %227 = arith.mulf %226, %225 : vector<8x256xf32>
    %cst_90 = arith.constant 5.000000e-01 : f32
    %228 = vector.broadcast %cst_90 : f32 to vector<8x256xf32>
    %229 = arith.addf %227, %228 : vector<8x256xf32>
    %230 = arith.mulf %219, %196 : vector<8x256xf32>
    %231 = arith.mulf %211, %221 : vector<8x256xf32>
    %232 = arith.addf %230, %231 : vector<8x256xf32>
    %233 = math.tanh %232 : vector<8x256xf32>
    %234 = arith.mulf %229, %233 : vector<8x256xf32>
    %c6_i32 = arith.constant 6 : i32
    %235 = arith.index_cast %c6_i32 : i32 to index
    %c0_91 = arith.constant 0 : index
    %c0_92 = arith.constant 0 : index
    %236 = vector.load %arg8[%235, %c0_91, %c0_92] : memref<8x8x1024xf32, #tpu.memory_space<vmem>>, vector<1x8x1024xf32>
    %237 = vector.shape_cast %236 : vector<1x8x1024xf32> to vector<8x1024xf32>
    %cst_93 = arith.constant dense<0.000000e+00> : vector<8x1024xf32>
    %238 = tpu.matmul %234, %16, %cst_93 {dimension_numbers = #tpu.dot_dimension_numbers<[1], [0], [0], [1], [0, 0, 1, 1], [], []>} : vector<8x256xf32>, vector<256x1024xf32>, vector<8x1024xf32> -> vector<8x1024xf32>
    %239 = arith.addf %237, %238 : vector<8x1024xf32>
    %240 = vector.extract_strided_slice %239 {offsets = [0, 0], sizes = [8, 256], strides = [1, 1]} : vector<8x1024xf32> to vector<8x256xf32>
    %cst_94 = arith.constant 5.000000e-01 : f32
    %241 = vector.broadcast %cst_94 : f32 to vector<8x256xf32>
    %242 = arith.mulf %241, %240 : vector<8x256xf32>
    %243 = math.tanh %242 : vector<8x256xf32>
    %cst_95 = arith.constant 5.000000e-01 : f32
    %244 = vector.broadcast %cst_95 : f32 to vector<8x256xf32>
    %245 = arith.mulf %244, %243 : vector<8x256xf32>
    %cst_96 = arith.constant 5.000000e-01 : f32
    %246 = vector.broadcast %cst_96 : f32 to vector<8x256xf32>
    %247 = arith.addf %245, %246 : vector<8x256xf32>
    %248 = vector.extract_strided_slice %239 {offsets = [0, 256], sizes = [8, 256], strides = [1, 1]} : vector<8x1024xf32> to vector<8x256xf32>
    %cst_97 = arith.constant 5.000000e-01 : f32
    %249 = vector.broadcast %cst_97 : f32 to vector<8x256xf32>
    %250 = arith.mulf %249, %248 : vector<8x256xf32>
    %251 = math.tanh %250 : vector<8x256xf32>
    %cst_98 = arith.constant 5.000000e-01 : f32
    %252 = vector.broadcast %cst_98 : f32 to vector<8x256xf32>
    %253 = arith.mulf %252, %251 : vector<8x256xf32>
    %cst_99 = arith.constant 5.000000e-01 : f32
    %254 = vector.broadcast %cst_99 : f32 to vector<8x256xf32>
    %255 = arith.addf %253, %254 : vector<8x256xf32>
    %256 = vector.extract_strided_slice %239 {offsets = [0, 512], sizes = [8, 256], strides = [1, 1]} : vector<8x1024xf32> to vector<8x256xf32>
    %257 = math.tanh %256 : vector<8x256xf32>
    %258 = vector.extract_strided_slice %239 {offsets = [0, 768], sizes = [8, 256], strides = [1, 1]} : vector<8x1024xf32> to vector<8x256xf32>
    %cst_100 = arith.constant 5.000000e-01 : f32
    %259 = vector.broadcast %cst_100 : f32 to vector<8x256xf32>
    %260 = arith.mulf %259, %258 : vector<8x256xf32>
    %261 = math.tanh %260 : vector<8x256xf32>
    %cst_101 = arith.constant 5.000000e-01 : f32
    %262 = vector.broadcast %cst_101 : f32 to vector<8x256xf32>
    %263 = arith.mulf %262, %261 : vector<8x256xf32>
    %cst_102 = arith.constant 5.000000e-01 : f32
    %264 = vector.broadcast %cst_102 : f32 to vector<8x256xf32>
    %265 = arith.addf %263, %264 : vector<8x256xf32>
    %266 = arith.mulf %255, %232 : vector<8x256xf32>
    %267 = arith.mulf %247, %257 : vector<8x256xf32>
    %268 = arith.addf %266, %267 : vector<8x256xf32>
    %269 = math.tanh %268 : vector<8x256xf32>
    %270 = arith.mulf %265, %269 : vector<8x256xf32>
    %c7_i32 = arith.constant 7 : i32
    %271 = arith.index_cast %c7_i32 : i32 to index
    %c0_103 = arith.constant 0 : index
    %c0_104 = arith.constant 0 : index
    %272 = vector.load %arg8[%271, %c0_103, %c0_104] : memref<8x8x1024xf32, #tpu.memory_space<vmem>>, vector<1x8x1024xf32>
    %273 = vector.shape_cast %272 : vector<1x8x1024xf32> to vector<8x1024xf32>
    %cst_105 = arith.constant dense<0.000000e+00> : vector<8x1024xf32>
    %274 = tpu.matmul %270, %16, %cst_105 {dimension_numbers = #tpu.dot_dimension_numbers<[1], [0], [0], [1], [0, 0, 1, 1], [], []>} : vector<8x256xf32>, vector<256x1024xf32>, vector<8x1024xf32> -> vector<8x1024xf32>
    %275 = arith.addf %273, %274 : vector<8x1024xf32>
    %276 = vector.extract_strided_slice %275 {offsets = [0, 0], sizes = [8, 256], strides = [1, 1]} : vector<8x1024xf32> to vector<8x256xf32>
    %cst_106 = arith.constant 5.000000e-01 : f32
    %277 = vector.broadcast %cst_106 : f32 to vector<8x256xf32>
    %278 = arith.mulf %277, %276 : vector<8x256xf32>
    %279 = math.tanh %278 : vector<8x256xf32>
    %cst_107 = arith.constant 5.000000e-01 : f32
    %280 = vector.broadcast %cst_107 : f32 to vector<8x256xf32>
    %281 = arith.mulf %280, %279 : vector<8x256xf32>
    %cst_108 = arith.constant 5.000000e-01 : f32
    %282 = vector.broadcast %cst_108 : f32 to vector<8x256xf32>
    %283 = arith.addf %281, %282 : vector<8x256xf32>
    %284 = vector.extract_strided_slice %275 {offsets = [0, 256], sizes = [8, 256], strides = [1, 1]} : vector<8x1024xf32> to vector<8x256xf32>
    %cst_109 = arith.constant 5.000000e-01 : f32
    %285 = vector.broadcast %cst_109 : f32 to vector<8x256xf32>
    %286 = arith.mulf %285, %284 : vector<8x256xf32>
    %287 = math.tanh %286 : vector<8x256xf32>
    %cst_110 = arith.constant 5.000000e-01 : f32
    %288 = vector.broadcast %cst_110 : f32 to vector<8x256xf32>
    %289 = arith.mulf %288, %287 : vector<8x256xf32>
    %cst_111 = arith.constant 5.000000e-01 : f32
    %290 = vector.broadcast %cst_111 : f32 to vector<8x256xf32>
    %291 = arith.addf %289, %290 : vector<8x256xf32>
    %292 = vector.extract_strided_slice %275 {offsets = [0, 512], sizes = [8, 256], strides = [1, 1]} : vector<8x1024xf32> to vector<8x256xf32>
    %293 = math.tanh %292 : vector<8x256xf32>
    %294 = vector.extract_strided_slice %275 {offsets = [0, 768], sizes = [8, 256], strides = [1, 1]} : vector<8x1024xf32> to vector<8x256xf32>
    %cst_112 = arith.constant 5.000000e-01 : f32
    %295 = vector.broadcast %cst_112 : f32 to vector<8x256xf32>
    %296 = arith.mulf %295, %294 : vector<8x256xf32>
    %297 = math.tanh %296 : vector<8x256xf32>
    %cst_113 = arith.constant 5.000000e-01 : f32
    %298 = vector.broadcast %cst_113 : f32 to vector<8x256xf32>
    %299 = arith.mulf %298, %297 : vector<8x256xf32>
    %cst_114 = arith.constant 5.000000e-01 : f32
    %300 = vector.broadcast %cst_114 : f32 to vector<8x256xf32>
    %301 = arith.addf %299, %300 : vector<8x256xf32>
    %302 = arith.mulf %291, %268 : vector<8x256xf32>
    %303 = arith.mulf %283, %293 : vector<8x256xf32>
    %304 = arith.addf %302, %303 : vector<8x256xf32>
    %305 = math.tanh %304 : vector<8x256xf32>
    %306 = arith.mulf %301, %305 : vector<8x256xf32>
    %c8_i32 = arith.constant 8 : i32
    %307 = vector.shape_cast %306 : vector<8x256xf32> to vector<1x8x256xf32>
    %c0_115 = arith.constant 0 : index
    %c0_116 = arith.constant 0 : index
    %c0_117 = arith.constant 0 : index
    %308 = vector.load %arg7[%c0_115, %c0_116, %c0_117] : memref<1x8x256xf32, #tpu.memory_space<vmem>>, vector<1x8x256xf32>
    tpu.vector_store %arg7[%c0_115, %c0_116, %c0_117], %307 {strides = array<i32>} : memref<1x8x256xf32, #tpu.memory_space<vmem>>, vector<1x8x256xf32>,
    return
  }
  func.func @transform_0(%arg0: i32) -> (i32, i32, i32) {
    %c0_i32 = arith.constant 0 : i32
    %c0_i32_0 = arith.constant 0 : i32
    %c0_i32_1 = arith.constant 0 : i32
    return %arg0, %c0_i32, %c0_i32_0 : i32, i32, i32
  }
  func.func @transform_1(%arg0: i32) -> (i32, i32) {
    %c0_i32 = arith.constant 0 : i32
    %c0_i32_0 = arith.constant 0 : i32
    %c0_i32_1 = arith.constant 0 : i32
    return %c0_i32, %c0_i32_0 : i32, i32
  }
  func.func @transform_2(%arg0: i32) -> (i32, i32) {
    %c0_i32 = arith.constant 0 : i32
    %c0_i32_0 = arith.constant 0 : i32
    %c0_i32_1 = arith.constant 0 : i32
    return %c0_i32, %c0_i32_0 : i32, i32
  }
  func.func @transform_3(%arg0: i32) -> (i32, i32) {
    %c0_i32 = arith.constant 0 : i32
    %c0_i32_0 = arith.constant 0 : i32
    %c0_i32_1 = arith.constant 0 : i32
    return %c0_i32, %c0_i32_0 : i32, i32
  }
  func.func @transform_4(%arg0: i32) -> (i32, i32) {
    %c0_i32 = arith.constant 0 : i32
    %c0_i32_0 = arith.constant 0 : i32
    %c0_i32_1 = arith.constant 0 : i32
    return %c0_i32, %c0_i32_0 : i32, i32
  }
  func.func @transform_5(%arg0: i32) -> (i32, i32) {
    %c0_i32 = arith.constant 0 : i32
    %c0_i32_0 = arith.constant 0 : i32
    %c0_i32_1 = arith.constant 0 : i32
    return %c0_i32, %c0_i32_0 : i32, i32
  }
  func.func @transform_6(%arg0: i32) -> (i32, i32, i32) {
    %c0_i32 = arith.constant 0 : i32
    %c0_i32_0 = arith.constant 0 : i32
    %c0_i32_1 = arith.constant 0 : i32
    return %arg0, %c0_i32, %c0_i32_0 : i32, i32, i32
  }
}

</mosaic_0001>

<llo_original>
// kernel: tpu_custom_call.1
$region0: #{tpu_custom_call.1}
  #allocation0 [shape = 'u32[]', space=smem, size = 0x4, offset = 0x4, fixed_abs, tag = 'smem constant byte address 0x4 - core index']
  #allocation1 [shape = 'u32[72,128]{1,0:T(1,128)}', space=vmem, size = 0x9000, scoped, tag = 'internal scratch']
  #allocation2 [shape = 'f32[8,8,1024]{2,1,0:T(8,128)}', space=vmem, size = 0x40000, scoped, tag = 'scratch operand']
  %s0 = inlined_call_operand.vmem [shape: f32[1,64,6], index: 0, kind: input, shape index: {}]
  %s1 = inlined_call_operand.vmem [shape: f32[6,16], index: 1, kind: input, shape index: {}]
  %s2 = inlined_call_operand.vmem [shape: f32[1,16], index: 2, kind: input, shape index: {}]
  %s3 = inlined_call_operand.hbm [shape: f32[16,1024], index: 3, kind: input, shape index: {}]
  %s4 = inlined_call_operand.hbm [shape: f32[256,1024], index: 4, kind: input, shape index: {}]
  %s5 = inlined_call_operand.vmem [shape: f32[1,1024], index: 5, kind: input, shape index: {}]
  %s6 = inlined_call_operand.hbm [shape: f32[1,8,256], index: 6, kind: output, shape index: {}]
  %s7 = sld [smem:[#allocation0]]
  $region42: #{tpu_custom_call.1} parent=0
    _
  %s9 = ssub.s32 1, %s7
  %s10 = scalar_select 0, %s9, %s7
  $region1: #{tpu_custom_call.1} parent=0
    #allocation3 [shape = 'u8[65536]{0}', space=vmem, size = 0x10000, scoped, tag = 'input window, operand 3, single buffered']
    #allocation4 [shape = 's32[1]{0}', space=sflag, size = 0x4, scoped, tag = 'scoped memory for tpu_custom_call.1']
    #allocation5 [shape = 's32[1]{0}', space=sflag, size = 0x4, scoped, tag = 'scoped memory for tpu_custom_call.1']
    #allocation6 [shape = 'u8[1048576]{0}', space=vmem, size = 0x100000, scoped, tag = 'input window, operand 4, single buffered']
    #allocation7 [shape = 's32[1]{0}', space=sflag, size = 0x4, scoped, tag = 'scoped memory for tpu_custom_call.1']
    #allocation8 [shape = 'u8[8192]{0}', space=vmem, size = 0x2000, scoped, tag = 'output window, operand 0, single buffered']
    %11 = vsyncpa [#allocation4], 0
    %12 = vsyncpa [#allocation7], 0
    %13 = vsyncpa [#allocation5], 0
    // Predicated region
    $region2: #{tpu_custom_call.1} parent=1 // pred_check
      _
    $region3: #{tpu_custom_call.1} parent=1 // pred_check_branch
      %15 = sbr.rel (0) target = $region5
    $region4: #{tpu_custom_call.1} parent=1 // pred_region
      _
    $region5: #{tpu_custom_call.1} parent=1 // pred_fallthru
      _
    // Predicated region
    $region6: #{tpu_custom_call.1} parent=1 // pred_check
      _
    $region7: #{tpu_custom_call.1} parent=1 // pred_check_branch
      %17 = sbr.rel (0) target = $region9
    $region8: #{tpu_custom_call.1} parent=1 // pred_region
      _
    $region9: #{tpu_custom_call.1} parent=1 // pred_fallthru
      _
    // Predicated region
    $region10: #{tpu_custom_call.1} parent=1 // pred_check
      _
    $region11: #{tpu_custom_call.1} parent=1 // pred_check_branch
      %19 = sbr.rel (0) target = $region13
    $region12: #{tpu_custom_call.1} parent=1 // pred_region
      _
    $region13: #{tpu_custom_call.1} parent=1 // pred_fallthru
      _
    // Predicated region
    $region14: #{tpu_custom_call.1} parent=1 // pred_check
      _
    $region15: #{tpu_custom_call.1} parent=1 // pred_check_branch
      %21 = sbr.rel (0) target = $region17
    $region16: #{tpu_custom_call.1} parent=1 // pred_region
      %23 = vsyncadd [#allocation4], 0
      %s24 = sshll.u32 %s3, 4
      %s25 = int_to_ptr.hbm [resolvable:$true] %s24
      %s26 = sshll.u32 [#allocation3], 4
      %s27 = int_to_ptr.vmem [resolvable:$true] %s26
      %32 = dma.hbm_to_vmem [thread:$0]  %s25, 2048, %s27, [#allocation4], 1024, 1024, 64
    $region17: #{tpu_custom_call.1} parent=1 // pred_fallthru
      _
    // Predicated region
    $region18: #{tpu_custom_call.1} parent=1 // pred_check
      _
    $region19: #{tpu_custom_call.1} parent=1 // pred_check_branch
      %34 = sbr.rel (0) target = $region21
    $region20: #{tpu_custom_call.1} parent=1 // pred_region
      %36 = vsyncadd [#allocation7], 0
      %s37 = sshll.u32 %s4, 4
      %s38 = int_to_ptr.hbm [resolvable:$true] %s37
      %s39 = sshll.u32 [#allocation6], 4
      %s40 = int_to_ptr.vmem [resolvable:$true] %s39
      %45 = dma.hbm_to_vmem [thread:$0]  %s38, 32768, %s40, [#allocation7], 1024, 1024, 64
    $region21: #{tpu_custom_call.1} parent=1 // pred_fallthru
      _
    // Predicated region
    $region22: #{tpu_custom_call.1} parent=1 // pred_check
      _
    $region23: #{tpu_custom_call.1} parent=1 // pred_check_branch
      %47 = sbr.rel (0) target = $region25
    $region24: #{tpu_custom_call.1} parent=1 // pred_region
      _
    $region25: #{tpu_custom_call.1} parent=1 // pred_fallthru
      _
    // Predicated region
    $region26: #{tpu_custom_call.1} parent=1 // pred_check
      _
    $region27: #{tpu_custom_call.1} parent=1 // pred_check_branch
      %49 = sbr.rel (0) target = $region29
    $region28: #{tpu_custom_call.1} parent=1 // pred_region
      %51 = dma.done [#allocation4], 2048
    $region29: #{tpu_custom_call.1} parent=1 // pred_fallthru
      _
    // Predicated region
    $region30: #{tpu_custom_call.1} parent=1 // pred_check
      _
    $region31: #{tpu_custom_call.1} parent=1 // pred_check_branch
      %53 = sbr.rel (0) target = $region33
    $region32: #{tpu_custom_call.1} parent=1 // pred_region
      %55 = dma.done [#allocation7], 32768
    $region33: #{tpu_custom_call.1} parent=1 // pred_fallthru
      _
    %v56 = vld [vmem:[%s0] sm:$0xff]
    %v57 = vld [vmem:[%s0 + $0x8] sm:$0xff]
    %v58 = vld [vmem:[%s0 + $0x10] sm:$0xff]
    %v59 = vld [vmem:[%s0 + $0x18] sm:$0xff]
    %v60 = vld [vmem:[%s0 + $0x20] sm:$0xff]
    %v61 = vld [vmem:[%s0 + $0x28] sm:$0xff]
    %v62 = vld [vmem:[%s0 + $0x30] sm:$0xff]
    %v63 = vld [vmem:[%s0 + $0x38] sm:$0xff]
    %v64 = vld [vmem:[%s1] sm:$0x3f]
    %v65 = vld [vmem:[%s2] sm:$0x1]
    %v67 = vperm.slane %v65, 0
    %vm69 = vcmask 48128
    %v71 = vsel %vm69, %v56, 0
    %v74 = vsel %vm69, %v57, 0
    %v77 = vsel %vm69, %v58, 0
    %v80 = vsel %vm69, %v59, 0
    %v83 = vsel %vm69, %v60, 0
    %v86 = vsel %vm69, %v61, 0
    %v89 = vsel %vm69, %v62, 0
    %v92 = vsel %vm69, %v63, 0
    %vm94 = vcmask 1045504
    %v96 = vsel %vm94, %v64, 0
    %98 = vmatpush.msra.mxu0 0.0
    %99 = vmatpush.msra.mxu0 0.0
    %100 = vmatpush.msra.mxu0 0.0
    %101 = vmatpush.msra.mxu0 0.0
    %102 = vmatpush.msra.mxu0 0.0
    %103 = vmatpush.msra.mxu0 0.0
    %104 = vmatpush.msra.mxu0 0.0
    %105 = vmatpush.msra.mxu0 0.0
    %106 = vmatpush.msra.mxu0 0.0
    %107 = vmatpush.msra.mxu0 0.0
    %108 = vmatpush.msra.mxu0 0.0
    %109 = vmatpush.msra.mxu0 0.0
    %110 = vmatpush.msra.mxu0 0.0
    %111 = vmatpush.msra.mxu0 0.0
    %112 = vmatpush.msra.mxu0 0.0
    %113 = vmatpush.msra.mxu0 %v96
    %114 = vmatmul.f32.gmra.mxu0 %v71
    %v115 = vpop.f32.mrf.mxu0
    %v116 = vadd.f32 %v67, %v115
    %117 = vmatmul.f32.gmra.mxu0 %v74
    %v118 = vpop.f32.mrf.mxu0
    %v119 = vadd.f32 %v67, %v118
    %120 = vmatmul.f32.gmra.mxu0 %v77
    %v121 = vpop.f32.mrf.mxu0
    %v122 = vadd.f32 %v67, %v121
    %123 = vmatmul.f32.gmra.mxu0 %v80
    %v124 = vpop.f32.mrf.mxu0
    %v125 = vadd.f32 %v67, %v124
    %126 = vmatmul.f32.gmra.mxu0 %v83
    %v127 = vpop.f32.mrf.mxu0
    %v128 = vadd.f32 %v67, %v127
    %129 = vmatmul.f32.gmra.mxu0 %v86
    %v130 = vpop.f32.mrf.mxu0
    %v131 = vadd.f32 %v67, %v130
    %132 = vmatmul.f32.gmra.mxu0 %v89
    %v133 = vpop.f32.mrf.mxu0
    %v134 = vadd.f32 %v67, %v133
    %135 = vmatmul.f32.gmra.mxu0 %v92
    %v136 = vpop.f32.mrf.mxu0
    %v137 = vadd.f32 %v67, %v136
    %138 = vdwg.mxu0
    %v139 = vmax.f32 %v116, 0.0
    %v140 = vmax.f32 %v119, 0.0
    %v141 = vmax.f32 %v122, 0.0
    %v142 = vmax.f32 %v125, 0.0
    %v143 = vmax.f32 %v128, 0.0
    %v144 = vmax.f32 %v131, 0.0
    %v145 = vmax.f32 %v134, 0.0
    %v146 = vmax.f32 %v137, 0.0
    %v147 = vld [vmem:[#allocation3] sm:$0xff]
    %v148 = vld [vmem:[#allocation3 + $0x8] sm:$0xff]
    %v149 = vld [vmem:[#allocation3 + $0x10] sm:$0xff]
    %v150 = vld [vmem:[#allocation3 + $0x18] sm:$0xff]
    %v151 = vld [vmem:[#allocation3 + $0x20] sm:$0xff]
    %v152 = vld [vmem:[#allocation3 + $0x28] sm:$0xff]
    %v153 = vld [vmem:[#allocation3 + $0x30] sm:$0xff]
    %v154 = vld [vmem:[#allocation3 + $0x38] sm:$0xff]
    %v155 = vld [vmem:[#allocation3 + $0x40] sm:$0xff]
    %v156 = vld [vmem:[#allocation3 + $0x48] sm:$0xff]
    %v157 = vld [vmem:[#allocation3 + $0x50] sm:$0xff]
    %v158 = vld [vmem:[#allocation3 + $0x58] sm:$0xff]
    %v159 = vld [vmem:[#allocation3 + $0x60] sm:$0xff]
    %v160 = vld [vmem:[#allocation3 + $0x68] sm:$0xff]
    %v161 = vld [vmem:[#allocation3 + $0x70] sm:$0xff]
    %v162 = vld [vmem:[#allocation3 + $0x78] sm:$0xff]
    %v163 = vld [vmem:[%s5] sm:$0xff]
    %v165 = vperm.slane %v163, 0
    %v166 = vperm.slane %v163, 1
    %v167 = vperm.slane %v163, 2
    %v168 = vperm.slane %v163, 3
    %v169 = vperm.slane %v163, 4
    %v170 = vperm.slane %v163, 5
    %v171 = vperm.slane %v163, 6
    %v172 = vperm.slane %v163, 7
    %vm181 = vcmask 130048
    %v183 = vsel %vm181, %v139, 0
    %v186 = vsel %vm181, %v140, 0
    %v189 = vsel %vm181, %v141, 0
    %v192 = vsel %vm181, %v142, 0
    %v195 = vsel %vm181, %v143, 0
    %v198 = vsel %vm181, %v144, 0
    %v201 = vsel %vm181, %v145, 0
    %v204 = vsel %vm181, %v146, 0
    %206 = vmatpush.msra.mxu0 0.0
    %207 = vmatpush.msra.mxu0 0.0
    %208 = vmatpush.msra.mxu0 0.0
    %209 = vmatpush.msra.mxu0 0.0
    %210 = vmatpush.msra.mxu0 0.0
    %211 = vmatpush.msra.mxu0 0.0
    %212 = vmatpush.msra.mxu0 0.0
    %213 = vmatpush.msra.mxu0 0.0
    %214 = vmatpush.msra.mxu0 0.0
    %215 = vmatpush.msra.mxu0 0.0
    %216 = vmatpush.msra.mxu0 0.0
    %217 = vmatpush.msra.mxu0 0.0
    %218 = vmatpush.msra.mxu0 0.0
    %219 = vmatpush.msra.mxu0 0.0
    %220 = vmatpush.msra.mxu0 %v155
    %221 = vmatpush.msra.mxu0 %v147
    %222 = vmatmul.f32.gmra.mxu0 %v183
    %v223 = vpop.f32.mrf.mxu0
    %v224 = vadd.f32 %v165, %v223
    %225 = vmatmul.f32.gmra.mxu0 %v186
    %v226 = vpop.f32.mrf.mxu0
    %v227 = vadd.f32 %v165, %v226
    %228 = vmatmul.f32.gmra.mxu0 %v189
    %v229 = vpop.f32.mrf.mxu0
    %v230 = vadd.f32 %v165, %v229
    %231 = vmatmul.f32.gmra.mxu0 %v192
    %v232 = vpop.f32.mrf.mxu0
    %v233 = vadd.f32 %v165, %v232
    %234 = vmatmul.f32.gmra.mxu0 %v195
    %v235 = vpop.f32.mrf.mxu0
    %v236 = vadd.f32 %v165, %v235
    %237 = vmatmul.f32.gmra.mxu0 %v198
    %v238 = vpop.f32.mrf.mxu0
    %v239 = vadd.f32 %v165, %v238
    %240 = vmatmul.f32.gmra.mxu0 %v201
    %v241 = vpop.f32.mrf.mxu0
    %v242 = vadd.f32 %v165, %v241
    %243 = vmatmul.f32.gmra.mxu0 %v204
    %v244 = vpop.f32.mrf.mxu0
    %v245 = vadd.f32 %v165, %v244
    %246 = vdwg.mxu0
    %247 = vmatpush.msra.mxu0 0.0
    %248 = vmatpush.msra.mxu0 0.0
    %249 = vmatpush.msra.mxu0 0.0
    %250 = vmatpush.msra.mxu0 0.0
    %251 = vmatpush.msra.mxu0 0.0
    %252 = vmatpush.msra.mxu0 0.0
    %253 = vmatpush.msra.mxu0 0.0
    %254 = vmatpush.msra.mxu0 0.0
    %255 = vmatpush.msra.mxu0 0.0
    %256 = vmatpush.msra.mxu0 0.0
    %257 = vmatpush.msra.mxu0 0.0
    %258 = vmatpush.msra.mxu0 0.0
    %259 = vmatpush.msra.mxu0 0.0
    %260 = vmatpush.msra.mxu0 0.0
    %261 = vmatpush.msra.mxu0 %v156
    %262 = vmatpush.msra.mxu0 %v148
    %263 = vmatmul.f32.gmra.mxu0 %v183
    %v264 = vpop.f32.mrf.mxu0
    %v265 = vadd.f32 %v166, %v264
    %266 = vmatmul.f32.gmra.mxu0 %v186
    %v267 = vpop.f32.mrf.mxu0
    %v268 = vadd.f32 %v166, %v267
    %269 = vmatmul.f32.gmra.mxu0 %v189
    %v270 = vpop.f32.mrf.mxu0
    %v271 = vadd.f32 %v166, %v270
    %272 = vmatmul.f32.gmra.mxu0 %v192
    %v273 = vpop.f32.mrf.mxu0
    %v274 = vadd.f32 %v166, %v273
    %275 = vmatmul.f32.gmra.mxu0 %v195
    %v276 = vpop.f32.mrf.mxu0
    %v277 = vadd.f32 %v166, %v276
    %278 = vmatmul.f32.gmra.mxu0 %v198
    %v279 = vpop.f32.mrf.mxu0
    %v280 = vadd.f32 %v166, %v279
    %281 = vmatmul.f32.gmra.mxu0 %v201
    %v282 = vpop.f32.mrf.mxu0
    %v283 = vadd.f32 %v166, %v282
    %284 = vmatmul.f32.gmra.mxu0 %v204
    %v285 = vpop.f32.mrf.mxu0
    %v286 = vadd.f32 %v166, %v285
    %287 = vdwg.mxu0
    %288 = vmatpush.msra.mxu0 0.0
    %289 = vmatpush.msra.mxu0 0.0
    %290 = vmatpush.msra.mxu0 0.0
    %291 = vmatpush.msra.mxu0 0.0
    %292 = vmatpush.msra.mxu0 0.0
    %293 = vmatpush.msra.mxu0 0.0
    %294 = vmatpush.msra.mxu0 0.0
    %295 = vmatpush.msra.mxu0 0.0
    %296 = vmatpush.msra.mxu0 0.0
    %297 = vmatpush.msra.mxu0 0.0
    %298 = vmatpush.msra.mxu0 0.0
    %299 = vmatpush.msra.mxu0 0.0
    %300 = vmatpush.msra.mxu0 0.0
    %301 = vmatpush.msra.mxu0 0.0
    %302 = vmatpush.msra.mxu0 %v157
    %303 = vmatpush.msra.mxu0 %v149
    %304 = vmatmul.f32.gmra.mxu0 %v183
    %v305 = vpop.f32.mrf.mxu0
    %v306 = vadd.f32 %v167, %v305
    %307 = vmatmul.f32.gmra.mxu0 %v186
    %v308 = vpop.f32.mrf.mxu0
    %v309 = vadd.f32 %v167, %v308
    %310 = vmatmul.f32.gmra.mxu0 %v189
    %v311 = vpop.f32.mrf.mxu0
    %v312 = vadd.f32 %v167, %v311
    %313 = vmatmul.f32.gmra.mxu0 %v192
    %v314 = vpop.f32.mrf.mxu0
    %v315 = vadd.f32 %v167, %v314
    %316 = vmatmul.f32.gmra.mxu0 %v195
    %v317 = vpop.f32.mrf.mxu0
    %v318 = vadd.f32 %v167, %v317
    %319 = vmatmul.f32.gmra.mxu0 %v198
    %v320 = vpop.f32.mrf.mxu0
    %v321 = vadd.f32 %v167, %v320
    %322 = vmatmul.f32.gmra.mxu0 %v201
    %v323 = vpop.f32.mrf.mxu0
    %v324 = vadd.f32 %v167, %v323
    %325 = vmatmul.f32.gmra.mxu0 %v204
    %v326 = vpop.f32.mrf.mxu0
    %v327 = vadd.f32 %v167, %v326
    %328 = vdwg.mxu0
    %329 = vmatpush.msra.mxu0 0.0
    %330 = vmatpush.msra.mxu0 0.0
    %331 = vmatpush.msra.mxu0 0.0
    %332 = vmatpush.msra.mxu0 0.0
    %333 = vmatpush.msra.mxu0 0.0
    %334 = vmatpush.msra.mxu0 0.0
    %335 = vmatpush.msra.mxu0 0.0
    %336 = vmatpush.msra.mxu0 0.0
    %337 = vmatpush.msra.mxu0 0.0
    %338 = vmatpush.msra.mxu0 0.0
    %339 = vmatpush.msra.mxu0 0.0
    %340 = vmatpush.msra.mxu0 0.0
    %341 = vmatpush.msra.mxu0 0.0
    %342 = vmatpush.msra.mxu0 0.0
    %343 = vmatpush.msra.mxu0 %v158
    %344 = vmatpush.msra.mxu0 %v150
    %345 = vmatmul.f32.gmra.mxu0 %v183
    %v346 = vpop.f32.mrf.mxu0
    %v347 = vadd.f32 %v168, %v346
    %348 = vmatmul.f32.gmra.mxu0 %v186
    %v349 = vpop.f32.mrf.mxu0
    %v350 = vadd.f32 %v168, %v349
    %351 = vmatmul.f32.gmra.mxu0 %v189
    %v352 = vpop.f32.mrf.mxu0
    %v353 = vadd.f32 %v168, %v352
    %354 = vmatmul.f32.gmra.mxu0 %v192
    %v355 = vpop.f32.mrf.mxu0
    %v356 = vadd.f32 %v168, %v355
    %357 = vmatmul.f32.gmra.mxu0 %v195
    %v358 = vpop.f32.mrf.mxu0
    %v359 = vadd.f32 %v168, %v358
    %360 = vmatmul.f32.gmra.mxu0 %v198
    %v361 = vpop.f32.mrf.mxu0
    %v362 = vadd.f32 %v168, %v361
    %363 = vmatmul.f32.gmra.mxu0 %v201
    %v364 = vpop.f32.mrf.mxu0
    %v365 = vadd.f32 %v168, %v364
    %366 = vmatmul.f32.gmra.mxu0 %v204
    %v367 = vpop.f32.mrf.mxu0
    %v368 = vadd.f32 %v168, %v367
    %369 = vdwg.mxu0
    %370 = vmatpush.msra.mxu0 0.0
    %371 = vmatpush.msra.mxu0 0.0
    %372 = vmatpush.msra.mxu0 0.0
    %373 = vmatpush.msra.mxu0 0.0
    %374 = vmatpush.msra.mxu0 0.0
    %375 = vmatpush.msra.mxu0 0.0
    %376 = vmatpush.msra.mxu0 0.0
    %377 = vmatpush.msra.mxu0 0.0
    %378 = vmatpush.msra.mxu0 0.0
    %379 = vmatpush.msra.mxu0 0.0
    %380 = vmatpush.msra.mxu0 0.0
    %381 = vmatpush.msra.mxu0 0.0
    %382 = vmatpush.msra.mxu0 0.0
    %383 = vmatpush.msra.mxu0 0.0
    %384 = vmatpush.msra.mxu0 %v159
    %385 = vmatpush.msra.mxu0 %v151
    %386 = vmatmul.f32.gmra.mxu0 %v183
    %v387 = vpop.f32.mrf.mxu0
    %v388 = vadd.f32 %v169, %v387
    %389 = vmatmul.f32.gmra.mxu0 %v186
    %v390 = vpop.f32.mrf.mxu0
    %v391 = vadd.f32 %v169, %v390
    %392 = vmatmul.f32.gmra.mxu0 %v189
    %v393 = vpop.f32.mrf.mxu0
    %v394 = vadd.f32 %v169, %v393
    %395 = vmatmul.f32.gmra.mxu0 %v192
    %v396 = vpop.f32.mrf.mxu0
    %v397 = vadd.f32 %v169, %v396
    %398 = vmatmul.f32.gmra.mxu0 %v195
    %v399 = vpop.f32.mrf.mxu0
    %v400 = vadd.f32 %v169, %v399
    %401 = vmatmul.f32.gmra.mxu0 %v198
    %v402 = vpop.f32.mrf.mxu0
    %v403 = vadd.f32 %v169, %v402
    %404 = vmatmul.f32.gmra.mxu0 %v201
    %v405 = vpop.f32.mrf.mxu0
    %v406 = vadd.f32 %v169, %v405
    %407 = vmatmul.f32.gmra.mxu0 %v204
    %v408 = vpop.f32.mrf.mxu0
    %v409 = vadd.f32 %v169, %v408
    %410 = vdwg.mxu0
    %411 = vmatpush.msra.mxu0 0.0
    %412 = vmatpush.msra.mxu0 0.0
    %413 = vmatpush.msra.mxu0 0.0
    %414 = vmatpush.msra.mxu0 0.0
    %415 = vmatpush.msra.mxu0 0.0
    %416 = vmatpush.msra.mxu0 0.0
    %417 = vmatpush.msra.mxu0 0.0
    %418 = vmatpush.msra.mxu0 0.0
    %419 = vmatpush.msra.mxu0 0.0
    %420 = vmatpush.msra.mxu0 0.0
    %421 = vmatpush.msra.mxu0 0.0
    %422 = vmatpush.msra.mxu0 0.0
    %423 = vmatpush.msra.mxu0 0.0
    %424 = vmatpush.msra.mxu0 0.0
    %425 = vmatpush.msra.mxu0 %v160
    %426 = vmatpush.msra.mxu0 %v152
    %427 = vmatmul.f32.gmra.mxu0 %v183
    %v428 = vpop.f32.mrf.mxu0
    %v429 = vadd.f32 %v170, %v428
    %430 = vmatmul.f32.gmra.mxu0 %v186
    %v431 = vpop.f32.mrf.mxu0
    %v432 = vadd.f32 %v170, %v431
    %433 = vmatmul.f32.gmra.mxu0 %v189
    %v434 = vpop.f32.mrf.mxu0
    %v435 = vadd.f32 %v170, %v434
    %436 = vmatmul.f32.gmra.mxu0 %v192
    %v437 = vpop.f32.mrf.mxu0
    %v438 = vadd.f32 %v170, %v437
    %439 = vmatmul.f32.gmra.mxu0 %v195
    %v440 = vpop.f32.mrf.mxu0
    %v441 = vadd.f32 %v170, %v440
    %442 = vmatmul.f32.gmra.mxu0 %v198
    %v443 = vpop.f32.mrf.mxu0
    %v444 = vadd.f32 %v170, %v443
    %445 = vmatmul.f32.gmra.mxu0 %v201
    %v446 = vpop.f32.mrf.mxu0
    %v447 = vadd.f32 %v170, %v446
    %448 = vmatmul.f32.gmra.mxu0 %v204
    %v449 = vpop.f32.mrf.mxu0
    %v450 = vadd.f32 %v170, %v449
    %451 = vdwg.mxu0
    %452 = vmatpush.msra.mxu0 0.0
    %453 = vmatpush.msra.mxu0 0.0
    %454 = vmatpush.msra.mxu0 0.0
    %455 = vmatpush.msra.mxu0 0.0
    %456 = vmatpush.msra.mxu0 0.0
    %457 = vmatpush.msra.mxu0 0.0
    %458 = vmatpush.msra.mxu0 0.0
    %459 = vmatpush.msra.mxu0 0.0
    %460 = vmatpush.msra.mxu0 0.0
    %461 = vmatpush.msra.mxu0 0.0
    %462 = vmatpush.msra.mxu0 0.0
    %463 = vmatpush.msra.mxu0 0.0
    %464 = vmatpush.msra.mxu0 0.0
    %465 = vmatpush.msra.mxu0 0.0
    %466 = vmatpush.msra.mxu0 %v161
    %467 = vmatpush.msra.mxu0 %v153
    %468 = vmatmul.f32.gmra.mxu0 %v183
    %v469 = vpop.f32.mrf.mxu0
    %v470 = vadd.f32 %v171, %v469
    %471 = vmatmul.f32.gmra.mxu0 %v186
    %v472 = vpop.f32.mrf.mxu0
    %v473 = vadd.f32 %v171, %v472
    %474 = vmatmul.f32.gmra.mxu0 %v189
    %v475 = vpop.f32.mrf.mxu0
    %v476 = vadd.f32 %v171, %v475
    %477 = vmatmul.f32.gmra.mxu0 %v192
    %v478 = vpop.f32.mrf.mxu0
    %v479 = vadd.f32 %v171, %v478
    %480 = vmatmul.f32.gmra.mxu0 %v195
    %v481 = vpop.f32.mrf.mxu0
    %v482 = vadd.f32 %v171, %v481
    %483 = vmatmul.f32.gmra.mxu0 %v198
    %v484 = vpop.f32.mrf.mxu0
    %v485 = vadd.f32 %v171, %v484
    %486 = vmatmul.f32.gmra.mxu0 %v201
    %v487 = vpop.f32.mrf.mxu0
    %v488 = vadd.f32 %v171, %v487
    %489 = vmatmul.f32.gmra.mxu0 %v204
    %v490 = vpop.f32.mrf.mxu0
    %v491 = vadd.f32 %v171, %v490
    %492 = vdwg.mxu0
    %493 = vmatpush.msra.mxu0 0.0
    %494 = vmatpush.msra.mxu0 0.0
    %495 = vmatpush.msra.mxu0 0.0
    %496 = vmatpush.msra.mxu0 0.0
    %497 = vmatpush.msra.mxu0 0.0
    %498 = vmatpush.msra.mxu0 0.0
    %499 = vmatpush.msra.mxu0 0.0
    %500 = vmatpush.msra.mxu0 0.0
    %501 = vmatpush.msra.mxu0 0.0
    %502 = vmatpush.msra.mxu0 0.0
    %503 = vmatpush.msra.mxu0 0.0
    %504 = vmatpush.msra.mxu0 0.0
    %505 = vmatpush.msra.mxu0 0.0
    %506 = vmatpush.msra.mxu0 0.0
    %507 = vmatpush.msra.mxu0 %v162
    %508 = vmatpush.msra.mxu0 %v154
    %509 = vmatmul.f32.gmra.mxu0 %v183
    %v510 = vpop.f32.mrf.mxu0
    %v511 = vadd.f32 %v172, %v510
    %512 = vmatmul.f32.gmra.mxu0 %v186
    %v513 = vpop.f32.mrf.mxu0
    %v514 = vadd.f32 %v172, %v513
    %515 = vmatmul.f32.gmra.mxu0 %v189
    %v516 = vpop.f32.mrf.mxu0
    %v517 = vadd.f32 %v172, %v516
    %518 = vmatmul.f32.gmra.mxu0 %v192
    %v519 = vpop.f32.mrf.mxu0
    %v520 = vadd.f32 %v172, %v519
    %521 = vmatmul.f32.gmra.mxu0 %v195
    %v522 = vpop.f32.mrf.mxu0
    %v523 = vadd.f32 %v172, %v522
    %524 = vmatmul.f32.gmra.mxu0 %v198
    %v525 = vpop.f32.mrf.mxu0
    %v526 = vadd.f32 %v172, %v525
    %527 = vmatmul.f32.gmra.mxu0 %v201
    %v528 = vpop.f32.mrf.mxu0
    %v529 = vadd.f32 %v172, %v528
    %530 = vmatmul.f32.gmra.mxu0 %v204
    %v531 = vpop.f32.mrf.mxu0
    %v532 = vadd.f32 %v172, %v531
    %533 = vdwg.mxu0
    %534 = vst [vmem:[#allocation2] sm:$0xff] %v224
    %535 = vst [vmem:[#allocation2 + $0x8] sm:$0xff] %v265
    %536 = vst [vmem:[#allocation2 + $0x10] sm:$0xff] %v306
    %537 = vst [vmem:[#allocation2 + $0x18] sm:$0xff] %v347
    %538 = vst [vmem:[#allocation2 + $0x20] sm:$0xff] %v388
    %539 = vst [vmem:[#allocation2 + $0x28] sm:$0xff] %v429
    %540 = vst [vmem:[#allocation2 + $0x30] sm:$0xff] %v470
    %541 = vst [vmem:[#allocation2 + $0x38] sm:$0xff] %v511
    %542 = vst [vmem:[#allocation2 + $0x40] sm:$0xff] %v227
    %543 = vst [vmem:[#allocation2 + $0x48] sm:$0xff] %v268
    %544 = vst [vmem:[#allocation2 + $0x50] sm:$0xff] %v309
    %545 = vst [vmem:[#allocation2 + $0x58] sm:$0xff] %v350
    %546 = vst [vmem:[#allocation2 + $0x60] sm:$0xff] %v391
    %547 = vst [vmem:[#allocation2 + $0x68] sm:$0xff] %v432
    %548 = vst [vmem:[#allocation2 + $0x70] sm:$0xff] %v473
    %549 = vst [vmem:[#allocation2 + $0x78] sm:$0xff] %v514
    %550 = vst [vmem:[#allocation2 + $0x80] sm:$0xff] %v230
    %551 = vst [vmem:[#allocation2 + $0x88] sm:$0xff] %v271
    %552 = vst [vmem:[#allocation2 + $0x90] sm:$0xff] %v312
    %553 = vst [vmem:[#allocation2 + $0x98] sm:$0xff] %v353
    %554 = vst [vmem:[#allocation2 + $0xa0] sm:$0xff] %v394
    %555 = vst [vmem:[#allocation2 + $0xa8] sm:$0xff] %v435
    %556 = vst [vmem:[#allocation2 + $0xb0] sm:$0xff] %v476
    %557 = vst [vmem:[#allocation2 + $0xb8] sm:$0xff] %v517
    %558 = vst [vmem:[#allocation2 + $0xc0] sm:$0xff] %v233
    %559 = vst [vmem:[#allocation2 + $0xc8] sm:$0xff] %v274
    %560 = vst [vmem:[#allocation2 + $0xd0] sm:$0xff] %v315
    %561 = vst [vmem:[#allocation2 + $0xd8] sm:$0xff] %v356
    %562 = vst [vmem:[#allocation2 + $0xe0] sm:$0xff] %v397
    %563 = vst [vmem:[#allocation2 + $0xe8] sm:$0xff] %v438
    %564 = vst [vmem:[#allocation2 + $0xf0] sm:$0xff] %v479
    %565 = vst [vmem:[#allocation2 + $0xf8] sm:$0xff] %v520
    %566 = vst [vmem:[#allocation2 + $0x100] sm:$0xff] %v236
    %567 = vst [vmem:[#allocation2 + $0x108] sm:$0xff] %v277
    %568 = vst [vmem:[#allocation2 + $0x110] sm:$0xff] %v318
    %569 = vst [vmem:[#allocation2 + $0x118] sm:$0xff] %v359
    %570 = vst [vmem:[#allocation2 + $0x120] sm:$0xff] %v400
    %571 = vst [vmem:[#allocation2 + $0x128] sm:$0xff] %v441
    %572 = vst [vmem:[#allocation2 + $0x130] sm:$0xff] %v482
    %573 = vst [vmem:[#allocation2 + $0x138] sm:$0xff] %v523
    %574 = vst [vmem:[#allocation2 + $0x140] sm:$0xff] %v239
    %575 = vst [vmem:[#allocation2 + $0x148] sm:$0xff] %v280
    %576 = vst [vmem:[#allocation2 + $0x150] sm:$0xff] %v321
    %577 = vst [vmem:[#allocation2 + $0x158] sm:$0xff] %v362
    %578 = vst [vmem:[#allocation2 + $0x160] sm:$0xff] %v403
    %579 = vst [vmem:[#allocation2 + $0x168] sm:$0xff] %v444
    %580 = vst [vmem:[#allocation2 + $0x170] sm:$0xff] %v485
    %581 = vst [vmem:[#allocation2 + $0x178] sm:$0xff] %v526
    %582 = vst [vmem:[#allocation2 + $0x180] sm:$0xff] %v242
    %583 = vst [vmem:[#allocation2 + $0x188] sm:$0xff] %v283
    %584 = vst [vmem:[#allocation2 + $0x190] sm:$0xff] %v324
    %585 = vst [vmem:[#allocation2 + $0x198] sm:$0xff] %v365
    %586 = vst [vmem:[#allocation2 + $0x1a0] sm:$0xff] %v406
    %587 = vst [vmem:[#allocation2 + $0x1a8] sm:$0xff] %v447
    %588 = vst [vmem:[#allocation2 + $0x1b0] sm:$0xff] %v488
    %589 = vst [vmem:[#allocation2 + $0x1b8] sm:$0xff] %v529
    %590 = vst [vmem:[#allocation2 + $0x1c0] sm:$0xff] %v245
    %591 = vst [vmem:[#allocation2 + $0x1c8] sm:$0xff] %v286
    %592 = vst [vmem:[#allocation2 + $0x1d0] sm:$0xff] %v327
    %593 = vst [vmem:[#allocation2 + $0x1d8] sm:$0xff] %v368
    %594 = vst [vmem:[#allocation2 + $0x1e0] sm:$0xff] %v409
    %595 = vst [vmem:[#allocation2 + $0x1e8] sm:$0xff] %v450
    %596 = vst [vmem:[#allocation2 + $0x1f0] sm:$0xff] %v491
    %597 = vst [vmem:[#allocation2 + $0x1f8] sm:$0xff] %v532
    %v598 = vld [vmem:[#allocation6] sm:$0xff]
    %v599 = vld [vmem:[#allocation6 + $0x8] sm:$0xff]
    %v600 = vld [vmem:[#allocation6 + $0x10] sm:$0xff]
    %v601 = vld [vmem:[#allocation6 + $0x18] sm:$0xff]
    %v602 = vld [vmem:[#allocation6 + $0x20] sm:$0xff]
    %v603 = vld [vmem:[#allocation6 + $0x28] sm:$0xff]
    %v604 = vld [vmem:[#allocation6 + $0x30] sm:$0xff]
    %v605 = vld [vmem:[#allocation6 + $0x38] sm:$0xff]
    %v606 = vld [vmem:[#allocation6 + $0x40] sm:$0xff]
    %v607 = vld [vmem:[#allocation6 + $0x48] sm:$0xff]
    %v608 = vld [vmem:[#allocation6 + $0x50] sm:$0xff]
    %v609 = vld [vmem:[#allocation6 + $0x58] sm:$0xff]
    %v610 = vld [vmem:[#allocation6 + $0x60] sm:$0xff]
    %v611 = vld [vmem:[#allocation6 + $0x68] sm:$0xff]
    %v612 = vld [vmem:[#allocation6 + $0x70] sm:$0xff]
    %v613 = vld [vmem:[#allocation6 + $0x78] sm:$0xff]
    %v614 = vld [vmem:[#allocation6 + $0x80] sm:$0xff]
    %v615 = vld [vmem:[#allocation6 + $0x88] sm:$0xff]
    %v616 = vld [vmem:[#allocation6 + $0x90] sm:$0xff]
    %v617 = vld [vmem:[#allocation6 + $0x98] sm:$0xff]
    %v618 = vld [vmem:[#allocation6 + $0xa0] sm:$0xff]
    %v619 = vld [vmem:[#allocation6 + $0xa8] sm:$0xff]
    %v620 = vld [vmem:[#allocation6 + $0xb0] sm:$0xff]
    %v621 = vld [vmem:[#allocation6 + $0xb8] sm:$0xff]
    %v622 = vld [vmem:[#allocation6 + $0xc0] sm:$0xff]
    %v623 = vld [vmem:[#allocation6 + $0xc8] sm:$0xff]
    %v624 = vld [vmem:[#allocation6 + $0xd0] sm:$0xff]
    %v625 = vld [vmem:[#allocation6 + $0xd8] sm:$0xff]
    %v626 = vld [vmem:[#allocation6 + $0xe0] sm:$0xff]
    %v627 = vld [vmem:[#allocation6 + $0xe8] sm:$0xff]
    %v628 = vld [vmem:[#allocation6 + $0xf0] sm:$0xff]
    %v629 = vld [vmem:[#allocation6 + $0xf8] sm:$0xff]
    %v630 = vld [vmem:[#allocation6 + $0x100] sm:$0xff]
    %v631 = vld [vmem:[#allocation6 + $0x108] sm:$0xff]
    %v632 = vld [vmem:[#allocation6 + $0x110] sm:$0xff]
    %v633 = vld [vmem:[#allocation6 + $0x118] sm:$0xff]
    %v634 = vld [vmem:[#allocation6 + $0x120] sm:$0xff]
    %v635 = vld [vmem:[#allocation6 + $0x128] sm:$0xff]
    %v636 = vld [vmem:[#allocation6 + $0x130] sm:$0xff]
    %v637 = vld [vmem:[#allocation6 + $0x138] sm:$0xff]
    %v638 = vld [vmem:[#allocation6 + $0x140] sm:$0xff]
    %v639 = vld [vmem:[#allocation6 + $0x148] sm:$0xff]
    %v640 = vld [vmem:[#allocation6 + $0x150] sm:$0xff]
    %v641 = vld [vmem:[#allocation6 + $0x158] sm:$0xff]
    %v642 = vld [vmem:[#allocation6 + $0x160] sm:$0xff]
    %v643 = vld [vmem:[#allocation6 + $0x168] sm:$0xff]
    %v644 = vld [vmem:[#allocation6 + $0x170] sm:$0xff]
    %v645 = vld [vmem:[#allocation6 + $0x178] sm:$0xff]
    %v646 = vld [vmem:[#allocation6 + $0x180] sm:$0xff]
    %v647 = vld [vmem:[#allocation6 + $0x188] sm:$0xff]
    %v648 = vld [vmem:[#allocation6 + $0x190] sm:$0xff]
    %v649 = vld [vmem:[#allocation6 + $0x198] sm:$0xff]
    %v650 = vld [vmem:[#allocation6 + $0x1a0] sm:$0xff]
    %v651 = vld [vmem:[#allocation6 + $0x1a8] sm:$0xff]
    %v652 = vld [vmem:[#allocation6 + $0x1b0] sm:$0xff]
    %v653 = vld [vmem:[#allocation6 + $0x1b8] sm:$0xff]
    %v654 = vld [vmem:[#allocation6 + $0x1c0] sm:$0xff]
    %v655 = vld [vmem:[#allocation6 + $0x1c8] sm:$0xff]
    %v656 = vld [vmem:[#allocation6 + $0x1d0] sm:$0xff]
    %v657 = vld [vmem:[#allocation6 + $0x1d8] sm:$0xff]
    %v658 = vld [vmem:[#allocation6 + $0x1e0] sm:$0xff]
    %v659 = vld [vmem:[#allocation6 + $0x1e8] sm:$0xff]
    %v660 = vld [vmem:[#allocation6 + $0x1f0] sm:$0xff]
    %v661 = vld [vmem:[#allocation6 + $0x1f8] sm:$0xff]
    %v662 = vld [vmem:[#allocation6 + $0x200] sm:$0xff]
    %v663 = vld [vmem:[#allocation6 + $0x208] sm:$0xff]
    %v664 = vld [vmem:[#allocation6 + $0x210] sm:$0xff]
    %v665 = vld [vmem:[#allocation6 + $0x218] sm:$0xff]
    %v666 = vld [vmem:[#allocation6 + $0x220] sm:$0xff]
    %v667 = vld [vmem:[#allocation6 + $0x228] sm:$0xff]
    %v668 = vld [vmem:[#allocation6 + $0x230] sm:$0xff]
    %v669 = vld [vmem:[#allocation6 + $0x238] sm:$0xff]
    %v670 = vld [vmem:[#allocation6 + $0x240] sm:$0xff]
    %v671 = vld [vmem:[#allocation6 + $0x248] sm:$0xff]
    %v672 = vld [vmem:[#allocation6 + $0x250] sm:$0xff]
    %v673 = vld [vmem:[#allocation6 + $0x258] sm:$0xff]
    %v674 = vld [vmem:[#allocation6 + $0x260] sm:$0xff]
    %v675 = vld [vmem:[#allocation6 + $0x268] sm:$0xff]
    %v676 = vld [vmem:[#allocation6 + $0x270] sm:$0xff]
    %v677 = vld [vmem:[#allocation6 + $0x278] sm:$0xff]
    %v678 = vld [vmem:[#allocation6 + $0x280] sm:$0xff]
    %v679 = vld [vmem:[#allocation6 + $0x288] sm:$0xff]
    %v680 = vld [vmem:[#allocation6 + $0x290] sm:$0xff]
    %v681 = vld [vmem:[#allocation6 + $0x298] sm:$0xff]
    %v682 = vld [vmem:[#allocation6 + $0x2a0] sm:$0xff]
    %v683 = vld [vmem:[#allocation6 + $0x2a8] sm:$0xff]
    %v684 = vld [vmem:[#allocation6 + $0x2b0] sm:$0xff]
    %v685 = vld [vmem:[#allocation6 + $0x2b8] sm:$0xff]
    %v686 = vld [vmem:[#allocation6 + $0x2c0] sm:$0xff]
    %v687 = vld [vmem:[#allocation6 + $0x2c8] sm:$0xff]
    %v688 = vld [vmem:[#allocation6 + $0x2d0] sm:$0xff]
    %v689 = vld [vmem:[#allocation6 + $0x2d8] sm:$0xff]
    %v690 = vld [vmem:[#allocation6 + $0x2e0] sm:$0xff]
    %v691 = vld [vmem:[#allocation6 + $0x2e8] sm:$0xff]
    %v692 = vld [vmem:[#allocation6 + $0x2f0] sm:$0xff]
    %v693 = vld [vmem:[#allocation6 + $0x2f8] sm:$0xff]
    %v694 = vld [vmem:[#allocation6 + $0x300] sm:$0xff]
    %v695 = vld [vmem:[#allocation6 + $0x308] sm:$0xff]
    %v696 = vld [vmem:[#allocation6 + $0x310] sm:$0xff]
    %v697 = vld [vmem:[#allocation6 + $0x318] sm:$0xff]
    %v698 = vld [vmem:[#allocation6 + $0x320] sm:$0xff]
    %v699 = vld [vmem:[#allocation6 + $0x328] sm:$0xff]
    %v700 = vld [vmem:[#allocation6 + $0x330] sm:$0xff]
    %v701 = vld [vmem:[#allocation6 + $0x338] sm:$0xff]
    %v702 = vld [vmem:[#allocation6 + $0x340] sm:$0xff]
    %v703 = vld [vmem:[#allocation6 + $0x348] sm:$0xff]
    %v704 = vld [vmem:[#allocation6 + $0x350] sm:$0xff]
    %v705 = vld [vmem:[#allocation6 + $0x358] sm:$0xff]
    %v706 = vld [vmem:[#allocation6 + $0x360] sm:$0xff]
    %v707 = vld [vmem:[#allocation6 + $0x368] sm:$0xff]
    %v708 = vld [vmem:[#allocation6 + $0x370] sm:$0xff]
    %v709 = vld [vmem:[#allocation6 + $0x378] sm:$0xff]
    %v710 = vld [vmem:[#allocation6 + $0x380] sm:$0xff]
    %v711 = vld [vmem:[#allocation6 + $0x388] sm:$0xff]
    %v712 = vld [vmem:[#allocation6 + $0x390] sm:$0xff]
    %v713 = vld [vmem:[#allocation6 + $0x398] sm:$0xff]
    %v714 = vld [vmem:[#allocation6 + $0x3a0] sm:$0xff]
    %v715 = vld [vmem:[#allocation6 + $0x3a8] sm:$0xff]
    %v716 = vld [vmem:[#allocation6 + $0x3b0] sm:$0xff]
    %v717 = vld [vmem:[#allocation6 + $0x3b8] sm:$0xff]
    %v718 = vld [vmem:[#allocation6 + $0x3c0] sm:$0xff]
    %v719 = vld [vmem:[#allocation6 + $0x3c8] sm:$0xff]
    %v720 = vld [vmem:[#allocation6 + $0x3d0] sm:$0xff]
    %v721 = vld [vmem:[#allocation6 + $0x3d8] sm:$0xff]
    %v722 = vld [vmem:[#allocation6 + $0x3e0] sm:$0xff]
    %v723 = vld [vmem:[#allocation6 + $0x3e8] sm:$0xff]
    %v724 = vld [vmem:[#allocation6 + $0x3f0] sm:$0xff]
    %v725 = vld [vmem:[#allocation6 + $0x3f8] sm:$0xff]
    %v726 = vld [vmem:[#allocation6 + $0x400] sm:$0xff]
    %v727 = vld [vmem:[#allocation6 + $0x408] sm:$0xff]
    %v728 = vld [vmem:[#allocation6 + $0x410] sm:$0xff]
    %v729 = vld [vmem:[#allocation6 + $0x418] sm:$0xff]
    %v730 = vld [vmem:[#allocation6 + $0x420] sm:$0xff]
    %v731 = vld [vmem:[#allocation6 + $0x428] sm:$0xff]
    %v732 = vld [vmem:[#allocation6 + $0x430] sm:$0xff]
    %v733 = vld [vmem:[#allocation6 + $0x438] sm:$0xff]
    %v734 = vld [vmem:[#allocation6 + $0x440] sm:$0xff]
    %v735 = vld [vmem:[#allocation6 + $0x448] sm:$0xff]
    %v736 = vld [vmem:[#allocation6 + $0x450] sm:$0xff]
    %v737 = vld [vmem:[#allocation6 + $0x458] sm:$0xff]
    %v738 = vld [vmem:[#allocation6 + $0x460] sm:$0xff]
    %v739 = vld [vmem:[#allocation6 + $0x468] sm:$0xff]
    %v740 = vld [vmem:[#allocation6 + $0x470] sm:$0xff]
    %v741 = vld [vmem:[#allocation6 + $0x478] sm:$0xff]
    %v742 = vld [vmem:[#allocation6 + $0x480] sm:$0xff]
    %v743 = vld [vmem:[#allocation6 + $0x488] sm:$0xff]
    %v744 = vld [vmem:[#allocation6 + $0x490] sm:$0xff]
    %v745 = vld [vmem:[#allocation6 + $0x498] sm:$0xff]
    %v746 = vld [vmem:[#allocation6 + $0x4a0] sm:$0xff]
    %v747 = vld [vmem:[#allocation6 + $0x4a8] sm:$0xff]
    %v748 = vld [vmem:[#allocation6 + $0x4b0] sm:$0xff]
    %v749 = vld [vmem:[#allocation6 + $0x4b8] sm:$0xff]
    %v750 = vld [vmem:[#allocation6 + $0x4c0] sm:$0xff]
    %v751 = vld [vmem:[#allocation6 + $0x4c8] sm:$0xff]
    %v752 = vld [vmem:[#allocation6 + $0x4d0] sm:$0xff]
    %v753 = vld [vmem:[#allocation6 + $0x4d8] sm:$0xff]
    %v754 = vld [vmem:[#allocation6 + $0x4e0] sm:$0xff]
    %v755 = vld [vmem:[#allocation6 + $0x4e8] sm:$0xff]
    %v756 = vld [vmem:[#allocation6 + $0x4f0] sm:$0xff]
    %v757 = vld [vmem:[#allocation6 + $0x4f8] sm:$0xff]
    %v758 = vld [vmem:[#allocation6 + $0x500] sm:$0xff]
    %v759 = vld [vmem:[#allocation6 + $0x508] sm:$0xff]
    %v760 = vld [vmem:[#allocation6 + $0x510] sm:$0xff]
    %v761 = vld [vmem:[#allocation6 + $0x518] sm:$0xff]
    %v762 = vld [vmem:[#allocation6 + $0x520] sm:$0xff]
    %v763 = vld [vmem:[#allocation6 + $0x528] sm:$0xff]
    %v764 = vld [vmem:[#allocation6 + $0x530] sm:$0xff]
    %v765 = vld [vmem:[#allocation6 + $0x538] sm:$0xff]
    %v766 = vld [vmem:[#allocation6 + $0x540] sm:$0xff]
    %v767 = vld [vmem:[#allocation6 + $0x548] sm:$0xff]
    %v768 = vld [vmem:[#allocation6 + $0x550] sm:$0xff]
    %v769 = vld [vmem:[#allocation6 + $0x558] sm:$0xff]
    %v770 = vld [vmem:[#allocation6 + $0x560] sm:$0xff]
    %v771 = vld [vmem:[#allocation6 + $0x568] sm:$0xff]
    %v772 = vld [vmem:[#allocation6 + $0x570] sm:$0xff]
    %v773 = vld [vmem:[#allocation6 + $0x578] sm:$0xff]
    %v774 = vld [vmem:[#allocation6 + $0x580] sm:$0xff]
    %v775 = vld [vmem:[#allocation6 + $0x588] sm:$0xff]
    %v776 = vld [vmem:[#allocation6 + $0x590] sm:$0xff]
    %v777 = vld [vmem:[#allocation6 + $0x598] sm:$0xff]
    %v778 = vld [vmem:[#allocation6 + $0x5a0] sm:$0xff]
    %v779 = vld [vmem:[#allocation6 + $0x5a8] sm:$0xff]
    %v780 = vld [vmem:[#allocation6 + $0x5b0] sm:$0xff]
    %v781 = vld [vmem:[#allocation6 + $0x5b8] sm:$0xff]
    %v782 = vld [vmem:[#allocation6 + $0x5c0] sm:$0xff]
    %v783 = vld [vmem:[#allocation6 + $0x5c8] sm:$0xff]
    %v784 = vld [vmem:[#allocation6 + $0x5d0] sm:$0xff]
    %v785 = vld [vmem:[#allocation6 + $0x5d8] sm:$0xff]
    %v786 = vld [vmem:[#allocation6 + $0x5e0] sm:$0xff]
    %v787 = vld [vmem:[#allocation6 + $0x5e8] sm:$0xff]
    %v788 = vld [vmem:[#allocation6 + $0x5f0] sm:$0xff]
    %v789 = vld [vmem:[#allocation6 + $0x5f8] sm:$0xff]
    %v790 = vld [vmem:[#allocation6 + $0x600] sm:$0xff]
    %v791 = vld [vmem:[#allocation6 + $0x608] sm:$0xff]
    %v792 = vld [vmem:[#allocation6 + $0x610] sm:$0xff]
    %v793 = vld [vmem:[#allocation6 + $0x618] sm:$0xff]
    %v794 = vld [vmem:[#allocation6 + $0x620] sm:$0xff]
    %v795 = vld [vmem:[#allocation6 + $0x628] sm:$0xff]
    %v796 = vld [vmem:[#allocation6 + $0x630] sm:$0xff]
    %v797 = vld [vmem:[#allocation6 + $0x638] sm:$0xff]
    %v798 = vld [vmem:[#allocation6 + $0x640] sm:$0xff]
    %v799 = vld [vmem:[#allocation6 + $0x648] sm:$0xff]
    %v800 = vld [vmem:[#allocation6 + $0x650] sm:$0xff]
    %v801 = vld [vmem:[#allocation6 + $0x658] sm:$0xff]
    %v802 = vld [vmem:[#allocation6 + $0x660] sm:$0xff]
    %v803 = vld [vmem:[#allocation6 + $0x668] sm:$0xff]
    %v804 = vld [vmem:[#allocation6 + $0x670] sm:$0xff]
    %v805 = vld [vmem:[#allocation6 + $0x678] sm:$0xff]
    %v806 = vld [vmem:[#allocation6 + $0x680] sm:$0xff]
    %v807 = vld [vmem:[#allocation6 + $0x688] sm:$0xff]
    %v808 = vld [vmem:[#allocation6 + $0x690] sm:$0xff]
    %v809 = vld [vmem:[#allocation6 + $0x698] sm:$0xff]
    %v810 = vld [vmem:[#allocation6 + $0x6a0] sm:$0xff]
    %v811 = vld [vmem:[#allocation6 + $0x6a8] sm:$0xff]
    %v812 = vld [vmem:[#allocation6 + $0x6b0] sm:$0xff]
    %v813 = vld [vmem:[#allocation6 + $0x6b8] sm:$0xff]
    %v814 = vld [vmem:[#allocation6 + $0x6c0] sm:$0xff]
    %v815 = vld [vmem:[#allocation6 + $0x6c8] sm:$0xff]
    %v816 = vld [vmem:[#allocation6 + $0x6d0] sm:$0xff]
    %v817 = vld [vmem:[#allocation6 + $0x6d8] sm:$0xff]
    %v818 = vld [vmem:[#allocation6 + $0x6e0] sm:$0xff]
    %v819 = vld [vmem:[#allocation6 + $0x6e8] sm:$0xff]
    %v820 = vld [vmem:[#allocation6 + $0x6f0] sm:$0xff]
    %v821 = vld [vmem:[#allocation6 + $0x6f8] sm:$0xff]
    %v822 = vld [vmem:[#allocation6 + $0x700] sm:$0xff]
    %v823 = vld [vmem:[#allocation6 + $0x708] sm:$0xff]
    %v824 = vld [vmem:[#allocation6 + $0x710] sm:$0xff]
    %v825 = vld [vmem:[#allocation6 + $0x718] sm:$0xff]
    %v826 = vld [vmem:[#allocation6 + $0x720] sm:$0xff]
    %v827 = vld [vmem:[#allocation6 + $0x728] sm:$0xff]
    %v828 = vld [vmem:[#allocation6 + $0x730] sm:$0xff]
    %v829 = vld [vmem:[#allocation6 + $0x738] sm:$0xff]
    %v830 = vld [vmem:[#allocation6 + $0x740] sm:$0xff]
    %v831 = vld [vmem:[#allocation6 + $0x748] sm:$0xff]
    %v832 = vld [vmem:[#allocation6 + $0x750] sm:$0xff]
    %v833 = vld [vmem:[#allocation6 + $0x758] sm:$0xff]
    %v834 = vld [vmem:[#allocation6 + $0x760] sm:$0xff]
    %v835 = vld [vmem:[#allocation6 + $0x768] sm:$0xff]
    %v836 = vld [vmem:[#allocation6 + $0x770] sm:$0xff]
    %v837 = vld [vmem:[#allocation6 + $0x778] sm:$0xff]
    %v838 = vld [vmem:[#allocation6 + $0x780] sm:$0xff]
    %v839 = vld [vmem:[#allocation6 + $0x788] sm:$0xff]
    %v840 = vld [vmem:[#allocation6 + $0x790] sm:$0xff]
    %v841 = vld [vmem:[#allocation6 + $0x798] sm:$0xff]
    %v842 = vld [vmem:[#allocation6 + $0x7a0] sm:$0xff]
    %v843 = vld [vmem:[#allocation6 + $0x7a8] sm:$0xff]
    %v844 = vld [vmem:[#allocation6 + $0x7b0] sm:$0xff]
    %v845 = vld [vmem:[#allocation6 + $0x7b8] sm:$0xff]
    %v846 = vld [vmem:[#allocation6 + $0x7c0] sm:$0xff]
    %v847 = vld [vmem:[#allocation6 + $0x7c8] sm:$0xff]
    %v848 = vld [vmem:[#allocation6 + $0x7d0] sm:$0xff]
    %v849 = vld [vmem:[#allocation6 + $0x7d8] sm:$0xff]
    %v850 = vld [vmem:[#allocation6 + $0x7e0] sm:$0xff]
    %v851 = vld [vmem:[#allocation6 + $0x7e8] sm:$0xff]
    %v852 = vld [vmem:[#allocation6 + $0x7f0] sm:$0xff]
    %v853 = vld [vmem:[#allocation6 + $0x7f8] sm:$0xff]
    %v854 = vld [vmem:[#allocation2] sm:$0xff]
    %v855 = vld [vmem:[#allocation2 + $0x8] sm:$0xff]
    %v856 = vld [vmem:[#allocation2 + $0x10] sm:$0xff]
    %v857 = vld [vmem:[#allocation2 + $0x18] sm:$0xff]
    %v858 = vld [vmem:[#allocation2 + $0x20] sm:$0xff]
    %v859 = vld [vmem:[#allocation2 + $0x28] sm:$0xff]
    %v860 = vld [vmem:[#allocation2 + $0x30] sm:$0xff]
    %v861 = vld [vmem:[#allocation2 + $0x38] sm:$0xff]
    %862 = vmatpush.msra.mxu0 %v718
    %863 = vmatpush.msra.mxu0 %v710
    %864 = vmatpush.msra.mxu0 %v702
    %865 = vmatpush.msra.mxu0 %v694
    %866 = vmatpush.msra.mxu0 %v686
    %867 = vmatpush.msra.mxu0 %v678
    %868 = vmatpush.msra.mxu0 %v670
    %869 = vmatpush.msra.mxu0 %v662
    %870 = vmatpush.msra.mxu0 %v654
    %871 = vmatpush.msra.mxu0 %v646
    %872 = vmatpush.msra.mxu0 %v638
    %873 = vmatpush.msra.mxu0 %v630
    %874 = vmatpush.msra.mxu0 %v622
    %875 = vmatpush.msra.mxu0 %v614
    %876 = vmatpush.msra.mxu0 %v606
    %877 = vmatpush.msra.mxu0 %v598
    %878 = vmatmul.f32.gmra.mxu0 0.0
    %v879 = vpop.f32.mrf.mxu0
    %v880 = vadd.f32 0.0, %v879
    %881 = vdwg.mxu0
    %882 = vmatpush.msra.mxu0 %v846
    %883 = vmatpush.msra.mxu0 %v838
    %884 = vmatpush.msra.mxu0 %v830
    %885 = vmatpush.msra.mxu0 %v822
    %886 = vmatpush.msra.mxu0 %v814
    %887 = vmatpush.msra.mxu0 %v806
    %888 = vmatpush.msra.mxu0 %v798
    %889 = vmatpush.msra.mxu0 %v790
    %890 = vmatpush.msra.mxu0 %v782
    %891 = vmatpush.msra.mxu0 %v774
    %892 = vmatpush.msra.mxu0 %v766
    %893 = vmatpush.msra.mxu0 %v758
    %894 = vmatpush.msra.mxu0 %v750
    %895 = vmatpush.msra.mxu0 %v742
    %896 = vmatpush.msra.mxu0 %v734
    %897 = vmatpush.msra.mxu0 %v726
    %898 = vmatmul.f32.gmra.mxu0 0.0
    %v899 = vpop.f32.mrf.mxu0
    %v900 = vadd.f32 %v880, %v899
    %901 = vdwg.mxu0
    %902 = vmatpush.msra.mxu0 %v719
    %903 = vmatpush.msra.mxu0 %v711
    %904 = vmatpush.msra.mxu0 %v703
    %905 = vmatpush.msra.mxu0 %v695
    %906 = vmatpush.msra.mxu0 %v687
    %907 = vmatpush.msra.mxu0 %v679
    %908 = vmatpush.msra.mxu0 %v671
    %909 = vmatpush.msra.mxu0 %v663
    %910 = vmatpush.msra.mxu0 %v655
    %911 = vmatpush.msra.mxu0 %v647
    %912 = vmatpush.msra.mxu0 %v639
    %913 = vmatpush.msra.mxu0 %v631
    %914 = vmatpush.msra.mxu0 %v623
    %915 = vmatpush.msra.mxu0 %v615
    %916 = vmatpush.msra.mxu0 %v607
    %917 = vmatpush.msra.mxu0 %v599
    %918 = vmatmul.f32.gmra.mxu0 0.0
    %v919 = vpop.f32.mrf.mxu0
    %v920 = vadd.f32 0.0, %v919
    %921 = vdwg.mxu0
    %922 = vmatpush.msra.mxu0 %v847
    %923 = vmatpush.msra.mxu0 %v839
    %924 = vmatpush.msra.mxu0 %v831
    %925 = vmatpush.msra.mxu0 %v823
    %926 = vmatpush.msra.mxu0 %v815
    %927 = vmatpush.msra.mxu0 %v807
    %928 = vmatpush.msra.mxu0 %v799
    %929 = vmatpush.msra.mxu0 %v791
    %930 = vmatpush.msra.mxu0 %v783
    %931 = vmatpush.msra.mxu0 %v775
    %932 = vmatpush.msra.mxu0 %v767
    %933 = vmatpush.msra.mxu0 %v759
    %934 = vmatpush.msra.mxu0 %v751
    %935 = vmatpush.msra.mxu0 %v743
    %936 = vmatpush.msra.mxu0 %v735
    %937 = vmatpush.msra.mxu0 %v727
    %938 = vmatmul.f32.gmra.mxu0 0.0
    %v939 = vpop.f32.mrf.mxu0
    %v940 = vadd.f32 %v920, %v939
    %941 = vdwg.mxu0
    %942 = vmatpush.msra.mxu0 %v720
    %943 = vmatpush.msra.mxu0 %v712
    %944 = vmatpush.msra.mxu0 %v704
    %945 = vmatpush.msra.mxu0 %v696
    %946 = vmatpush.msra.mxu0 %v688
    %947 = vmatpush.msra.mxu0 %v680
    %948 = vmatpush.msra.mxu0 %v672
    %949 = vmatpush.msra.mxu0 %v664
    %950 = vmatpush.msra.mxu0 %v656
    %951 = vmatpush.msra.mxu0 %v648
    %952 = vmatpush.msra.mxu0 %v640
    %953 = vmatpush.msra.mxu0 %v632
    %954 = vmatpush.msra.mxu0 %v624
    %955 = vmatpush.msra.mxu0 %v616
    %956 = vmatpush.msra.mxu0 %v608
    %957 = vmatpush.msra.mxu0 %v600
    %958 = vmatmul.f32.gmra.mxu0 0.0
    %v959 = vpop.f32.mrf.mxu0
    %v960 = vadd.f32 0.0, %v959
    %961 = vdwg.mxu0
    %962 = vmatpush.msra.mxu0 %v848
    %963 = vmatpush.msra.mxu0 %v840
    %964 = vmatpush.msra.mxu0 %v832
    %965 = vmatpush.msra.mxu0 %v824
    %966 = vmatpush.msra.mxu0 %v816
    %967 = vmatpush.msra.mxu0 %v808
    %968 = vmatpush.msra.mxu0 %v800
    %969 = vmatpush.msra.mxu0 %v792
    %970 = vmatpush.msra.mxu0 %v784
    %971 = vmatpush.msra.mxu0 %v776
    %972 = vmatpush.msra.mxu0 %v768
    %973 = vmatpush.msra.mxu0 %v760
    %974 = vmatpush.msra.mxu0 %v752
    %975 = vmatpush.msra.mxu0 %v744
    %976 = vmatpush.msra.mxu0 %v736
    %977 = vmatpush.msra.mxu0 %v728
    %978 = vmatmul.f32.gmra.mxu0 0.0
    %v979 = vpop.f32.mrf.mxu0
    %v980 = vadd.f32 %v960, %v979
    %981 = vdwg.mxu0
    %982 = vmatpush.msra.mxu0 %v721
    %983 = vmatpush.msra.mxu0 %v713
    %984 = vmatpush.msra.mxu0 %v705
    %985 = vmatpush.msra.mxu0 %v697
    %986 = vmatpush.msra.mxu0 %v689
    %987 = vmatpush.msra.mxu0 %v681
    %988 = vmatpush.msra.mxu0 %v673
    %989 = vmatpush.msra.mxu0 %v665
    %990 = vmatpush.msra.mxu0 %v657
    %991 = vmatpush.msra.mxu0 %v649
    %992 = vmatpush.msra.mxu0 %v641
    %993 = vmatpush.msra.mxu0 %v633
    %994 = vmatpush.msra.mxu0 %v625
    %995 = vmatpush.msra.mxu0 %v617
    %996 = vmatpush.msra.mxu0 %v609
    %997 = vmatpush.msra.mxu0 %v601
    %998 = vmatmul.f32.gmra.mxu0 0.0
    %v999 = vpop.f32.mrf.mxu0
    %v1000 = vadd.f32 0.0, %v999
    %1001 = vdwg.mxu0
    %1002 = vmatpush.msra.mxu0 %v849
    %1003 = vmatpush.msra.mxu0 %v841
    %1004 = vmatpush.msra.mxu0 %v833
    %1005 = vmatpush.msra.mxu0 %v825
    %1006 = vmatpush.msra.mxu0 %v817
    %1007 = vmatpush.msra.mxu0 %v809
    %1008 = vmatpush.msra.mxu0 %v801
    %1009 = vmatpush.msra.mxu0 %v793
    %1010 = vmatpush.msra.mxu0 %v785
    %1011 = vmatpush.msra.mxu0 %v777
    %1012 = vmatpush.msra.mxu0 %v769
    %1013 = vmatpush.msra.mxu0 %v761
    %1014 = vmatpush.msra.mxu0 %v753
    %1015 = vmatpush.msra.mxu0 %v745
    %1016 = vmatpush.msra.mxu0 %v737
    %1017 = vmatpush.msra.mxu0 %v729
    %1018 = vmatmul.f32.gmra.mxu0 0.0
    %v1019 = vpop.f32.mrf.mxu0
    %v1020 = vadd.f32 %v1000, %v1019
    %1021 = vdwg.mxu0
    %1022 = vmatpush.msra.mxu0 %v722
    %1023 = vmatpush.msra.mxu0 %v714
    %1024 = vmatpush.msra.mxu0 %v706
    %1025 = vmatpush.msra.mxu0 %v698
    %1026 = vmatpush.msra.mxu0 %v690
    %1027 = vmatpush.msra.mxu0 %v682
    %1028 = vmatpush.msra.mxu0 %v674
    %1029 = vmatpush.msra.mxu0 %v666
    %1030 = vmatpush.msra.mxu0 %v658
    %1031 = vmatpush.msra.mxu0 %v650
    %1032 = vmatpush.msra.mxu0 %v642
    %1033 = vmatpush.msra.mxu0 %v634
    %1034 = vmatpush.msra.mxu0 %v626
    %1035 = vmatpush.msra.mxu0 %v618
    %1036 = vmatpush.msra.mxu0 %v610
    %1037 = vmatpush.msra.mxu0 %v602
    %1038 = vmatmul.f32.gmra.mxu0 0.0
    %v1039 = vpop.f32.mrf.mxu0
    %v1040 = vadd.f32 0.0, %v1039
    %1041 = vdwg.mxu0
    %1042 = vmatpush.msra.mxu0 %v850
    %1043 = vmatpush.msra.mxu0 %v842
    %1044 = vmatpush.msra.mxu0 %v834
    %1045 = vmatpush.msra.mxu0 %v826
    %1046 = vmatpush.msra.mxu0 %v818
    %1047 = vmatpush.msra.mxu0 %v810
    %1048 = vmatpush.msra.mxu0 %v802
    %1049 = vmatpush.msra.mxu0 %v794
    %1050 = vmatpush.msra.mxu0 %v786
    %1051 = vmatpush.msra.mxu0 %v778
    %1052 = vmatpush.msra.mxu0 %v770
    %1053 = vmatpush.msra.mxu0 %v762
    %1054 = vmatpush.msra.mxu0 %v754
    %1055 = vmatpush.msra.mxu0 %v746
    %1056 = vmatpush.msra.mxu0 %v738
    %1057 = vmatpush.msra.mxu0 %v730
    %1058 = vmatmul.f32.gmra.mxu0 0.0
    %v1059 = vpop.f32.mrf.mxu0
    %v1060 = vadd.f32 %v1040, %v1059
    %1061 = vdwg.mxu0
    %1062 = vmatpush.msra.mxu0 %v723
    %1063 = vmatpush.msra.mxu0 %v715
    %1064 = vmatpush.msra.mxu0 %v707
    %1065 = vmatpush.msra.mxu0 %v699
    %1066 = vmatpush.msra.mxu0 %v691
    %1067 = vmatpush.msra.mxu0 %v683
    %1068 = vmatpush.msra.mxu0 %v675
    %1069 = vmatpush.msra.mxu0 %v667
    %1070 = vmatpush.msra.mxu0 %v659
    %1071 = vmatpush.msra.mxu0 %v651
    %1072 = vmatpush.msra.mxu0 %v643
    %1073 = vmatpush.msra.mxu0 %v635
    %1074 = vmatpush.msra.mxu0 %v627
    %1075 = vmatpush.msra.mxu0 %v619
    %1076 = vmatpush.msra.mxu0 %v611
    %1077 = vmatpush.msra.mxu0 %v603
    %1078 = vmatmul.f32.gmra.mxu0 0.0
    %v1079 = vpop.f32.mrf.mxu0
    %v1080 = vadd.f32 0.0, %v1079
    %1081 = vdwg.mxu0
    %1082 = vmatpush.msra.mxu0 %v851
    %1083 = vmatpush.msra.mxu0 %v843
    %1084 = vmatpush.msra.mxu0 %v835
    %1085 = vmatpush.msra.mxu0 %v827
    %1086 = vmatpush.msra.mxu0 %v819
    %1087 = vmatpush.msra.mxu0 %v811
    %1088 = vmatpush.msra.mxu0 %v803
    %1089 = vmatpush.msra.mxu0 %v795
    %1090 = vmatpush.msra.mxu0 %v787
    %1091 = vmatpush.msra.mxu0 %v779
    %1092 = vmatpush.msra.mxu0 %v771
    %1093 = vmatpush.msra.mxu0 %v763
    %1094 = vmatpush.msra.mxu0 %v755
    %1095 = vmatpush.msra.mxu0 %v747
    %1096 = vmatpush.msra.mxu0 %v739
    %1097 = vmatpush.msra.mxu0 %v731
    %1098 = vmatmul.f32.gmra.mxu0 0.0
    %v1099 = vpop.f32.mrf.mxu0
    %v1100 = vadd.f32 %v1080, %v1099
    %1101 = vdwg.mxu0
    %1102 = vmatpush.msra.mxu0 %v724
    %1103 = vmatpush.msra.mxu0 %v716
    %1104 = vmatpush.msra.mxu0 %v708
    %1105 = vmatpush.msra.mxu0 %v700
    %1106 = vmatpush.msra.mxu0 %v692
    %1107 = vmatpush.msra.mxu0 %v684
    %1108 = vmatpush.msra.mxu0 %v676
    %1109 = vmatpush.msra.mxu0 %v668
    %1110 = vmatpush.msra.mxu0 %v660
    %1111 = vmatpush.msra.mxu0 %v652
    %1112 = vmatpush.msra.mxu0 %v644
    %1113 = vmatpush.msra.mxu0 %v636
    %1114 = vmatpush.msra.mxu0 %v628
    %1115 = vmatpush.msra.mxu0 %v620
    %1116 = vmatpush.msra.mxu0 %v612
    %1117 = vmatpush.msra.mxu0 %v604
    %1118 = vmatmul.f32.gmra.mxu0 0.0
    %v1119 = vpop.f32.mrf.mxu0
    %v1120 = vadd.f32 0.0, %v1119
    %1121 = vdwg.mxu0
    %1122 = vmatpush.msra.mxu0 %v852
    %1123 = vmatpush.msra.mxu0 %v844
    %1124 = vmatpush.msra.mxu0 %v836
    %1125 = vmatpush.msra.mxu0 %v828
    %1126 = vmatpush.msra.mxu0 %v820
    %1127 = vmatpush.msra.mxu0 %v812
    %1128 = vmatpush.msra.mxu0 %v804
    %1129 = vmatpush.msra.mxu0 %v796
    %1130 = vmatpush.msra.mxu0 %v788
    %1131 = vmatpush.msra.mxu0 %v780
    %1132 = vmatpush.msra.mxu0 %v772
    %1133 = vmatpush.msra.mxu0 %v764
    %1134 = vmatpush.msra.mxu0 %v756
    %1135 = vmatpush.msra.mxu0 %v748
    %1136 = vmatpush.msra.mxu0 %v740
    %1137 = vmatpush.msra.mxu0 %v732
    %1138 = vmatmul.f32.gmra.mxu0 0.0
    %v1139 = vpop.f32.mrf.mxu0
    %v1140 = vadd.f32 %v1120, %v1139
    %1141 = vdwg.mxu0
    %1142 = vmatpush.msra.mxu0 %v725
    %1143 = vmatpush.msra.mxu0 %v717
    %1144 = vmatpush.msra.mxu0 %v709
    %1145 = vmatpush.msra.mxu0 %v701
    %1146 = vmatpush.msra.mxu0 %v693
    %1147 = vmatpush.msra.mxu0 %v685
    %1148 = vmatpush.msra.mxu0 %v677
    %1149 = vmatpush.msra.mxu0 %v669
    %1150 = vmatpush.msra.mxu0 %v661
    %1151 = vmatpush.msra.mxu0 %v653
    %1152 = vmatpush.msra.mxu0 %v645
    %1153 = vmatpush.msra.mxu0 %v637
    %1154 = vmatpush.msra.mxu0 %v629
    %1155 = vmatpush.msra.mxu0 %v621
    %1156 = vmatpush.msra.mxu0 %v613
    %1157 = vmatpush.msra.mxu0 %v605
    %1158 = vmatmul.f32.gmra.mxu0 0.0
    %v1159 = vpop.f32.mrf.mxu0
    %v1160 = vadd.f32 0.0, %v1159
    %1161 = vdwg.mxu0
    %1162 = vmatpush.msra.mxu0 %v853
    %1163 = vmatpush.msra.mxu0 %v845
    %1164 = vmatpush.msra.mxu0 %v837
    %1165 = vmatpush.msra.mxu0 %v829
    %1166 = vmatpush.msra.mxu0 %v821
    %1167 = vmatpush.msra.mxu0 %v813
    %1168 = vmatpush.msra.mxu0 %v805
    %1169 = vmatpush.msra.mxu0 %v797
    %1170 = vmatpush.msra.mxu0 %v789
    %1171 = vmatpush.msra.mxu0 %v781
    %1172 = vmatpush.msra.mxu0 %v773
    %1173 = vmatpush.msra.mxu0 %v765
    %1174 = vmatpush.msra.mxu0 %v757
    %1175 = vmatpush.msra.mxu0 %v749
    %1176 = vmatpush.msra.mxu0 %v741
    %1177 = vmatpush.msra.mxu0 %v733
    %1178 = vmatmul.f32.gmra.mxu0 0.0
    %v1179 = vpop.f32.mrf.mxu0
    %v1180 = vadd.f32 %v1160, %v1179
    %1181 = vdwg.mxu0
    %v1182 = vadd.f32 %v854, %v900
    %v1183 = vadd.f32 %v855, %v940
    %v1184 = vadd.f32 %v856, %v980
    %v1185 = vadd.f32 %v857, %v1020
    %v1186 = vadd.f32 %v858, %v1060
    %v1187 = vadd.f32 %v859, %v1100
    %v1188 = vadd.f32 %v860, %v1140
    %v1189 = vadd.f32 %v861, %v1180
    %v1190 = vmul.f32 %v1182, 0.5
    %v1191 = vmul.f32 %v1183, 0.5
    %v1192 = vtanh.pop %v1190
    %v1193 = vtanh.pop %v1191
    %v1194 = vmul.f32 %v1192, 0.5
    %v1195 = vmul.f32 %v1193, 0.5
    %v1196 = vadd.f32 %v1194, 0.5
    %v1197 = vadd.f32 %v1195, 0.5
    %v1198 = vmul.f32 %v1184, 0.5
    %v1199 = vmul.f32 %v1185, 0.5
    %v1200 = vtanh.pop %v1198
    %v1201 = vtanh.pop %v1199
    %v1202 = vmul.f32 %v1200, 0.5
    %v1203 = vmul.f32 %v1201, 0.5
    %v1204 = vadd.f32 %v1202, 0.5
    %v1205 = vadd.f32 %v1203, 0.5
    %v1206 = vtanh.pop %v1186
    %v1207 = vtanh.pop %v1187
    %v1208 = vmul.f32 %v1188, 0.5
    %v1209 = vmul.f32 %v1189, 0.5
    %v1210 = vtanh.pop %v1208
    %v1211 = vtanh.pop %v1209
    %v1212 = vmul.f32 %v1210, 0.5
    %v1213 = vmul.f32 %v1211, 0.5
    %v1214 = vadd.f32 %v1212, 0.5
    %v1215 = vadd.f32 %v1213, 0.5
    %v1216 = vmul.f32 %v1204, 0.0
    %v1217 = vmul.f32 %v1205, 0.0
    %v1218 = vmul.f32 %v1196, %v1206
    %v1219 = vmul.f32 %v1197, %v1207
    %v1220 = vadd.f32 %v1216, %v1218
    %v1221 = vadd.f32 %v1217, %v1219
    %v1222 = vtanh.pop %v1220
    %v1223 = vtanh.pop %v1221
    %v1224 = vmul.f32 %v1214, %v1222
    %v1225 = vmul.f32 %v1215, %v1223
    %s1226 = scalar_lea.vmem [#allocation2], 64
    %v1227 = vld [vmem:[%s1226] sm:$0xff]
    %v1228 = vld [vmem:[%s1226 + $0x8] sm:$0xff]
    %v1229 = vld [vmem:[%s1226 + $0x10] sm:$0xff]
    %v1230 = vld [vmem:[%s1226 + $0x18] sm:$0xff]
    %v1231 = vld [vmem:[%s1226 + $0x20] sm:$0xff]
    %v1232 = vld [vmem:[%s1226 + $0x28] sm:$0xff]
    %v1233 = vld [vmem:[%s1226 + $0x30] sm:$0xff]
    %v1234 = vld [vmem:[%s1226 + $0x38] sm:$0xff]
    %1235 = vmatpush.msra.mxu0 %v718
    %1236 = vmatpush.msra.mxu0 %v710
    %1237 = vmatpush.msra.mxu0 %v702
    %1238 = vmatpush.msra.mxu0 %v694
    %1239 = vmatpush.msra.mxu0 %v686
    %1240 = vmatpush.msra.mxu0 %v678
    %1241 = vmatpush.msra.mxu0 %v670
    %1242 = vmatpush.msra.mxu0 %v662
    %1243 = vmatpush.msra.mxu0 %v654
    %1244 = vmatpush.msra.mxu0 %v646
    %1245 = vmatpush.msra.mxu0 %v638
    %1246 = vmatpush.msra.mxu0 %v630
    %1247 = vmatpush.msra.mxu0 %v622
    %1248 = vmatpush.msra.mxu0 %v614
    %1249 = vmatpush.msra.mxu0 %v606
    %1250 = vmatpush.msra.mxu0 %v598
    %1251 = vmatmul.f32.gmra.mxu0 %v1224
    %v1252 = vpop.f32.mrf.mxu0
    %v1253 = vadd.f32 0.0, %v1252
    %1254 = vdwg.mxu0
    %1255 = vmatpush.msra.mxu0 %v846
    %1256 = vmatpush.msra.mxu0 %v838
    %1257 = vmatpush.msra.mxu0 %v830
    %1258 = vmatpush.msra.mxu0 %v822
    %1259 = vmatpush.msra.mxu0 %v814
    %1260 = vmatpush.msra.mxu0 %v806
    %1261 = vmatpush.msra.mxu0 %v798
    %1262 = vmatpush.msra.mxu0 %v790
    %1263 = vmatpush.msra.mxu0 %v782
    %1264 = vmatpush.msra.mxu0 %v774
    %1265 = vmatpush.msra.mxu0 %v766
    %1266 = vmatpush.msra.mxu0 %v758
    %1267 = vmatpush.msra.mxu0 %v750
    %1268 = vmatpush.msra.mxu0 %v742
    %1269 = vmatpush.msra.mxu0 %v734
    %1270 = vmatpush.msra.mxu0 %v726
    %1271 = vmatmul.f32.gmra.mxu0 %v1225
    %v1272 = vpop.f32.mrf.mxu0
    %v1273 = vadd.f32 %v1253, %v1272
    %1274 = vdwg.mxu0
    %1275 = vmatpush.msra.mxu0 %v719
    %1276 = vmatpush.msra.mxu0 %v711
    %1277 = vmatpush.msra.mxu0 %v703
    %1278 = vmatpush.msra.mxu0 %v695
    %1279 = vmatpush.msra.mxu0 %v687
    %1280 = vmatpush.msra.mxu0 %v679
    %1281 = vmatpush.msra.mxu0 %v671
    %1282 = vmatpush.msra.mxu0 %v663
    %1283 = vmatpush.msra.mxu0 %v655
    %1284 = vmatpush.msra.mxu0 %v647
    %1285 = vmatpush.msra.mxu0 %v639
    %1286 = vmatpush.msra.mxu0 %v631
    %1287 = vmatpush.msra.mxu0 %v623
    %1288 = vmatpush.msra.mxu0 %v615
    %1289 = vmatpush.msra.mxu0 %v607
    %1290 = vmatpush.msra.mxu0 %v599
    %1291 = vmatmul.f32.gmra.mxu0 %v1224
    %v1292 = vpop.f32.mrf.mxu0
    %v1293 = vadd.f32 0.0, %v1292
    %1294 = vdwg.mxu0
    %1295 = vmatpush.msra.mxu0 %v847
    %1296 = vmatpush.msra.mxu0 %v839
    %1297 = vmatpush.msra.mxu0 %v831
    %1298 = vmatpush.msra.mxu0 %v823
    %1299 = vmatpush.msra.mxu0 %v815
    %1300 = vmatpush.msra.mxu0 %v807
    %1301 = vmatpush.msra.mxu0 %v799
    %1302 = vmatpush.msra.mxu0 %v791
    %1303 = vmatpush.msra.mxu0 %v783
    %1304 = vmatpush.msra.mxu0 %v775
    %1305 = vmatpush.msra.mxu0 %v767
    %1306 = vmatpush.msra.mxu0 %v759
    %1307 = vmatpush.msra.mxu0 %v751
    %1308 = vmatpush.msra.mxu0 %v743
    %1309 = vmatpush.msra.mxu0 %v735
    %1310 = vmatpush.msra.mxu0 %v727
    %1311 = vmatmul.f32.gmra.mxu0 %v1225
    %v1312 = vpop.f32.mrf.mxu0
    %v1313 = vadd.f32 %v1293, %v1312
    %1314 = vdwg.mxu0
    %1315 = vmatpush.msra.mxu0 %v720
    %1316 = vmatpush.msra.mxu0 %v712
    %1317 = vmatpush.msra.mxu0 %v704
    %1318 = vmatpush.msra.mxu0 %v696
    %1319 = vmatpush.msra.mxu0 %v688
    %1320 = vmatpush.msra.mxu0 %v680
    %1321 = vmatpush.msra.mxu0 %v672
    %1322 = vmatpush.msra.mxu0 %v664
    %1323 = vmatpush.msra.mxu0 %v656
    %1324 = vmatpush.msra.mxu0 %v648
    %1325 = vmatpush.msra.mxu0 %v640
    %1326 = vmatpush.msra.mxu0 %v632
    %1327 = vmatpush.msra.mxu0 %v624
    %1328 = vmatpush.msra.mxu0 %v616
    %1329 = vmatpush.msra.mxu0 %v608
    %1330 = vmatpush.msra.mxu0 %v600
    %1331 = vmatmul.f32.gmra.mxu0 %v1224
    %v1332 = vpop.f32.mrf.mxu0
    %v1333 = vadd.f32 0.0, %v1332
    %1334 = vdwg.mxu0
    %1335 = vmatpush.msra.mxu0 %v848
    %1336 = vmatpush.msra.mxu0 %v840
    %1337 = vmatpush.msra.mxu0 %v832
    %1338 = vmatpush.msra.mxu0 %v824
    %1339 = vmatpush.msra.mxu0 %v816
    %1340 = vmatpush.msra.mxu0 %v808
    %1341 = vmatpush.msra.mxu0 %v800
    %1342 = vmatpush.msra.mxu0 %v792
    %1343 = vmatpush.msra.mxu0 %v784
    %1344 = vmatpush.msra.mxu0 %v776
    %1345 = vmatpush.msra.mxu0 %v768
    %1346 = vmatpush.msra.mxu0 %v760
    %1347 = vmatpush.msra.mxu0 %v752
    %1348 = vmatpush.msra.mxu0 %v744
    %1349 = vmatpush.msra.mxu0 %v736
    %1350 = vmatpush.msra.mxu0 %v728
    %1351 = vmatmul.f32.gmra.mxu0 %v1225
    %v1352 = vpop.f32.mrf.mxu0
    %v1353 = vadd.f32 %v1333, %v1352
    %1354 = vdwg.mxu0
    %1355 = vmatpush.msra.mxu0 %v721
    %1356 = vmatpush.msra.mxu0 %v713
    %1357 = vmatpush.msra.mxu0 %v705
    %1358 = vmatpush.msra.mxu0 %v697
    %1359 = vmatpush.msra.mxu0 %v689
    %1360 = vmatpush.msra.mxu0 %v681
    %1361 = vmatpush.msra.mxu0 %v673
    %1362 = vmatpush.msra.mxu0 %v665
    %1363 = vmatpush.msra.mxu0 %v657
    %1364 = vmatpush.msra.mxu0 %v649
    %1365 = vmatpush.msra.mxu0 %v641
    %1366 = vmatpush.msra.mxu0 %v633
    %1367 = vmatpush.msra.mxu0 %v625
    %1368 = vmatpush.msra.mxu0 %v617
    %1369 = vmatpush.msra.mxu0 %v609
    %1370 = vmatpush.msra.mxu0 %v601
    %1371 = vmatmul.f32.gmra.mxu0 %v1224
    %v1372 = vpop.f32.mrf.mxu0
    %v1373 = vadd.f32 0.0, %v1372
    %1374 = vdwg.mxu0
    %1375 = vmatpush.msra.mxu0 %v849
    %1376 = vmatpush.msra.mxu0 %v841
    %1377 = vmatpush.msra.mxu0 %v833
    %1378 = vmatpush.msra.mxu0 %v825
    %1379 = vmatpush.msra.mxu0 %v817
    %1380 = vmatpush.msra.mxu0 %v809
    %1381 = vmatpush.msra.mxu0 %v801
    %1382 = vmatpush.msra.mxu0 %v793
    %1383 = vmatpush.msra.mxu0 %v785
    %1384 = vmatpush.msra.mxu0 %v777
    %1385 = vmatpush.msra.mxu0 %v769
    %1386 = vmatpush.msra.mxu0 %v761
    %1387 = vmatpush.msra.mxu0 %v753
    %1388 = vmatpush.msra.mxu0 %v745
    %1389 = vmatpush.msra.mxu0 %v737
    %1390 = vmatpush.msra.mxu0 %v729
    %1391 = vmatmul.f32.gmra.mxu0 %v1225
    %v1392 = vpop.f32.mrf.mxu0
    %v1393 = vadd.f32 %v1373, %v1392
    %1394 = vdwg.mxu0
    %1395 = vmatpush.msra.mxu0 %v722
    %1396 = vmatpush.msra.mxu0 %v714
    %1397 = vmatpush.msra.mxu0 %v706
    %1398 = vmatpush.msra.mxu0 %v698
    %1399 = vmatpush.msra.mxu0 %v690
    %1400 = vmatpush.msra.mxu0 %v682
    %1401 = vmatpush.msra.mxu0 %v674
    %1402 = vmatpush.msra.mxu0 %v666
    %1403 = vmatpush.msra.mxu0 %v658
    %1404 = vmatpush.msra.mxu0 %v650
    %1405 = vmatpush.msra.mxu0 %v642
    %1406 = vmatpush.msra.mxu0 %v634
    %1407 = vmatpush.msra.mxu0 %v626
    %1408 = vmatpush.msra.mxu0 %v618
    %1409 = vmatpush.msra.mxu0 %v610
    %1410 = vmatpush.msra.mxu0 %v602
    %1411 = vmatmul.f32.gmra.mxu0 %v1224
    %v1412 = vpop.f32.mrf.mxu0
    %v1413 = vadd.f32 0.0, %v1412
    %1414 = vdwg.mxu0
    %1415 = vmatpush.msra.mxu0 %v850
    %1416 = vmatpush.msra.mxu0 %v842
    %1417 = vmatpush.msra.mxu0 %v834
    %1418 = vmatpush.msra.mxu0 %v826
    %1419 = vmatpush.msra.mxu0 %v818
    %1420 = vmatpush.msra.mxu0 %v810
    %1421 = vmatpush.msra.mxu0 %v802
    %1422 = vmatpush.msra.mxu0 %v794
    %1423 = vmatpush.msra.mxu0 %v786
    %1424 = vmatpush.msra.mxu0 %v778
    %1425 = vmatpush.msra.mxu0 %v770
    %1426 = vmatpush.msra.mxu0 %v762
    %1427 = vmatpush.msra.mxu0 %v754
    %1428 = vmatpush.msra.mxu0 %v746
    %1429 = vmatpush.msra.mxu0 %v738
    %1430 = vmatpush.msra.mxu0 %v730
    %1431 = vmatmul.f32.gmra.mxu0 %v1225
    %v1432 = vpop.f32.mrf.mxu0
    %v1433 = vadd.f32 %v1413, %v1432
    %1434 = vdwg.mxu0
    %1435 = vmatpush.msra.mxu0 %v723
    %1436 = vmatpush.msra.mxu0 %v715
    %1437 = vmatpush.msra.mxu0 %v707
    %1438 = vmatpush.msra.mxu0 %v699
    %1439 = vmatpush.msra.mxu0 %v691
    %1440 = vmatpush.msra.mxu0 %v683
    %1441 = vmatpush.msra.mxu0 %v675
    %1442 = vmatpush.msra.mxu0 %v667
    %1443 = vmatpush.msra.mxu0 %v659
    %1444 = vmatpush.msra.mxu0 %v651
    %1445 = vmatpush.msra.mxu0 %v643
    %1446 = vmatpush.msra.mxu0 %v635
    %1447 = vmatpush.msra.mxu0 %v627
    %1448 = vmatpush.msra.mxu0 %v619
    %1449 = vmatpush.msra.mxu0 %v611
    %1450 = vmatpush.msra.mxu0 %v603
    %1451 = vmatmul.f32.gmra.mxu0 %v1224
    %v1452 = vpop.f32.mrf.mxu0
    %v1453 = vadd.f32 0.0, %v1452
    %1454 = vdwg.mxu0
    %1455 = vmatpush.msra.mxu0 %v851
    %1456 = vmatpush.msra.mxu0 %v843
    %1457 = vmatpush.msra.mxu0 %v835
    %1458 = vmatpush.msra.mxu0 %v827
    %1459 = vmatpush.msra.mxu0 %v819
    %1460 = vmatpush.msra.mxu0 %v811
    %1461 = vmatpush.msra.mxu0 %v803
    %1462 = vmatpush.msra.mxu0 %v795
    %1463 = vmatpush.msra.mxu0 %v787
    %1464 = vmatpush.msra.mxu0 %v779
    %1465 = vmatpush.msra.mxu0 %v771
    %1466 = vmatpush.msra.mxu0 %v763
    %1467 = vmatpush.msra.mxu0 %v755
    %1468 = vmatpush.msra.mxu0 %v747
    %1469 = vmatpush.msra.mxu0 %v739
    %1470 = vmatpush.msra.mxu0 %v731
    %1471 = vmatmul.f32.gmra.mxu0 %v1225
    %v1472 = vpop.f32.mrf.mxu0
    %v1473 = vadd.f32 %v1453, %v1472
    %1474 = vdwg.mxu0
    %1475 = vmatpush.msra.mxu0 %v724
    %1476 = vmatpush.msra.mxu0 %v716
    %1477 = vmatpush.msra.mxu0 %v708
    %1478 = vmatpush.msra.mxu0 %v700
    %1479 = vmatpush.msra.mxu0 %v692
    %1480 = vmatpush.msra.mxu0 %v684
    %1481 = vmatpush.msra.mxu0 %v676
    %1482 = vmatpush.msra.mxu0 %v668
    %1483 = vmatpush.msra.mxu0 %v660
    %1484 = vmatpush.msra.mxu0 %v652
    %1485 = vmatpush.msra.mxu0 %v644
    %1486 = vmatpush.msra.mxu0 %v636
    %1487 = vmatpush.msra.mxu0 %v628
    %1488 = vmatpush.msra.mxu0 %v620
    %1489 = vmatpush.msra.mxu0 %v612
    %1490 = vmatpush.msra.mxu0 %v604
    %1491 = vmatmul.f32.gmra.mxu0 %v1224
    %v1492 = vpop.f32.mrf.mxu0
    %v1493 = vadd.f32 0.0, %v1492
    %1494 = vdwg.mxu0
    %1495 = vmatpush.msra.mxu0 %v852
    %1496 = vmatpush.msra.mxu0 %v844
    %1497 = vmatpush.msra.mxu0 %v836
    %1498 = vmatpush.msra.mxu0 %v828
    %1499 = vmatpush.msra.mxu0 %v820
    %1500 = vmatpush.msra.mxu0 %v812
    %1501 = vmatpush.msra.mxu0 %v804
    %1502 = vmatpush.msra.mxu0 %v796
    %1503 = vmatpush.msra.mxu0 %v788
    %1504 = vmatpush.msra.mxu0 %v780
    %1505 = vmatpush.msra.mxu0 %v772
    %1506 = vmatpush.msra.mxu0 %v764
    %1507 = vmatpush.msra.mxu0 %v756
    %1508 = vmatpush.msra.mxu0 %v748
    %1509 = vmatpush.msra.mxu0 %v740
    %1510 = vmatpush.msra.mxu0 %v732
    %1511 = vmatmul.f32.gmra.mxu0 %v1225
    %v1512 = vpop.f32.mrf.mxu0
    %v1513 = vadd.f32 %v1493, %v1512
    %1514 = vdwg.mxu0
    %1515 = vmatpush.msra.mxu0 %v725
    %1516 = vmatpush.msra.mxu0 %v717
    %1517 = vmatpush.msra.mxu0 %v709
    %1518 = vmatpush.msra.mxu0 %v701
    %1519 = vmatpush.msra.mxu0 %v693
    %1520 = vmatpush.msra.mxu0 %v685
    %1521 = vmatpush.msra.mxu0 %v677
    %1522 = vmatpush.msra.mxu0 %v669
    %1523 = vmatpush.msra.mxu0 %v661
    %1524 = vmatpush.msra.mxu0 %v653
    %1525 = vmatpush.msra.mxu0 %v645
    %1526 = vmatpush.msra.mxu0 %v637
    %1527 = vmatpush.msra.mxu0 %v629
    %1528 = vmatpush.msra.mxu0 %v621
    %1529 = vmatpush.msra.mxu0 %v613
    %1530 = vmatpush.msra.mxu0 %v605
    %1531 = vmatmul.f32.gmra.mxu0 %v1224
    %v1532 = vpop.f32.mrf.mxu0
    %v1533 = vadd.f32 0.0, %v1532
    %1534 = vdwg.mxu0
    %1535 = vmatpush.msra.mxu0 %v853
    %1536 = vmatpush.msra.mxu0 %v845
    %1537 = vmatpush.msra.mxu0 %v837
    %1538 = vmatpush.msra.mxu0 %v829
    %1539 = vmatpush.msra.mxu0 %v821
    %1540 = vmatpush.msra.mxu0 %v813
    %1541 = vmatpush.msra.mxu0 %v805
    %1542 = vmatpush.msra.mxu0 %v797
    %1543 = vmatpush.msra.mxu0 %v789
    %1544 = vmatpush.msra.mxu0 %v781
    %1545 = vmatpush.msra.mxu0 %v773
    %1546 = vmatpush.msra.mxu0 %v765
    %1547 = vmatpush.msra.mxu0 %v757
    %1548 = vmatpush.msra.mxu0 %v749
    %1549 = vmatpush.msra.mxu0 %v741
    %1550 = vmatpush.msra.mxu0 %v733
    %1551 = vmatmul.f32.gmra.mxu0 %v1225
    %v1552 = vpop.f32.mrf.mxu0
    %v1553 = vadd.f32 %v1533, %v1552
    %1554 = vdwg.mxu0
    %v1555 = vadd.f32 %v1227, %v1273
    %v1556 = vadd.f32 %v1228, %v1313
    %v1557 = vadd.f32 %v1229, %v1353
    %v1558 = vadd.f32 %v1230, %v1393
    %v1559 = vadd.f32 %v1231, %v1433
    %v1560 = vadd.f32 %v1232, %v1473
    %v1561 = vadd.f32 %v1233, %v1513
    %v1562 = vadd.f32 %v1234, %v1553
    %v1563 = vmul.f32 %v1555, 0.5
    %v1564 = vmul.f32 %v1556, 0.5
    %v1565 = vtanh.pop %v1563
    %v1566 = vtanh.pop %v1564
    %v1567 = vmul.f32 %v1565, 0.5
    %v1568 = vmul.f32 %v1566, 0.5
    %v1569 = vadd.f32 %v1567, 0.5
    %v1570 = vadd.f32 %v1568, 0.5
    %v1571 = vmul.f32 %v1557, 0.5
    %v1572 = vmul.f32 %v1558, 0.5
    %v1573 = vtanh.pop %v1571
    %v1574 = vtanh.pop %v1572
    %v1575 = vmul.f32 %v1573, 0.5
    %v1576 = vmul.f32 %v1574, 0.5
    %v1577 = vadd.f32 %v1575, 0.5
    %v1578 = vadd.f32 %v1576, 0.5
    %v1579 = vtanh.pop %v1559
    %v1580 = vtanh.pop %v1560
    %v1581 = vmul.f32 %v1561, 0.5
    %v1582 = vmul.f32 %v1562, 0.5
    %v1583 = vtanh.pop %v1581
    %v1584 = vtanh.pop %v1582
    %v1585 = vmul.f32 %v1583, 0.5
    %v1586 = vmul.f32 %v1584, 0.5
    %v1587 = vadd.f32 %v1585, 0.5
    %v1588 = vadd.f32 %v1586, 0.5
    %v1589 = vmul.f32 %v1577, %v1220
    %v1590 = vmul.f32 %v1578, %v1221
    %v1591 = vmul.f32 %v1569, %v1579
    %v1592 = vmul.f32 %v1570, %v1580
    %v1593 = vadd.f32 %v1589, %v1591
    %v1594 = vadd.f32 %v1590, %v1592
    %v1595 = vtanh.pop %v1593
    %v1596 = vtanh.pop %v1594
    %v1597 = vmul.f32 %v1587, %v1595
    %v1598 = vmul.f32 %v1588, %v1596
    %s1599 = scalar_lea.vmem [#allocation2], 128
    %v1600 = vld [vmem:[%s1599] sm:$0xff]
    %v1601 = vld [vmem:[%s1599 + $0x8] sm:$0xff]
    %v1602 = vld [vmem:[%s1599 + $0x10] sm:$0xff]
    %v1603 = vld [vmem:[%s1599 + $0x18] sm:$0xff]
    %v1604 = vld [vmem:[%s1599 + $0x20] sm:$0xff]
    %v1605 = vld [vmem:[%s1599 + $0x28] sm:$0xff]
    %v1606 = vld [vmem:[%s1599 + $0x30] sm:$0xff]
    %v1607 = vld [vmem:[%s1599 + $0x38] sm:$0xff]
    %1608 = vmatpush.msra.mxu0 %v718
    %1609 = vmatpush.msra.mxu0 %v710
    %1610 = vmatpush.msra.mxu0 %v702
    %1611 = vmatpush.msra.mxu0 %v694
    %1612 = vmatpush.msra.mxu0 %v686
    %1613 = vmatpush.msra.mxu0 %v678
    %1614 = vmatpush.msra.mxu0 %v670
    %1615 = vmatpush.msra.mxu0 %v662
    %1616 = vmatpush.msra.mxu0 %v654
    %1617 = vmatpush.msra.mxu0 %v646
    %1618 = vmatpush.msra.mxu0 %v638
    %1619 = vmatpush.msra.mxu0 %v630
    %1620 = vmatpush.msra.mxu0 %v622
    %1621 = vmatpush.msra.mxu0 %v614
    %1622 = vmatpush.msra.mxu0 %v606
    %1623 = vmatpush.msra.mxu0 %v598
    %1624 = vmatmul.f32.gmra.mxu0 %v1597
    %v1625 = vpop.f32.mrf.mxu0
    %v1626 = vadd.f32 0.0, %v1625
    %1627 = vdwg.mxu0
    %1628 = vmatpush.msra.mxu0 %v846
    %1629 = vmatpush.msra.mxu0 %v838
    %1630 = vmatpush.msra.mxu0 %v830
    %1631 = vmatpush.msra.mxu0 %v822
    %1632 = vmatpush.msra.mxu0 %v814
    %1633 = vmatpush.msra.mxu0 %v806
    %1634 = vmatpush.msra.mxu0 %v798
    %1635 = vmatpush.msra.mxu0 %v790
    %1636 = vmatpush.msra.mxu0 %v782
    %1637 = vmatpush.msra.mxu0 %v774
    %1638 = vmatpush.msra.mxu0 %v766
    %1639 = vmatpush.msra.mxu0 %v758
    %1640 = vmatpush.msra.mxu0 %v750
    %1641 = vmatpush.msra.mxu0 %v742
    %1642 = vmatpush.msra.mxu0 %v734
    %1643 = vmatpush.msra.mxu0 %v726
    %1644 = vmatmul.f32.gmra.mxu0 %v1598
    %v1645 = vpop.f32.mrf.mxu0
    %v1646 = vadd.f32 %v1626, %v1645
    %1647 = vdwg.mxu0
    %1648 = vmatpush.msra.mxu0 %v719
    %1649 = vmatpush.msra.mxu0 %v711
    %1650 = vmatpush.msra.mxu0 %v703
    %1651 = vmatpush.msra.mxu0 %v695
    %1652 = vmatpush.msra.mxu0 %v687
    %1653 = vmatpush.msra.mxu0 %v679
    %1654 = vmatpush.msra.mxu0 %v671
    %1655 = vmatpush.msra.mxu0 %v663
    %1656 = vmatpush.msra.mxu0 %v655
    %1657 = vmatpush.msra.mxu0 %v647
    %1658 = vmatpush.msra.mxu0 %v639
    %1659 = vmatpush.msra.mxu0 %v631
    %1660 = vmatpush.msra.mxu0 %v623
    %1661 = vmatpush.msra.mxu0 %v615
    %1662 = vmatpush.msra.mxu0 %v607
    %1663 = vmatpush.msra.mxu0 %v599
    %1664 = vmatmul.f32.gmra.mxu0 %v1597
    %v1665 = vpop.f32.mrf.mxu0
    %v1666 = vadd.f32 0.0, %v1665
    %1667 = vdwg.mxu0
    %1668 = vmatpush.msra.mxu0 %v847
    %1669 = vmatpush.msra.mxu0 %v839
    %1670 = vmatpush.msra.mxu0 %v831
    %1671 = vmatpush.msra.mxu0 %v823
    %1672 = vmatpush.msra.mxu0 %v815
    %1673 = vmatpush.msra.mxu0 %v807
    %1674 = vmatpush.msra.mxu0 %v799
    %1675 = vmatpush.msra.mxu0 %v791
    %1676 = vmatpush.msra.mxu0 %v783
    %1677 = vmatpush.msra.mxu0 %v775
    %1678 = vmatpush.msra.mxu0 %v767
    %1679 = vmatpush.msra.mxu0 %v759
    %1680 = vmatpush.msra.mxu0 %v751
    %1681 = vmatpush.msra.mxu0 %v743
    %1682 = vmatpush.msra.mxu0 %v735
    %1683 = vmatpush.msra.mxu0 %v727
    %1684 = vmatmul.f32.gmra.mxu0 %v1598
    %v1685 = vpop.f32.mrf.mxu0
    %v1686 = vadd.f32 %v1666, %v1685
    %1687 = vdwg.mxu0
    %1688 = vmatpush.msra.mxu0 %v720
    %1689 = vmatpush.msra.mxu0 %v712
    %1690 = vmatpush.msra.mxu0 %v704
    %1691 = vmatpush.msra.mxu0 %v696
    %1692 = vmatpush.msra.mxu0 %v688
    %1693 = vmatpush.msra.mxu0 %v680
    %1694 = vmatpush.msra.mxu0 %v672
    %1695 = vmatpush.msra.mxu0 %v664
    %1696 = vmatpush.msra.mxu0 %v656
    %1697 = vmatpush.msra.mxu0 %v648
    %1698 = vmatpush.msra.mxu0 %v640
    %1699 = vmatpush.msra.mxu0 %v632
    %1700 = vmatpush.msra.mxu0 %v624
    %1701 = vmatpush.msra.mxu0 %v616
    %1702 = vmatpush.msra.mxu0 %v608
    %1703 = vmatpush.msra.mxu0 %v600
    %1704 = vmatmul.f32.gmra.mxu0 %v1597
    %v1705 = vpop.f32.mrf.mxu0
    %v1706 = vadd.f32 0.0, %v1705
    %1707 = vdwg.mxu0
    %1708 = vmatpush.msra.mxu0 %v848
    %1709 = vmatpush.msra.mxu0 %v840
    %1710 = vmatpush.msra.mxu0 %v832
    %1711 = vmatpush.msra.mxu0 %v824
    %1712 = vmatpush.msra.mxu0 %v816
    %1713 = vmatpush.msra.mxu0 %v808
    %1714 = vmatpush.msra.mxu0 %v800
    %1715 = vmatpush.msra.mxu0 %v792
    %1716 = vmatpush.msra.mxu0 %v784
    %1717 = vmatpush.msra.mxu0 %v776
    %1718 = vmatpush.msra.mxu0 %v768
    %1719 = vmatpush.msra.mxu0 %v760
    %1720 = vmatpush.msra.mxu0 %v752
    %1721 = vmatpush.msra.mxu0 %v744
    %1722 = vmatpush.msra.mxu0 %v736
    %1723 = vmatpush.msra.mxu0 %v728
    %1724 = vmatmul.f32.gmra.mxu0 %v1598
    %v1725 = vpop.f32.mrf.mxu0
    %v1726 = vadd.f32 %v1706, %v1725
    %1727 = vdwg.mxu0
    %1728 = vmatpush.msra.mxu0 %v721
    %1729 = vmatpush.msra.mxu0 %v713
    %1730 = vmatpush.msra.mxu0 %v705
    %1731 = vmatpush.msra.mxu0 %v697
    %1732 = vmatpush.msra.mxu0 %v689
    %1733 = vmatpush.msra.mxu0 %v681
    %1734 = vmatpush.msra.mxu0 %v673
    %1735 = vmatpush.msra.mxu0 %v665
    %1736 = vmatpush.msra.mxu0 %v657
    %1737 = vmatpush.msra.mxu0 %v649
    %1738 = vmatpush.msra.mxu0 %v641
    %1739 = vmatpush.msra.mxu0 %v633
    %1740 = vmatpush.msra.mxu0 %v625
    %1741 = vmatpush.msra.mxu0 %v617
    %1742 = vmatpush.msra.mxu0 %v609
    %1743 = vmatpush.msra.mxu0 %v601
    %1744 = vmatmul.f32.gmra.mxu0 %v1597
    %v1745 = vpop.f32.mrf.mxu0
    %v1746 = vadd.f32 0.0, %v1745
    %1747 = vdwg.mxu0
    %1748 = vmatpush.msra.mxu0 %v849
    %1749 = vmatpush.msra.mxu0 %v841
    %1750 = vmatpush.msra.mxu0 %v833
    %1751 = vmatpush.msra.mxu0 %v825
    %1752 = vmatpush.msra.mxu0 %v817
    %1753 = vmatpush.msra.mxu0 %v809
    %1754 = vmatpush.msra.mxu0 %v801
    %1755 = vmatpush.msra.mxu0 %v793
    %1756 = vmatpush.msra.mxu0 %v785
    %1757 = vmatpush.msra.mxu0 %v777
    %1758 = vmatpush.msra.mxu0 %v769
    %1759 = vmatpush.msra.mxu0 %v761
    %1760 = vmatpush.msra.mxu0 %v753
    %1761 = vmatpush.msra.mxu0 %v745
    %1762 = vmatpush.msra.mxu0 %v737
    %1763 = vmatpush.msra.mxu0 %v729
    %1764 = vmatmul.f32.gmra.mxu0 %v1598
    %v1765 = vpop.f32.mrf.mxu0
    %v1766 = vadd.f32 %v1746, %v1765
    %1767 = vdwg.mxu0
    %1768 = vmatpush.msra.mxu0 %v722
    %1769 = vmatpush.msra.mxu0 %v714
    %1770 = vmatpush.msra.mxu0 %v706
    %1771 = vmatpush.msra.mxu0 %v698
    %1772 = vmatpush.msra.mxu0 %v690
    %1773 = vmatpush.msra.mxu0 %v682
    %1774 = vmatpush.msra.mxu0 %v674
    %1775 = vmatpush.msra.mxu0 %v666
    %1776 = vmatpush.msra.mxu0 %v658
    %1777 = vmatpush.msra.mxu0 %v650
    %1778 = vmatpush.msra.mxu0 %v642
    %1779 = vmatpush.msra.mxu0 %v634
    %1780 = vmatpush.msra.mxu0 %v626
    %1781 = vmatpush.msra.mxu0 %v618
    %1782 = vmatpush.msra.mxu0 %v610
    %1783 = vmatpush.msra.mxu0 %v602
    %1784 = vmatmul.f32.gmra.mxu0 %v1597
    %v1785 = vpop.f32.mrf.mxu0
    %v1786 = vadd.f32 0.0, %v1785
    %1787 = vdwg.mxu0
    %1788 = vmatpush.msra.mxu0 %v850
    %1789 = vmatpush.msra.mxu0 %v842
    %1790 = vmatpush.msra.mxu0 %v834
    %1791 = vmatpush.msra.mxu0 %v826
    %1792 = vmatpush.msra.mxu0 %v818
    %1793 = vmatpush.msra.mxu0 %v810
    %1794 = vmatpush.msra.mxu0 %v802
    %1795 = vmatpush.msra.mxu0 %v794
    %1796 = vmatpush.msra.mxu0 %v786
    %1797 = vmatpush.msra.mxu0 %v778
    %1798 = vmatpush.msra.mxu0 %v770
    %1799 = vmatpush.msra.mxu0 %v762
    %1800 = vmatpush.msra.mxu0 %v754
    %1801 = vmatpush.msra.mxu0 %v746
    %1802 = vmatpush.msra.mxu0 %v738
    %1803 = vmatpush.msra.mxu0 %v730
    %1804 = vmatmul.f32.gmra.mxu0 %v1598
    %v1805 = vpop.f32.mrf.mxu0
    %v1806 = vadd.f32 %v1786, %v1805
    %1807 = vdwg.mxu0
    %1808 = vmatpush.msra.mxu0 %v723
    %1809 = vmatpush.msra.mxu0 %v715
    %1810 = vmatpush.msra.mxu0 %v707
    %1811 = vmatpush.msra.mxu0 %v699
    %1812 = vmatpush.msra.mxu0 %v691
    %1813 = vmatpush.msra.mxu0 %v683
    %1814 = vmatpush.msra.mxu0 %v675
    %1815 = vmatpush.msra.mxu0 %v667
    %1816 = vmatpush.msra.mxu0 %v659
    %1817 = vmatpush.msra.mxu0 %v651
    %1818 = vmatpush.msra.mxu0 %v643
    %1819 = vmatpush.msra.mxu0 %v635
    %1820 = vmatpush.msra.mxu0 %v627
    %1821 = vmatpush.msra.mxu0 %v619
    %1822 = vmatpush.msra.mxu0 %v611
    %1823 = vmatpush.msra.mxu0 %v603
    %1824 = vmatmul.f32.gmra.mxu0 %v1597
    %v1825 = vpop.f32.mrf.mxu0
    %v1826 = vadd.f32 0.0, %v1825
    %1827 = vdwg.mxu0
    %1828 = vmatpush.msra.mxu0 %v851
    %1829 = vmatpush.msra.mxu0 %v843
    %1830 = vmatpush.msra.mxu0 %v835
    %1831 = vmatpush.msra.mxu0 %v827
    %1832 = vmatpush.msra.mxu0 %v819
    %1833 = vmatpush.msra.mxu0 %v811
    %1834 = vmatpush.msra.mxu0 %v803
    %1835 = vmatpush.msra.mxu0 %v795
    %1836 = vmatpush.msra.mxu0 %v787
    %1837 = vmatpush.msra.mxu0 %v779
    %1838 = vmatpush.msra.mxu0 %v771
    %1839 = vmatpush.msra.mxu0 %v763
    %1840 = vmatpush.msra.mxu0 %v755
    %1841 = vmatpush.msra.mxu0 %v747
    %1842 = vmatpush.msra.mxu0 %v739
    %1843 = vmatpush.msra.mxu0 %v731
    %1844 = vmatmul.f32.gmra.mxu0 %v1598
    %v1845 = vpop.f32.mrf.mxu0
    %v1846 = vadd.f32 %v1826, %v1845
    %1847 = vdwg.mxu0
    %1848 = vmatpush.msra.mxu0 %v724
    %1849 = vmatpush.msra.mxu0 %v716
    %1850 = vmatpush.msra.mxu0 %v708
    %1851 = vmatpush.msra.mxu0 %v700
    %1852 = vmatpush.msra.mxu0 %v692
    %1853 = vmatpush.msra.mxu0 %v684
    %1854 = vmatpush.msra.mxu0 %v676
    %1855 = vmatpush.msra.mxu0 %v668
    %1856 = vmatpush.msra.mxu0 %v660
    %1857 = vmatpush.msra.mxu0 %v652
    %1858 = vmatpush.msra.mxu0 %v644
    %1859 = vmatpush.msra.mxu0 %v636
    %1860 = vmatpush.msra.mxu0 %v628
    %1861 = vmatpush.msra.mxu0 %v620
    %1862 = vmatpush.msra.mxu0 %v612
    %1863 = vmatpush.msra.mxu0 %v604
    %1864 = vmatmul.f32.gmra.mxu0 %v1597
    %v1865 = vpop.f32.mrf.mxu0
    %v1866 = vadd.f32 0.0, %v1865
    %1867 = vdwg.mxu0
    %1868 = vmatpush.msra.mxu0 %v852
    %1869 = vmatpush.msra.mxu0 %v844
    %1870 = vmatpush.msra.mxu0 %v836
    %1871 = vmatpush.msra.mxu0 %v828
    %1872 = vmatpush.msra.mxu0 %v820
    %1873 = vmatpush.msra.mxu0 %v812
    %1874 = vmatpush.msra.mxu0 %v804
    %1875 = vmatpush.msra.mxu0 %v796
    %1876 = vmatpush.msra.mxu0 %v788
    %1877 = vmatpush.msra.mxu0 %v780
    %1878 = vmatpush.msra.mxu0 %v772
    %1879 = vmatpush.msra.mxu0 %v764
    %1880 = vmatpush.msra.mxu0 %v756
    %1881 = vmatpush.msra.mxu0 %v748
    %1882 = vmatpush.msra.mxu0 %v740
    %1883 = vmatpush.msra.mxu0 %v732
    %1884 = vmatmul.f32.gmra.mxu0 %v1598
    %v1885 = vpop.f32.mrf.mxu0
    %v1886 = vadd.f32 %v1866, %v1885
    %1887 = vdwg.mxu0
    %1888 = vmatpush.msra.mxu0 %v725
    %1889 = vmatpush.msra.mxu0 %v717
    %1890 = vmatpush.msra.mxu0 %v709
    %1891 = vmatpush.msra.mxu0 %v701
    %1892 = vmatpush.msra.mxu0 %v693
    %1893 = vmatpush.msra.mxu0 %v685
    %1894 = vmatpush.msra.mxu0 %v677
    %1895 = vmatpush.msra.mxu0 %v669
    %1896 = vmatpush.msra.mxu0 %v661
    %1897 = vmatpush.msra.mxu0 %v653
    %1898 = vmatpush.msra.mxu0 %v645
    %1899 = vmatpush.msra.mxu0 %v637
    %1900 = vmatpush.msra.mxu0 %v629
    %1901 = vmatpush.msra.mxu0 %v621
    %1902 = vmatpush.msra.mxu0 %v613
    %1903 = vmatpush.msra.mxu0 %v605
    %1904 = vmatmul.f32.gmra.mxu0 %v1597
    %v1905 = vpop.f32.mrf.mxu0
    %v1906 = vadd.f32 0.0, %v1905
    %1907 = vdwg.mxu0
    %1908 = vmatpush.msra.mxu0 %v853
    %1909 = vmatpush.msra.mxu0 %v845
    %1910 = vmatpush.msra.mxu0 %v837
    %1911 = vmatpush.msra.mxu0 %v829
    %1912 = vmatpush.msra.mxu0 %v821
    %1913 = vmatpush.msra.mxu0 %v813
    %1914 = vmatpush.msra.mxu0 %v805
    %1915 = vmatpush.msra.mxu0 %v797
    %1916 = vmatpush.msra.mxu0 %v789
    %1917 = vmatpush.msra.mxu0 %v781
    %1918 = vmatpush.msra.mxu0 %v773
    %1919 = vmatpush.msra.mxu0 %v765
    %1920 = vmatpush.msra.mxu0 %v757
    %1921 = vmatpush.msra.mxu0 %v749
    %1922 = vmatpush.msra.mxu0 %v741
    %1923 = vmatpush.msra.mxu0 %v733
    %1924 = vmatmul.f32.gmra.mxu0 %v1598
    %v1925 = vpop.f32.mrf.mxu0
    %v1926 = vadd.f32 %v1906, %v1925
    %1927 = vdwg.mxu0
    %v1928 = vadd.f32 %v1600, %v1646
    %v1929 = vadd.f32 %v1601, %v1686
    %v1930 = vadd.f32 %v1602, %v1726
    %v1931 = vadd.f32 %v1603, %v1766
    %v1932 = vadd.f32 %v1604, %v1806
    %v1933 = vadd.f32 %v1605, %v1846
    %v1934 = vadd.f32 %v1606, %v1886
    %v1935 = vadd.f32 %v1607, %v1926
    %v1936 = vmul.f32 %v1928, 0.5
    %v1937 = vmul.f32 %v1929, 0.5
    %v1938 = vtanh.pop %v1936
    %v1939 = vtanh.pop %v1937
    %v1940 = vmul.f32 %v1938, 0.5
    %v1941 = vmul.f32 %v1939, 0.5
    %v1942 = vadd.f32 %v1940, 0.5
    %v1943 = vadd.f32 %v1941, 0.5
    %v1944 = vmul.f32 %v1930, 0.5
    %v1945 = vmul.f32 %v1931, 0.5
    %v1946 = vtanh.pop %v1944
    %v1947 = vtanh.pop %v1945
    %v1948 = vmul.f32 %v1946, 0.5
    %v1949 = vmul.f32 %v1947, 0.5
    %v1950 = vadd.f32 %v1948, 0.5
    %v1951 = vadd.f32 %v1949, 0.5
    %v1952 = vtanh.pop %v1932
    %v1953 = vtanh.pop %v1933
    %v1954 = vmul.f32 %v1934, 0.5
    %v1955 = vmul.f32 %v1935, 0.5
    %v1956 = vtanh.pop %v1954
    %v1957 = vtanh.pop %v1955
    %v1958 = vmul.f32 %v1956, 0.5
    %v1959 = vmul.f32 %v1957, 0.5
    %v1960 = vadd.f32 %v1958, 0.5
    %v1961 = vadd.f32 %v1959, 0.5
    %v1962 = vmul.f32 %v1950, %v1593
    %v1963 = vmul.f32 %v1951, %v1594
    %v1964 = vmul.f32 %v1942, %v1952
    %v1965 = vmul.f32 %v1943, %v1953
    %v1966 = vadd.f32 %v1962, %v1964
    %v1967 = vadd.f32 %v1963, %v1965
    %v1968 = vtanh.pop %v1966
    %v1969 = vtanh.pop %v1967
    %v1970 = vmul.f32 %v1960, %v1968
    %v1971 = vmul.f32 %v1961, %v1969
    %s1972 = scalar_lea.vmem [#allocation2], 192
    %v1973 = vld [vmem:[%s1972] sm:$0xff]
    %v1974 = vld [vmem:[%s1972 + $0x8] sm:$0xff]
    %v1975 = vld [vmem:[%s1972 + $0x10] sm:$0xff]
    %v1976 = vld [vmem:[%s1972 + $0x18] sm:$0xff]
    %v1977 = vld [vmem:[%s1972 + $0x20] sm:$0xff]
    %v1978 = vld [vmem:[%s1972 + $0x28] sm:$0xff]
    %v1979 = vld [vmem:[%s1972 + $0x30] sm:$0xff]
    %v1980 = vld [vmem:[%s1972 + $0x38] sm:$0xff]
    %1981 = vmatpush.msra.mxu0 %v718
    %1982 = vmatpush.msra.mxu0 %v710
    %1983 = vmatpush.msra.mxu0 %v702
    %1984 = vmatpush.msra.mxu0 %v694
    %1985 = vmatpush.msra.mxu0 %v686
    %1986 = vmatpush.msra.mxu0 %v678
    %1987 = vmatpush.msra.mxu0 %v670
    %1988 = vmatpush.msra.mxu0 %v662
    %1989 = vmatpush.msra.mxu0 %v654
    %1990 = vmatpush.msra.mxu0 %v646
    %1991 = vmatpush.msra.mxu0 %v638
    %1992 = vmatpush.msra.mxu0 %v630
    %1993 = vmatpush.msra.mxu0 %v622
    %1994 = vmatpush.msra.mxu0 %v614
    %1995 = vmatpush.msra.mxu0 %v606
    %1996 = vmatpush.msra.mxu0 %v598
    %1997 = vmatmul.f32.gmra.mxu0 %v1970
    %v1998 = vpop.f32.mrf.mxu0
    %v1999 = vadd.f32 0.0, %v1998
    %2000 = vdwg.mxu0
    %2001 = vmatpush.msra.mxu0 %v846
    %2002 = vmatpush.msra.mxu0 %v838
    %2003 = vmatpush.msra.mxu0 %v830
    %2004 = vmatpush.msra.mxu0 %v822
    %2005 = vmatpush.msra.mxu0 %v814
    %2006 = vmatpush.msra.mxu0 %v806
    %2007 = vmatpush.msra.mxu0 %v798
    %2008 = vmatpush.msra.mxu0 %v790
    %2009 = vmatpush.msra.mxu0 %v782
    %2010 = vmatpush.msra.mxu0 %v774
    %2011 = vmatpush.msra.mxu0 %v766
    %2012 = vmatpush.msra.mxu0 %v758
    %2013 = vmatpush.msra.mxu0 %v750
    %2014 = vmatpush.msra.mxu0 %v742
    %2015 = vmatpush.msra.mxu0 %v734
    %2016 = vmatpush.msra.mxu0 %v726
    %2017 = vmatmul.f32.gmra.mxu0 %v1971
    %v2018 = vpop.f32.mrf.mxu0
    %v2019 = vadd.f32 %v1999, %v2018
    %2020 = vdwg.mxu0
    %2021 = vmatpush.msra.mxu0 %v719
    %2022 = vmatpush.msra.mxu0 %v711
    %2023 = vmatpush.msra.mxu0 %v703
    %2024 = vmatpush.msra.mxu0 %v695
    %2025 = vmatpush.msra.mxu0 %v687
    %2026 = vmatpush.msra.mxu0 %v679
    %2027 = vmatpush.msra.mxu0 %v671
    %2028 = vmatpush.msra.mxu0 %v663
    %2029 = vmatpush.msra.mxu0 %v655
    %2030 = vmatpush.msra.mxu0 %v647
    %2031 = vmatpush.msra.mxu0 %v639
    %2032 = vmatpush.msra.mxu0 %v631
    %2033 = vmatpush.msra.mxu0 %v623
    %2034 = vmatpush.msra.mxu0 %v615
    %2035 = vmatpush.msra.mxu0 %v607
    %2036 = vmatpush.msra.mxu0 %v599
    %2037 = vmatmul.f32.gmra.mxu0 %v1970
    %v2038 = vpop.f32.mrf.mxu0
    %v2039 = vadd.f32 0.0, %v2038
    %2040 = vdwg.mxu0
    %2041 = vmatpush.msra.mxu0 %v847
    %2042 = vmatpush.msra.mxu0 %v839
    %2043 = vmatpush.msra.mxu0 %v831
    %2044 = vmatpush.msra.mxu0 %v823
    %2045 = vmatpush.msra.mxu0 %v815
    %2046 = vmatpush.msra.mxu0 %v807
    %2047 = vmatpush.msra.mxu0 %v799
    %2048 = vmatpush.msra.mxu0 %v791
    %2049 = vmatpush.msra.mxu0 %v783
    %2050 = vmatpush.msra.mxu0 %v775
    %2051 = vmatpush.msra.mxu0 %v767
    %2052 = vmatpush.msra.mxu0 %v759
    %2053 = vmatpush.msra.mxu0 %v751
    %2054 = vmatpush.msra.mxu0 %v743
    %2055 = vmatpush.msra.mxu0 %v735
    %2056 = vmatpush.msra.mxu0 %v727
    %2057 = vmatmul.f32.gmra.mxu0 %v1971
    %v2058 = vpop.f32.mrf.mxu0
    %v2059 = vadd.f32 %v2039, %v2058
    %2060 = vdwg.mxu0
    %2061 = vmatpush.msra.mxu0 %v720
    %2062 = vmatpush.msra.mxu0 %v712
    %2063 = vmatpush.msra.mxu0 %v704
    %2064 = vmatpush.msra.mxu0 %v696
    %2065 = vmatpush.msra.mxu0 %v688
    %2066 = vmatpush.msra.mxu0 %v680
    %2067 = vmatpush.msra.mxu0 %v672
    %2068 = vmatpush.msra.mxu0 %v664
    %2069 = vmatpush.msra.mxu0 %v656
    %2070 = vmatpush.msra.mxu0 %v648
    %2071 = vmatpush.msra.mxu0 %v640
    %2072 = vmatpush.msra.mxu0 %v632
    %2073 = vmatpush.msra.mxu0 %v624
    %2074 = vmatpush.msra.mxu0 %v616
    %2075 = vmatpush.msra.mxu0 %v608
    %2076 = vmatpush.msra.mxu0 %v600
    %2077 = vmatmul.f32.gmra.mxu0 %v1970
    %v2078 = vpop.f32.mrf.mxu0
    %v2079 = vadd.f32 0.0, %v2078
    %2080 = vdwg.mxu0
    %2081 = vmatpush.msra.mxu0 %v848
    %2082 = vmatpush.msra.mxu0 %v840
    %2083 = vmatpush.msra.mxu0 %v832
    %2084 = vmatpush.msra.mxu0 %v824
    %2085 = vmatpush.msra.mxu0 %v816
    %2086 = vmatpush.msra.mxu0 %v808
    %2087 = vmatpush.msra.mxu0 %v800
    %2088 = vmatpush.msra.mxu0 %v792
    %2089 = vmatpush.msra.mxu0 %v784
    %2090 = vmatpush.msra.mxu0 %v776
    %2091 = vmatpush.msra.mxu0 %v768
    %2092 = vmatpush.msra.mxu0 %v760
    %2093 = vmatpush.msra.mxu0 %v752
    %2094 = vmatpush.msra.mxu0 %v744
    %2095 = vmatpush.msra.mxu0 %v736
    %2096 = vmatpush.msra.mxu0 %v728
    %2097 = vmatmul.f32.gmra.mxu0 %v1971
    %v2098 = vpop.f32.mrf.mxu0
    %v2099 = vadd.f32 %v2079, %v2098
    %2100 = vdwg.mxu0
    %2101 = vmatpush.msra.mxu0 %v721
    %2102 = vmatpush.msra.mxu0 %v713
    %2103 = vmatpush.msra.mxu0 %v705
    %2104 = vmatpush.msra.mxu0 %v697
    %2105 = vmatpush.msra.mxu0 %v689
    %2106 = vmatpush.msra.mxu0 %v681
    %2107 = vmatpush.msra.mxu0 %v673
    %2108 = vmatpush.msra.mxu0 %v665
    %2109 = vmatpush.msra.mxu0 %v657
    %2110 = vmatpush.msra.mxu0 %v649
    %2111 = vmatpush.msra.mxu0 %v641
    %2112 = vmatpush.msra.mxu0 %v633
    %2113 = vmatpush.msra.mxu0 %v625
    %2114 = vmatpush.msra.mxu0 %v617
    %2115 = vmatpush.msra.mxu0 %v609
    %2116 = vmatpush.msra.mxu0 %v601
    %2117 = vmatmul.f32.gmra.mxu0 %v1970
    %v2118 = vpop.f32.mrf.mxu0
    %v2119 = vadd.f32 0.0, %v2118
    %2120 = vdwg.mxu0
    %2121 = vmatpush.msra.mxu0 %v849
    %2122 = vmatpush.msra.mxu0 %v841
    %2123 = vmatpush.msra.mxu0 %v833
    %2124 = vmatpush.msra.mxu0 %v825
    %2125 = vmatpush.msra.mxu0 %v817
    %2126 = vmatpush.msra.mxu0 %v809
    %2127 = vmatpush.msra.mxu0 %v801
    %2128 = vmatpush.msra.mxu0 %v793
    %2129 = vmatpush.msra.mxu0 %v785
    %2130 = vmatpush.msra.mxu0 %v777
    %2131 = vmatpush.msra.mxu0 %v769
    %2132 = vmatpush.msra.mxu0 %v761
    %2133 = vmatpush.msra.mxu0 %v753
    %2134 = vmatpush.msra.mxu0 %v745
    %2135 = vmatpush.msra.mxu0 %v737
    %2136 = vmatpush.msra.mxu0 %v729
    %2137 = vmatmul.f32.gmra.mxu0 %v1971
    %v2138 = vpop.f32.mrf.mxu0
    %v2139 = vadd.f32 %v2119, %v2138
    %2140 = vdwg.mxu0
    %2141 = vmatpush.msra.mxu0 %v722
    %2142 = vmatpush.msra.mxu0 %v714
    %2143 = vmatpush.msra.mxu0 %v706
    %2144 = vmatpush.msra.mxu0 %v698
    %2145 = vmatpush.msra.mxu0 %v690
    %2146 = vmatpush.msra.mxu0 %v682
    %2147 = vmatpush.msra.mxu0 %v674
    %2148 = vmatpush.msra.mxu0 %v666
    %2149 = vmatpush.msra.mxu0 %v658
    %2150 = vmatpush.msra.mxu0 %v650
    %2151 = vmatpush.msra.mxu0 %v642
    %2152 = vmatpush.msra.mxu0 %v634
    %2153 = vmatpush.msra.mxu0 %v626
    %2154 = vmatpush.msra.mxu0 %v618
    %2155 = vmatpush.msra.mxu0 %v610
    %2156 = vmatpush.msra.mxu0 %v602
    %2157 = vmatmul.f32.gmra.mxu0 %v1970
    %v2158 = vpop.f32.mrf.mxu0
    %v2159 = vadd.f32 0.0, %v2158
    %2160 = vdwg.mxu0
    %2161 = vmatpush.msra.mxu0 %v850
    %2162 = vmatpush.msra.mxu0 %v842
    %2163 = vmatpush.msra.mxu0 %v834
    %2164 = vmatpush.msra.mxu0 %v826
    %2165 = vmatpush.msra.mxu0 %v818
    %2166 = vmatpush.msra.mxu0 %v810
    %2167 = vmatpush.msra.mxu0 %v802
    %2168 = vmatpush.msra.mxu0 %v794
    %2169 = vmatpush.msra.mxu0 %v786
    %2170 = vmatpush.msra.mxu0 %v778
    %2171 = vmatpush.msra.mxu0 %v770
    %2172 = vmatpush.msra.mxu0 %v762
    %2173 = vmatpush.msra.mxu0 %v754
    %2174 = vmatpush.msra.mxu0 %v746
    %2175 = vmatpush.msra.mxu0 %v738
    %2176 = vmatpush.msra.mxu0 %v730
    %2177 = vmatmul.f32.gmra.mxu0 %v1971
    %v2178 = vpop.f32.mrf.mxu0
    %v2179 = vadd.f32 %v2159, %v2178
    %2180 = vdwg.mxu0
    %2181 = vmatpush.msra.mxu0 %v723
    %2182 = vmatpush.msra.mxu0 %v715
    %2183 = vmatpush.msra.mxu0 %v707
    %2184 = vmatpush.msra.mxu0 %v699
    %2185 = vmatpush.msra.mxu0 %v691
    %2186 = vmatpush.msra.mxu0 %v683
    %2187 = vmatpush.msra.mxu0 %v675
    %2188 = vmatpush.msra.mxu0 %v667
    %2189 = vmatpush.msra.mxu0 %v659
    %2190 = vmatpush.msra.mxu0 %v651
    %2191 = vmatpush.msra.mxu0 %v643
    %2192 = vmatpush.msra.mxu0 %v635
    %2193 = vmatpush.msra.mxu0 %v627
    %2194 = vmatpush.msra.mxu0 %v619
    %2195 = vmatpush.msra.mxu0 %v611
    %2196 = vmatpush.msra.mxu0 %v603
    %2197 = vmatmul.f32.gmra.mxu0 %v1970
    %v2198 = vpop.f32.mrf.mxu0
    %v2199 = vadd.f32 0.0, %v2198
    %2200 = vdwg.mxu0
    %2201 = vmatpush.msra.mxu0 %v851
    %2202 = vmatpush.msra.mxu0 %v843
    %2203 = vmatpush.msra.mxu0 %v835
    %2204 = vmatpush.msra.mxu0 %v827
    %2205 = vmatpush.msra.mxu0 %v819
    %2206 = vmatpush.msra.mxu0 %v811
    %2207 = vmatpush.msra.mxu0 %v803
    %2208 = vmatpush.msra.mxu0 %v795
    %2209 = vmatpush.msra.mxu0 %v787
    %2210 = vmatpush.msra.mxu0 %v779
    %2211 = vmatpush.msra.mxu0 %v771
    %2212 = vmatpush.msra.mxu0 %v763
    %2213 = vmatpush.msra.mxu0 %v755
    %2214 = vmatpush.msra.mxu0 %v747
    %2215 = vmatpush.msra.mxu0 %v739
    %2216 = vmatpush.msra.mxu0 %v731
    %2217 = vmatmul.f32.gmra.mxu0 %v1971
    %v2218 = vpop.f32.mrf.mxu0
    %v2219 = vadd.f32 %v2199, %v2218
    %2220 = vdwg.mxu0
    %2221 = vmatpush.msra.mxu0 %v724
    %2222 = vmatpush.msra.mxu0 %v716
    %2223 = vmatpush.msra.mxu0 %v708
    %2224 = vmatpush.msra.mxu0 %v700
    %2225 = vmatpush.msra.mxu0 %v692
    %2226 = vmatpush.msra.mxu0 %v684
    %2227 = vmatpush.msra.mxu0 %v676
    %2228 = vmatpush.msra.mxu0 %v668
    %2229 = vmatpush.msra.mxu0 %v660
    %2230 = vmatpush.msra.mxu0 %v652
    %2231 = vmatpush.msra.mxu0 %v644
    %2232 = vmatpush.msra.mxu0 %v636
    %2233 = vmatpush.msra.mxu0 %v628
    %2234 = vmatpush.msra.mxu0 %v620
    %2235 = vmatpush.msra.mxu0 %v612
    %2236 = vmatpush.msra.mxu0 %v604
    %2237 = vmatmul.f32.gmra.mxu0 %v1970
    %v2238 = vpop.f32.mrf.mxu0
    %v2239 = vadd.f32 0.0, %v2238
    %2240 = vdwg.mxu0
    %2241 = vmatpush.msra.mxu0 %v852
    %2242 = vmatpush.msra.mxu0 %v844
    %2243 = vmatpush.msra.mxu0 %v836
    %2244 = vmatpush.msra.mxu0 %v828
    %2245 = vmatpush.msra.mxu0 %v820
    %2246 = vmatpush.msra.mxu0 %v812
    %2247 = vmatpush.msra.mxu0 %v804
    %2248 = vmatpush.msra.mxu0 %v796
    %2249 = vmatpush.msra.mxu0 %v788
    %2250 = vmatpush.msra.mxu0 %v780
    %2251 = vmatpush.msra.mxu0 %v772
    %2252 = vmatpush.msra.mxu0 %v764
    %2253 = vmatpush.msra.mxu0 %v756
    %2254 = vmatpush.msra.mxu0 %v748
    %2255 = vmatpush.msra.mxu0 %v740
    %2256 = vmatpush.msra.mxu0 %v732
    %2257 = vmatmul.f32.gmra.mxu0 %v1971
    %v2258 = vpop.f32.mrf.mxu0
    %v2259 = vadd.f32 %v2239, %v2258
    %2260 = vdwg.mxu0
    %2261 = vmatpush.msra.mxu0 %v725
    %2262 = vmatpush.msra.mxu0 %v717
    %2263 = vmatpush.msra.mxu0 %v709
    %2264 = vmatpush.msra.mxu0 %v701
    %2265 = vmatpush.msra.mxu0 %v693
    %2266 = vmatpush.msra.mxu0 %v685
    %2267 = vmatpush.msra.mxu0 %v677
    %2268 = vmatpush.msra.mxu0 %v669
    %2269 = vmatpush.msra.mxu0 %v661
    %2270 = vmatpush.msra.mxu0 %v653
    %2271 = vmatpush.msra.mxu0 %v645
    %2272 = vmatpush.msra.mxu0 %v637
    %2273 = vmatpush.msra.mxu0 %v629
    %2274 = vmatpush.msra.mxu0 %v621
    %2275 = vmatpush.msra.mxu0 %v613
    %2276 = vmatpush.msra.mxu0 %v605
    %2277 = vmatmul.f32.gmra.mxu0 %v1970
    %v2278 = vpop.f32.mrf.mxu0
    %v2279 = vadd.f32 0.0, %v2278
    %2280 = vdwg.mxu0
    %2281 = vmatpush.msra.mxu0 %v853
    %2282 = vmatpush.msra.mxu0 %v845
    %2283 = vmatpush.msra.mxu0 %v837
    %2284 = vmatpush.msra.mxu0 %v829
    %2285 = vmatpush.msra.mxu0 %v821
    %2286 = vmatpush.msra.mxu0 %v813
    %2287 = vmatpush.msra.mxu0 %v805
    %2288 = vmatpush.msra.mxu0 %v797
    %2289 = vmatpush.msra.mxu0 %v789
    %2290 = vmatpush.msra.mxu0 %v781
    %2291 = vmatpush.msra.mxu0 %v773
    %2292 = vmatpush.msra.mxu0 %v765
    %2293 = vmatpush.msra.mxu0 %v757
    %2294 = vmatpush.msra.mxu0 %v749
    %2295 = vmatpush.msra.mxu0 %v741
    %2296 = vmatpush.msra.mxu0 %v733
    %2297 = vmatmul.f32.gmra.mxu0 %v1971
    %v2298 = vpop.f32.mrf.mxu0
    %v2299 = vadd.f32 %v2279, %v2298
    %2300 = vdwg.mxu0
    %v2301 = vadd.f32 %v1973, %v2019
    %v2302 = vadd.f32 %v1974, %v2059
    %v2303 = vadd.f32 %v1975, %v2099
    %v2304 = vadd.f32 %v1976, %v2139
    %v2305 = vadd.f32 %v1977, %v2179
    %v2306 = vadd.f32 %v1978, %v2219
    %v2307 = vadd.f32 %v1979, %v2259
    %v2308 = vadd.f32 %v1980, %v2299
    %v2309 = vmul.f32 %v2301, 0.5
    %v2310 = vmul.f32 %v2302, 0.5
    %v2311 = vtanh.pop %v2309
    %v2312 = vtanh.pop %v2310
    %v2313 = vmul.f32 %v2311, 0.5
    %v2314 = vmul.f32 %v2312, 0.5
    %v2315 = vadd.f32 %v2313, 0.5
    %v2316 = vadd.f32 %v2314, 0.5
    %v2317 = vmul.f32 %v2303, 0.5
    %v2318 = vmul.f32 %v2304, 0.5
    %v2319 = vtanh.pop %v2317
    %v2320 = vtanh.pop %v2318
    %v2321 = vmul.f32 %v2319, 0.5
    %v2322 = vmul.f32 %v2320, 0.5
    %v2323 = vadd.f32 %v2321, 0.5
    %v2324 = vadd.f32 %v2322, 0.5
    %v2325 = vtanh.pop %v2305
    %v2326 = vtanh.pop %v2306
    %v2327 = vmul.f32 %v2307, 0.5
    %v2328 = vmul.f32 %v2308, 0.5
    %v2329 = vtanh.pop %v2327
    %v2330 = vtanh.pop %v2328
    %v2331 = vmul.f32 %v2329, 0.5
    %v2332 = vmul.f32 %v2330, 0.5
    %v2333 = vadd.f32 %v2331, 0.5
    %v2334 = vadd.f32 %v2332, 0.5
    %v2335 = vmul.f32 %v2323, %v1966
    %v2336 = vmul.f32 %v2324, %v1967
    %v2337 = vmul.f32 %v2315, %v2325
    %v2338 = vmul.f32 %v2316, %v2326
    %v2339 = vadd.f32 %v2335, %v2337
    %v2340 = vadd.f32 %v2336, %v2338
    %v2341 = vtanh.pop %v2339
    %v2342 = vtanh.pop %v2340
    %v2343 = vmul.f32 %v2333, %v2341
    %v2344 = vmul.f32 %v2334, %v2342
    %s2345 = scalar_lea.vmem [#allocation2], 256
    %v2346 = vld [vmem:[%s2345] sm:$0xff]
    %v2347 = vld [vmem:[%s2345 + $0x8] sm:$0xff]
    %v2348 = vld [vmem:[%s2345 + $0x10] sm:$0xff]
    %v2349 = vld [vmem:[%s2345 + $0x18] sm:$0xff]
    %v2350 = vld [vmem:[%s2345 + $0x20] sm:$0xff]
    %v2351 = vld [vmem:[%s2345 + $0x28] sm:$0xff]
    %v2352 = vld [vmem:[%s2345 + $0x30] sm:$0xff]
    %v2353 = vld [vmem:[%s2345 + $0x38] sm:$0xff]
    %2354 = vmatpush.msra.mxu0 %v718
    %2355 = vmatpush.msra.mxu0 %v710
    %2356 = vmatpush.msra.mxu0 %v702
    %2357 = vmatpush.msra.mxu0 %v694
    %2358 = vmatpush.msra.mxu0 %v686
    %2359 = vmatpush.msra.mxu0 %v678
    %2360 = vmatpush.msra.mxu0 %v670
    %2361 = vmatpush.msra.mxu0 %v662
    %2362 = vmatpush.msra.mxu0 %v654
    %2363 = vmatpush.msra.mxu0 %v646
    %2364 = vmatpush.msra.mxu0 %v638
    %2365 = vmatpush.msra.mxu0 %v630
    %2366 = vmatpush.msra.mxu0 %v622
    %2367 = vmatpush.msra.mxu0 %v614
    %2368 = vmatpush.msra.mxu0 %v606
    %2369 = vmatpush.msra.mxu0 %v598
    %2370 = vmatmul.f32.gmra.mxu0 %v2343
    %v2371 = vpop.f32.mrf.mxu0
    %v2372 = vadd.f32 0.0, %v2371
    %2373 = vdwg.mxu0
    %2374 = vmatpush.msra.mxu0 %v846
    %2375 = vmatpush.msra.mxu0 %v838
    %2376 = vmatpush.msra.mxu0 %v830
    %2377 = vmatpush.msra.mxu0 %v822
    %2378 = vmatpush.msra.mxu0 %v814
    %2379 = vmatpush.msra.mxu0 %v806
    %2380 = vmatpush.msra.mxu0 %v798
    %2381 = vmatpush.msra.mxu0 %v790
    %2382 = vmatpush.msra.mxu0 %v782
    %2383 = vmatpush.msra.mxu0 %v774
    %2384 = vmatpush.msra.mxu0 %v766
    %2385 = vmatpush.msra.mxu0 %v758
    %2386 = vmatpush.msra.mxu0 %v750
    %2387 = vmatpush.msra.mxu0 %v742
    %2388 = vmatpush.msra.mxu0 %v734
    %2389 = vmatpush.msra.mxu0 %v726
    %2390 = vmatmul.f32.gmra.mxu0 %v2344
    %v2391 = vpop.f32.mrf.mxu0
    %v2392 = vadd.f32 %v2372, %v2391
    %2393 = vdwg.mxu0
    %2394 = vmatpush.msra.mxu0 %v719
    %2395 = vmatpush.msra.mxu0 %v711
    %2396 = vmatpush.msra.mxu0 %v703
    %2397 = vmatpush.msra.mxu0 %v695
    %2398 = vmatpush.msra.mxu0 %v687
    %2399 = vmatpush.msra.mxu0 %v679
    %2400 = vmatpush.msra.mxu0 %v671
    %2401 = vmatpush.msra.mxu0 %v663
    %2402 = vmatpush.msra.mxu0 %v655
    %2403 = vmatpush.msra.mxu0 %v647
    %2404 = vmatpush.msra.mxu0 %v639
    %2405 = vmatpush.msra.mxu0 %v631
    %2406 = vmatpush.msra.mxu0 %v623
    %2407 = vmatpush.msra.mxu0 %v615
    %2408 = vmatpush.msra.mxu0 %v607
    %2409 = vmatpush.msra.mxu0 %v599
    %2410 = vmatmul.f32.gmra.mxu0 %v2343
    %v2411 = vpop.f32.mrf.mxu0
    %v2412 = vadd.f32 0.0, %v2411
    %2413 = vdwg.mxu0
    %2414 = vmatpush.msra.mxu0 %v847
    %2415 = vmatpush.msra.mxu0 %v839
    %2416 = vmatpush.msra.mxu0 %v831
    %2417 = vmatpush.msra.mxu0 %v823
    %2418 = vmatpush.msra.mxu0 %v815
    %2419 = vmatpush.msra.mxu0 %v807
    %2420 = vmatpush.msra.mxu0 %v799
    %2421 = vmatpush.msra.mxu0 %v791
    %2422 = vmatpush.msra.mxu0 %v783
    %2423 = vmatpush.msra.mxu0 %v775
    %2424 = vmatpush.msra.mxu0 %v767
    %2425 = vmatpush.msra.mxu0 %v759
    %2426 = vmatpush.msra.mxu0 %v751
    %2427 = vmatpush.msra.mxu0 %v743
    %2428 = vmatpush.msra.mxu0 %v735
    %2429 = vmatpush.msra.mxu0 %v727
    %2430 = vmatmul.f32.gmra.mxu0 %v2344
    %v2431 = vpop.f32.mrf.mxu0
    %v2432 = vadd.f32 %v2412, %v2431
    %2433 = vdwg.mxu0
    %2434 = vmatpush.msra.mxu0 %v720
    %2435 = vmatpush.msra.mxu0 %v712
    %2436 = vmatpush.msra.mxu0 %v704
    %2437 = vmatpush.msra.mxu0 %v696
    %2438 = vmatpush.msra.mxu0 %v688
    %2439 = vmatpush.msra.mxu0 %v680
    %2440 = vmatpush.msra.mxu0 %v672
    %2441 = vmatpush.msra.mxu0 %v664
    %2442 = vmatpush.msra.mxu0 %v656
    %2443 = vmatpush.msra.mxu0 %v648
    %2444 = vmatpush.msra.mxu0 %v640
    %2445 = vmatpush.msra.mxu0 %v632
    %2446 = vmatpush.msra.mxu0 %v624
    %2447 = vmatpush.msra.mxu0 %v616
    %2448 = vmatpush.msra.mxu0 %v608
    %2449 = vmatpush.msra.mxu0 %v600
    %2450 = vmatmul.f32.gmra.mxu0 %v2343
    %v2451 = vpop.f32.mrf.mxu0
    %v2452 = vadd.f32 0.0, %v2451
    %2453 = vdwg.mxu0
    %2454 = vmatpush.msra.mxu0 %v848
    %2455 = vmatpush.msra.mxu0 %v840
    %2456 = vmatpush.msra.mxu0 %v832
    %2457 = vmatpush.msra.mxu0 %v824
    %2458 = vmatpush.msra.mxu0 %v816
    %2459 = vmatpush.msra.mxu0 %v808
    %2460 = vmatpush.msra.mxu0 %v800
    %2461 = vmatpush.msra.mxu0 %v792
    %2462 = vmatpush.msra.mxu0 %v784
    %2463 = vmatpush.msra.mxu0 %v776
    %2464 = vmatpush.msra.mxu0 %v768
    %2465 = vmatpush.msra.mxu0 %v760
    %2466 = vmatpush.msra.mxu0 %v752
    %2467 = vmatpush.msra.mxu0 %v744
    %2468 = vmatpush.msra.mxu0 %v736
    %2469 = vmatpush.msra.mxu0 %v728
    %2470 = vmatmul.f32.gmra.mxu0 %v2344
    %v2471 = vpop.f32.mrf.mxu0
    %v2472 = vadd.f32 %v2452, %v2471
    %2473 = vdwg.mxu0
    %2474 = vmatpush.msra.mxu0 %v721
    %2475 = vmatpush.msra.mxu0 %v713
    %2476 = vmatpush.msra.mxu0 %v705
    %2477 = vmatpush.msra.mxu0 %v697
    %2478 = vmatpush.msra.mxu0 %v689
    %2479 = vmatpush.msra.mxu0 %v681
    %2480 = vmatpush.msra.mxu0 %v673
    %2481 = vmatpush.msra.mxu0 %v665
    %2482 = vmatpush.msra.mxu0 %v657
    %2483 = vmatpush.msra.mxu0 %v649
    %2484 = vmatpush.msra.mxu0 %v641
    %2485 = vmatpush.msra.mxu0 %v633
    %2486 = vmatpush.msra.mxu0 %v625
    %2487 = vmatpush.msra.mxu0 %v617
    %2488 = vmatpush.msra.mxu0 %v609
    %2489 = vmatpush.msra.mxu0 %v601
    %2490 = vmatmul.f32.gmra.mxu0 %v2343
    %v2491 = vpop.f32.mrf.mxu0
    %v2492 = vadd.f32 0.0, %v2491
    %2493 = vdwg.mxu0
    %2494 = vmatpush.msra.mxu0 %v849
    %2495 = vmatpush.msra.mxu0 %v841
    %2496 = vmatpush.msra.mxu0 %v833
    %2497 = vmatpush.msra.mxu0 %v825
    %2498 = vmatpush.msra.mxu0 %v817
    %2499 = vmatpush.msra.mxu0 %v809
    %2500 = vmatpush.msra.mxu0 %v801
    %2501 = vmatpush.msra.mxu0 %v793
    %2502 = vmatpush.msra.mxu0 %v785
    %2503 = vmatpush.msra.mxu0 %v777
    %2504 = vmatpush.msra.mxu0 %v769
    %2505 = vmatpush.msra.mxu0 %v761
    %2506 = vmatpush.msra.mxu0 %v753
    %2507 = vmatpush.msra.mxu0 %v745
    %2508 = vmatpush.msra.mxu0 %v737
    %2509 = vmatpush.msra.mxu0 %v729
    %2510 = vmatmul.f32.gmra.mxu0 %v2344
    %v2511 = vpop.f32.mrf.mxu0
    %v2512 = vadd.f32 %v2492, %v2511
    %2513 = vdwg.mxu0
    %2514 = vmatpush.msra.mxu0 %v722
    %2515 = vmatpush.msra.mxu0 %v714
    %2516 = vmatpush.msra.mxu0 %v706
    %2517 = vmatpush.msra.mxu0 %v698
    %2518 = vmatpush.msra.mxu0 %v690
    %2519 = vmatpush.msra.mxu0 %v682
    %2520 = vmatpush.msra.mxu0 %v674
    %2521 = vmatpush.msra.mxu0 %v666
    %2522 = vmatpush.msra.mxu0 %v658
    %2523 = vmatpush.msra.mxu0 %v650
    %2524 = vmatpush.msra.mxu0 %v642
    %2525 = vmatpush.msra.mxu0 %v634
    %2526 = vmatpush.msra.mxu0 %v626
    %2527 = vmatpush.msra.mxu0 %v618
    %2528 = vmatpush.msra.mxu0 %v610
    %2529 = vmatpush.msra.mxu0 %v602
    %2530 = vmatmul.f32.gmra.mxu0 %v2343
    %v2531 = vpop.f32.mrf.mxu0
    %v2532 = vadd.f32 0.0, %v2531
    %2533 = vdwg.mxu0
    %2534 = vmatpush.msra.mxu0 %v850
    %2535 = vmatpush.msra.mxu0 %v842
    %2536 = vmatpush.msra.mxu0 %v834
    %2537 = vmatpush.msra.mxu0 %v826
    %2538 = vmatpush.msra.mxu0 %v818
    %2539 = vmatpush.msra.mxu0 %v810
    %2540 = vmatpush.msra.mxu0 %v802
    %2541 = vmatpush.msra.mxu0 %v794
    %2542 = vmatpush.msra.mxu0 %v786
    %2543 = vmatpush.msra.mxu0 %v778
    %2544 = vmatpush.msra.mxu0 %v770
    %2545 = vmatpush.msra.mxu0 %v762
    %2546 = vmatpush.msra.mxu0 %v754
    %2547 = vmatpush.msra.mxu0 %v746
    %2548 = vmatpush.msra.mxu0 %v738
    %2549 = vmatpush.msra.mxu0 %v730
    %2550 = vmatmul.f32.gmra.mxu0 %v2344
    %v2551 = vpop.f32.mrf.mxu0
    %v2552 = vadd.f32 %v2532, %v2551
    %2553 = vdwg.mxu0
    %2554 = vmatpush.msra.mxu0 %v723
    %2555 = vmatpush.msra.mxu0 %v715
    %2556 = vmatpush.msra.mxu0 %v707
    %2557 = vmatpush.msra.mxu0 %v699
    %2558 = vmatpush.msra.mxu0 %v691
    %2559 = vmatpush.msra.mxu0 %v683
    %2560 = vmatpush.msra.mxu0 %v675
    %2561 = vmatpush.msra.mxu0 %v667
    %2562 = vmatpush.msra.mxu0 %v659
    %2563 = vmatpush.msra.mxu0 %v651
    %2564 = vmatpush.msra.mxu0 %v643
    %2565 = vmatpush.msra.mxu0 %v635
    %2566 = vmatpush.msra.mxu0 %v627
    %2567 = vmatpush.msra.mxu0 %v619
    %2568 = vmatpush.msra.mxu0 %v611
    %2569 = vmatpush.msra.mxu0 %v603
    %2570 = vmatmul.f32.gmra.mxu0 %v2343
    %v2571 = vpop.f32.mrf.mxu0
    %v2572 = vadd.f32 0.0, %v2571
    %2573 = vdwg.mxu0
    %2574 = vmatpush.msra.mxu0 %v851
    %2575 = vmatpush.msra.mxu0 %v843
    %2576 = vmatpush.msra.mxu0 %v835
    %2577 = vmatpush.msra.mxu0 %v827
    %2578 = vmatpush.msra.mxu0 %v819
    %2579 = vmatpush.msra.mxu0 %v811
    %2580 = vmatpush.msra.mxu0 %v803
    %2581 = vmatpush.msra.mxu0 %v795
    %2582 = vmatpush.msra.mxu0 %v787
    %2583 = vmatpush.msra.mxu0 %v779
    %2584 = vmatpush.msra.mxu0 %v771
    %2585 = vmatpush.msra.mxu0 %v763
    %2586 = vmatpush.msra.mxu0 %v755
    %2587 = vmatpush.msra.mxu0 %v747
    %2588 = vmatpush.msra.mxu0 %v739
    %2589 = vmatpush.msra.mxu0 %v731
    %2590 = vmatmul.f32.gmra.mxu0 %v2344
    %v2591 = vpop.f32.mrf.mxu0
    %v2592 = vadd.f32 %v2572, %v2591
    %2593 = vdwg.mxu0
    %2594 = vmatpush.msra.mxu0 %v724
    %2595 = vmatpush.msra.mxu0 %v716
    %2596 = vmatpush.msra.mxu0 %v708
    %2597 = vmatpush.msra.mxu0 %v700
    %2598 = vmatpush.msra.mxu0 %v692
    %2599 = vmatpush.msra.mxu0 %v684
    %2600 = vmatpush.msra.mxu0 %v676
    %2601 = vmatpush.msra.mxu0 %v668
    %2602 = vmatpush.msra.mxu0 %v660
    %2603 = vmatpush.msra.mxu0 %v652
    %2604 = vmatpush.msra.mxu0 %v644
    %2605 = vmatpush.msra.mxu0 %v636
    %2606 = vmatpush.msra.mxu0 %v628
    %2607 = vmatpush.msra.mxu0 %v620
    %2608 = vmatpush.msra.mxu0 %v612
    %2609 = vmatpush.msra.mxu0 %v604
    %2610 = vmatmul.f32.gmra.mxu0 %v2343
    %v2611 = vpop.f32.mrf.mxu0
    %v2612 = vadd.f32 0.0, %v2611
    %2613 = vdwg.mxu0
    %2614 = vmatpush.msra.mxu0 %v852
    %2615 = vmatpush.msra.mxu0 %v844
    %2616 = vmatpush.msra.mxu0 %v836
    %2617 = vmatpush.msra.mxu0 %v828
    %2618 = vmatpush.msra.mxu0 %v820
    %2619 = vmatpush.msra.mxu0 %v812
    %2620 = vmatpush.msra.mxu0 %v804
    %2621 = vmatpush.msra.mxu0 %v796
    %2622 = vmatpush.msra.mxu0 %v788
    %2623 = vmatpush.msra.mxu0 %v780
    %2624 = vmatpush.msra.mxu0 %v772
    %2625 = vmatpush.msra.mxu0 %v764
    %2626 = vmatpush.msra.mxu0 %v756
    %2627 = vmatpush.msra.mxu0 %v748
    %2628 = vmatpush.msra.mxu0 %v740
    %2629 = vmatpush.msra.mxu0 %v732
    %2630 = vmatmul.f32.gmra.mxu0 %v2344
    %v2631 = vpop.f32.mrf.mxu0
    %v2632 = vadd.f32 %v2612, %v2631
    %2633 = vdwg.mxu0
    %2634 = vmatpush.msra.mxu0 %v725
    %2635 = vmatpush.msra.mxu0 %v717
    %2636 = vmatpush.msra.mxu0 %v709
    %2637 = vmatpush.msra.mxu0 %v701
    %2638 = vmatpush.msra.mxu0 %v693
    %2639 = vmatpush.msra.mxu0 %v685
    %2640 = vmatpush.msra.mxu0 %v677
    %2641 = vmatpush.msra.mxu0 %v669
    %2642 = vmatpush.msra.mxu0 %v661
    %2643 = vmatpush.msra.mxu0 %v653
    %2644 = vmatpush.msra.mxu0 %v645
    %2645 = vmatpush.msra.mxu0 %v637
    %2646 = vmatpush.msra.mxu0 %v629
    %2647 = vmatpush.msra.mxu0 %v621
    %2648 = vmatpush.msra.mxu0 %v613
    %2649 = vmatpush.msra.mxu0 %v605
    %2650 = vmatmul.f32.gmra.mxu0 %v2343
    %v2651 = vpop.f32.mrf.mxu0
    %v2652 = vadd.f32 0.0, %v2651
    %2653 = vdwg.mxu0
    %2654 = vmatpush.msra.mxu0 %v853
    %2655 = vmatpush.msra.mxu0 %v845
    %2656 = vmatpush.msra.mxu0 %v837
    %2657 = vmatpush.msra.mxu0 %v829
    %2658 = vmatpush.msra.mxu0 %v821
    %2659 = vmatpush.msra.mxu0 %v813
    %2660 = vmatpush.msra.mxu0 %v805
    %2661 = vmatpush.msra.mxu0 %v797
    %2662 = vmatpush.msra.mxu0 %v789
    %2663 = vmatpush.msra.mxu0 %v781
    %2664 = vmatpush.msra.mxu0 %v773
    %2665 = vmatpush.msra.mxu0 %v765
    %2666 = vmatpush.msra.mxu0 %v757
    %2667 = vmatpush.msra.mxu0 %v749
    %2668 = vmatpush.msra.mxu0 %v741
    %2669 = vmatpush.msra.mxu0 %v733
    %2670 = vmatmul.f32.gmra.mxu0 %v2344
    %v2671 = vpop.f32.mrf.mxu0
    %v2672 = vadd.f32 %v2652, %v2671
    %2673 = vdwg.mxu0
    %v2674 = vadd.f32 %v2346, %v2392
    %v2675 = vadd.f32 %v2347, %v2432
    %v2676 = vadd.f32 %v2348, %v2472
    %v2677 = vadd.f32 %v2349, %v2512
    %v2678 = vadd.f32 %v2350, %v2552
    %v2679 = vadd.f32 %v2351, %v2592
    %v2680 = vadd.f32 %v2352, %v2632
    %v2681 = vadd.f32 %v2353, %v2672
    %v2682 = vmul.f32 %v2674, 0.5
    %v2683 = vmul.f32 %v2675, 0.5
    %v2684 = vtanh.pop %v2682
    %v2685 = vtanh.pop %v2683
    %v2686 = vmul.f32 %v2684, 0.5
    %v2687 = vmul.f32 %v2685, 0.5
    %v2688 = vadd.f32 %v2686, 0.5
    %v2689 = vadd.f32 %v2687, 0.5
    %v2690 = vmul.f32 %v2676, 0.5
    %v2691 = vmul.f32 %v2677, 0.5
    %v2692 = vtanh.pop %v2690
    %v2693 = vtanh.pop %v2691
    %v2694 = vmul.f32 %v2692, 0.5
    %v2695 = vmul.f32 %v2693, 0.5
    %v2696 = vadd.f32 %v2694, 0.5
    %v2697 = vadd.f32 %v2695, 0.5
    %v2698 = vtanh.pop %v2678
    %v2699 = vtanh.pop %v2679
    %v2700 = vmul.f32 %v2680, 0.5
    %v2701 = vmul.f32 %v2681, 0.5
    %v2702 = vtanh.pop %v2700
    %v2703 = vtanh.pop %v2701
    %v2704 = vmul.f32 %v2702, 0.5
    %v2705 = vmul.f32 %v2703, 0.5
    %v2706 = vadd.f32 %v2704, 0.5
    %v2707 = vadd.f32 %v2705, 0.5
    %v2708 = vmul.f32 %v2696, %v2339
    %v2709 = vmul.f32 %v2697, %v2340
    %v2710 = vmul.f32 %v2688, %v2698
    %v2711 = vmul.f32 %v2689, %v2699
    %v2712 = vadd.f32 %v2708, %v2710
    %v2713 = vadd.f32 %v2709, %v2711
    %v2714 = vtanh.pop %v2712
    %v2715 = vtanh.pop %v2713
    %v2716 = vmul.f32 %v2706, %v2714
    %v2717 = vmul.f32 %v2707, %v2715
    %s2718 = scalar_lea.vmem [#allocation2], 320
    %v2719 = vld [vmem:[%s2718] sm:$0xff]
    %v2720 = vld [vmem:[%s2718 + $0x8] sm:$0xff]
    %v2721 = vld [vmem:[%s2718 + $0x10] sm:$0xff]
    %v2722 = vld [vmem:[%s2718 + $0x18] sm:$0xff]
    %v2723 = vld [vmem:[%s2718 + $0x20] sm:$0xff]
    %v2724 = vld [vmem:[%s2718 + $0x28] sm:$0xff]
    %v2725 = vld [vmem:[%s2718 + $0x30] sm:$0xff]
    %v2726 = vld [vmem:[%s2718 + $0x38] sm:$0xff]
    %2727 = vmatpush.msra.mxu0 %v718
    %2728 = vmatpush.msra.mxu0 %v710
    %2729 = vmatpush.msra.mxu0 %v702
    %2730 = vmatpush.msra.mxu0 %v694
    %2731 = vmatpush.msra.mxu0 %v686
    %2732 = vmatpush.msra.mxu0 %v678
    %2733 = vmatpush.msra.mxu0 %v670
    %2734 = vmatpush.msra.mxu0 %v662
    %2735 = vmatpush.msra.mxu0 %v654
    %2736 = vmatpush.msra.mxu0 %v646
    %2737 = vmatpush.msra.mxu0 %v638
    %2738 = vmatpush.msra.mxu0 %v630
    %2739 = vmatpush.msra.mxu0 %v622
    %2740 = vmatpush.msra.mxu0 %v614
    %2741 = vmatpush.msra.mxu0 %v606
    %2742 = vmatpush.msra.mxu0 %v598
    %2743 = vmatmul.f32.gmra.mxu0 %v2716
    %v2744 = vpop.f32.mrf.mxu0
    %v2745 = vadd.f32 0.0, %v2744
    %2746 = vdwg.mxu0
    %2747 = vmatpush.msra.mxu0 %v846
    %2748 = vmatpush.msra.mxu0 %v838
    %2749 = vmatpush.msra.mxu0 %v830
    %2750 = vmatpush.msra.mxu0 %v822
    %2751 = vmatpush.msra.mxu0 %v814
    %2752 = vmatpush.msra.mxu0 %v806
    %2753 = vmatpush.msra.mxu0 %v798
    %2754 = vmatpush.msra.mxu0 %v790
    %2755 = vmatpush.msra.mxu0 %v782
    %2756 = vmatpush.msra.mxu0 %v774
    %2757 = vmatpush.msra.mxu0 %v766
    %2758 = vmatpush.msra.mxu0 %v758
    %2759 = vmatpush.msra.mxu0 %v750
    %2760 = vmatpush.msra.mxu0 %v742
    %2761 = vmatpush.msra.mxu0 %v734
    %2762 = vmatpush.msra.mxu0 %v726
    %2763 = vmatmul.f32.gmra.mxu0 %v2717
    %v2764 = vpop.f32.mrf.mxu0
    %v2765 = vadd.f32 %v2745, %v2764
    %2766 = vdwg.mxu0
    %2767 = vmatpush.msra.mxu0 %v719
    %2768 = vmatpush.msra.mxu0 %v711
    %2769 = vmatpush.msra.mxu0 %v703
    %2770 = vmatpush.msra.mxu0 %v695
    %2771 = vmatpush.msra.mxu0 %v687
    %2772 = vmatpush.msra.mxu0 %v679
    %2773 = vmatpush.msra.mxu0 %v671
    %2774 = vmatpush.msra.mxu0 %v663
    %2775 = vmatpush.msra.mxu0 %v655
    %2776 = vmatpush.msra.mxu0 %v647
    %2777 = vmatpush.msra.mxu0 %v639
    %2778 = vmatpush.msra.mxu0 %v631
    %2779 = vmatpush.msra.mxu0 %v623
    %2780 = vmatpush.msra.mxu0 %v615
    %2781 = vmatpush.msra.mxu0 %v607
    %2782 = vmatpush.msra.mxu0 %v599
    %2783 = vmatmul.f32.gmra.mxu0 %v2716
    %v2784 = vpop.f32.mrf.mxu0
    %v2785 = vadd.f32 0.0, %v2784
    %2786 = vdwg.mxu0
    %2787 = vmatpush.msra.mxu0 %v847
    %2788 = vmatpush.msra.mxu0 %v839
    %2789 = vmatpush.msra.mxu0 %v831
    %2790 = vmatpush.msra.mxu0 %v823
    %2791 = vmatpush.msra.mxu0 %v815
    %2792 = vmatpush.msra.mxu0 %v807
    %2793 = vmatpush.msra.mxu0 %v799
    %2794 = vmatpush.msra.mxu0 %v791
    %2795 = vmatpush.msra.mxu0 %v783
    %2796 = vmatpush.msra.mxu0 %v775
    %2797 = vmatpush.msra.mxu0 %v767
    %2798 = vmatpush.msra.mxu0 %v759
    %2799 = vmatpush.msra.mxu0 %v751
    %2800 = vmatpush.msra.mxu0 %v743
    %2801 = vmatpush.msra.mxu0 %v735
    %2802 = vmatpush.msra.mxu0 %v727
    %2803 = vmatmul.f32.gmra.mxu0 %v2717
    %v2804 = vpop.f32.mrf.mxu0
    %v2805 = vadd.f32 %v2785, %v2804
    %2806 = vdwg.mxu0
    %2807 = vmatpush.msra.mxu0 %v720
    %2808 = vmatpush.msra.mxu0 %v712
    %2809 = vmatpush.msra.mxu0 %v704
    %2810 = vmatpush.msra.mxu0 %v696
    %2811 = vmatpush.msra.mxu0 %v688
    %2812 = vmatpush.msra.mxu0 %v680
    %2813 = vmatpush.msra.mxu0 %v672
    %2814 = vmatpush.msra.mxu0 %v664
    %2815 = vmatpush.msra.mxu0 %v656
    %2816 = vmatpush.msra.mxu0 %v648
    %2817 = vmatpush.msra.mxu0 %v640
    %2818 = vmatpush.msra.mxu0 %v632
    %2819 = vmatpush.msra.mxu0 %v624
    %2820 = vmatpush.msra.mxu0 %v616
    %2821 = vmatpush.msra.mxu0 %v608
    %2822 = vmatpush.msra.mxu0 %v600
    %2823 = vmatmul.f32.gmra.mxu0 %v2716
    %v2824 = vpop.f32.mrf.mxu0
    %v2825 = vadd.f32 0.0, %v2824
    %2826 = vdwg.mxu0
    %2827 = vmatpush.msra.mxu0 %v848
    %2828 = vmatpush.msra.mxu0 %v840
    %2829 = vmatpush.msra.mxu0 %v832
    %2830 = vmatpush.msra.mxu0 %v824
    %2831 = vmatpush.msra.mxu0 %v816
    %2832 = vmatpush.msra.mxu0 %v808
    %2833 = vmatpush.msra.mxu0 %v800
    %2834 = vmatpush.msra.mxu0 %v792
    %2835 = vmatpush.msra.mxu0 %v784
    %2836 = vmatpush.msra.mxu0 %v776
    %2837 = vmatpush.msra.mxu0 %v768
    %2838 = vmatpush.msra.mxu0 %v760
    %2839 = vmatpush.msra.mxu0 %v752
    %2840 = vmatpush.msra.mxu0 %v744
    %2841 = vmatpush.msra.mxu0 %v736
    %2842 = vmatpush.msra.mxu0 %v728
    %2843 = vmatmul.f32.gmra.mxu0 %v2717
    %v2844 = vpop.f32.mrf.mxu0
    %v2845 = vadd.f32 %v2825, %v2844
    %2846 = vdwg.mxu0
    %2847 = vmatpush.msra.mxu0 %v721
    %2848 = vmatpush.msra.mxu0 %v713
    %2849 = vmatpush.msra.mxu0 %v705
    %2850 = vmatpush.msra.mxu0 %v697
    %2851 = vmatpush.msra.mxu0 %v689
    %2852 = vmatpush.msra.mxu0 %v681
    %2853 = vmatpush.msra.mxu0 %v673
    %2854 = vmatpush.msra.mxu0 %v665
    %2855 = vmatpush.msra.mxu0 %v657
    %2856 = vmatpush.msra.mxu0 %v649
    %2857 = vmatpush.msra.mxu0 %v641
    %2858 = vmatpush.msra.mxu0 %v633
    %2859 = vmatpush.msra.mxu0 %v625
    %2860 = vmatpush.msra.mxu0 %v617
    %2861 = vmatpush.msra.mxu0 %v609
    %2862 = vmatpush.msra.mxu0 %v601
    %2863 = vmatmul.f32.gmra.mxu0 %v2716
    %v2864 = vpop.f32.mrf.mxu0
    %v2865 = vadd.f32 0.0, %v2864
    %2866 = vdwg.mxu0
    %2867 = vmatpush.msra.mxu0 %v849
    %2868 = vmatpush.msra.mxu0 %v841
    %2869 = vmatpush.msra.mxu0 %v833
    %2870 = vmatpush.msra.mxu0 %v825
    %2871 = vmatpush.msra.mxu0 %v817
    %2872 = vmatpush.msra.mxu0 %v809
    %2873 = vmatpush.msra.mxu0 %v801
    %2874 = vmatpush.msra.mxu0 %v793
    %2875 = vmatpush.msra.mxu0 %v785
    %2876 = vmatpush.msra.mxu0 %v777
    %2877 = vmatpush.msra.mxu0 %v769
    %2878 = vmatpush.msra.mxu0 %v761
    %2879 = vmatpush.msra.mxu0 %v753
    %2880 = vmatpush.msra.mxu0 %v745
    %2881 = vmatpush.msra.mxu0 %v737
    %2882 = vmatpush.msra.mxu0 %v729
    %2883 = vmatmul.f32.gmra.mxu0 %v2717
    %v2884 = vpop.f32.mrf.mxu0
    %v2885 = vadd.f32 %v2865, %v2884
    %2886 = vdwg.mxu0
    %2887 = vmatpush.msra.mxu0 %v722
    %2888 = vmatpush.msra.mxu0 %v714
    %2889 = vmatpush.msra.mxu0 %v706
    %2890 = vmatpush.msra.mxu0 %v698
    %2891 = vmatpush.msra.mxu0 %v690
    %2892 = vmatpush.msra.mxu0 %v682
    %2893 = vmatpush.msra.mxu0 %v674
    %2894 = vmatpush.msra.mxu0 %v666
    %2895 = vmatpush.msra.mxu0 %v658
    %2896 = vmatpush.msra.mxu0 %v650
    %2897 = vmatpush.msra.mxu0 %v642
    %2898 = vmatpush.msra.mxu0 %v634
    %2899 = vmatpush.msra.mxu0 %v626
    %2900 = vmatpush.msra.mxu0 %v618
    %2901 = vmatpush.msra.mxu0 %v610
    %2902 = vmatpush.msra.mxu0 %v602
    %2903 = vmatmul.f32.gmra.mxu0 %v2716
    %v2904 = vpop.f32.mrf.mxu0
    %v2905 = vadd.f32 0.0, %v2904
    %2906 = vdwg.mxu0
    %2907 = vmatpush.msra.mxu0 %v850
    %2908 = vmatpush.msra.mxu0 %v842
    %2909 = vmatpush.msra.mxu0 %v834
    %2910 = vmatpush.msra.mxu0 %v826
    %2911 = vmatpush.msra.mxu0 %v818
    %2912 = vmatpush.msra.mxu0 %v810
    %2913 = vmatpush.msra.mxu0 %v802
    %2914 = vmatpush.msra.mxu0 %v794
    %2915 = vmatpush.msra.mxu0 %v786
    %2916 = vmatpush.msra.mxu0 %v778
    %2917 = vmatpush.msra.mxu0 %v770
    %2918 = vmatpush.msra.mxu0 %v762
    %2919 = vmatpush.msra.mxu0 %v754
    %2920 = vmatpush.msra.mxu0 %v746
    %2921 = vmatpush.msra.mxu0 %v738
    %2922 = vmatpush.msra.mxu0 %v730
    %2923 = vmatmul.f32.gmra.mxu0 %v2717
    %v2924 = vpop.f32.mrf.mxu0
    %v2925 = vadd.f32 %v2905, %v2924
    %2926 = vdwg.mxu0
    %2927 = vmatpush.msra.mxu0 %v723
    %2928 = vmatpush.msra.mxu0 %v715
    %2929 = vmatpush.msra.mxu0 %v707
    %2930 = vmatpush.msra.mxu0 %v699
    %2931 = vmatpush.msra.mxu0 %v691
    %2932 = vmatpush.msra.mxu0 %v683
    %2933 = vmatpush.msra.mxu0 %v675
    %2934 = vmatpush.msra.mxu0 %v667
    %2935 = vmatpush.msra.mxu0 %v659
    %2936 = vmatpush.msra.mxu0 %v651
    %2937 = vmatpush.msra.mxu0 %v643
    %2938 = vmatpush.msra.mxu0 %v635
    %2939 = vmatpush.msra.mxu0 %v627
    %2940 = vmatpush.msra.mxu0 %v619
    %2941 = vmatpush.msra.mxu0 %v611
    %2942 = vmatpush.msra.mxu0 %v603
    %2943 = vmatmul.f32.gmra.mxu0 %v2716
    %v2944 = vpop.f32.mrf.mxu0
    %v2945 = vadd.f32 0.0, %v2944
    %2946 = vdwg.mxu0
    %2947 = vmatpush.msra.mxu0 %v851
    %2948 = vmatpush.msra.mxu0 %v843
    %2949 = vmatpush.msra.mxu0 %v835
    %2950 = vmatpush.msra.mxu0 %v827
    %2951 = vmatpush.msra.mxu0 %v819
    %2952 = vmatpush.msra.mxu0 %v811
    %2953 = vmatpush.msra.mxu0 %v803
    %2954 = vmatpush.msra.mxu0 %v795
    %2955 = vmatpush.msra.mxu0 %v787
    %2956 = vmatpush.msra.mxu0 %v779
    %2957 = vmatpush.msra.mxu0 %v771
    %2958 = vmatpush.msra.mxu0 %v763
    %2959 = vmatpush.msra.mxu0 %v755
    %2960 = vmatpush.msra.mxu0 %v747
    %2961 = vmatpush.msra.mxu0 %v739
    %2962 = vmatpush.msra.mxu0 %v731
    %2963 = vmatmul.f32.gmra.mxu0 %v2717
    %v2964 = vpop.f32.mrf.mxu0
    %v2965 = vadd.f32 %v2945, %v2964
    %2966 = vdwg.mxu0
    %2967 = vmatpush.msra.mxu0 %v724
    %2968 = vmatpush.msra.mxu0 %v716
    %2969 = vmatpush.msra.mxu0 %v708
    %2970 = vmatpush.msra.mxu0 %v700
    %2971 = vmatpush.msra.mxu0 %v692
    %2972 = vmatpush.msra.mxu0 %v684
    %2973 = vmatpush.msra.mxu0 %v676
    %2974 = vmatpush.msra.mxu0 %v668
    %2975 = vmatpush.msra.mxu0 %v660
    %2976 = vmatpush.msra.mxu0 %v652
    %2977 = vmatpush.msra.mxu0 %v644
    %2978 = vmatpush.msra.mxu0 %v636
    %2979 = vmatpush.msra.mxu0 %v628
    %2980 = vmatpush.msra.mxu0 %v620
    %2981 = vmatpush.msra.mxu0 %v612
    %2982 = vmatpush.msra.mxu0 %v604
    %2983 = vmatmul.f32.gmra.mxu0 %v2716
    %v2984 = vpop.f32.mrf.mxu0
    %v2985 = vadd.f32 0.0, %v2984
    %2986 = vdwg.mxu0
    %2987 = vmatpush.msra.mxu0 %v852
    %2988 = vmatpush.msra.mxu0 %v844
    %2989 = vmatpush.msra.mxu0 %v836
    %2990 = vmatpush.msra.mxu0 %v828
    %2991 = vmatpush.msra.mxu0 %v820
    %2992 = vmatpush.msra.mxu0 %v812
    %2993 = vmatpush.msra.mxu0 %v804
    %2994 = vmatpush.msra.mxu0 %v796
    %2995 = vmatpush.msra.mxu0 %v788
    %2996 = vmatpush.msra.mxu0 %v780
    %2997 = vmatpush.msra.mxu0 %v772
    %2998 = vmatpush.msra.mxu0 %v764
    %2999 = vmatpush.msra.mxu0 %v756
    %3000 = vmatpush.msra.mxu0 %v748
    %3001 = vmatpush.msra.mxu0 %v740
    %3002 = vmatpush.msra.mxu0 %v732
    %3003 = vmatmul.f32.gmra.mxu0 %v2717
    %v3004 = vpop.f32.mrf.mxu0
    %v3005 = vadd.f32 %v2985, %v3004
    %3006 = vdwg.mxu0
    %3007 = vmatpush.msra.mxu0 %v725
    %3008 = vmatpush.msra.mxu0 %v717
    %3009 = vmatpush.msra.mxu0 %v709
    %3010 = vmatpush.msra.mxu0 %v701
    %3011 = vmatpush.msra.mxu0 %v693
    %3012 = vmatpush.msra.mxu0 %v685
    %3013 = vmatpush.msra.mxu0 %v677
    %3014 = vmatpush.msra.mxu0 %v669
    %3015 = vmatpush.msra.mxu0 %v661
    %3016 = vmatpush.msra.mxu0 %v653
    %3017 = vmatpush.msra.mxu0 %v645
    %3018 = vmatpush.msra.mxu0 %v637
    %3019 = vmatpush.msra.mxu0 %v629
    %3020 = vmatpush.msra.mxu0 %v621
    %3021 = vmatpush.msra.mxu0 %v613
    %3022 = vmatpush.msra.mxu0 %v605
    %3023 = vmatmul.f32.gmra.mxu0 %v2716
    %v3024 = vpop.f32.mrf.mxu0
    %v3025 = vadd.f32 0.0, %v3024
    %3026 = vdwg.mxu0
    %3027 = vmatpush.msra.mxu0 %v853
    %3028 = vmatpush.msra.mxu0 %v845
    %3029 = vmatpush.msra.mxu0 %v837
    %3030 = vmatpush.msra.mxu0 %v829
    %3031 = vmatpush.msra.mxu0 %v821
    %3032 = vmatpush.msra.mxu0 %v813
    %3033 = vmatpush.msra.mxu0 %v805
    %3034 = vmatpush.msra.mxu0 %v797
    %3035 = vmatpush.msra.mxu0 %v789
    %3036 = vmatpush.msra.mxu0 %v781
    %3037 = vmatpush.msra.mxu0 %v773
    %3038 = vmatpush.msra.mxu0 %v765
    %3039 = vmatpush.msra.mxu0 %v757
    %3040 = vmatpush.msra.mxu0 %v749
    %3041 = vmatpush.msra.mxu0 %v741
    %3042 = vmatpush.msra.mxu0 %v733
    %3043 = vmatmul.f32.gmra.mxu0 %v2717
    %v3044 = vpop.f32.mrf.mxu0
    %v3045 = vadd.f32 %v3025, %v3044
    %3046 = vdwg.mxu0
    %v3047 = vadd.f32 %v2719, %v2765
    %v3048 = vadd.f32 %v2720, %v2805
    %v3049 = vadd.f32 %v2721, %v2845
    %v3050 = vadd.f32 %v2722, %v2885
    %v3051 = vadd.f32 %v2723, %v2925
    %v3052 = vadd.f32 %v2724, %v2965
    %v3053 = vadd.f32 %v2725, %v3005
    %v3054 = vadd.f32 %v2726, %v3045
    %v3055 = vmul.f32 %v3047, 0.5
    %v3056 = vmul.f32 %v3048, 0.5
    %v3057 = vtanh.pop %v3055
    %v3058 = vtanh.pop %v3056
    %v3059 = vmul.f32 %v3057, 0.5
    %v3060 = vmul.f32 %v3058, 0.5
    %v3061 = vadd.f32 %v3059, 0.5
    %v3062 = vadd.f32 %v3060, 0.5
    %v3063 = vmul.f32 %v3049, 0.5
    %v3064 = vmul.f32 %v3050, 0.5
    %v3065 = vtanh.pop %v3063
    %v3066 = vtanh.pop %v3064
    %v3067 = vmul.f32 %v3065, 0.5
    %v3068 = vmul.f32 %v3066, 0.5
    %v3069 = vadd.f32 %v3067, 0.5
    %v3070 = vadd.f32 %v3068, 0.5
    %v3071 = vtanh.pop %v3051
    %v3072 = vtanh.pop %v3052
    %v3073 = vmul.f32 %v3053, 0.5
    %v3074 = vmul.f32 %v3054, 0.5
    %v3075 = vtanh.pop %v3073
    %v3076 = vtanh.pop %v3074
    %v3077 = vmul.f32 %v3075, 0.5
    %v3078 = vmul.f32 %v3076, 0.5
    %v3079 = vadd.f32 %v3077, 0.5
    %v3080 = vadd.f32 %v3078, 0.5
    %v3081 = vmul.f32 %v3069, %v2712
    %v3082 = vmul.f32 %v3070, %v2713
    %v3083 = vmul.f32 %v3061, %v3071
    %v3084 = vmul.f32 %v3062, %v3072
    %v3085 = vadd.f32 %v3081, %v3083
    %v3086 = vadd.f32 %v3082, %v3084
    %v3087 = vtanh.pop %v3085
    %v3088 = vtanh.pop %v3086
    %v3089 = vmul.f32 %v3079, %v3087
    %v3090 = vmul.f32 %v3080, %v3088
    %s3091 = scalar_lea.vmem [#allocation2], 384
    %v3092 = vld [vmem:[%s3091] sm:$0xff]
    %v3093 = vld [vmem:[%s3091 + $0x8] sm:$0xff]
    %v3094 = vld [vmem:[%s3091 + $0x10] sm:$0xff]
    %v3095 = vld [vmem:[%s3091 + $0x18] sm:$0xff]
    %v3096 = vld [vmem:[%s3091 + $0x20] sm:$0xff]
    %v3097 = vld [vmem:[%s3091 + $0x28] sm:$0xff]
    %v3098 = vld [vmem:[%s3091 + $0x30] sm:$0xff]
    %v3099 = vld [vmem:[%s3091 + $0x38] sm:$0xff]
    %3100 = vmatpush.msra.mxu0 %v718
    %3101 = vmatpush.msra.mxu0 %v710
    %3102 = vmatpush.msra.mxu0 %v702
    %3103 = vmatpush.msra.mxu0 %v694
    %3104 = vmatpush.msra.mxu0 %v686
    %3105 = vmatpush.msra.mxu0 %v678
    %3106 = vmatpush.msra.mxu0 %v670
    %3107 = vmatpush.msra.mxu0 %v662
    %3108 = vmatpush.msra.mxu0 %v654
    %3109 = vmatpush.msra.mxu0 %v646
    %3110 = vmatpush.msra.mxu0 %v638
    %3111 = vmatpush.msra.mxu0 %v630
    %3112 = vmatpush.msra.mxu0 %v622
    %3113 = vmatpush.msra.mxu0 %v614
    %3114 = vmatpush.msra.mxu0 %v606
    %3115 = vmatpush.msra.mxu0 %v598
    %3116 = vmatmul.f32.gmra.mxu0 %v3089
    %v3117 = vpop.f32.mrf.mxu0
    %v3118 = vadd.f32 0.0, %v3117
    %3119 = vdwg.mxu0
    %3120 = vmatpush.msra.mxu0 %v846
    %3121 = vmatpush.msra.mxu0 %v838
    %3122 = vmatpush.msra.mxu0 %v830
    %3123 = vmatpush.msra.mxu0 %v822
    %3124 = vmatpush.msra.mxu0 %v814
    %3125 = vmatpush.msra.mxu0 %v806
    %3126 = vmatpush.msra.mxu0 %v798
    %3127 = vmatpush.msra.mxu0 %v790
    %3128 = vmatpush.msra.mxu0 %v782
    %3129 = vmatpush.msra.mxu0 %v774
    %3130 = vmatpush.msra.mxu0 %v766
    %3131 = vmatpush.msra.mxu0 %v758
    %3132 = vmatpush.msra.mxu0 %v750
    %3133 = vmatpush.msra.mxu0 %v742
    %3134 = vmatpush.msra.mxu0 %v734
    %3135 = vmatpush.msra.mxu0 %v726
    %3136 = vmatmul.f32.gmra.mxu0 %v3090
    %v3137 = vpop.f32.mrf.mxu0
    %v3138 = vadd.f32 %v3118, %v3137
    %3139 = vdwg.mxu0
    %3140 = vmatpush.msra.mxu0 %v719
    %3141 = vmatpush.msra.mxu0 %v711
    %3142 = vmatpush.msra.mxu0 %v703
    %3143 = vmatpush.msra.mxu0 %v695
    %3144 = vmatpush.msra.mxu0 %v687
    %3145 = vmatpush.msra.mxu0 %v679
    %3146 = vmatpush.msra.mxu0 %v671
    %3147 = vmatpush.msra.mxu0 %v663
    %3148 = vmatpush.msra.mxu0 %v655
    %3149 = vmatpush.msra.mxu0 %v647
    %3150 = vmatpush.msra.mxu0 %v639
    %3151 = vmatpush.msra.mxu0 %v631
    %3152 = vmatpush.msra.mxu0 %v623
    %3153 = vmatpush.msra.mxu0 %v615
    %3154 = vmatpush.msra.mxu0 %v607
    %3155 = vmatpush.msra.mxu0 %v599
    %3156 = vmatmul.f32.gmra.mxu0 %v3089
    %v3157 = vpop.f32.mrf.mxu0
    %v3158 = vadd.f32 0.0, %v3157
    %3159 = vdwg.mxu0
    %3160 = vmatpush.msra.mxu0 %v847
    %3161 = vmatpush.msra.mxu0 %v839
    %3162 = vmatpush.msra.mxu0 %v831
    %3163 = vmatpush.msra.mxu0 %v823
    %3164 = vmatpush.msra.mxu0 %v815
    %3165 = vmatpush.msra.mxu0 %v807
    %3166 = vmatpush.msra.mxu0 %v799
    %3167 = vmatpush.msra.mxu0 %v791
    %3168 = vmatpush.msra.mxu0 %v783
    %3169 = vmatpush.msra.mxu0 %v775
    %3170 = vmatpush.msra.mxu0 %v767
    %3171 = vmatpush.msra.mxu0 %v759
    %3172 = vmatpush.msra.mxu0 %v751
    %3173 = vmatpush.msra.mxu0 %v743
    %3174 = vmatpush.msra.mxu0 %v735
    %3175 = vmatpush.msra.mxu0 %v727
    %3176 = vmatmul.f32.gmra.mxu0 %v3090
    %v3177 = vpop.f32.mrf.mxu0
    %v3178 = vadd.f32 %v3158, %v3177
    %3179 = vdwg.mxu0
    %3180 = vmatpush.msra.mxu0 %v720
    %3181 = vmatpush.msra.mxu0 %v712
    %3182 = vmatpush.msra.mxu0 %v704
    %3183 = vmatpush.msra.mxu0 %v696
    %3184 = vmatpush.msra.mxu0 %v688
    %3185 = vmatpush.msra.mxu0 %v680
    %3186 = vmatpush.msra.mxu0 %v672
    %3187 = vmatpush.msra.mxu0 %v664
    %3188 = vmatpush.msra.mxu0 %v656
    %3189 = vmatpush.msra.mxu0 %v648
    %3190 = vmatpush.msra.mxu0 %v640
    %3191 = vmatpush.msra.mxu0 %v632
    %3192 = vmatpush.msra.mxu0 %v624
    %3193 = vmatpush.msra.mxu0 %v616
    %3194 = vmatpush.msra.mxu0 %v608
    %3195 = vmatpush.msra.mxu0 %v600
    %3196 = vmatmul.f32.gmra.mxu0 %v3089
    %v3197 = vpop.f32.mrf.mxu0
    %v3198 = vadd.f32 0.0, %v3197
    %3199 = vdwg.mxu0
    %3200 = vmatpush.msra.mxu0 %v848
    %3201 = vmatpush.msra.mxu0 %v840
    %3202 = vmatpush.msra.mxu0 %v832
    %3203 = vmatpush.msra.mxu0 %v824
    %3204 = vmatpush.msra.mxu0 %v816
    %3205 = vmatpush.msra.mxu0 %v808
    %3206 = vmatpush.msra.mxu0 %v800
    %3207 = vmatpush.msra.mxu0 %v792
    %3208 = vmatpush.msra.mxu0 %v784
    %3209 = vmatpush.msra.mxu0 %v776
    %3210 = vmatpush.msra.mxu0 %v768
    %3211 = vmatpush.msra.mxu0 %v760
    %3212 = vmatpush.msra.mxu0 %v752
    %3213 = vmatpush.msra.mxu0 %v744
    %3214 = vmatpush.msra.mxu0 %v736
    %3215 = vmatpush.msra.mxu0 %v728
    %3216 = vmatmul.f32.gmra.mxu0 %v3090
    %v3217 = vpop.f32.mrf.mxu0
    %v3218 = vadd.f32 %v3198, %v3217
    %3219 = vdwg.mxu0
    %3220 = vmatpush.msra.mxu0 %v721
    %3221 = vmatpush.msra.mxu0 %v713
    %3222 = vmatpush.msra.mxu0 %v705
    %3223 = vmatpush.msra.mxu0 %v697
    %3224 = vmatpush.msra.mxu0 %v689
    %3225 = vmatpush.msra.mxu0 %v681
    %3226 = vmatpush.msra.mxu0 %v673
    %3227 = vmatpush.msra.mxu0 %v665
    %3228 = vmatpush.msra.mxu0 %v657
    %3229 = vmatpush.msra.mxu0 %v649
    %3230 = vmatpush.msra.mxu0 %v641
    %3231 = vmatpush.msra.mxu0 %v633
    %3232 = vmatpush.msra.mxu0 %v625
    %3233 = vmatpush.msra.mxu0 %v617
    %3234 = vmatpush.msra.mxu0 %v609
    %3235 = vmatpush.msra.mxu0 %v601
    %3236 = vmatmul.f32.gmra.mxu0 %v3089
    %v3237 = vpop.f32.mrf.mxu0
    %v3238 = vadd.f32 0.0, %v3237
    %3239 = vdwg.mxu0
    %3240 = vmatpush.msra.mxu0 %v849
    %3241 = vmatpush.msra.mxu0 %v841
    %3242 = vmatpush.msra.mxu0 %v833
    %3243 = vmatpush.msra.mxu0 %v825
    %3244 = vmatpush.msra.mxu0 %v817
    %3245 = vmatpush.msra.mxu0 %v809
    %3246 = vmatpush.msra.mxu0 %v801
    %3247 = vmatpush.msra.mxu0 %v793
    %3248 = vmatpush.msra.mxu0 %v785
    %3249 = vmatpush.msra.mxu0 %v777
    %3250 = vmatpush.msra.mxu0 %v769
    %3251 = vmatpush.msra.mxu0 %v761
    %3252 = vmatpush.msra.mxu0 %v753
    %3253 = vmatpush.msra.mxu0 %v745
    %3254 = vmatpush.msra.mxu0 %v737
    %3255 = vmatpush.msra.mxu0 %v729
    %3256 = vmatmul.f32.gmra.mxu0 %v3090
    %v3257 = vpop.f32.mrf.mxu0
    %v3258 = vadd.f32 %v3238, %v3257
    %3259 = vdwg.mxu0
    %3260 = vmatpush.msra.mxu0 %v722
    %3261 = vmatpush.msra.mxu0 %v714
    %3262 = vmatpush.msra.mxu0 %v706
    %3263 = vmatpush.msra.mxu0 %v698
    %3264 = vmatpush.msra.mxu0 %v690
    %3265 = vmatpush.msra.mxu0 %v682
    %3266 = vmatpush.msra.mxu0 %v674
    %3267 = vmatpush.msra.mxu0 %v666
    %3268 = vmatpush.msra.mxu0 %v658
    %3269 = vmatpush.msra.mxu0 %v650
    %3270 = vmatpush.msra.mxu0 %v642
    %3271 = vmatpush.msra.mxu0 %v634
    %3272 = vmatpush.msra.mxu0 %v626
    %3273 = vmatpush.msra.mxu0 %v618
    %3274 = vmatpush.msra.mxu0 %v610
    %3275 = vmatpush.msra.mxu0 %v602
    %3276 = vmatmul.f32.gmra.mxu0 %v3089
    %v3277 = vpop.f32.mrf.mxu0
    %v3278 = vadd.f32 0.0, %v3277
    %3279 = vdwg.mxu0
    %3280 = vmatpush.msra.mxu0 %v850
    %3281 = vmatpush.msra.mxu0 %v842
    %3282 = vmatpush.msra.mxu0 %v834
    %3283 = vmatpush.msra.mxu0 %v826
    %3284 = vmatpush.msra.mxu0 %v818
    %3285 = vmatpush.msra.mxu0 %v810
    %3286 = vmatpush.msra.mxu0 %v802
    %3287 = vmatpush.msra.mxu0 %v794
    %3288 = vmatpush.msra.mxu0 %v786
    %3289 = vmatpush.msra.mxu0 %v778
    %3290 = vmatpush.msra.mxu0 %v770
    %3291 = vmatpush.msra.mxu0 %v762
    %3292 = vmatpush.msra.mxu0 %v754
    %3293 = vmatpush.msra.mxu0 %v746
    %3294 = vmatpush.msra.mxu0 %v738
    %3295 = vmatpush.msra.mxu0 %v730
    %3296 = vmatmul.f32.gmra.mxu0 %v3090
    %v3297 = vpop.f32.mrf.mxu0
    %v3298 = vadd.f32 %v3278, %v3297
    %3299 = vdwg.mxu0
    %3300 = vmatpush.msra.mxu0 %v723
    %3301 = vmatpush.msra.mxu0 %v715
    %3302 = vmatpush.msra.mxu0 %v707
    %3303 = vmatpush.msra.mxu0 %v699
    %3304 = vmatpush.msra.mxu0 %v691
    %3305 = vmatpush.msra.mxu0 %v683
    %3306 = vmatpush.msra.mxu0 %v675
    %3307 = vmatpush.msra.mxu0 %v667
    %3308 = vmatpush.msra.mxu0 %v659
    %3309 = vmatpush.msra.mxu0 %v651
    %3310 = vmatpush.msra.mxu0 %v643
    %3311 = vmatpush.msra.mxu0 %v635
    %3312 = vmatpush.msra.mxu0 %v627
    %3313 = vmatpush.msra.mxu0 %v619
    %3314 = vmatpush.msra.mxu0 %v611
    %3315 = vmatpush.msra.mxu0 %v603
    %3316 = vmatmul.f32.gmra.mxu0 %v3089
    %v3317 = vpop.f32.mrf.mxu0
    %v3318 = vadd.f32 0.0, %v3317
    %3319 = vdwg.mxu0
    %3320 = vmatpush.msra.mxu0 %v851
    %3321 = vmatpush.msra.mxu0 %v843
    %3322 = vmatpush.msra.mxu0 %v835
    %3323 = vmatpush.msra.mxu0 %v827
    %3324 = vmatpush.msra.mxu0 %v819
    %3325 = vmatpush.msra.mxu0 %v811
    %3326 = vmatpush.msra.mxu0 %v803
    %3327 = vmatpush.msra.mxu0 %v795
    %3328 = vmatpush.msra.mxu0 %v787
    %3329 = vmatpush.msra.mxu0 %v779
    %3330 = vmatpush.msra.mxu0 %v771
    %3331 = vmatpush.msra.mxu0 %v763
    %3332 = vmatpush.msra.mxu0 %v755
    %3333 = vmatpush.msra.mxu0 %v747
    %3334 = vmatpush.msra.mxu0 %v739
    %3335 = vmatpush.msra.mxu0 %v731
    %3336 = vmatmul.f32.gmra.mxu0 %v3090
    %v3337 = vpop.f32.mrf.mxu0
    %v3338 = vadd.f32 %v3318, %v3337
    %3339 = vdwg.mxu0
    %3340 = vmatpush.msra.mxu0 %v724
    %3341 = vmatpush.msra.mxu0 %v716
    %3342 = vmatpush.msra.mxu0 %v708
    %3343 = vmatpush.msra.mxu0 %v700
    %3344 = vmatpush.msra.mxu0 %v692
    %3345 = vmatpush.msra.mxu0 %v684
    %3346 = vmatpush.msra.mxu0 %v676
    %3347 = vmatpush.msra.mxu0 %v668
    %3348 = vmatpush.msra.mxu0 %v660
    %3349 = vmatpush.msra.mxu0 %v652
    %3350 = vmatpush.msra.mxu0 %v644
    %3351 = vmatpush.msra.mxu0 %v636
    %3352 = vmatpush.msra.mxu0 %v628
    %3353 = vmatpush.msra.mxu0 %v620
    %3354 = vmatpush.msra.mxu0 %v612
    %3355 = vmatpush.msra.mxu0 %v604
    %3356 = vmatmul.f32.gmra.mxu0 %v3089
    %v3357 = vpop.f32.mrf.mxu0
    %v3358 = vadd.f32 0.0, %v3357
    %3359 = vdwg.mxu0
    %3360 = vmatpush.msra.mxu0 %v852
    %3361 = vmatpush.msra.mxu0 %v844
    %3362 = vmatpush.msra.mxu0 %v836
    %3363 = vmatpush.msra.mxu0 %v828
    %3364 = vmatpush.msra.mxu0 %v820
    %3365 = vmatpush.msra.mxu0 %v812
    %3366 = vmatpush.msra.mxu0 %v804
    %3367 = vmatpush.msra.mxu0 %v796
    %3368 = vmatpush.msra.mxu0 %v788
    %3369 = vmatpush.msra.mxu0 %v780
    %3370 = vmatpush.msra.mxu0 %v772
    %3371 = vmatpush.msra.mxu0 %v764
    %3372 = vmatpush.msra.mxu0 %v756
    %3373 = vmatpush.msra.mxu0 %v748
    %3374 = vmatpush.msra.mxu0 %v740
    %3375 = vmatpush.msra.mxu0 %v732
    %3376 = vmatmul.f32.gmra.mxu0 %v3090
    %v3377 = vpop.f32.mrf.mxu0
    %v3378 = vadd.f32 %v3358, %v3377
    %3379 = vdwg.mxu0
    %3380 = vmatpush.msra.mxu0 %v725
    %3381 = vmatpush.msra.mxu0 %v717
    %3382 = vmatpush.msra.mxu0 %v709
    %3383 = vmatpush.msra.mxu0 %v701
    %3384 = vmatpush.msra.mxu0 %v693
    %3385 = vmatpush.msra.mxu0 %v685
    %3386 = vmatpush.msra.mxu0 %v677
    %3387 = vmatpush.msra.mxu0 %v669
    %3388 = vmatpush.msra.mxu0 %v661
    %3389 = vmatpush.msra.mxu0 %v653
    %3390 = vmatpush.msra.mxu0 %v645
    %3391 = vmatpush.msra.mxu0 %v637
    %3392 = vmatpush.msra.mxu0 %v629
    %3393 = vmatpush.msra.mxu0 %v621
    %3394 = vmatpush.msra.mxu0 %v613
    %3395 = vmatpush.msra.mxu0 %v605
    %3396 = vmatmul.f32.gmra.mxu0 %v3089
    %v3397 = vpop.f32.mrf.mxu0
    %v3398 = vadd.f32 0.0, %v3397
    %3399 = vdwg.mxu0
    %3400 = vmatpush.msra.mxu0 %v853
    %3401 = vmatpush.msra.mxu0 %v845
    %3402 = vmatpush.msra.mxu0 %v837
    %3403 = vmatpush.msra.mxu0 %v829
    %3404 = vmatpush.msra.mxu0 %v821
    %3405 = vmatpush.msra.mxu0 %v813
    %3406 = vmatpush.msra.mxu0 %v805
    %3407 = vmatpush.msra.mxu0 %v797
    %3408 = vmatpush.msra.mxu0 %v789
    %3409 = vmatpush.msra.mxu0 %v781
    %3410 = vmatpush.msra.mxu0 %v773
    %3411 = vmatpush.msra.mxu0 %v765
    %3412 = vmatpush.msra.mxu0 %v757
    %3413 = vmatpush.msra.mxu0 %v749
    %3414 = vmatpush.msra.mxu0 %v741
    %3415 = vmatpush.msra.mxu0 %v733
    %3416 = vmatmul.f32.gmra.mxu0 %v3090
    %v3417 = vpop.f32.mrf.mxu0
    %v3418 = vadd.f32 %v3398, %v3417
    %3419 = vdwg.mxu0
    %v3420 = vadd.f32 %v3092, %v3138
    %v3421 = vadd.f32 %v3093, %v3178
    %v3422 = vadd.f32 %v3094, %v3218
    %v3423 = vadd.f32 %v3095, %v3258
    %v3424 = vadd.f32 %v3096, %v3298
    %v3425 = vadd.f32 %v3097, %v3338
    %v3426 = vadd.f32 %v3098, %v3378
    %v3427 = vadd.f32 %v3099, %v3418
    %v3428 = vmul.f32 %v3420, 0.5
    %v3429 = vmul.f32 %v3421, 0.5
    %v3430 = vtanh.pop %v3428
    %v3431 = vtanh.pop %v3429
    %v3432 = vmul.f32 %v3430, 0.5
    %v3433 = vmul.f32 %v3431, 0.5
    %v3434 = vadd.f32 %v3432, 0.5
    %v3435 = vadd.f32 %v3433, 0.5
    %v3436 = vmul.f32 %v3422, 0.5
    %v3437 = vmul.f32 %v3423, 0.5
    %v3438 = vtanh.pop %v3436
    %v3439 = vtanh.pop %v3437
    %v3440 = vmul.f32 %v3438, 0.5
    %v3441 = vmul.f32 %v3439, 0.5
    %v3442 = vadd.f32 %v3440, 0.5
    %v3443 = vadd.f32 %v3441, 0.5
    %v3444 = vtanh.pop %v3424
    %v3445 = vtanh.pop %v3425
    %v3446 = vmul.f32 %v3426, 0.5
    %v3447 = vmul.f32 %v3427, 0.5
    %v3448 = vtanh.pop %v3446
    %v3449 = vtanh.pop %v3447
    %v3450 = vmul.f32 %v3448, 0.5
    %v3451 = vmul.f32 %v3449, 0.5
    %v3452 = vadd.f32 %v3450, 0.5
    %v3453 = vadd.f32 %v3451, 0.5
    %v3454 = vmul.f32 %v3442, %v3085
    %v3455 = vmul.f32 %v3443, %v3086
    %v3456 = vmul.f32 %v3434, %v3444
    %v3457 = vmul.f32 %v3435, %v3445
    %v3458 = vadd.f32 %v3454, %v3456
    %v3459 = vadd.f32 %v3455, %v3457
    %v3460 = vtanh.pop %v3458
    %v3461 = vtanh.pop %v3459
    %v3462 = vmul.f32 %v3452, %v3460
    %v3463 = vmul.f32 %v3453, %v3461
    %s3464 = scalar_lea.vmem [#allocation2], 448
    %v3465 = vld [vmem:[%s3464] sm:$0xff]
    %v3466 = vld [vmem:[%s3464 + $0x8] sm:$0xff]
    %v3467 = vld [vmem:[%s3464 + $0x10] sm:$0xff]
    %v3468 = vld [vmem:[%s3464 + $0x18] sm:$0xff]
    %v3469 = vld [vmem:[%s3464 + $0x20] sm:$0xff]
    %v3470 = vld [vmem:[%s3464 + $0x28] sm:$0xff]
    %v3471 = vld [vmem:[%s3464 + $0x30] sm:$0xff]
    %v3472 = vld [vmem:[%s3464 + $0x38] sm:$0xff]
    %3473 = vmatpush.msra.mxu0 %v718
    %3474 = vmatpush.msra.mxu0 %v710
    %3475 = vmatpush.msra.mxu0 %v702
    %3476 = vmatpush.msra.mxu0 %v694
    %3477 = vmatpush.msra.mxu0 %v686
    %3478 = vmatpush.msra.mxu0 %v678
    %3479 = vmatpush.msra.mxu0 %v670
    %3480 = vmatpush.msra.mxu0 %v662
    %3481 = vmatpush.msra.mxu0 %v654
    %3482 = vmatpush.msra.mxu0 %v646
    %3483 = vmatpush.msra.mxu0 %v638
    %3484 = vmatpush.msra.mxu0 %v630
    %3485 = vmatpush.msra.mxu0 %v622
    %3486 = vmatpush.msra.mxu0 %v614
    %3487 = vmatpush.msra.mxu0 %v606
    %3488 = vmatpush.msra.mxu0 %v598
    %3489 = vmatmul.f32.gmra.mxu0 %v3462
    %v3490 = vpop.f32.mrf.mxu0
    %v3491 = vadd.f32 0.0, %v3490
    %3492 = vdwg.mxu0
    %3493 = vmatpush.msra.mxu0 %v846
    %3494 = vmatpush.msra.mxu0 %v838
    %3495 = vmatpush.msra.mxu0 %v830
    %3496 = vmatpush.msra.mxu0 %v822
    %3497 = vmatpush.msra.mxu0 %v814
    %3498 = vmatpush.msra.mxu0 %v806
    %3499 = vmatpush.msra.mxu0 %v798
    %3500 = vmatpush.msra.mxu0 %v790
    %3501 = vmatpush.msra.mxu0 %v782
    %3502 = vmatpush.msra.mxu0 %v774
    %3503 = vmatpush.msra.mxu0 %v766
    %3504 = vmatpush.msra.mxu0 %v758
    %3505 = vmatpush.msra.mxu0 %v750
    %3506 = vmatpush.msra.mxu0 %v742
    %3507 = vmatpush.msra.mxu0 %v734
    %3508 = vmatpush.msra.mxu0 %v726
    %3509 = vmatmul.f32.gmra.mxu0 %v3463
    %v3510 = vpop.f32.mrf.mxu0
    %v3511 = vadd.f32 %v3491, %v3510
    %3512 = vdwg.mxu0
    %3513 = vmatpush.msra.mxu0 %v719
    %3514 = vmatpush.msra.mxu0 %v711
    %3515 = vmatpush.msra.mxu0 %v703
    %3516 = vmatpush.msra.mxu0 %v695
    %3517 = vmatpush.msra.mxu0 %v687
    %3518 = vmatpush.msra.mxu0 %v679
    %3519 = vmatpush.msra.mxu0 %v671
    %3520 = vmatpush.msra.mxu0 %v663
    %3521 = vmatpush.msra.mxu0 %v655
    %3522 = vmatpush.msra.mxu0 %v647
    %3523 = vmatpush.msra.mxu0 %v639
    %3524 = vmatpush.msra.mxu0 %v631
    %3525 = vmatpush.msra.mxu0 %v623
    %3526 = vmatpush.msra.mxu0 %v615
    %3527 = vmatpush.msra.mxu0 %v607
    %3528 = vmatpush.msra.mxu0 %v599
    %3529 = vmatmul.f32.gmra.mxu0 %v3462
    %v3530 = vpop.f32.mrf.mxu0
    %v3531 = vadd.f32 0.0, %v3530
    %3532 = vdwg.mxu0
    %3533 = vmatpush.msra.mxu0 %v847
    %3534 = vmatpush.msra.mxu0 %v839
    %3535 = vmatpush.msra.mxu0 %v831
    %3536 = vmatpush.msra.mxu0 %v823
    %3537 = vmatpush.msra.mxu0 %v815
    %3538 = vmatpush.msra.mxu0 %v807
    %3539 = vmatpush.msra.mxu0 %v799
    %3540 = vmatpush.msra.mxu0 %v791
    %3541 = vmatpush.msra.mxu0 %v783
    %3542 = vmatpush.msra.mxu0 %v775
    %3543 = vmatpush.msra.mxu0 %v767
    %3544 = vmatpush.msra.mxu0 %v759
    %3545 = vmatpush.msra.mxu0 %v751
    %3546 = vmatpush.msra.mxu0 %v743
    %3547 = vmatpush.msra.mxu0 %v735
    %3548 = vmatpush.msra.mxu0 %v727
    %3549 = vmatmul.f32.gmra.mxu0 %v3463
    %v3550 = vpop.f32.mrf.mxu0
    %v3551 = vadd.f32 %v3531, %v3550
    %3552 = vdwg.mxu0
    %3553 = vmatpush.msra.mxu0 %v720
    %3554 = vmatpush.msra.mxu0 %v712
    %3555 = vmatpush.msra.mxu0 %v704
    %3556 = vmatpush.msra.mxu0 %v696
    %3557 = vmatpush.msra.mxu0 %v688
    %3558 = vmatpush.msra.mxu0 %v680
    %3559 = vmatpush.msra.mxu0 %v672
    %3560 = vmatpush.msra.mxu0 %v664
    %3561 = vmatpush.msra.mxu0 %v656
    %3562 = vmatpush.msra.mxu0 %v648
    %3563 = vmatpush.msra.mxu0 %v640
    %3564 = vmatpush.msra.mxu0 %v632
    %3565 = vmatpush.msra.mxu0 %v624
    %3566 = vmatpush.msra.mxu0 %v616
    %3567 = vmatpush.msra.mxu0 %v608
    %3568 = vmatpush.msra.mxu0 %v600
    %3569 = vmatmul.f32.gmra.mxu0 %v3462
    %v3570 = vpop.f32.mrf.mxu0
    %v3571 = vadd.f32 0.0, %v3570
    %3572 = vdwg.mxu0
    %3573 = vmatpush.msra.mxu0 %v848
    %3574 = vmatpush.msra.mxu0 %v840
    %3575 = vmatpush.msra.mxu0 %v832
    %3576 = vmatpush.msra.mxu0 %v824
    %3577 = vmatpush.msra.mxu0 %v816
    %3578 = vmatpush.msra.mxu0 %v808
    %3579 = vmatpush.msra.mxu0 %v800
    %3580 = vmatpush.msra.mxu0 %v792
    %3581 = vmatpush.msra.mxu0 %v784
    %3582 = vmatpush.msra.mxu0 %v776
    %3583 = vmatpush.msra.mxu0 %v768
    %3584 = vmatpush.msra.mxu0 %v760
    %3585 = vmatpush.msra.mxu0 %v752
    %3586 = vmatpush.msra.mxu0 %v744
    %3587 = vmatpush.msra.mxu0 %v736
    %3588 = vmatpush.msra.mxu0 %v728
    %3589 = vmatmul.f32.gmra.mxu0 %v3463
    %v3590 = vpop.f32.mrf.mxu0
    %v3591 = vadd.f32 %v3571, %v3590
    %3592 = vdwg.mxu0
    %3593 = vmatpush.msra.mxu0 %v721
    %3594 = vmatpush.msra.mxu0 %v713
    %3595 = vmatpush.msra.mxu0 %v705
    %3596 = vmatpush.msra.mxu0 %v697
    %3597 = vmatpush.msra.mxu0 %v689
    %3598 = vmatpush.msra.mxu0 %v681
    %3599 = vmatpush.msra.mxu0 %v673
    %3600 = vmatpush.msra.mxu0 %v665
    %3601 = vmatpush.msra.mxu0 %v657
    %3602 = vmatpush.msra.mxu0 %v649
    %3603 = vmatpush.msra.mxu0 %v641
    %3604 = vmatpush.msra.mxu0 %v633
    %3605 = vmatpush.msra.mxu0 %v625
    %3606 = vmatpush.msra.mxu0 %v617
    %3607 = vmatpush.msra.mxu0 %v609
    %3608 = vmatpush.msra.mxu0 %v601
    %3609 = vmatmul.f32.gmra.mxu0 %v3462
    %v3610 = vpop.f32.mrf.mxu0
    %v3611 = vadd.f32 0.0, %v3610
    %3612 = vdwg.mxu0
    %3613 = vmatpush.msra.mxu0 %v849
    %3614 = vmatpush.msra.mxu0 %v841
    %3615 = vmatpush.msra.mxu0 %v833
    %3616 = vmatpush.msra.mxu0 %v825
    %3617 = vmatpush.msra.mxu0 %v817
    %3618 = vmatpush.msra.mxu0 %v809
    %3619 = vmatpush.msra.mxu0 %v801
    %3620 = vmatpush.msra.mxu0 %v793
    %3621 = vmatpush.msra.mxu0 %v785
    %3622 = vmatpush.msra.mxu0 %v777
    %3623 = vmatpush.msra.mxu0 %v769
    %3624 = vmatpush.msra.mxu0 %v761
    %3625 = vmatpush.msra.mxu0 %v753
    %3626 = vmatpush.msra.mxu0 %v745
    %3627 = vmatpush.msra.mxu0 %v737
    %3628 = vmatpush.msra.mxu0 %v729
    %3629 = vmatmul.f32.gmra.mxu0 %v3463
    %v3630 = vpop.f32.mrf.mxu0
    %v3631 = vadd.f32 %v3611, %v3630
    %3632 = vdwg.mxu0
    %3633 = vmatpush.msra.mxu0 %v722
    %3634 = vmatpush.msra.mxu0 %v714
    %3635 = vmatpush.msra.mxu0 %v706
    %3636 = vmatpush.msra.mxu0 %v698
    %3637 = vmatpush.msra.mxu0 %v690
    %3638 = vmatpush.msra.mxu0 %v682
    %3639 = vmatpush.msra.mxu0 %v674
    %3640 = vmatpush.msra.mxu0 %v666
    %3641 = vmatpush.msra.mxu0 %v658
    %3642 = vmatpush.msra.mxu0 %v650
    %3643 = vmatpush.msra.mxu0 %v642
    %3644 = vmatpush.msra.mxu0 %v634
    %3645 = vmatpush.msra.mxu0 %v626
    %3646 = vmatpush.msra.mxu0 %v618
    %3647 = vmatpush.msra.mxu0 %v610
    %3648 = vmatpush.msra.mxu0 %v602
    %3649 = vmatmul.f32.gmra.mxu0 %v3462
    %v3650 = vpop.f32.mrf.mxu0
    %v3651 = vadd.f32 0.0, %v3650
    %3652 = vdwg.mxu0
    %3653 = vmatpush.msra.mxu0 %v850
    %3654 = vmatpush.msra.mxu0 %v842
    %3655 = vmatpush.msra.mxu0 %v834
    %3656 = vmatpush.msra.mxu0 %v826
    %3657 = vmatpush.msra.mxu0 %v818
    %3658 = vmatpush.msra.mxu0 %v810
    %3659 = vmatpush.msra.mxu0 %v802
    %3660 = vmatpush.msra.mxu0 %v794
    %3661 = vmatpush.msra.mxu0 %v786
    %3662 = vmatpush.msra.mxu0 %v778
    %3663 = vmatpush.msra.mxu0 %v770
    %3664 = vmatpush.msra.mxu0 %v762
    %3665 = vmatpush.msra.mxu0 %v754
    %3666 = vmatpush.msra.mxu0 %v746
    %3667 = vmatpush.msra.mxu0 %v738
    %3668 = vmatpush.msra.mxu0 %v730
    %3669 = vmatmul.f32.gmra.mxu0 %v3463
    %v3670 = vpop.f32.mrf.mxu0
    %v3671 = vadd.f32 %v3651, %v3670
    %3672 = vdwg.mxu0
    %3673 = vmatpush.msra.mxu0 %v723
    %3674 = vmatpush.msra.mxu0 %v715
    %3675 = vmatpush.msra.mxu0 %v707
    %3676 = vmatpush.msra.mxu0 %v699
    %3677 = vmatpush.msra.mxu0 %v691
    %3678 = vmatpush.msra.mxu0 %v683
    %3679 = vmatpush.msra.mxu0 %v675
    %3680 = vmatpush.msra.mxu0 %v667
    %3681 = vmatpush.msra.mxu0 %v659
    %3682 = vmatpush.msra.mxu0 %v651
    %3683 = vmatpush.msra.mxu0 %v643
    %3684 = vmatpush.msra.mxu0 %v635
    %3685 = vmatpush.msra.mxu0 %v627
    %3686 = vmatpush.msra.mxu0 %v619
    %3687 = vmatpush.msra.mxu0 %v611
    %3688 = vmatpush.msra.mxu0 %v603
    %3689 = vmatmul.f32.gmra.mxu0 %v3462
    %v3690 = vpop.f32.mrf.mxu0
    %v3691 = vadd.f32 0.0, %v3690
    %3692 = vdwg.mxu0
    %3693 = vmatpush.msra.mxu0 %v851
    %3694 = vmatpush.msra.mxu0 %v843
    %3695 = vmatpush.msra.mxu0 %v835
    %3696 = vmatpush.msra.mxu0 %v827
    %3697 = vmatpush.msra.mxu0 %v819
    %3698 = vmatpush.msra.mxu0 %v811
    %3699 = vmatpush.msra.mxu0 %v803
    %3700 = vmatpush.msra.mxu0 %v795
    %3701 = vmatpush.msra.mxu0 %v787
    %3702 = vmatpush.msra.mxu0 %v779
    %3703 = vmatpush.msra.mxu0 %v771
    %3704 = vmatpush.msra.mxu0 %v763
    %3705 = vmatpush.msra.mxu0 %v755
    %3706 = vmatpush.msra.mxu0 %v747
    %3707 = vmatpush.msra.mxu0 %v739
    %3708 = vmatpush.msra.mxu0 %v731
    %3709 = vmatmul.f32.gmra.mxu0 %v3463
    %v3710 = vpop.f32.mrf.mxu0
    %v3711 = vadd.f32 %v3691, %v3710
    %3712 = vdwg.mxu0
    %3713 = vmatpush.msra.mxu0 %v724
    %3714 = vmatpush.msra.mxu0 %v716
    %3715 = vmatpush.msra.mxu0 %v708
    %3716 = vmatpush.msra.mxu0 %v700
    %3717 = vmatpush.msra.mxu0 %v692
    %3718 = vmatpush.msra.mxu0 %v684
    %3719 = vmatpush.msra.mxu0 %v676
    %3720 = vmatpush.msra.mxu0 %v668
    %3721 = vmatpush.msra.mxu0 %v660
    %3722 = vmatpush.msra.mxu0 %v652
    %3723 = vmatpush.msra.mxu0 %v644
    %3724 = vmatpush.msra.mxu0 %v636
    %3725 = vmatpush.msra.mxu0 %v628
    %3726 = vmatpush.msra.mxu0 %v620
    %3727 = vmatpush.msra.mxu0 %v612
    %3728 = vmatpush.msra.mxu0 %v604
    %3729 = vmatmul.f32.gmra.mxu0 %v3462
    %v3730 = vpop.f32.mrf.mxu0
    %v3731 = vadd.f32 0.0, %v3730
    %3732 = vdwg.mxu0
    %3733 = vmatpush.msra.mxu0 %v852
    %3734 = vmatpush.msra.mxu0 %v844
    %3735 = vmatpush.msra.mxu0 %v836
    %3736 = vmatpush.msra.mxu0 %v828
    %3737 = vmatpush.msra.mxu0 %v820
    %3738 = vmatpush.msra.mxu0 %v812
    %3739 = vmatpush.msra.mxu0 %v804
    %3740 = vmatpush.msra.mxu0 %v796
    %3741 = vmatpush.msra.mxu0 %v788
    %3742 = vmatpush.msra.mxu0 %v780
    %3743 = vmatpush.msra.mxu0 %v772
    %3744 = vmatpush.msra.mxu0 %v764
    %3745 = vmatpush.msra.mxu0 %v756
    %3746 = vmatpush.msra.mxu0 %v748
    %3747 = vmatpush.msra.mxu0 %v740
    %3748 = vmatpush.msra.mxu0 %v732
    %3749 = vmatmul.f32.gmra.mxu0 %v3463
    %v3750 = vpop.f32.mrf.mxu0
    %v3751 = vadd.f32 %v3731, %v3750
    %3752 = vdwg.mxu0
    %3753 = vmatpush.msra.mxu0 %v725
    %3754 = vmatpush.msra.mxu0 %v717
    %3755 = vmatpush.msra.mxu0 %v709
    %3756 = vmatpush.msra.mxu0 %v701
    %3757 = vmatpush.msra.mxu0 %v693
    %3758 = vmatpush.msra.mxu0 %v685
    %3759 = vmatpush.msra.mxu0 %v677
    %3760 = vmatpush.msra.mxu0 %v669
    %3761 = vmatpush.msra.mxu0 %v661
    %3762 = vmatpush.msra.mxu0 %v653
    %3763 = vmatpush.msra.mxu0 %v645
    %3764 = vmatpush.msra.mxu0 %v637
    %3765 = vmatpush.msra.mxu0 %v629
    %3766 = vmatpush.msra.mxu0 %v621
    %3767 = vmatpush.msra.mxu0 %v613
    %3768 = vmatpush.msra.mxu0 %v605
    %3769 = vmatmul.f32.gmra.mxu0 %v3462
    %v3770 = vpop.f32.mrf.mxu0
    %v3771 = vadd.f32 0.0, %v3770
    %3772 = vdwg.mxu0
    %3773 = vmatpush.msra.mxu0 %v853
    %3774 = vmatpush.msra.mxu0 %v845
    %3775 = vmatpush.msra.mxu0 %v837
    %3776 = vmatpush.msra.mxu0 %v829
    %3777 = vmatpush.msra.mxu0 %v821
    %3778 = vmatpush.msra.mxu0 %v813
    %3779 = vmatpush.msra.mxu0 %v805
    %3780 = vmatpush.msra.mxu0 %v797
    %3781 = vmatpush.msra.mxu0 %v789
    %3782 = vmatpush.msra.mxu0 %v781
    %3783 = vmatpush.msra.mxu0 %v773
    %3784 = vmatpush.msra.mxu0 %v765
    %3785 = vmatpush.msra.mxu0 %v757
    %3786 = vmatpush.msra.mxu0 %v749
    %3787 = vmatpush.msra.mxu0 %v741
    %3788 = vmatpush.msra.mxu0 %v733
    %3789 = vmatmul.f32.gmra.mxu0 %v3463
    %v3790 = vpop.f32.mrf.mxu0
    %v3791 = vadd.f32 %v3771, %v3790
    %3792 = vdwg.mxu0
    %v3793 = vadd.f32 %v3465, %v3511
    %v3794 = vadd.f32 %v3466, %v3551
    %v3795 = vadd.f32 %v3467, %v3591
    %v3796 = vadd.f32 %v3468, %v3631
    %v3797 = vadd.f32 %v3469, %v3671
    %v3798 = vadd.f32 %v3470, %v3711
    %v3799 = vadd.f32 %v3471, %v3751
    %v3800 = vadd.f32 %v3472, %v3791
    %v3801 = vmul.f32 %v3793, 0.5
    %v3802 = vmul.f32 %v3794, 0.5
    %v3803 = vtanh.pop %v3801
    %v3804 = vtanh.pop %v3802
    %v3805 = vmul.f32 %v3803, 0.5
    %v3806 = vmul.f32 %v3804, 0.5
    %v3807 = vadd.f32 %v3805, 0.5
    %v3808 = vadd.f32 %v3806, 0.5
    %v3809 = vmul.f32 %v3795, 0.5
    %v3810 = vmul.f32 %v3796, 0.5
    %v3811 = vtanh.pop %v3809
    %v3812 = vtanh.pop %v3810
    %v3813 = vmul.f32 %v3811, 0.5
    %v3814 = vmul.f32 %v3812, 0.5
    %v3815 = vadd.f32 %v3813, 0.5
    %v3816 = vadd.f32 %v3814, 0.5
    %v3817 = vtanh.pop %v3797
    %v3818 = vtanh.pop %v3798
    %v3819 = vmul.f32 %v3799, 0.5
    %v3820 = vmul.f32 %v3800, 0.5
    %v3821 = vtanh.pop %v3819
    %v3822 = vtanh.pop %v3820
    %v3823 = vmul.f32 %v3821, 0.5
    %v3824 = vmul.f32 %v3822, 0.5
    %v3825 = vadd.f32 %v3823, 0.5
    %v3826 = vadd.f32 %v3824, 0.5
    %v3827 = vmul.f32 %v3815, %v3458
    %v3828 = vmul.f32 %v3816, %v3459
    %v3829 = vmul.f32 %v3807, %v3817
    %v3830 = vmul.f32 %v3808, %v3818
    %v3831 = vadd.f32 %v3827, %v3829
    %v3832 = vadd.f32 %v3828, %v3830
    %v3833 = vtanh.pop %v3831
    %v3834 = vtanh.pop %v3832
    %v3835 = vmul.f32 %v3825, %v3833
    %v3836 = vmul.f32 %v3826, %v3834
    %3837 = vst [vmem:[#allocation8] sm:$0xff] %v3835
    %3838 = vst [vmem:[#allocation8 + $0x8] sm:$0xff] %v3836
    // Predicated region
    $region34: #{tpu_custom_call.1} parent=1 // pred_check
      _
    $region35: #{tpu_custom_call.1} parent=1 // pred_check_branch
      %3840 = sbr.rel (0) target = $region37
    $region36: #{tpu_custom_call.1} parent=1 // pred_region
      %3842 = vsyncadd [#allocation5], 0
      %s3844 = sshll.u32 [#allocation8], 4
      %s3845 = int_to_ptr.vmem [resolvable:$true] %s3844
      %s3846 = sshll.u32 %s6, 4
      %s3847 = int_to_ptr.hbm [resolvable:$true] %s3846
      %3849 = dma.vmem_to_hbm [thread:$0]  %s3845, 256, %s3847, [#allocation5]
    $region37: #{tpu_custom_call.1} parent=1 // pred_fallthru
      _
    // Predicated region
    $region38: #{tpu_custom_call.1} parent=1 // pred_check
      _
    $region39: #{tpu_custom_call.1} parent=1 // pred_check_branch
      %3851 = sbr.rel (0) target = $region41
    $region40: #{tpu_custom_call.1} parent=1 // pred_region
      %3853 = dma.done [#allocation5], 256
    $region41: #{tpu_custom_call.1} parent=1 // pred_fallthru
      _
    %3854 = vsyncpa [#allocation4], 1
    %3855 = vsyncpa [#allocation7], 1
    %3856 = vsyncpa [#allocation5], 1

// kernel: tpu_custom_call.1
$region0: #{tpu_custom_call.1}
  #allocation0 [shape = 'u32[]', space=smem, size = 0x4, offset = 0x4, fixed_abs, tag = 'smem constant byte address 0x4 - core index']
  #allocation1 [shape = 'u32[72,128]{1,0:T(1,128)}', space=vmem, size = 0x9000, scoped, tag = 'internal scratch']
  #allocation2 [shape = 'f32[8,8,1024]{2,1,0:T(8,128)}', space=vmem, size = 0x40000, scoped, tag = 'scratch operand']
  %s0 = inlined_call_operand.vmem [shape: f32[1,64,6], index: 0, kind: input, shape index: {}]
  %s1 = inlined_call_operand.vmem [shape: f32[6,16], index: 1, kind: input, shape index: {}]
  %s2 = inlined_call_operand.vmem [shape: f32[1,16], index: 2, kind: input, shape index: {}]
  %s3 = inlined_call_operand.hbm [shape: f32[16,1024], index: 3, kind: input, shape index: {}]
  %s4 = inlined_call_operand.hbm [shape: f32[256,1024], index: 4, kind: input, shape index: {}]
  %s5 = inlined_call_operand.vmem [shape: f32[1,1024], index: 5, kind: input, shape index: {}]
  %s6 = inlined_call_operand.hbm [shape: f32[1,8,256], index: 6, kind: output, shape index: {}]
  %s7 = sld [smem:[#allocation0]]
  $region42: #{tpu_custom_call.1} parent=0
    _
  %s9 = ssub.s32 1, %s7
  %s10 = scalar_select 0, %s9, %s7
  $region1: #{tpu_custom_call.1} parent=0
    #allocation3 [shape = 'u8[65536]{0}', space=vmem, size = 0x10000, scoped, tag = 'input window, operand 3, single buffered']
    #allocation4 [shape = 's32[1]{0}', space=sflag, size = 0x4, scoped, tag = 'scoped memory for tpu_custom_call.1']
    #allocation5 [shape = 's32[1]{0}', space=sflag, size = 0x4, scoped, tag = 'scoped memory for tpu_custom_call.1']
    #allocation6 [shape = 'u8[1048576]{0}', space=vmem, size = 0x100000, scoped, tag = 'input window, operand 4, single buffered']
    #allocation7 [shape = 's32[1]{0}', space=sflag, size = 0x4, scoped, tag = 'scoped memory for tpu_custom_call.1']
    #allocation8 [shape = 'u8[8192]{0}', space=vmem, size = 0x2000, scoped, tag = 'output window, operand 0, single buffered']
    %11 = vsyncpa [#allocation4], 0
    %12 = vsyncpa [#allocation7], 0
    %13 = vsyncpa [#allocation5], 0
    // Predicated region
    $region2: #{tpu_custom_call.1} parent=1 // pred_check
      _
    $region3: #{tpu_custom_call.1} parent=1 // pred_check_branch
      %15 = sbr.rel (0) target = $region5
    $region4: #{tpu_custom_call.1} parent=1 // pred_region
      _
    $region5: #{tpu_custom_call.1} parent=1 // pred_fallthru
      _
    // Predicated region
    $region6: #{tpu_custom_call.1} parent=1 // pred_check
      _
    $region7: #{tpu_custom_call.1} parent=1 // pred_check_branch
      %17 = sbr.rel (0) target = $region9
    $region8: #{tpu_custom_call.1} parent=1 // pred_region
      _
    $region9: #{tpu_custom_call.1} parent=1 // pred_fallthru
      _
    // Predicated region
    $region10: #{tpu_custom_call.1} parent=1 // pred_check
      _
    $region11: #{tpu_custom_call.1} parent=1 // pred_check_branch
      %19 = sbr.rel (0) target = $region13
    $region12: #{tpu_custom_call.1} parent=1 // pred_region
      _
    $region13: #{tpu_custom_call.1} parent=1 // pred_fallthru
      _
    // Predicated region
    $region14: #{tpu_custom_call.1} parent=1 // pred_check
      _
    $region15: #{tpu_custom_call.1} parent=1 // pred_check_branch
      %21 = sbr.rel (0) target = $region17
    $region16: #{tpu_custom_call.1} parent=1 // pred_region
      %23 = vsyncadd [#allocation4], 0
      %s24 = sshll.u32 %s3, 4
      %s25 = int_to_ptr.hbm [resolvable:$true] %s24
      %s26 = sshll.u32 [#allocation3], 4
      %s27 = int_to_ptr.vmem [resolvable:$true] %s26
      %32 = dma.hbm_to_vmem [thread:$0]  %s25, 2048, %s27, [#allocation4], 1024, 1024, 64
    $region17: #{tpu_custom_call.1} parent=1 // pred_fallthru
      _
    // Predicated region
    $region18: #{tpu_custom_call.1} parent=1 // pred_check
      _
    $region19: #{tpu_custom_call.1} parent=1 // pred_check_branch
      %34 = sbr.rel (0) target = $region21
    $region20: #{tpu_custom_call.1} parent=1 // pred_region
      %36 = vsyncadd [#allocation7], 0
      %s37 = sshll.u32 %s4, 4
      %s38 = int_to_ptr.hbm [resolvable:$true] %s37
      %s39 = sshll.u32 [#allocation6], 4
      %s40 = int_to_ptr.vmem [resolvable:$true] %s39
      %45 = dma.hbm_to_vmem [thread:$0]  %s38, 32768, %s40, [#allocation7], 1024, 1024, 64
    $region21: #{tpu_custom_call.1} parent=1 // pred_fallthru
      _
    // Predicated region
    $region22: #{tpu_custom_call.1} parent=1 // pred_check
      _
    $region23: #{tpu_custom_call.1} parent=1 // pred_check_branch
      %47 = sbr.rel (0) target = $region25
    $region24: #{tpu_custom_call.1} parent=1 // pred_region
      _
    $region25: #{tpu_custom_call.1} parent=1 // pred_fallthru
      _
    // Predicated region
    $region26: #{tpu_custom_call.1} parent=1 // pred_check
      _
    $region27: #{tpu_custom_call.1} parent=1 // pred_check_branch
      %49 = sbr.rel (0) target = $region29
    $region28: #{tpu_custom_call.1} parent=1 // pred_region
      %51 = dma.done [#allocation4], 2048
    $region29: #{tpu_custom_call.1} parent=1 // pred_fallthru
      _
    // Predicated region
    $region30: #{tpu_custom_call.1} parent=1 // pred_check
      _
    $region31: #{tpu_custom_call.1} parent=1 // pred_check_branch
      %53 = sbr.rel (0) target = $region33
    $region32: #{tpu_custom_call.1} parent=1 // pred_region
      %55 = dma.done [#allocation7], 32768
    $region33: #{tpu_custom_call.1} parent=1 // pred_fallthru
      _
    %v56 = vld [vmem:[%s0] sm:$0xff]
    %v57 = vld [vmem:[%s0 + $0x8] sm:$0xff]
    %v58 = vld [vmem:[%s0 + $0x10] sm:$0xff]
    %v59 = vld [vmem:[%s0 + $0x18] sm:$0xff]
    %v60 = vld [vmem:[%s0 + $0x20] sm:$0xff]
    %v61 = vld [vmem:[%s0 + $0x28] sm:$0xff]
    %v62 = vld [vmem:[%s0 + $0x30] sm:$0xff]
    %v63 = vld [vmem:[%s0 + $0x38] sm:$0xff]
    %v64 = vld [vmem:[%s1] sm:$0x3f]
    %v65 = vld [vmem:[%s2] sm:$0x1]
    %v67 = vperm.slane %v65, 0
    %vm69 = vcmask 48128
    %v71 = vsel %vm69, %v56, 0
    %v74 = vsel %vm69, %v57, 0
    %v77 = vsel %vm69, %v58, 0
    %v80 = vsel %vm69, %v59, 0
    %v83 = vsel %vm69, %v60, 0
    %v86 = vsel %vm69, %v61, 0
    %v89 = vsel %vm69, %v62, 0
    %v92 = vsel %vm69, %v63, 0
    %vm94 = vcmask 1045504
    %v96 = vsel %vm94, %v64, 0
    %98 = vmatpush.msra.mxu0 0.0
    %99 = vmatpush.msra.mxu0 0.0
    %100 = vmatpush.msra.mxu0 0.0
    %101 = vmatpush.msra.mxu0 0.0
    %102 = vmatpush.msra.mxu0 0.0
    %103 = vmatpush.msra.mxu0 0.0
    %104 = vmatpush.msra.mxu0 0.0
    %105 = vmatpush.msra.mxu0 0.0
    %106 = vmatpush.msra.mxu0 0.0
    %107 = vmatpush.msra.mxu0 0.0
    %108 = vmatpush.msra.mxu0 0.0
    %109 = vmatpush.msra.mxu0 0.0
    %110 = vmatpush.msra.mxu0 0.0
    %111 = vmatpush.msra.mxu0 0.0
    %112 = vmatpush.msra.mxu0 0.0
    %113 = vmatpush.msra.mxu0 %v96
    %114 = vmatmul.f32.gmra.mxu0 %v71
    %v115 = vpop.f32.mrf.mxu0
    %v116 = vadd.f32 %v67, %v115
    %117 = vmatmul.f32.gmra.mxu0 %v74
    %v118 = vpop.f32.mrf.mxu0
    %v119 = vadd.f32 %v67, %v118
    %120 = vmatmul.f32.gmra.mxu0 %v77
    %v121 = vpop.f32.mrf.mxu0
    %v122 = vadd.f32 %v67, %v121
    %123 = vmatmul.f32.gmra.mxu0 %v80
    %v124 = vpop.f32.mrf.mxu0
    %v125 = vadd.f32 %v67, %v124
    %126 = vmatmul.f32.gmra.mxu0 %v83
    %v127 = vpop.f32.mrf.mxu0
    %v128 = vadd.f32 %v67, %v127
    %129 = vmatmul.f32.gmra.mxu0 %v86
    %v130 = vpop.f32.mrf.mxu0
    %v131 = vadd.f32 %v67, %v130
    %132 = vmatmul.f32.gmra.mxu0 %v89
    %v133 = vpop.f32.mrf.mxu0
    %v134 = vadd.f32 %v67, %v133
    %135 = vmatmul.f32.gmra.mxu0 %v92
    %v136 = vpop.f32.mrf.mxu0
    %v137 = vadd.f32 %v67, %v136
    %138 = vdwg.mxu0
    %v139 = vmax.f32 %v116, 0.0
    %v140 = vmax.f32 %v119, 0.0
    %v141 = vmax.f32 %v122, 0.0
    %v142 = vmax.f32 %v125, 0.0
    %v143 = vmax.f32 %v128, 0.0
    %v144 = vmax.f32 %v131, 0.0
    %v145 = vmax.f32 %v134, 0.0
    %v146 = vmax.f32 %v137, 0.0
    %v147 = vld [vmem:[#allocation3] sm:$0xff]
    %v148 = vld [vmem:[#allocation3 + $0x8] sm:$0xff]
    %v149 = vld [vmem:[#allocation3 + $0x10] sm:$0xff]
    %v150 = vld [vmem:[#allocation3 + $0x18] sm:$0xff]
    %v151 = vld [vmem:[#allocation3 + $0x20] sm:$0xff]
    %v152 = vld [vmem:[#allocation3 + $0x28] sm:$0xff]
    %v153 = vld [vmem:[#allocation3 + $0x30] sm:$0xff]
    %v154 = vld [vmem:[#allocation3 + $0x38] sm:$0xff]
    %v155 = vld [vmem:[#allocation3 + $0x40] sm:$0xff]
    %v156 = vld [vmem:[#allocation3 + $0x48] sm:$0xff]
    %v157 = vld [vmem:[#allocation3 + $0x50] sm:$0xff]
    %v158 = vld [vmem:[#allocation3 + $0x58] sm:$0xff]
    %v159 = vld [vmem:[#allocation3 + $0x60] sm:$0xff]
    %v160 = vld [vmem:[#allocation3 + $0x68] sm:$0xff]
    %v161 = vld [vmem:[#allocation3 + $0x70] sm:$0xff]
    %v162 = vld [vmem:[#allocation3 + $0x78] sm:$0xff]
    %v163 = vld [vmem:[%s5] sm:$0xff]
    %v165 = vperm.slane %v163, 0
    %v166 = vperm.slane %v163, 1
    %v167 = vperm.slane %v163, 2
    %v168 = vperm.slane %v163, 3
    %v169 = vperm.slane %v163, 4
    %v170 = vperm.slane %v163, 5
    %v171 = vperm.slane %v163, 6
    %v172 = vperm.slane %v163, 7
    %vm181 = vcmask 130048
    %v183 = vsel %vm181, %v139, 0
    %v186 = vsel %vm181, %v140, 0
    %v189 = vsel %vm181, %v141, 0
    %v192 = vsel %vm181, %v142, 0
    %v195 = vsel %vm181, %v143, 0
    %v198 = vsel %vm181, %v144, 0
    %v201 = vsel %vm181, %v145, 0
    %v204 = vsel %vm181, %v146, 0
    %206 = vmatpush.msra.mxu0 0.0
    %207 = vmatpush.msra.mxu0 0.0
    %208 = vmatpush.msra.mxu0 0.0
    %209 = vmatpush.msra.mxu0 0.0
    %210 = vmatpush.msra.mxu0 0.0
    %211 = vmatpush.msra.mxu0 0.0
    %212 = vmatpush.msra.mxu0 0.0
    %213 = vmatpush.msra.mxu0 0.0
    %214 = vmatpush.msra.mxu0 0.0
    %215 = vmatpush.msra.mxu0 0.0
    %216 = vmatpush.msra.mxu0 0.0
    %217 = vmatpush.msra.mxu0 0.0
    %218 = vmatpush.msra.mxu0 0.0
    %219 = vmatpush.msra.mxu0 0.0
    %220 = vmatpush.msra.mxu0 %v155
    %221 = vmatpush.msra.mxu0 %v147
    %222 = vmatmul.f32.gmra.mxu0 %v183
    %v223 = vpop.f32.mrf.mxu0
    %v224 = vadd.f32 %v165, %v223
    %225 = vmatmul.f32.gmra.mxu0 %v186
    %v226 = vpop.f32.mrf.mxu0
    %v227 = vadd.f32 %v165, %v226
    %228 = vmatmul.f32.gmra.mxu0 %v189
    %v229 = vpop.f32.mrf.mxu0
    %v230 = vadd.f32 %v165, %v229
    %231 = vmatmul.f32.gmra.mxu0 %v192
    %v232 = vpop.f32.mrf.mxu0
    %v233 = vadd.f32 %v165, %v232
    %234 = vmatmul.f32.gmra.mxu0 %v195
    %v235 = vpop.f32.mrf.mxu0
    %v236 = vadd.f32 %v165, %v235
    %237 = vmatmul.f32.gmra.mxu0 %v198
    %v238 = vpop.f32.mrf.mxu0
    %v239 = vadd.f32 %v165, %v238
    %240 = vmatmul.f32.gmra.mxu0 %v201
    %v241 = vpop.f32.mrf.mxu0
    %v242 = vadd.f32 %v165, %v241
    %243 = vmatmul.f32.gmra.mxu0 %v204
    %v244 = vpop.f32.mrf.mxu0
    %v245 = vadd.f32 %v165, %v244
    %246 = vdwg.mxu0
    %247 = vmatpush.msra.mxu0 0.0
    %248 = vmatpush.msra.mxu0 0.0
    %249 = vmatpush.msra.mxu0 0.0
    %250 = vmatpush.msra.mxu0 0.0
    %251 = vmatpush.msra.mxu0 0.0
    %252 = vmatpush.msra.mxu0 0.0
    %253 = vmatpush.msra.mxu0 0.0
    %254 = vmatpush.msra.mxu0 0.0
    %255 = vmatpush.msra.mxu0 0.0
    %256 = vmatpush.msra.mxu0 0.0
    %257 = vmatpush.msra.mxu0 0.0
    %258 = vmatpush.msra.mxu0 0.0
    %259 = vmatpush.msra.mxu0 0.0
    %260 = vmatpush.msra.mxu0 0.0
    %261 = vmatpush.msra.mxu0 %v156
    %262 = vmatpush.msra.mxu0 %v148
    %263 = vmatmul.f32.gmra.mxu0 %v183
    %v264 = vpop.f32.mrf.mxu0
    %v265 = vadd.f32 %v166, %v264
    %266 = vmatmul.f32.gmra.mxu0 %v186
    %v267 = vpop.f32.mrf.mxu0
    %v268 = vadd.f32 %v166, %v267
    %269 = vmatmul.f32.gmra.mxu0 %v189
    %v270 = vpop.f32.mrf.mxu0
    %v271 = vadd.f32 %v166, %v270
    %272 = vmatmul.f32.gmra.mxu0 %v192
    %v273 = vpop.f32.mrf.mxu0
    %v274 = vadd.f32 %v166, %v273
    %275 = vmatmul.f32.gmra.mxu0 %v195
    %v276 = vpop.f32.mrf.mxu0
    %v277 = vadd.f32 %v166, %v276
    %278 = vmatmul.f32.gmra.mxu0 %v198
    %v279 = vpop.f32.mrf.mxu0
    %v280 = vadd.f32 %v166, %v279
    %281 = vmatmul.f32.gmra.mxu0 %v201
    %v282 = vpop.f32.mrf.mxu0
    %v283 = vadd.f32 %v166, %v282
    %284 = vmatmul.f32.gmra.mxu0 %v204
    %v285 = vpop.f32.mrf.mxu0
    %v286 = vadd.f32 %v166, %v285
    %287 = vdwg.mxu0
    %288 = vmatpush.msra.mxu0 0.0
    %289 = vmatpush.msra.mxu0 0.0
    %290 = vmatpush.msra.mxu0 0.0
    %291 = vmatpush.msra.mxu0 0.0
    %292 = vmatpush.msra.mxu0 0.0
    %293 = vmatpush.msra.mxu0 0.0
    %294 = vmatpush.msra.mxu0 0.0
    %295 = vmatpush.msra.mxu0 0.0
    %296 = vmatpush.msra.mxu0 0.0
    %297 = vmatpush.msra.mxu0 0.0
    %298 = vmatpush.msra.mxu0 0.0
    %299 = vmatpush.msra.mxu0 0.0
    %300 = vmatpush.msra.mxu0 0.0
    %301 = vmatpush.msra.mxu0 0.0
    %302 = vmatpush.msra.mxu0 %v157
    %303 = vmatpush.msra.mxu0 %v149
    %304 = vmatmul.f32.gmra.mxu0 %v183
    %v305 = vpop.f32.mrf.mxu0
    %v306 = vadd.f32 %v167, %v305
    %307 = vmatmul.f32.gmra.mxu0 %v186
    %v308 = vpop.f32.mrf.mxu0
    %v309 = vadd.f32 %v167, %v308
    %310 = vmatmul.f32.gmra.mxu0 %v189
    %v311 = vpop.f32.mrf.mxu0
    %v312 = vadd.f32 %v167, %v311
    %313 = vmatmul.f32.gmra.mxu0 %v192
    %v314 = vpop.f32.mrf.mxu0
    %v315 = vadd.f32 %v167, %v314
    %316 = vmatmul.f32.gmra.mxu0 %v195
    %v317 = vpop.f32.mrf.mxu0
    %v318 = vadd.f32 %v167, %v317
    %319 = vmatmul.f32.gmra.mxu0 %v198
    %v320 = vpop.f32.mrf.mxu0
    %v321 = vadd.f32 %v167, %v320
    %322 = vmatmul.f32.gmra.mxu0 %v201
    %v323 = vpop.f32.mrf.mxu0
    %v324 = vadd.f32 %v167, %v323
    %325 = vmatmul.f32.gmra.mxu0 %v204
    %v326 = vpop.f32.mrf.mxu0
    %v327 = vadd.f32 %v167, %v326
    %328 = vdwg.mxu0
    %329 = vmatpush.msra.mxu0 0.0
    %330 = vmatpush.msra.mxu0 0.0
    %331 = vmatpush.msra.mxu0 0.0
    %332 = vmatpush.msra.mxu0 0.0
    %333 = vmatpush.msra.mxu0 0.0
    %334 = vmatpush.msra.mxu0 0.0
    %335 = vmatpush.msra.mxu0 0.0
    %336 = vmatpush.msra.mxu0 0.0
    %337 = vmatpush.msra.mxu0 0.0
    %338 = vmatpush.msra.mxu0 0.0
    %339 = vmatpush.msra.mxu0 0.0
    %340 = vmatpush.msra.mxu0 0.0
    %341 = vmatpush.msra.mxu0 0.0
    %342 = vmatpush.msra.mxu0 0.0
    %343 = vmatpush.msra.mxu0 %v158
    %344 = vmatpush.msra.mxu0 %v150
    %345 = vmatmul.f32.gmra.mxu0 %v183
    %v346 = vpop.f32.mrf.mxu0
    %v347 = vadd.f32 %v168, %v346
    %348 = vmatmul.f32.gmra.mxu0 %v186
    %v349 = vpop.f32.mrf.mxu0
    %v350 = vadd.f32 %v168, %v349
    %351 = vmatmul.f32.gmra.mxu0 %v189
    %v352 = vpop.f32.mrf.mxu0
    %v353 = vadd.f32 %v168, %v352
    %354 = vmatmul.f32.gmra.mxu0 %v192
    %v355 = vpop.f32.mrf.mxu0
    %v356 = vadd.f32 %v168, %v355
    %357 = vmatmul.f32.gmra.mxu0 %v195
    %v358 = vpop.f32.mrf.mxu0
    %v359 = vadd.f32 %v168, %v358
    %360 = vmatmul.f32.gmra.mxu0 %v198
    %v361 = vpop.f32.mrf.mxu0
    %v362 = vadd.f32 %v168, %v361
    %363 = vmatmul.f32.gmra.mxu0 %v201
    %v364 = vpop.f32.mrf.mxu0
    %v365 = vadd.f32 %v168, %v364
    %366 = vmatmul.f32.gmra.mxu0 %v204
    %v367 = vpop.f32.mrf.mxu0
    %v368 = vadd.f32 %v168, %v367
    %369 = vdwg.mxu0
    %370 = vmatpush.msra.mxu0 0.0
    %371 = vmatpush.msra.mxu0 0.0
    %372 = vmatpush.msra.mxu0 0.0
    %373 = vmatpush.msra.mxu0 0.0
    %374 = vmatpush.msra.mxu0 0.0
    %375 = vmatpush.msra.mxu0 0.0
    %376 = vmatpush.msra.mxu0 0.0
    %377 = vmatpush.msra.mxu0 0.0
    %378 = vmatpush.msra.mxu0 0.0
    %379 = vmatpush.msra.mxu0 0.0
    %380 = vmatpush.msra.mxu0 0.0
    %381 = vmatpush.msra.mxu0 0.0
    %382 = vmatpush.msra.mxu0 0.0
    %383 = vmatpush.msra.mxu0 0.0
    %384 = vmatpush.msra.mxu0 %v159
    %385 = vmatpush.msra.mxu0 %v151
    %386 = vmatmul.f32.gmra.mxu0 %v183
    %v387 = vpop.f32.mrf.mxu0
    %v388 = vadd.f32 %v169, %v387
    %389 = vmatmul.f32.gmra.mxu0 %v186
    %v390 = vpop.f32.mrf.mxu0
    %v391 = vadd.f32 %v169, %v390
    %392 = vmatmul.f32.gmra.mxu0 %v189
    %v393 = vpop.f32.mrf.mxu0
    %v394 = vadd.f32 %v169, %v393
    %395 = vmatmul.f32.gmra.mxu0 %v192
    %v396 = vpop.f32.mrf.mxu0
    %v397 = vadd.f32 %v169, %v396
    %398 = vmatmul.f32.gmra.mxu0 %v195
    %v399 = vpop.f32.mrf.mxu0
    %v400 = vadd.f32 %v169, %v399
    %401 = vmatmul.f32.gmra.mxu0 %v198
    %v402 = vpop.f32.mrf.mxu0
    %v403 = vadd.f32 %v169, %v402
    %404 = vmatmul.f32.gmra.mxu0 %v201
    %v405 = vpop.f32.mrf.mxu0
    %v406 = vadd.f32 %v169, %v405
    %407 = vmatmul.f32.gmra.mxu0 %v204
    %v408 = vpop.f32.mrf.mxu0
    %v409 = vadd.f32 %v169, %v408
    %410 = vdwg.mxu0
    %411 = vmatpush.msra.mxu0 0.0
    %412 = vmatpush.msra.mxu0 0.0
    %413 = vmatpush.msra.mxu0 0.0
    %414 = vmatpush.msra.mxu0 0.0
    %415 = vmatpush.msra.mxu0 0.0
    %416 = vmatpush.msra.mxu0 0.0
    %417 = vmatpush.msra.mxu0 0.0
    %418 = vmatpush.msra.mxu0 0.0
    %419 = vmatpush.msra.mxu0 0.0
    %420 = vmatpush.msra.mxu0 0.0
    %421 = vmatpush.msra.mxu0 0.0
    %422 = vmatpush.msra.mxu0 0.0
    %423 = vmatpush.msra.mxu0 0.0
    %424 = vmatpush.msra.mxu0 0.0
    %425 = vmatpush.msra.mxu0 %v160
    %426 = vmatpush.msra.mxu0 %v152
    %427 = vmatmul.f32.gmra.mxu0 %v183
    %v428 = vpop.f32.mrf.mxu0
    %v429 = vadd.f32 %v170, %v428
    %430 = vmatmul.f32.gmra.mxu0 %v186
    %v431 = vpop.f32.mrf.mxu0
    %v432 = vadd.f32 %v170, %v431
    %433 = vmatmul.f32.gmra.mxu0 %v189
    %v434 = vpop.f32.mrf.mxu0
    %v435 = vadd.f32 %v170, %v434
    %436 = vmatmul.f32.gmra.mxu0 %v192
    %v437 = vpop.f32.mrf.mxu0
    %v438 = vadd.f32 %v170, %v437
    %439 = vmatmul.f32.gmra.mxu0 %v195
    %v440 = vpop.f32.mrf.mxu0
    %v441 = vadd.f32 %v170, %v440
    %442 = vmatmul.f32.gmra.mxu0 %v198
    %v443 = vpop.f32.mrf.mxu0
    %v444 = vadd.f32 %v170, %v443
    %445 = vmatmul.f32.gmra.mxu0 %v201
    %v446 = vpop.f32.mrf.mxu0
    %v447 = vadd.f32 %v170, %v446
    %448 = vmatmul.f32.gmra.mxu0 %v204
    %v449 = vpop.f32.mrf.mxu0
    %v450 = vadd.f32 %v170, %v449
    %451 = vdwg.mxu0
    %452 = vmatpush.msra.mxu0 0.0
    %453 = vmatpush.msra.mxu0 0.0
    %454 = vmatpush.msra.mxu0 0.0
    %455 = vmatpush.msra.mxu0 0.0
    %456 = vmatpush.msra.mxu0 0.0
    %457 = vmatpush.msra.mxu0 0.0
    %458 = vmatpush.msra.mxu0 0.0
    %459 = vmatpush.msra.mxu0 0.0
    %460 = vmatpush.msra.mxu0 0.0
    %461 = vmatpush.msra.mxu0 0.0
    %462 = vmatpush.msra.mxu0 0.0
    %463 = vmatpush.msra.mxu0 0.0
    %464 = vmatpush.msra.mxu0 0.0
    %465 = vmatpush.msra.mxu0 0.0
    %466 = vmatpush.msra.mxu0 %v161
    %467 = vmatpush.msra.mxu0 %v153
    %468 = vmatmul.f32.gmra.mxu0 %v183
    %v469 = vpop.f32.mrf.mxu0
    %v470 = vadd.f32 %v171, %v469
    %471 = vmatmul.f32.gmra.mxu0 %v186
    %v472 = vpop.f32.mrf.mxu0
    %v473 = vadd.f32 %v171, %v472
    %474 = vmatmul.f32.gmra.mxu0 %v189
    %v475 = vpop.f32.mrf.mxu0
    %v476 = vadd.f32 %v171, %v475
    %477 = vmatmul.f32.gmra.mxu0 %v192
    %v478 = vpop.f32.mrf.mxu0
    %v479 = vadd.f32 %v171, %v478
    %480 = vmatmul.f32.gmra.mxu0 %v195
    %v481 = vpop.f32.mrf.mxu0
    %v482 = vadd.f32 %v171, %v481
    %483 = vmatmul.f32.gmra.mxu0 %v198
    %v484 = vpop.f32.mrf.mxu0
    %v485 = vadd.f32 %v171, %v484
    %486 = vmatmul.f32.gmra.mxu0 %v201
    %v487 = vpop.f32.mrf.mxu0
    %v488 = vadd.f32 %v171, %v487
    %489 = vmatmul.f32.gmra.mxu0 %v204
    %v490 = vpop.f32.mrf.mxu0
    %v491 = vadd.f32 %v171, %v490
    %492 = vdwg.mxu0
    %493 = vmatpush.msra.mxu0 0.0
    %494 = vmatpush.msra.mxu0 0.0
    %495 = vmatpush.msra.mxu0 0.0
    %496 = vmatpush.msra.mxu0 0.0
    %497 = vmatpush.msra.mxu0 0.0
    %498 = vmatpush.msra.mxu0 0.0
    %499 = vmatpush.msra.mxu0 0.0
    %500 = vmatpush.msra.mxu0 0.0
    %501 = vmatpush.msra.mxu0 0.0
    %502 = vmatpush.msra.mxu0 0.0
    %503 = vmatpush.msra.mxu0 0.0
    %504 = vmatpush.msra.mxu0 0.0
    %505 = vmatpush.msra.mxu0 0.0
    %506 = vmatpush.msra.mxu0 0.0
    %507 = vmatpush.msra.mxu0 %v162
    %508 = vmatpush.msra.mxu0 %v154
    %509 = vmatmul.f32.gmra.mxu0 %v183
    %v510 = vpop.f32.mrf.mxu0
    %v511 = vadd.f32 %v172, %v510
    %512 = vmatmul.f32.gmra.mxu0 %v186
    %v513 = vpop.f32.mrf.mxu0
    %v514 = vadd.f32 %v172, %v513
    %515 = vmatmul.f32.gmra.mxu0 %v189
    %v516 = vpop.f32.mrf.mxu0
    %v517 = vadd.f32 %v172, %v516
    %518 = vmatmul.f32.gmra.mxu0 %v192
    %v519 = vpop.f32.mrf.mxu0
    %v520 = vadd.f32 %v172, %v519
    %521 = vmatmul.f32.gmra.mxu0 %v195
    %v522 = vpop.f32.mrf.mxu0
    %v523 = vadd.f32 %v172, %v522
    %524 = vmatmul.f32.gmra.mxu0 %v198
    %v525 = vpop.f32.mrf.mxu0
    %v526 = vadd.f32 %v172, %v525
    %527 = vmatmul.f32.gmra.mxu0 %v201
    %v528 = vpop.f32.mrf.mxu0
    %v529 = vadd.f32 %v172, %v528
    %530 = vmatmul.f32.gmra.mxu0 %v204
    %v531 = vpop.f32.mrf.mxu0
    %v532 = vadd.f32 %v172, %v531
    %533 = vdwg.mxu0
    %534 = vst [vmem:[#allocation2] sm:$0xff] %v224
    %535 = vst [vmem:[#allocation2 + $0x8] sm:$0xff] %v265
    %536 = vst [vmem:[#allocation2 + $0x10] sm:$0xff] %v306
    %537 = vst [vmem:[#allocation2 + $0x18] sm:$0xff] %v347
    %538 = vst [vmem:[#allocation2 + $0x20] sm:$0xff] %v388
    %539 = vst [vmem:[#allocation2 + $0x28] sm:$0xff] %v429
    %540 = vst [vmem:[#allocation2 + $0x30] sm:$0xff] %v470
    %541 = vst [vmem:[#allocation2 + $0x38] sm:$0xff] %v511
    %542 = vst [vmem:[#allocation2 + $0x40] sm:$0xff] %v227
    %543 = vst [vmem:[#allocation2 + $0x48] sm:$0xff] %v268
    %544 = vst [vmem:[#allocation2 + $0x50] sm:$0xff] %v309
    %545 = vst [vmem:[#allocation2 + $0x58] sm:$0xff] %v350
    %546 = vst [vmem:[#allocation2 + $0x60] sm:$0xff] %v391
    %547 = vst [vmem:[#allocation2 + $0x68] sm:$0xff] %v432
    %548 = vst [vmem:[#allocation2 + $0x70] sm:$0xff] %v473
    %549 = vst [vmem:[#allocation2 + $0x78] sm:$0xff] %v514
    %550 = vst [vmem:[#allocation2 + $0x80] sm:$0xff] %v230
    %551 = vst [vmem:[#allocation2 + $0x88] sm:$0xff] %v271
    %552 = vst [vmem:[#allocation2 + $0x90] sm:$0xff] %v312
    %553 = vst [vmem:[#allocation2 + $0x98] sm:$0xff] %v353
    %554 = vst [vmem:[#allocation2 + $0xa0] sm:$0xff] %v394
    %555 = vst [vmem:[#allocation2 + $0xa8] sm:$0xff] %v435
    %556 = vst [vmem:[#allocation2 + $0xb0] sm:$0xff] %v476
    %557 = vst [vmem:[#allocation2 + $0xb8] sm:$0xff] %v517
    %558 = vst [vmem:[#allocation2 + $0xc0] sm:$0xff] %v233
    %559 = vst [vmem:[#allocation2 + $0xc8] sm:$0xff] %v274
    %560 = vst [vmem:[#allocation2 + $0xd0] sm:$0xff] %v315
    %561 = vst [vmem:[#allocation2 + $0xd8] sm:$0xff] %v356
    %562 = vst [vmem:[#allocation2 + $0xe0] sm:$0xff] %v397
    %563 = vst [vmem:[#allocation2 + $0xe8] sm:$0xff] %v438
    %564 = vst [vmem:[#allocation2 + $0xf0] sm:$0xff] %v479
    %565 = vst [vmem:[#allocation2 + $0xf8] sm:$0xff] %v520
    %566 = vst [vmem:[#allocation2 + $0x100] sm:$0xff] %v236
    %567 = vst [vmem:[#allocation2 + $0x108] sm:$0xff] %v277
    %568 = vst [vmem:[#allocation2 + $0x110] sm:$0xff] %v318
    %569 = vst [vmem:[#allocation2 + $0x118] sm:$0xff] %v359
    %570 = vst [vmem:[#allocation2 + $0x120] sm:$0xff] %v400
    %571 = vst [vmem:[#allocation2 + $0x128] sm:$0xff] %v441
    %572 = vst [vmem:[#allocation2 + $0x130] sm:$0xff] %v482
    %573 = vst [vmem:[#allocation2 + $0x138] sm:$0xff] %v523
    %574 = vst [vmem:[#allocation2 + $0x140] sm:$0xff] %v239
    %575 = vst [vmem:[#allocation2 + $0x148] sm:$0xff] %v280
    %576 = vst [vmem:[#allocation2 + $0x150] sm:$0xff] %v321
    %577 = vst [vmem:[#allocation2 + $0x158] sm:$0xff] %v362
    %578 = vst [vmem:[#allocation2 + $0x160] sm:$0xff] %v403
    %579 = vst [vmem:[#allocation2 + $0x168] sm:$0xff] %v444
    %580 = vst [vmem:[#allocation2 + $0x170] sm:$0xff] %v485
    %581 = vst [vmem:[#allocation2 + $0x178] sm:$0xff] %v526
    %582 = vst [vmem:[#allocation2 + $0x180] sm:$0xff] %v242
    %583 = vst [vmem:[#allocation2 + $0x188] sm:$0xff] %v283
    %584 = vst [vmem:[#allocation2 + $0x190] sm:$0xff] %v324
    %585 = vst [vmem:[#allocation2 + $0x198] sm:$0xff] %v365
    %586 = vst [vmem:[#allocation2 + $0x1a0] sm:$0xff] %v406
    %587 = vst [vmem:[#allocation2 + $0x1a8] sm:$0xff] %v447
    %588 = vst [vmem:[#allocation2 + $0x1b0] sm:$0xff] %v488
    %589 = vst [vmem:[#allocation2 + $0x1b8] sm:$0xff] %v529
    %590 = vst [vmem:[#allocation2 + $0x1c0] sm:$0xff] %v245
    %591 = vst [vmem:[#allocation2 + $0x1c8] sm:$0xff] %v286
    %592 = vst [vmem:[#allocation2 + $0x1d0] sm:$0xff] %v327
    %593 = vst [vmem:[#allocation2 + $0x1d8] sm:$0xff] %v368
    %594 = vst [vmem:[#allocation2 + $0x1e0] sm:$0xff] %v409
    %595 = vst [vmem:[#allocation2 + $0x1e8] sm:$0xff] %v450
    %596 = vst [vmem:[#allocation2 + $0x1f0] sm:$0xff] %v491
    %597 = vst [vmem:[#allocation2 + $0x1f8] sm:$0xff] %v532
    %v598 = vld [vmem:[#allocation6] sm:$0xff]
    %v599 = vld [vmem:[#allocation6 + $0x8] sm:$0xff]
    %v600 = vld [vmem:[#allocation6 + $0x10] sm:$0xff]
    %v601 = vld [vmem:[#allocation6 + $0x18] sm:$0xff]
    %v602 = vld [vmem:[#allocation6 + $0x20] sm:$0xff]
    %v603 = vld [vmem:[#allocation6 + $0x28] sm:$0xff]
    %v604 = vld [vmem:[#allocation6 + $0x30] sm:$0xff]
    %v605 = vld [vmem:[#allocation6 + $0x38] sm:$0xff]
    %v606 = vld [vmem:[#allocation6 + $0x40] sm:$0xff]
    %v607 = vld [vmem:[#allocation6 + $0x48] sm:$0xff]
    %v608 = vld [vmem:[#allocation6 + $0x50] sm:$0xff]
    %v609 = vld [vmem:[#allocation6 + $0x58] sm:$0xff]
    %v610 = vld [vmem:[#allocation6 + $0x60] sm:$0xff]
    %v611 = vld [vmem:[#allocation6 + $0x68] sm:$0xff]
    %v612 = vld [vmem:[#allocation6 + $0x70] sm:$0xff]
    %v613 = vld [vmem:[#allocation6 + $0x78] sm:$0xff]
    %v614 = vld [vmem:[#allocation6 + $0x80] sm:$0xff]
    %v615 = vld [vmem:[#allocation6 + $0x88] sm:$0xff]
    %v616 = vld [vmem:[#allocation6 + $0x90] sm:$0xff]
    %v617 = vld [vmem:[#allocation6 + $0x98] sm:$0xff]
    %v618 = vld [vmem:[#allocation6 + $0xa0] sm:$0xff]
    %v619 = vld [vmem:[#allocation6 + $0xa8] sm:$0xff]
    %v620 = vld [vmem:[#allocation6 + $0xb0] sm:$0xff]
    %v621 = vld [vmem:[#allocation6 + $0xb8] sm:$0xff]
    %v622 = vld [vmem:[#allocation6 + $0xc0] sm:$0xff]
    %v623 = vld [vmem:[#allocation6 + $0xc8] sm:$0xff]
    %v624 = vld [vmem:[#allocation6 + $0xd0] sm:$0xff]
    %v625 = vld [vmem:[#allocation6 + $0xd8] sm:$0xff]
    %v626 = vld [vmem:[#allocation6 + $0xe0] sm:$0xff]
    %v627 = vld [vmem:[#allocation6 + $0xe8] sm:$0xff]
    %v628 = vld [vmem:[#allocation6 + $0xf0] sm:$0xff]
    %v629 = vld [vmem:[#allocation6 + $0xf8] sm:$0xff]
    %v630 = vld [vmem:[#allocation6 + $0x100] sm:$0xff]
    %v631 = vld [vmem:[#allocation6 + $0x108] sm:$0xff]
    %v632 = vld [vmem:[#allocation6 + $0x110] sm:$0xff]
    %v633 = vld [vmem:[#allocation6 + $0x118] sm:$0xff]
    %v634 = vld [vmem:[#allocation6 + $0x120] sm:$0xff]
    %v635 = vld [vmem:[#allocation6 + $0x128] sm:$0xff]
    %v636 = vld [vmem:[#allocation6 + $0x130] sm:$0xff]
    %v637 = vld [vmem:[#allocation6 + $0x138] sm:$0xff]
    %v638 = vld [vmem:[#allocation6 + $0x140] sm:$0xff]
    %v639 = vld [vmem:[#allocation6 + $0x148] sm:$0xff]
    %v640 = vld [vmem:[#allocation6 + $0x150] sm:$0xff]
    %v641 = vld [vmem:[#allocation6 + $0x158] sm:$0xff]
    %v642 = vld [vmem:[#allocation6 + $0x160] sm:$0xff]
    %v643 = vld [vmem:[#allocation6 + $0x168] sm:$0xff]
    %v644 = vld [vmem:[#allocation6 + $0x170] sm:$0xff]
    %v645 = vld [vmem:[#allocation6 + $0x178] sm:$0xff]
    %v646 = vld [vmem:[#allocation6 + $0x180] sm:$0xff]
    %v647 = vld [vmem:[#allocation6 + $0x188] sm:$0xff]
    %v648 = vld [vmem:[#allocation6 + $0x190] sm:$0xff]
    %v649 = vld [vmem:[#allocation6 + $0x198] sm:$0xff]
    %v650 = vld [vmem:[#allocation6 + $0x1a0] sm:$0xff]
    %v651 = vld [vmem:[#allocation6 + $0x1a8] sm:$0xff]
    %v652 = vld [vmem:[#allocation6 + $0x1b0] sm:$0xff]
    %v653 = vld [vmem:[#allocation6 + $0x1b8] sm:$0xff]
    %v654 = vld [vmem:[#allocation6 + $0x1c0] sm:$0xff]
    %v655 = vld [vmem:[#allocation6 + $0x1c8] sm:$0xff]
    %v656 = vld [vmem:[#allocation6 + $0x1d0] sm:$0xff]
    %v657 = vld [vmem:[#allocation6 + $0x1d8] sm:$0xff]
    %v658 = vld [vmem:[#allocation6 + $0x1e0] sm:$0xff]
    %v659 = vld [vmem:[#allocation6 + $0x1e8] sm:$0xff]
    %v660 = vld [vmem:[#allocation6 + $0x1f0] sm:$0xff]
    %v661 = vld [vmem:[#allocation6 + $0x1f8] sm:$0xff]
    %v662 = vld [vmem:[#allocation6 + $0x200] sm:$0xff]
    %v663 = vld [vmem:[#allocation6 + $0x208] sm:$0xff]
    %v664 = vld [vmem:[#allocation6 + $0x210] sm:$0xff]
    %v665 = vld [vmem:[#allocation6 + $0x218] sm:$0xff]
    %v666 = vld [vmem:[#allocation6 + $0x220] sm:$0xff]
    %v667 = vld [vmem:[#allocation6 + $0x228] sm:$0xff]
    %v668 = vld [vmem:[#allocation6 + $0x230] sm:$0xff]
    %v669 = vld [vmem:[#allocation6 + $0x238] sm:$0xff]
    %v670 = vld [vmem:[#allocation6 + $0x240] sm:$0xff]
    %v671 = vld [vmem:[#allocation6 + $0x248] sm:$0xff]
    %v672 = vld [vmem:[#allocation6 + $0x250] sm:$0xff]
    %v673 = vld [vmem:[#allocation6 + $0x258] sm:$0xff]
    %v674 = vld [vmem:[#allocation6 + $0x260] sm:$0xff]
    %v675 = vld [vmem:[#allocation6 + $0x268] sm:$0xff]
    %v676 = vld [vmem:[#allocation6 + $0x270] sm:$0xff]
    %v677 = vld [vmem:[#allocation6 + $0x278] sm:$0xff]
    %v678 = vld [vmem:[#allocation6 + $0x280] sm:$0xff]
    %v679 = vld [vmem:[#allocation6 + $0x288] sm:$0xff]
    %v680 = vld [vmem:[#allocation6 + $0x290] sm:$0xff]
    %v681 = vld [vmem:[#allocation6 + $0x298] sm:$0xff]
    %v682 = vld [vmem:[#allocation6 + $0x2a0] sm:$0xff]
    %v683 = vld [vmem:[#allocation6 + $0x2a8] sm:$0xff]
    %v684 = vld [vmem:[#allocation6 + $0x2b0] sm:$0xff]
    %v685 = vld [vmem:[#allocation6 + $0x2b8] sm:$0xff]
    %v686 = vld [vmem:[#allocation6 + $0x2c0] sm:$0xff]
    %v687 = vld [vmem:[#allocation6 + $0x2c8] sm:$0xff]
    %v688 = vld [vmem:[#allocation6 + $0x2d0] sm:$0xff]
    %v689 = vld [vmem:[#allocation6 + $0x2d8] sm:$0xff]
    %v690 = vld [vmem:[#allocation6 + $0x2e0] sm:$0xff]
    %v691 = vld [vmem:[#allocation6 + $0x2e8] sm:$0xff]
    %v692 = vld [vmem:[#allocation6 + $0x2f0] sm:$0xff]
    %v693 = vld [vmem:[#allocation6 + $0x2f8] sm:$0xff]
    %v694 = vld [vmem:[#allocation6 + $0x300] sm:$0xff]
    %v695 = vld [vmem:[#allocation6 + $0x308] sm:$0xff]
    %v696 = vld [vmem:[#allocation6 + $0x310] sm:$0xff]
    %v697 = vld [vmem:[#allocation6 + $0x318] sm:$0xff]
    %v698 = vld [vmem:[#allocation6 + $0x320] sm:$0xff]
    %v699 = vld [vmem:[#allocation6 + $0x328] sm:$0xff]
    %v700 = vld [vmem:[#allocation6 + $0x330] sm:$0xff]
    %v701 = vld [vmem:[#allocation6 + $0x338] sm:$0xff]
    %v702 = vld [vmem:[#allocation6 + $0x340] sm:$0xff]
    %v703 = vld [vmem:[#allocation6 + $0x348] sm:$0xff]
    %v704 = vld [vmem:[#allocation6 + $0x350] sm:$0xff]
    %v705 = vld [vmem:[#allocation6 + $0x358] sm:$0xff]
    %v706 = vld [vmem:[#allocation6 + $0x360] sm:$0xff]
    %v707 = vld [vmem:[#allocation6 + $0x368] sm:$0xff]
    %v708 = vld [vmem:[#allocation6 + $0x370] sm:$0xff]
    %v709 = vld [vmem:[#allocation6 + $0x378] sm:$0xff]
    %v710 = vld [vmem:[#allocation6 + $0x380] sm:$0xff]
    %v711 = vld [vmem:[#allocation6 + $0x388] sm:$0xff]
    %v712 = vld [vmem:[#allocation6 + $0x390] sm:$0xff]
    %v713 = vld [vmem:[#allocation6 + $0x398] sm:$0xff]
    %v714 = vld [vmem:[#allocation6 + $0x3a0] sm:$0xff]
    %v715 = vld [vmem:[#allocation6 + $0x3a8] sm:$0xff]
    %v716 = vld [vmem:[#allocation6 + $0x3b0] sm:$0xff]
    %v717 = vld [vmem:[#allocation6 + $0x3b8] sm:$0xff]
    %v718 = vld [vmem:[#allocation6 + $0x3c0] sm:$0xff]
    %v719 = vld [vmem:[#allocation6 + $0x3c8] sm:$0xff]
    %v720 = vld [vmem:[#allocation6 + $0x3d0] sm:$0xff]
    %v721 = vld [vmem:[#allocation6 + $0x3d8] sm:$0xff]
    %v722 = vld [vmem:[#allocation6 + $0x3e0] sm:$0xff]
    %v723 = vld [vmem:[#allocation6 + $0x3e8] sm:$0xff]
    %v724 = vld [vmem:[#allocation6 + $0x3f0] sm:$0xff]
    %v725 = vld [vmem:[#allocation6 + $0x3f8] sm:$0xff]
    %v726 = vld [vmem:[#allocation6 + $0x400] sm:$0xff]
    %v727 = vld [vmem:[#allocation6 + $0x408] sm:$0xff]
    %v728 = vld [vmem:[#allocation6 + $0x410] sm:$0xff]
    %v729 = vld [vmem:[#allocation6 + $0x418] sm:$0xff]
    %v730 = vld [vmem:[#allocation6 + $0x420] sm:$0xff]
    %v731 = vld [vmem:[#allocation6 + $0x428] sm:$0xff]
    %v732 = vld [vmem:[#allocation6 + $0x430] sm:$0xff]
    %v733 = vld [vmem:[#allocation6 + $0x438] sm:$0xff]
    %v734 = vld [vmem:[#allocation6 + $0x440] sm:$0xff]
    %v735 = vld [vmem:[#allocation6 + $0x448] sm:$0xff]
    %v736 = vld [vmem:[#allocation6 + $0x450] sm:$0xff]
    %v737 = vld [vmem:[#allocation6 + $0x458] sm:$0xff]
    %v738 = vld [vmem:[#allocation6 + $0x460] sm:$0xff]
    %v739 = vld [vmem:[#allocation6 + $0x468] sm:$0xff]
    %v740 = vld [vmem:[#allocation6 + $0x470] sm:$0xff]
    %v741 = vld [vmem:[#allocation6 + $0x478] sm:$0xff]
    %v742 = vld [vmem:[#allocation6 + $0x480] sm:$0xff]
    %v743 = vld [vmem:[#allocation6 + $0x488] sm:$0xff]
    %v744 = vld [vmem:[#allocation6 + $0x490] sm:$0xff]
    %v745 = vld [vmem:[#allocation6 + $0x498] sm:$0xff]
    %v746 = vld [vmem:[#allocation6 + $0x4a0] sm:$0xff]
    %v747 = vld [vmem:[#allocation6 + $0x4a8] sm:$0xff]
    %v748 = vld [vmem:[#allocation6 + $0x4b0] sm:$0xff]
    %v749 = vld [vmem:[#allocation6 + $0x4b8] sm:$0xff]
    %v750 = vld [vmem:[#allocation6 + $0x4c0] sm:$0xff]
    %v751 = vld [vmem:[#allocation6 + $0x4c8] sm:$0xff]
    %v752 = vld [vmem:[#allocation6 + $0x4d0] sm:$0xff]
    %v753 = vld [vmem:[#allocation6 + $0x4d8] sm:$0xff]
    %v754 = vld [vmem:[#allocation6 + $0x4e0] sm:$0xff]
    %v755 = vld [vmem:[#allocation6 + $0x4e8] sm:$0xff]
    %v756 = vld [vmem:[#allocation6 + $0x4f0] sm:$0xff]
    %v757 = vld [vmem:[#allocation6 + $0x4f8] sm:$0xff]
    %v758 = vld [vmem:[#allocation6 + $0x500] sm:$0xff]
    %v759 = vld [vmem:[#allocation6 + $0x508] sm:$0xff]
    %v760 = vld [vmem:[#allocation6 + $0x510] sm:$0xff]
    %v761 = vld [vmem:[#allocation6 + $0x518] sm:$0xff]
    %v762 = vld [vmem:[#allocation6 + $0x520] sm:$0xff]
    %v763 = vld [vmem:[#allocation6 + $0x528] sm:$0xff]
    %v764 = vld [vmem:[#allocation6 + $0x530] sm:$0xff]
    %v765 = vld [vmem:[#allocation6 + $0x538] sm:$0xff]
    %v766 = vld [vmem:[#allocation6 + $0x540] sm:$0xff]
    %v767 = vld [vmem:[#allocation6 + $0x548] sm:$0xff]
    %v768 = vld [vmem:[#allocation6 + $0x550] sm:$0xff]
    %v769 = vld [vmem:[#allocation6 + $0x558] sm:$0xff]
    %v770 = vld [vmem:[#allocation6 + $0x560] sm:$0xff]
    %v771 = vld [vmem:[#allocation6 + $0x568] sm:$0xff]
    %v772 = vld [vmem:[#allocation6 + $0x570] sm:$0xff]
    %v773 = vld [vmem:[#allocation6 + $0x578] sm:$0xff]
    %v774 = vld [vmem:[#allocation6 + $0x580] sm:$0xff]
    %v775 = vld [vmem:[#allocation6 + $0x588] sm:$0xff]
    %v776 = vld [vmem:[#allocation6 + $0x590] sm:$0xff]
    %v777 = vld [vmem:[#allocation6 + $0x598] sm:$0xff]
    %v778 = vld [vmem:[#allocation6 + $0x5a0] sm:$0xff]
    %v779 = vld [vmem:[#allocation6 + $0x5a8] sm:$0xff]
    %v780 = vld [vmem:[#allocation6 + $0x5b0] sm:$0xff]
    %v781 = vld [vmem:[#allocation6 + $0x5b8] sm:$0xff]
    %v782 = vld [vmem:[#allocation6 + $0x5c0] sm:$0xff]
    %v783 = vld [vmem:[#allocation6 + $0x5c8] sm:$0xff]
    %v784 = vld [vmem:[#allocation6 + $0x5d0] sm:$0xff]
    %v785 = vld [vmem:[#allocation6 + $0x5d8] sm:$0xff]
    %v786 = vld [vmem:[#allocation6 + $0x5e0] sm:$0xff]
    %v787 = vld [vmem:[#allocation6 + $0x5e8] sm:$0xff]
    %v788 = vld [vmem:[#allocation6 + $0x5f0] sm:$0xff]
    %v789 = vld [vmem:[#allocation6 + $0x5f8] sm:$0xff]
    %v790 = vld [vmem:[#allocation6 + $0x600] sm:$0xff]
    %v791 = vld [vmem:[#allocation6 + $0x608] sm:$0xff]
    %v792 = vld [vmem:[#allocation6 + $0x610] sm:$0xff]
    %v793 = vld [vmem:[#allocation6 + $0x618] sm:$0xff]
    %v794 = vld [vmem:[#allocation6 + $0x620] sm:$0xff]
    %v795 = vld [vmem:[#allocation6 + $0x628] sm:$0xff]
    %v796 = vld [vmem:[#allocation6 + $0x630] sm:$0xff]
    %v797 = vld [vmem:[#allocation6 + $0x638] sm:$0xff]
    %v798 = vld [vmem:[#allocation6 + $0x640] sm:$0xff]
    %v799 = vld [vmem:[#allocation6 + $0x648] sm:$0xff]
    %v800 = vld [vmem:[#allocation6 + $0x650] sm:$0xff]
    %v801 = vld [vmem:[#allocation6 + $0x658] sm:$0xff]
    %v802 = vld [vmem:[#allocation6 + $0x660] sm:$0xff]
    %v803 = vld [vmem:[#allocation6 + $0x668] sm:$0xff]
    %v804 = vld [vmem:[#allocation6 + $0x670] sm:$0xff]
    %v805 = vld [vmem:[#allocation6 + $0x678] sm:$0xff]
    %v806 = vld [vmem:[#allocation6 + $0x680] sm:$0xff]
    %v807 = vld [vmem:[#allocation6 + $0x688] sm:$0xff]
    %v808 = vld [vmem:[#allocation6 + $0x690] sm:$0xff]
    %v809 = vld [vmem:[#allocation6 + $0x698] sm:$0xff]
    %v810 = vld [vmem:[#allocation6 + $0x6a0] sm:$0xff]
    %v811 = vld [vmem:[#allocation6 + $0x6a8] sm:$0xff]
    %v812 = vld [vmem:[#allocation6 + $0x6b0] sm:$0xff]
    %v813 = vld [vmem:[#allocation6 + $0x6b8] sm:$0xff]
    %v814 = vld [vmem:[#allocation6 + $0x6c0] sm:$0xff]
    %v815 = vld [vmem:[#allocation6 + $0x6c8] sm:$0xff]
    %v816 = vld [vmem:[#allocation6 + $0x6d0] sm:$0xff]
    %v817 = vld [vmem:[#allocation6 + $0x6d8] sm:$0xff]
    %v818 = vld [vmem:[#allocation6 + $0x6e0] sm:$0xff]
    %v819 = vld [vmem:[#allocation6 + $0x6e8] sm:$0xff]
    %v820 = vld [vmem:[#allocation6 + $0x6f0] sm:$0xff]
    %v821 = vld [vmem:[#allocation6 + $0x6f8] sm:$0xff]
    %v822 = vld [vmem:[#allocation6 + $0x700] sm:$0xff]
    %v823 = vld [vmem:[#allocation6 + $0x708] sm:$0xff]
    %v824 = vld [vmem:[#allocation6 + $0x710] sm:$0xff]
    %v825 = vld [vmem:[#allocation6 + $0x718] sm:$0xff]
    %v826 = vld [vmem:[#allocation6 + $0x720] sm:$0xff]
    %v827 = vld [vmem:[#allocation6 + $0x728] sm:$0xff]
    %v828 = vld [vmem:[#allocation6 + $0x730] sm:$0xff]
    %v829 = vld [vmem:[#allocation6 + $0x738] sm:$0xff]
    %v830 = vld [vmem:[#allocation6 + $0x740] sm:$0xff]
    %v831 = vld [vmem:[#allocation6 + $0x748] sm:$0xff]
    %v832 = vld [vmem:[#allocation6 + $0x750] sm:$0xff]
    %v833 = vld [vmem:[#allocation6 + $0x758] sm:$0xff]
    %v834 = vld [vmem:[#allocation6 + $0x760] sm:$0xff]
    %v835 = vld [vmem:[#allocation6 + $0x768] sm:$0xff]
    %v836 = vld [vmem:[#allocation6 + $0x770] sm:$0xff]
    %v837 = vld [vmem:[#allocation6 + $0x778] sm:$0xff]
    %v838 = vld [vmem:[#allocation6 + $0x780] sm:$0xff]
    %v839 = vld [vmem:[#allocation6 + $0x788] sm:$0xff]
    %v840 = vld [vmem:[#allocation6 + $0x790] sm:$0xff]
    %v841 = vld [vmem:[#allocation6 + $0x798] sm:$0xff]
    %v842 = vld [vmem:[#allocation6 + $0x7a0] sm:$0xff]
    %v843 = vld [vmem:[#allocation6 + $0x7a8] sm:$0xff]
    %v844 = vld [vmem:[#allocation6 + $0x7b0] sm:$0xff]
    %v845 = vld [vmem:[#allocation6 + $0x7b8] sm:$0xff]
    %v846 = vld [vmem:[#allocation6 + $0x7c0] sm:$0xff]
    %v847 = vld [vmem:[#allocation6 + $0x7c8] sm:$0xff]
    %v848 = vld [vmem:[#allocation6 + $0x7d0] sm:$0xff]
    %v849 = vld [vmem:[#allocation6 + $0x7d8] sm:$0xff]
    %v850 = vld [vmem:[#allocation6 + $0x7e0] sm:$0xff]
    %v851 = vld [vmem:[#allocation6 + $0x7e8] sm:$0xff]
    %v852 = vld [vmem:[#allocation6 + $0x7f0] sm:$0xff]
    %v853 = vld [vmem:[#allocation6 + $0x7f8] sm:$0xff]
    %v854 = vld [vmem:[#allocation2] sm:$0xff]
    %v855 = vld [vmem:[#allocation2 + $0x8] sm:$0xff]
    %v856 = vld [vmem:[#allocation2 + $0x10] sm:$0xff]
    %v857 = vld [vmem:[#allocation2 + $0x18] sm:$0xff]
    %v858 = vld [vmem:[#allocation2 + $0x20] sm:$0xff]
    %v859 = vld [vmem:[#allocation2 + $0x28] sm:$0xff]
    %v860 = vld [vmem:[#allocation2 + $0x30] sm:$0xff]
    %v861 = vld [vmem:[#allocation2 + $0x38] sm:$0xff]
    %862 = vmatpush.msra.mxu0 %v718
    %863 = vmatpush.msra.mxu0 %v710
    %864 = vmatpush.msra.mxu0 %v702
    %865 = vmatpush.msra.mxu0 %v694
    %866 = vmatpush.msra.mxu0 %v686
    %867 = vmatpush.msra.mxu0 %v678
    %868 = vmatpush.msra.mxu0 %v670
    %869 = vmatpush.msra.mxu0 %v662
    %870 = vmatpush.msra.mxu0 %v654
    %871 = vmatpush.msra.mxu0 %v646
    %872 = vmatpush.msra.mxu0 %v638
    %873 = vmatpush.msra.mxu0 %v630
    %874 = vmatpush.msra.mxu0 %v622
    %875 = vmatpush.msra.mxu0 %v614
    %876 = vmatpush.msra.mxu0 %v606
    %877 = vmatpush.msra.mxu0 %v598
    %878 = vmatmul.f32.gmra.mxu0 0.0
    %v879 = vpop.f32.mrf.mxu0
    %v880 = vadd.f32 0.0, %v879
    %881 = vdwg.mxu0
    %882 = vmatpush.msra.mxu0 %v846
    %883 = vmatpush.msra.mxu0 %v838
    %884 = vmatpush.msra.mxu0 %v830
    %885 = vmatpush.msra.mxu0 %v822
    %886 = vmatpush.msra.mxu0 %v814
    %887 = vmatpush.msra.mxu0 %v806
    %888 = vmatpush.msra.mxu0 %v798
    %889 = vmatpush.msra.mxu0 %v790
    %890 = vmatpush.msra.mxu0 %v782
    %891 = vmatpush.msra.mxu0 %v774
    %892 = vmatpush.msra.mxu0 %v766
    %893 = vmatpush.msra.mxu0 %v758
    %894 = vmatpush.msra.mxu0 %v750
    %895 = vmatpush.msra.mxu0 %v742
    %896 = vmatpush.msra.mxu0 %v734
    %897 = vmatpush.msra.mxu0 %v726
    %898 = vmatmul.f32.gmra.mxu0 0.0
    %v899 = vpop.f32.mrf.mxu0
    %v900 = vadd.f32 %v880, %v899
    %901 = vdwg.mxu0
    %902 = vmatpush.msra.mxu0 %v719
    %903 = vmatpush.msra.mxu0 %v711
    %904 = vmatpush.msra.mxu0 %v703
    %905 = vmatpush.msra.mxu0 %v695
    %906 = vmatpush.msra.mxu0 %v687
    %907 = vmatpush.msra.mxu0 %v679
    %908 = vmatpush.msra.mxu0 %v671
    %909 = vmatpush.msra.mxu0 %v663
    %910 = vmatpush.msra.mxu0 %v655
    %911 = vmatpush.msra.mxu0 %v647
    %912 = vmatpush.msra.mxu0 %v639
    %913 = vmatpush.msra.mxu0 %v631
    %914 = vmatpush.msra.mxu0 %v623
    %915 = vmatpush.msra.mxu0 %v615
    %916 = vmatpush.msra.mxu0 %v607
    %917 = vmatpush.msra.mxu0 %v599
    %918 = vmatmul.f32.gmra.mxu0 0.0
    %v919 = vpop.f32.mrf.mxu0
    %v920 = vadd.f32 0.0, %v919
    %921 = vdwg.mxu0
    %922 = vmatpush.msra.mxu0 %v847
    %923 = vmatpush.msra.mxu0 %v839
    %924 = vmatpush.msra.mxu0 %v831
    %925 = vmatpush.msra.mxu0 %v823
    %926 = vmatpush.msra.mxu0 %v815
    %927 = vmatpush.msra.mxu0 %v807
    %928 = vmatpush.msra.mxu0 %v799
    %929 = vmatpush.msra.mxu0 %v791
    %930 = vmatpush.msra.mxu0 %v783
    %931 = vmatpush.msra.mxu0 %v775
    %932 = vmatpush.msra.mxu0 %v767
    %933 = vmatpush.msra.mxu0 %v759
    %934 = vmatpush.msra.mxu0 %v751
    %935 = vmatpush.msra.mxu0 %v743
    %936 = vmatpush.msra.mxu0 %v735
    %937 = vmatpush.msra.mxu0 %v727
    %938 = vmatmul.f32.gmra.mxu0 0.0
    %v939 = vpop.f32.mrf.mxu0
    %v940 = vadd.f32 %v920, %v939
    %941 = vdwg.mxu0
    %942 = vmatpush.msra.mxu0 %v720
    %943 = vmatpush.msra.mxu0 %v712
    %944 = vmatpush.msra.mxu0 %v704
    %945 = vmatpush.msra.mxu0 %v696
    %946 = vmatpush.msra.mxu0 %v688
    %947 = vmatpush.msra.mxu0 %v680
    %948 = vmatpush.msra.mxu0 %v672
    %949 = vmatpush.msra.mxu0 %v664
    %950 = vmatpush.msra.mxu0 %v656
    %951 = vmatpush.msra.mxu0 %v648
    %952 = vmatpush.msra.mxu0 %v640
    %953 = vmatpush.msra.mxu0 %v632
    %954 = vmatpush.msra.mxu0 %v624
    %955 = vmatpush.msra.mxu0 %v616
    %956 = vmatpush.msra.mxu0 %v608
    %957 = vmatpush.msra.mxu0 %v600
    %958 = vmatmul.f32.gmra.mxu0 0.0
    %v959 = vpop.f32.mrf.mxu0
    %v960 = vadd.f32 0.0, %v959
    %961 = vdwg.mxu0
    %962 = vmatpush.msra.mxu0 %v848
    %963 = vmatpush.msra.mxu0 %v840
    %964 = vmatpush.msra.mxu0 %v832
    %965 = vmatpush.msra.mxu0 %v824
    %966 = vmatpush.msra.mxu0 %v816
    %967 = vmatpush.msra.mxu0 %v808
    %968 = vmatpush.msra.mxu0 %v800
    %969 = vmatpush.msra.mxu0 %v792
    %970 = vmatpush.msra.mxu0 %v784
    %971 = vmatpush.msra.mxu0 %v776
    %972 = vmatpush.msra.mxu0 %v768
    %973 = vmatpush.msra.mxu0 %v760
    %974 = vmatpush.msra.mxu0 %v752
    %975 = vmatpush.msra.mxu0 %v744
    %976 = vmatpush.msra.mxu0 %v736
    %977 = vmatpush.msra.mxu0 %v728
    %978 = vmatmul.f32.gmra.mxu0 0.0
    %v979 = vpop.f32.mrf.mxu0
    %v980 = vadd.f32 %v960, %v979
    %981 = vdwg.mxu0
    %982 = vmatpush.msra.mxu0 %v721
    %983 = vmatpush.msra.mxu0 %v713
    %984 = vmatpush.msra.mxu0 %v705
    %985 = vmatpush.msra.mxu0 %v697
    %986 = vmatpush.msra.mxu0 %v689
    %987 = vmatpush.msra.mxu0 %v681
    %988 = vmatpush.msra.mxu0 %v673
    %989 = vmatpush.msra.mxu0 %v665
    %990 = vmatpush.msra.mxu0 %v657
    %991 = vmatpush.msra.mxu0 %v649
    %992 = vmatpush.msra.mxu0 %v641
    %993 = vmatpush.msra.mxu0 %v633
    %994 = vmatpush.msra.mxu0 %v625
    %995 = vmatpush.msra.mxu0 %v617
    %996 = vmatpush.msra.mxu0 %v609
    %997 = vmatpush.msra.mxu0 %v601
    %998 = vmatmul.f32.gmra.mxu0 0.0
    %v999 = vpop.f32.mrf.mxu0
    %v1000 = vadd.f32 0.0, %v999
    %1001 = vdwg.mxu0
    %1002 = vmatpush.msra.mxu0 %v849
    %1003 = vmatpush.msra.mxu0 %v841
    %1004 = vmatpush.msra.mxu0 %v833
    %1005 = vmatpush.msra.mxu0 %v825
    %1006 = vmatpush.msra.mxu0 %v817
    %1007 = vmatpush.msra.mxu0 %v809
    %1008 = vmatpush.msra.mxu0 %v801
    %1009 = vmatpush.msra.mxu0 %v793
    %1010 = vmatpush.msra.mxu0 %v785
    %1011 = vmatpush.msra.mxu0 %v777
    %1012 = vmatpush.msra.mxu0 %v769
    %1013 = vmatpush.msra.mxu0 %v761
    %1014 = vmatpush.msra.mxu0 %v753
    %1015 = vmatpush.msra.mxu0 %v745
    %1016 = vmatpush.msra.mxu0 %v737
    %1017 = vmatpush.msra.mxu0 %v729
    %1018 = vmatmul.f32.gmra.mxu0 0.0
    %v1019 = vpop.f32.mrf.mxu0
    %v1020 = vadd.f32 %v1000, %v1019
    %1021 = vdwg.mxu0
    %1022 = vmatpush.msra.mxu0 %v722
    %1023 = vmatpush.msra.mxu0 %v714
    %1024 = vmatpush.msra.mxu0 %v706
    %1025 = vmatpush.msra.mxu0 %v698
    %1026 = vmatpush.msra.mxu0 %v690
    %1027 = vmatpush.msra.mxu0 %v682
    %1028 = vmatpush.msra.mxu0 %v674
    %1029 = vmatpush.msra.mxu0 %v666
    %1030 = vmatpush.msra.mxu0 %v658
    %1031 = vmatpush.msra.mxu0 %v650
    %1032 = vmatpush.msra.mxu0 %v642
    %1033 = vmatpush.msra.mxu0 %v634
    %1034 = vmatpush.msra.mxu0 %v626
    %1035 = vmatpush.msra.mxu0 %v618
    %1036 = vmatpush.msra.mxu0 %v610
    %1037 = vmatpush.msra.mxu0 %v602
    %1038 = vmatmul.f32.gmra.mxu0 0.0
    %v1039 = vpop.f32.mrf.mxu0
    %v1040 = vadd.f32 0.0, %v1039
    %1041 = vdwg.mxu0
    %1042 = vmatpush.msra.mxu0 %v850
    %1043 = vmatpush.msra.mxu0 %v842
    %1044 = vmatpush.msra.mxu0 %v834
    %1045 = vmatpush.msra.mxu0 %v826
    %1046 = vmatpush.msra.mxu0 %v818
    %1047 = vmatpush.msra.mxu0 %v810
    %1048 = vmatpush.msra.mxu0 %v802
    %1049 = vmatpush.msra.mxu0 %v794
    %1050 = vmatpush.msra.mxu0 %v786
    %1051 = vmatpush.msra.mxu0 %v778
    %1052 = vmatpush.msra.mxu0 %v770
    %1053 = vmatpush.msra.mxu0 %v762
    %1054 = vmatpush.msra.mxu0 %v754
    %1055 = vmatpush.msra.mxu0 %v746
    %1056 = vmatpush.msra.mxu0 %v738
    %1057 = vmatpush.msra.mxu0 %v730
    %1058 = vmatmul.f32.gmra.mxu0 0.0
    %v1059 = vpop.f32.mrf.mxu0
    %v1060 = vadd.f32 %v1040, %v1059
    %1061 = vdwg.mxu0
    %1062 = vmatpush.msra.mxu0 %v723
    %1063 = vmatpush.msra.mxu0 %v715
    %1064 = vmatpush.msra.mxu0 %v707
    %1065 = vmatpush.msra.mxu0 %v699
    %1066 = vmatpush.msra.mxu0 %v691
    %1067 = vmatpush.msra.mxu0 %v683
    %1068 = vmatpush.msra.mxu0 %v675
    %1069 = vmatpush.msra.mxu0 %v667
    %1070 = vmatpush.msra.mxu0 %v659
    %1071 = vmatpush.msra.mxu0 %v651
    %1072 = vmatpush.msra.mxu0 %v643
    %1073 = vmatpush.msra.mxu0 %v635
    %1074 = vmatpush.msra.mxu0 %v627
    %1075 = vmatpush.msra.mxu0 %v619
    %1076 = vmatpush.msra.mxu0 %v611
    %1077 = vmatpush.msra.mxu0 %v603
    %1078 = vmatmul.f32.gmra.mxu0 0.0
    %v1079 = vpop.f32.mrf.mxu0
    %v1080 = vadd.f32 0.0, %v1079
    %1081 = vdwg.mxu0
    %1082 = vmatpush.msra.mxu0 %v851
    %1083 = vmatpush.msra.mxu0 %v843
    %1084 = vmatpush.msra.mxu0 %v835
    %1085 = vmatpush.msra.mxu0 %v827
    %1086 = vmatpush.msra.mxu0 %v819
    %1087 = vmatpush.msra.mxu0 %v811
    %1088 = vmatpush.msra.mxu0 %v803
    %1089 = vmatpush.msra.mxu0 %v795
    %1090 = vmatpush.msra.mxu0 %v787
    %1091 = vmatpush.msra.mxu0 %v779
    %1092 = vmatpush.msra.mxu0 %v771
    %1093 = vmatpush.msra.mxu0 %v763
    %1094 = vmatpush.msra.mxu0 %v755
    %1095 = vmatpush.msra.mxu0 %v747
    %1096 = vmatpush.msra.mxu0 %v739
    %1097 = vmatpush.msra.mxu0 %v731
    %1098 = vmatmul.f32.gmra.mxu0 0.0
    %v1099 = vpop.f32.mrf.mxu0
    %v1100 = vadd.f32 %v1080, %v1099
    %1101 = vdwg.mxu0
    %1102 = vmatpush.msra.mxu0 %v724
    %1103 = vmatpush.msra.mxu0 %v716
    %1104 = vmatpush.msra.mxu0 %v708
    %1105 = vmatpush.msra.mxu0 %v700
    %1106 = vmatpush.msra.mxu0 %v692
    %1107 = vmatpush.msra.mxu0 %v684
    %1108 = vmatpush.msra.mxu0 %v676
    %1109 = vmatpush.msra.mxu0 %v668
    %1110 = vmatpush.msra.mxu0 %v660
    %1111 = vmatpush.msra.mxu0 %v652
    %1112 = vmatpush.msra.mxu0 %v644
    %1113 = vmatpush.msra.mxu0 %v636
    %1114 = vmatpush.msra.mxu0 %v628
    %1115 = vmatpush.msra.mxu0 %v620
    %1116 = vmatpush.msra.mxu0 %v612
    %1117 = vmatpush.msra.mxu0 %v604
    %1118 = vmatmul.f32.gmra.mxu0 0.0
    %v1119 = vpop.f32.mrf.mxu0
    %v1120 = vadd.f32 0.0, %v1119
    %1121 = vdwg.mxu0
    %1122 = vmatpush.msra.mxu0 %v852
    %1123 = vmatpush.msra.mxu0 %v844
    %1124 = vmatpush.msra.mxu0 %v836
    %1125 = vmatpush.msra.mxu0 %v828
    %1126 = vmatpush.msra.mxu0 %v820
    %1127 = vmatpush.msra.mxu0 %v812
    %1128 = vmatpush.msra.mxu0 %v804
    %1129 = vmatpush.msra.mxu0 %v796
    %1130 = vmatpush.msra.mxu0 %v788
    %1131 = vmatpush.msra.mxu0 %v780
    %1132 = vmatpush.msra.mxu0 %v772
    %1133 = vmatpush.msra.mxu0 %v764
    %1134 = vmatpush.msra.mxu0 %v756
    %1135 = vmatpush.msra.mxu0 %v748
    %1136 = vmatpush.msra.mxu0 %v740
    %1137 = vmatpush.msra.mxu0 %v732
    %1138 = vmatmul.f32.gmra.mxu0 0.0
    %v1139 = vpop.f32.mrf.mxu0
    %v1140 = vadd.f32 %v1120, %v1139
    %1141 = vdwg.mxu0
    %1142 = vmatpush.msra.mxu0 %v725
    %1143 = vmatpush.msra.mxu0 %v717
    %1144 = vmatpush.msra.mxu0 %v709
    %1145 = vmatpush.msra.mxu0 %v701
    %1146 = vmatpush.msra.mxu0 %v693
    %1147 = vmatpush.msra.mxu0 %v685
    %1148 = vmatpush.msra.mxu0 %v677
    %1149 = vmatpush.msra.mxu0 %v669
    %1150 = vmatpush.msra.mxu0 %v661
    %1151 = vmatpush.msra.mxu0 %v653
    %1152 = vmatpush.msra.mxu0 %v645
    %1153 = vmatpush.msra.mxu0 %v637
    %1154 = vmatpush.msra.mxu0 %v629
    %1155 = vmatpush.msra.mxu0 %v621
    %1156 = vmatpush.msra.mxu0 %v613
    %1157 = vmatpush.msra.mxu0 %v605
    %1158 = vmatmul.f32.gmra.mxu0 0.0
    %v1159 = vpop.f32.mrf.mxu0
    %v1160 = vadd.f32 0.0, %v1159
    %1161 = vdwg.mxu0
    %1162 = vmatpush.msra.mxu0 %v853
    %1163 = vmatpush.msra.mxu0 %v845
    %1164 = vmatpush.msra.mxu0 %v837
    %1165 = vmatpush.msra.mxu0 %v829
    %1166 = vmatpush.msra.mxu0 %v821
    %1167 = vmatpush.msra.mxu0 %v813
    %1168 = vmatpush.msra.mxu0 %v805
    %1169 = vmatpush.msra.mxu0 %v797
    %1170 = vmatpush.msra.mxu0 %v789
    %1171 = vmatpush.msra.mxu0 %v781
    %1172 = vmatpush.msra.mxu0 %v773
    %1173 = vmatpush.msra.mxu0 %v765
    %1174 = vmatpush.msra.mxu0 %v757
    %1175 = vmatpush.msra.mxu0 %v749
    %1176 = vmatpush.msra.mxu0 %v741
    %1177 = vmatpush.msra.mxu0 %v733
    %1178 = vmatmul.f32.gmra.mxu0 0.0
    %v1179 = vpop.f32.mrf.mxu0
    %v1180 = vadd.f32 %v1160, %v1179
    %1181 = vdwg.mxu0
    %v1182 = vadd.f32 %v854, %v900
    %v1183 = vadd.f32 %v855, %v940
    %v1184 = vadd.f32 %v856, %v980
    %v1185 = vadd.f32 %v857, %v1020
    %v1186 = vadd.f32 %v858, %v1060
    %v1187 = vadd.f32 %v859, %v1100
    %v1188 = vadd.f32 %v860, %v1140
    %v1189 = vadd.f32 %v861, %v1180
    %v1190 = vmul.f32 %v1182, 0.5
    %v1191 = vmul.f32 %v1183, 0.5
    %v1192 = vtanh.pop %v1190
    %v1193 = vtanh.pop %v1191
    %v1194 = vmul.f32 %v1192, 0.5
    %v1195 = vmul.f32 %v1193, 0.5
    %v1196 = vadd.f32 %v1194, 0.5
    %v1197 = vadd.f32 %v1195, 0.5
    %v1198 = vmul.f32 %v1184, 0.5
    %v1199 = vmul.f32 %v1185, 0.5
    %v1200 = vtanh.pop %v1198
    %v1201 = vtanh.pop %v1199
    %v1202 = vmul.f32 %v1200, 0.5
    %v1203 = vmul.f32 %v1201, 0.5
    %v1204 = vadd.f32 %v1202, 0.5
    %v1205 = vadd.f32 %v1203, 0.5
    %v1206 = vtanh.pop %v1186
    %v1207 = vtanh.pop %v1187
    %v1208 = vmul.f32 %v1188, 0.5
    %v1209 = vmul.f32 %v1189, 0.5
    %v1210 = vtanh.pop %v1208
    %v1211 = vtanh.pop %v1209
    %v1212 = vmul.f32 %v1210, 0.5
    %v1213 = vmul.f32 %v1211, 0.5
    %v1214 = vadd.f32 %v1212, 0.5
    %v1215 = vadd.f32 %v1213, 0.5
    %v1216 = vmul.f32 %v1204, 0.0
    %v1217 = vmul.f32 %v1205, 0.0
    %v1218 = vmul.f32 %v1196, %v1206
    %v1219 = vmul.f32 %v1197, %v1207
    %v1220 = vadd.f32 %v1216, %v1218
    %v1221 = vadd.f32 %v1217, %v1219
    %v1222 = vtanh.pop %v1220
    %v1223 = vtanh.pop %v1221
    %v1224 = vmul.f32 %v1214, %v1222
    %v1225 = vmul.f32 %v1215, %v1223
    %s1226 = scalar_lea.vmem [#allocation2], 64
    %v1227 = vld [vmem:[%s1226] sm:$0xff]
    %v1228 = vld [vmem:[%s1226 + $0x8] sm:$0xff]
    %v1229 = vld [vmem:[%s1226 + $0x10] sm:$0xff]
    %v1230 = vld [vmem:[%s1226 + $0x18] sm:$0xff]
    %v1231 = vld [vmem:[%s1226 + $0x20] sm:$0xff]
    %v1232 = vld [vmem:[%s1226 + $0x28] sm:$0xff]
    %v1233 = vld [vmem:[%s1226 + $0x30] sm:$0xff]
    %v1234 = vld [vmem:[%s1226 + $0x38] sm:$0xff]
    %1235 = vmatpush.msra.mxu0 %v718
    %1236 = vmatpush.msra.mxu0 %v710
    %1237 = vmatpush.msra.mxu0 %v702
    %1238 = vmatpush.msra.mxu0 %v694
    %1239 = vmatpush.msra.mxu0 %v686
    %1240 = vmatpush.msra.mxu0 %v678
    %1241 = vmatpush.msra.mxu0 %v670
    %1242 = vmatpush.msra.mxu0 %v662
    %1243 = vmatpush.msra.mxu0 %v654
    %1244 = vmatpush.msra.mxu0 %v646
    %1245 = vmatpush.msra.mxu0 %v638
    %1246 = vmatpush.msra.mxu0 %v630
    %1247 = vmatpush.msra.mxu0 %v622
    %1248 = vmatpush.msra.mxu0 %v614
    %1249 = vmatpush.msra.mxu0 %v606
    %1250 = vmatpush.msra.mxu0 %v598
    %1251 = vmatmul.f32.gmra.mxu0 %v1224
    %v1252 = vpop.f32.mrf.mxu0
    %v1253 = vadd.f32 0.0, %v1252
    %1254 = vdwg.mxu0
    %1255 = vmatpush.msra.mxu0 %v846
    %1256 = vmatpush.msra.mxu0 %v838
    %1257 = vmatpush.msra.mxu0 %v830
    %1258 = vmatpush.msra.mxu0 %v822
    %1259 = vmatpush.msra.mxu0 %v814
    %1260 = vmatpush.msra.mxu0 %v806
    %1261 = vmatpush.msra.mxu0 %v798
    %1262 = vmatpush.msra.mxu0 %v790
    %1263 = vmatpush.msra.mxu0 %v782
    %1264 = vmatpush.msra.mxu0 %v774
    %1265 = vmatpush.msra.mxu0 %v766
    %1266 = vmatpush.msra.mxu0 %v758
    %1267 = vmatpush.msra.mxu0 %v750
    %1268 = vmatpush.msra.mxu0 %v742
    %1269 = vmatpush.msra.mxu0 %v734
    %1270 = vmatpush.msra.mxu0 %v726
    %1271 = vmatmul.f32.gmra.mxu0 %v1225
    %v1272 = vpop.f32.mrf.mxu0
    %v1273 = vadd.f32 %v1253, %v1272
    %1274 = vdwg.mxu0
    %1275 = vmatpush.msra.mxu0 %v719
    %1276 = vmatpush.msra.mxu0 %v711
    %1277 = vmatpush.msra.mxu0 %v703
    %1278 = vmatpush.msra.mxu0 %v695
    %1279 = vmatpush.msra.mxu0 %v687
    %1280 = vmatpush.msra.mxu0 %v679
    %1281 = vmatpush.msra.mxu0 %v671
    %1282 = vmatpush.msra.mxu0 %v663
    %1283 = vmatpush.msra.mxu0 %v655
    %1284 = vmatpush.msra.mxu0 %v647
    %1285 = vmatpush.msra.mxu0 %v639
    %1286 = vmatpush.msra.mxu0 %v631
    %1287 = vmatpush.msra.mxu0 %v623
    %1288 = vmatpush.msra.mxu0 %v615
    %1289 = vmatpush.msra.mxu0 %v607
    %1290 = vmatpush.msra.mxu0 %v599
    %1291 = vmatmul.f32.gmra.mxu0 %v1224
    %v1292 = vpop.f32.mrf.mxu0
    %v1293 = vadd.f32 0.0, %v1292
    %1294 = vdwg.mxu0
    %1295 = vmatpush.msra.mxu0 %v847
    %1296 = vmatpush.msra.mxu0 %v839
    %1297 = vmatpush.msra.mxu0 %v831
    %1298 = vmatpush.msra.mxu0 %v823
    %1299 = vmatpush.msra.mxu0 %v815
    %1300 = vmatpush.msra.mxu0 %v807
    %1301 = vmatpush.msra.mxu0 %v799
    %1302 = vmatpush.msra.mxu0 %v791
    %1303 = vmatpush.msra.mxu0 %v783
    %1304 = vmatpush.msra.mxu0 %v775
    %1305 = vmatpush.msra.mxu0 %v767
    %1306 = vmatpush.msra.mxu0 %v759
    %1307 = vmatpush.msra.mxu0 %v751
    %1308 = vmatpush.msra.mxu0 %v743
    %1309 = vmatpush.msra.mxu0 %v735
    %1310 = vmatpush.msra.mxu0 %v727
    %1311 = vmatmul.f32.gmra.mxu0 %v1225
    %v1312 = vpop.f32.mrf.mxu0
    %v1313 = vadd.f32 %v1293, %v1312
    %1314 = vdwg.mxu0
    %1315 = vmatpush.msra.mxu0 %v720
    %1316 = vmatpush.msra.mxu0 %v712
    %1317 = vmatpush.msra.mxu0 %v704
    %1318 = vmatpush.msra.mxu0 %v696
    %1319 = vmatpush.msra.mxu0 %v688
    %1320 = vmatpush.msra.mxu0 %v680
    %1321 = vmatpush.msra.mxu0 %v672
    %1322 = vmatpush.msra.mxu0 %v664
    %1323 = vmatpush.msra.mxu0 %v656
    %1324 = vmatpush.msra.mxu0 %v648
    %1325 = vmatpush.msra.mxu0 %v640
    %1326 = vmatpush.msra.mxu0 %v632
    %1327 = vmatpush.msra.mxu0 %v624
    %1328 = vmatpush.msra.mxu0 %v616
    %1329 = vmatpush.msra.mxu0 %v608
    %1330 = vmatpush.msra.mxu0 %v600
    %1331 = vmatmul.f32.gmra.mxu0 %v1224
    %v1332 = vpop.f32.mrf.mxu0
    %v1333 = vadd.f32 0.0, %v1332
    %1334 = vdwg.mxu0
    %1335 = vmatpush.msra.mxu0 %v848
    %1336 = vmatpush.msra.mxu0 %v840
    %1337 = vmatpush.msra.mxu0 %v832
    %1338 = vmatpush.msra.mxu0 %v824
    %1339 = vmatpush.msra.mxu0 %v816
    %1340 = vmatpush.msra.mxu0 %v808
    %1341 = vmatpush.msra.mxu0 %v800
    %1342 = vmatpush.msra.mxu0 %v792
    %1343 = vmatpush.msra.mxu0 %v784
    %1344 = vmatpush.msra.mxu0 %v776
    %1345 = vmatpush.msra.mxu0 %v768
    %1346 = vmatpush.msra.mxu0 %v760
    %1347 = vmatpush.msra.mxu0 %v752
    %1348 = vmatpush.msra.mxu0 %v744
    %1349 = vmatpush.msra.mxu0 %v736
    %1350 = vmatpush.msra.mxu0 %v728
    %1351 = vmatmul.f32.gmra.mxu0 %v1225
    %v1352 = vpop.f32.mrf.mxu0
    %v1353 = vadd.f32 %v1333, %v1352
    %1354 = vdwg.mxu0
    %1355 = vmatpush.msra.mxu0 %v721
    %1356 = vmatpush.msra.mxu0 %v713
    %1357 = vmatpush.msra.mxu0 %v705
    %1358 = vmatpush.msra.mxu0 %v697
    %1359 = vmatpush.msra.mxu0 %v689
    %1360 = vmatpush.msra.mxu0 %v681
    %1361 = vmatpush.msra.mxu0 %v673
    %1362 = vmatpush.msra.mxu0 %v665
    %1363 = vmatpush.msra.mxu0 %v657
    %1364 = vmatpush.msra.mxu0 %v649
    %1365 = vmatpush.msra.mxu0 %v641
    %1366 = vmatpush.msra.mxu0 %v633
    %1367 = vmatpush.msra.mxu0 %v625
    %1368 = vmatpush.msra.mxu0 %v617
    %1369 = vmatpush.msra.mxu0 %v609
    %1370 = vmatpush.msra.mxu0 %v601
    %1371 = vmatmul.f32.gmra.mxu0 %v1224
    %v1372 = vpop.f32.mrf.mxu0
    %v1373 = vadd.f32 0.0, %v1372
    %1374 = vdwg.mxu0
    %1375 = vmatpush.msra.mxu0 %v849
    %1376 = vmatpush.msra.mxu0 %v841
    %1377 = vmatpush.msra.mxu0 %v833
    %1378 = vmatpush.msra.mxu0 %v825
    %1379 = vmatpush.msra.mxu0 %v817
    %1380 = vmatpush.msra.mxu0 %v809
    %1381 = vmatpush.msra.mxu0 %v801
    %1382 = vmatpush.msra.mxu0 %v793
    %1383 = vmatpush.msra.mxu0 %v785
    %1384 = vmatpush.msra.mxu0 %v777
    %1385 = vmatpush.msra.mxu0 %v769
    %1386 = vmatpush.msra.mxu0 %v761
    %1387 = vmatpush.msra.mxu0 %v753
    %1388 = vmatpush.msra.mxu0 %v745
    %1389 = vmatpush.msra.mxu0 %v737
    %1390 = vmatpush.msra.mxu0 %v729
    %1391 = vmatmul.f32.gmra.mxu0 %v1225
    %v1392 = vpop.f32.mrf.mxu0
    %v1393 = vadd.f32 %v1373, %v1392
    %1394 = vdwg.mxu0
    %1395 = vmatpush.msra.mxu0 %v722
    %1396 = vmatpush.msra.mxu0 %v714
    %1397 = vmatpush.msra.mxu0 %v706
    %1398 = vmatpush.msra.mxu0 %v698
    %1399 = vmatpush.msra.mxu0 %v690
    %1400 = vmatpush.msra.mxu0 %v682
    %1401 = vmatpush.msra.mxu0 %v674
    %1402 = vmatpush.msra.mxu0 %v666
    %1403 = vmatpush.msra.mxu0 %v658
    %1404 = vmatpush.msra.mxu0 %v650
    %1405 = vmatpush.msra.mxu0 %v642
    %1406 = vmatpush.msra.mxu0 %v634
    %1407 = vmatpush.msra.mxu0 %v626
    %1408 = vmatpush.msra.mxu0 %v618
    %1409 = vmatpush.msra.mxu0 %v610
    %1410 = vmatpush.msra.mxu0 %v602
    %1411 = vmatmul.f32.gmra.mxu0 %v1224
    %v1412 = vpop.f32.mrf.mxu0
    %v1413 = vadd.f32 0.0, %v1412
    %1414 = vdwg.mxu0
    %1415 = vmatpush.msra.mxu0 %v850
    %1416 = vmatpush.msra.mxu0 %v842
    %1417 = vmatpush.msra.mxu0 %v834
    %1418 = vmatpush.msra.mxu0 %v826
    %1419 = vmatpush.msra.mxu0 %v818
    %1420 = vmatpush.msra.mxu0 %v810
    %1421 = vmatpush.msra.mxu0 %v802
    %1422 = vmatpush.msra.mxu0 %v794
    %1423 = vmatpush.msra.mxu0 %v786
    %1424 = vmatpush.msra.mxu0 %v778
    %1425 = vmatpush.msra.mxu0 %v770
    %1426 = vmatpush.msra.mxu0 %v762
    %1427 = vmatpush.msra.mxu0 %v754
    %1428 = vmatpush.msra.mxu0 %v746
    %1429 = vmatpush.msra.mxu0 %v738
    %1430 = vmatpush.msra.mxu0 %v730
    %1431 = vmatmul.f32.gmra.mxu0 %v1225
    %v1432 = vpop.f32.mrf.mxu0
    %v1433 = vadd.f32 %v1413, %v1432
    %1434 = vdwg.mxu0
    %1435 = vmatpush.msra.mxu0 %v723
    %1436 = vmatpush.msra.mxu0 %v715
    %1437 = vmatpush.msra.mxu0 %v707
    %1438 = vmatpush.msra.mxu0 %v699
    %1439 = vmatpush.msra.mxu0 %v691
    %1440 = vmatpush.msra.mxu0 %v683
    %1441 = vmatpush.msra.mxu0 %v675
    %1442 = vmatpush.msra.mxu0 %v667
    %1443 = vmatpush.msra.mxu0 %v659
    %1444 = vmatpush.msra.mxu0 %v651
    %1445 = vmatpush.msra.mxu0 %v643
    %1446 = vmatpush.msra.mxu0 %v635
    %1447 = vmatpush.msra.mxu0 %v627
    %1448 = vmatpush.msra.mxu0 %v619
    %1449 = vmatpush.msra.mxu0 %v611
    %1450 = vmatpush.msra.mxu0 %v603
    %1451 = vmatmul.f32.gmra.mxu0 %v1224
    %v1452 = vpop.f32.mrf.mxu0
    %v1453 = vadd.f32 0.0, %v1452
    %1454 = vdwg.mxu0
    %1455 = vmatpush.msra.mxu0 %v851
    %1456 = vmatpush.msra.mxu0 %v843
    %1457 = vmatpush.msra.mxu0 %v835
    %1458 = vmatpush.msra.mxu0 %v827
    %1459 = vmatpush.msra.mxu0 %v819
    %1460 = vmatpush.msra.mxu0 %v811
    %1461 = vmatpush.msra.mxu0 %v803
    %1462 = vmatpush.msra.mxu0 %v795
    %1463 = vmatpush.msra.mxu0 %v787
    %1464 = vmatpush.msra.mxu0 %v779
    %1465 = vmatpush.msra.mxu0 %v771
    %1466 = vmatpush.msra.mxu0 %v763
    %1467 = vmatpush.msra.mxu0 %v755
    %1468 = vmatpush.msra.mxu0 %v747
    %1469 = vmatpush.msra.mxu0 %v739
    %1470 = vmatpush.msra.mxu0 %v731
    %1471 = vmatmul.f32.gmra.mxu0 %v1225
    %v1472 = vpop.f32.mrf.mxu0
    %v1473 = vadd.f32 %v1453, %v1472
    %1474 = vdwg.mxu0
    %1475 = vmatpush.msra.mxu0 %v724
    %1476 = vmatpush.msra.mxu0 %v716
    %1477 = vmatpush.msra.mxu0 %v708
    %1478 = vmatpush.msra.mxu0 %v700
    %1479 = vmatpush.msra.mxu0 %v692
    %1480 = vmatpush.msra.mxu0 %v684
    %1481 = vmatpush.msra.mxu0 %v676
    %1482 = vmatpush.msra.mxu0 %v668
    %1483 = vmatpush.msra.mxu0 %v660
    %1484 = vmatpush.msra.mxu0 %v652
    %1485 = vmatpush.msra.mxu0 %v644
    %1486 = vmatpush.msra.mxu0 %v636
    %1487 = vmatpush.msra.mxu0 %v628
    %1488 = vmatpush.msra.mxu0 %v620
    %1489 = vmatpush.msra.mxu0 %v612
    %1490 = vmatpush.msra.mxu0 %v604
    %1491 = vmatmul.f32.gmra.mxu0 %v1224
    %v1492 = vpop.f32.mrf.mxu0
    %v1493 = vadd.f32 0.0, %v1492
    %1494 = vdwg.mxu0
    %1495 = vmatpush.msra.mxu0 %v852
    %1496 = vmatpush.msra.mxu0 %v844
    %1497 = vmatpush.msra.mxu0 %v836
    %1498 = vmatpush.msra.mxu0 %v828
    %1499 = vmatpush.msra.mxu0 %v820
    %1500 = vmatpush.msra.mxu0 %v812
    %1501 = vmatpush.msra.mxu0 %v804
    %1502 = vmatpush.msra.mxu0 %v796
    %1503 = vmatpush.msra.mxu0 %v788
    %1504 = vmatpush.msra.mxu0 %v780
    %1505 = vmatpush.msra.mxu0 %v772
    %1506 = vmatpush.msra.mxu0 %v764
    %1507 = vmatpush.msra.mxu0 %v756
    %1508 = vmatpush.msra.mxu0 %v748
    %1509 = vmatpush.msra.mxu0 %v740
    %1510 = vmatpush.msra.mxu0 %v732
    %1511 = vmatmul.f32.gmra.mxu0 %v1225
    %v1512 = vpop.f32.mrf.mxu0
    %v1513 = vadd.f32 %v1493, %v1512
    %1514 = vdwg.mxu0
    %1515 = vmatpush.msra.mxu0 %v725
    %1516 = vmatpush.msra.mxu0 %v717
    %1517 = vmatpush.msra.mxu0 %v709
    %1518 = vmatpush.msra.mxu0 %v701
    %1519 = vmatpush.msra.mxu0 %v693
    %1520 = vmatpush.msra.mxu0 %v685
    %1521 = vmatpush.msra.mxu0 %v677
    %1522 = vmatpush.msra.mxu0 %v669
    %1523 = vmatpush.msra.mxu0 %v661
    %1524 = vmatpush.msra.mxu0 %v653
    %1525 = vmatpush.msra.mxu0 %v645
    %1526 = vmatpush.msra.mxu0 %v637
    %1527 = vmatpush.msra.mxu0 %v629
    %1528 = vmatpush.msra.mxu0 %v621
    %1529 = vmatpush.msra.mxu0 %v613
    %1530 = vmatpush.msra.mxu0 %v605
    %1531 = vmatmul.f32.gmra.mxu0 %v1224
    %v1532 = vpop.f32.mrf.mxu0
    %v1533 = vadd.f32 0.0, %v1532
    %1534 = vdwg.mxu0
    %1535 = vmatpush.msra.mxu0 %v853
    %1536 = vmatpush.msra.mxu0 %v845
    %1537 = vmatpush.msra.mxu0 %v837
    %1538 = vmatpush.msra.mxu0 %v829
    %1539 = vmatpush.msra.mxu0 %v821
    %1540 = vmatpush.msra.mxu0 %v813
    %1541 = vmatpush.msra.mxu0 %v805
    %1542 = vmatpush.msra.mxu0 %v797
    %1543 = vmatpush.msra.mxu0 %v789
    %1544 = vmatpush.msra.mxu0 %v781
    %1545 = vmatpush.msra.mxu0 %v773
    %1546 = vmatpush.msra.mxu0 %v765
    %1547 = vmatpush.msra.mxu0 %v757
    %1548 = vmatpush.msra.mxu0 %v749
    %1549 = vmatpush.msra.mxu0 %v741
    %1550 = vmatpush.msra.mxu0 %v733
    %1551 = vmatmul.f32.gmra.mxu0 %v1225
    %v1552 = vpop.f32.mrf.mxu0
    %v1553 = vadd.f32 %v1533, %v1552
    %1554 = vdwg.mxu0
    %v1555 = vadd.f32 %v1227, %v1273
    %v1556 = vadd.f32 %v1228, %v1313
    %v1557 = vadd.f32 %v1229, %v1353
    %v1558 = vadd.f32 %v1230, %v1393
    %v1559 = vadd.f32 %v1231, %v1433
    %v1560 = vadd.f32 %v1232, %v1473
    %v1561 = vadd.f32 %v1233, %v1513
    %v1562 = vadd.f32 %v1234, %v1553
    %v1563 = vmul.f32 %v1555, 0.5
    %v1564 = vmul.f32 %v1556, 0.5
    %v1565 = vtanh.pop %v1563
    %v1566 = vtanh.pop %v1564
    %v1567 = vmul.f32 %v1565, 0.5
    %v1568 = vmul.f32 %v1566, 0.5
    %v1569 = vadd.f32 %v1567, 0.5
    %v1570 = vadd.f32 %v1568, 0.5
    %v1571 = vmul.f32 %v1557, 0.5
    %v1572 = vmul.f32 %v1558, 0.5
    %v1573 = vtanh.pop %v1571
    %v1574 = vtanh.pop %v1572
    %v1575 = vmul.f32 %v1573, 0.5
    %v1576 = vmul.f32 %v1574, 0.5
    %v1577 = vadd.f32 %v1575, 0.5
    %v1578 = vadd.f32 %v1576, 0.5
    %v1579 = vtanh.pop %v1559
    %v1580 = vtanh.pop %v1560
    %v1581 = vmul.f32 %v1561, 0.5
    %v1582 = vmul.f32 %v1562, 0.5
    %v1583 = vtanh.pop %v1581
    %v1584 = vtanh.pop %v1582
    %v1585 = vmul.f32 %v1583, 0.5
    %v1586 = vmul.f32 %v1584, 0.5
    %v1587 = vadd.f32 %v1585, 0.5
    %v1588 = vadd.f32 %v1586, 0.5
    %v1589 = vmul.f32 %v1577, %v1220
    %v1590 = vmul.f32 %v1578, %v1221
    %v1591 = vmul.f32 %v1569, %v1579
    %v1592 = vmul.f32 %v1570, %v1580
    %v1593 = vadd.f32 %v1589, %v1591
    %v1594 = vadd.f32 %v1590, %v1592
    %v1595 = vtanh.pop %v1593
    %v1596 = vtanh.pop %v1594
    %v1597 = vmul.f32 %v1587, %v1595
    %v1598 = vmul.f32 %v1588, %v1596
    %s1599 = scalar_lea.vmem [#allocation2], 128
    %v1600 = vld [vmem:[%s1599] sm:$0xff]
    %v1601 = vld [vmem:[%s1599 + $0x8] sm:$0xff]
    %v1602 = vld [vmem:[%s1599 + $0x10] sm:$0xff]
    %v1603 = vld [vmem:[%s1599 + $0x18] sm:$0xff]
    %v1604 = vld [vmem:[%s1599 + $0x20] sm:$0xff]
    %v1605 = vld [vmem:[%s1599 + $0x28] sm:$0xff]
    %v1606 = vld [vmem:[%s1599 + $0x30] sm:$0xff]
    %v1607 = vld [vmem:[%s1599 + $0x38] sm:$0xff]
    %1608 = vmatpush.msra.mxu0 %v718
    %1609 = vmatpush.msra.mxu0 %v710
    %1610 = vmatpush.msra.mxu0 %v702
    %1611 = vmatpush.msra.mxu0 %v694
    %1612 = vmatpush.msra.mxu0 %v686
    %1613 = vmatpush.msra.mxu0 %v678
    %1614 = vmatpush.msra.mxu0 %v670
    %1615 = vmatpush.msra.mxu0 %v662
    %1616 = vmatpush.msra.mxu0 %v654
    %1617 = vmatpush.msra.mxu0 %v646
    %1618 = vmatpush.msra.mxu0 %v638
    %1619 = vmatpush.msra.mxu0 %v630
    %1620 = vmatpush.msra.mxu0 %v622
    %1621 = vmatpush.msra.mxu0 %v614
    %1622 = vmatpush.msra.mxu0 %v606
    %1623 = vmatpush.msra.mxu0 %v598
    %1624 = vmatmul.f32.gmra.mxu0 %v1597
    %v1625 = vpop.f32.mrf.mxu0
    %v1626 = vadd.f32 0.0, %v1625
    %1627 = vdwg.mxu0
    %1628 = vmatpush.msra.mxu0 %v846
    %1629 = vmatpush.msra.mxu0 %v838
    %1630 = vmatpush.msra.mxu0 %v830
    %1631 = vmatpush.msra.mxu0 %v822
    %1632 = vmatpush.msra.mxu0 %v814
    %1633 = vmatpush.msra.mxu0 %v806
    %1634 = vmatpush.msra.mxu0 %v798
    %1635 = vmatpush.msra.mxu0 %v790
    %1636 = vmatpush.msra.mxu0 %v782
    %1637 = vmatpush.msra.mxu0 %v774
    %1638 = vmatpush.msra.mxu0 %v766
    %1639 = vmatpush.msra.mxu0 %v758
    %1640 = vmatpush.msra.mxu0 %v750
    %1641 = vmatpush.msra.mxu0 %v742
    %1642 = vmatpush.msra.mxu0 %v734
    %1643 = vmatpush.msra.mxu0 %v726
    %1644 = vmatmul.f32.gmra.mxu0 %v1598
    %v1645 = vpop.f32.mrf.mxu0
    %v1646 = vadd.f32 %v1626, %v1645
    %1647 = vdwg.mxu0
    %1648 = vmatpush.msra.mxu0 %v719
    %1649 = vmatpush.msra.mxu0 %v711
    %1650 = vmatpush.msra.mxu0 %v703
    %1651 = vmatpush.msra.mxu0 %v695
    %1652 = vmatpush.msra.mxu0 %v687
    %1653 = vmatpush.msra.mxu0 %v679
    %1654 = vmatpush.msra.mxu0 %v671
    %1655 = vmatpush.msra.mxu0 %v663
    %1656 = vmatpush.msra.mxu0 %v655
    %1657 = vmatpush.msra.mxu0 %v647
    %1658 = vmatpush.msra.mxu0 %v639
    %1659 = vmatpush.msra.mxu0 %v631
    %1660 = vmatpush.msra.mxu0 %v623
    %1661 = vmatpush.msra.mxu0 %v615
    %1662 = vmatpush.msra.mxu0 %v607
    %1663 = vmatpush.msra.mxu0 %v599
    %1664 = vmatmul.f32.gmra.mxu0 %v1597
    %v1665 = vpop.f32.mrf.mxu0
    %v1666 = vadd.f32 0.0, %v1665
    %1667 = vdwg.mxu0
    %1668 = vmatpush.msra.mxu0 %v847
    %1669 = vmatpush.msra.mxu0 %v839
    %1670 = vmatpush.msra.mxu0 %v831
    %1671 = vmatpush.msra.mxu0 %v823
    %1672 = vmatpush.msra.mxu0 %v815
    %1673 = vmatpush.msra.mxu0 %v807
    %1674 = vmatpush.msra.mxu0 %v799
    %1675 = vmatpush.msra.mxu0 %v791
    %1676 = vmatpush.msra.mxu0 %v783
    %1677 = vmatpush.msra.mxu0 %v775
    %1678 = vmatpush.msra.mxu0 %v767
    %1679 = vmatpush.msra.mxu0 %v759
    %1680 = vmatpush.msra.mxu0 %v751
    %1681 = vmatpush.msra.mxu0 %v743
    %1682 = vmatpush.msra.mxu0 %v735
    %1683 = vmatpush.msra.mxu0 %v727
    %1684 = vmatmul.f32.gmra.mxu0 %v1598
    %v1685 = vpop.f32.mrf.mxu0
    %v1686 = vadd.f32 %v1666, %v1685
    %1687 = vdwg.mxu0
    %1688 = vmatpush.msra.mxu0 %v720
    %1689 = vmatpush.msra.mxu0 %v712
    %1690 = vmatpush.msra.mxu0 %v704
    %1691 = vmatpush.msra.mxu0 %v696
    %1692 = vmatpush.msra.mxu0 %v688
    %1693 = vmatpush.msra.mxu0 %v680
    %1694 = vmatpush.msra.mxu0 %v672
    %1695 = vmatpush.msra.mxu0 %v664
    %1696 = vmatpush.msra.mxu0 %v656
    %1697 = vmatpush.msra.mxu0 %v648
    %1698 = vmatpush.msra.mxu0 %v640
    %1699 = vmatpush.msra.mxu0 %v632
    %1700 = vmatpush.msra.mxu0 %v624
    %1701 = vmatpush.msra.mxu0 %v616
    %1702 = vmatpush.msra.mxu0 %v608
    %1703 = vmatpush.msra.mxu0 %v600
    %1704 = vmatmul.f32.gmra.mxu0 %v1597
    %v1705 = vpop.f32.mrf.mxu0
    %v1706 = vadd.f32 0.0, %v1705
    %1707 = vdwg.mxu0
    %1708 = vmatpush.msra.mxu0 %v848
    %1709 = vmatpush.msra.mxu0 %v840
    %1710 = vmatpush.msra.mxu0 %v832
    %1711 = vmatpush.msra.mxu0 %v824
    %1712 = vmatpush.msra.mxu0 %v816
    %1713 = vmatpush.msra.mxu0 %v808
    %1714 = vmatpush.msra.mxu0 %v800
    %1715 = vmatpush.msra.mxu0 %v792
    %1716 = vmatpush.msra.mxu0 %v784
    %1717 = vmatpush.msra.mxu0 %v776
    %1718 = vmatpush.msra.mxu0 %v768
    %1719 = vmatpush.msra.mxu0 %v760
    %1720 = vmatpush.msra.mxu0 %v752
    %1721 = vmatpush.msra.mxu0 %v744
    %1722 = vmatpush.msra.mxu0 %v736
    %1723 = vmatpush.msra.mxu0 %v728
    %1724 = vmatmul.f32.gmra.mxu0 %v1598
    %v1725 = vpop.f32.mrf.mxu0
    %v1726 = vadd.f32 %v1706, %v1725
    %1727 = vdwg.mxu0
    %1728 = vmatpush.msra.mxu0 %v721
    %1729 = vmatpush.msra.mxu0 %v713
    %1730 = vmatpush.msra.mxu0 %v705
    %1731 = vmatpush.msra.mxu0 %v697
    %1732 = vmatpush.msra.mxu0 %v689
    %1733 = vmatpush.msra.mxu0 %v681
    %1734 = vmatpush.msra.mxu0 %v673
    %1735 = vmatpush.msra.mxu0 %v665
    %1736 = vmatpush.msra.mxu0 %v657
    %1737 = vmatpush.msra.mxu0 %v649
    %1738 = vmatpush.msra.mxu0 %v641
    %1739 = vmatpush.msra.mxu0 %v633
    %1740 = vmatpush.msra.mxu0 %v625
    %1741 = vmatpush.msra.mxu0 %v617
    %1742 = vmatpush.msra.mxu0 %v609
    %1743 = vmatpush.msra.mxu0 %v601
    %1744 = vmatmul.f32.gmra.mxu0 %v1597
    %v1745 = vpop.f32.mrf.mxu0
    %v1746 = vadd.f32 0.0, %v1745
    %1747 = vdwg.mxu0
    %1748 = vmatpush.msra.mxu0 %v849
    %1749 = vmatpush.msra.mxu0 %v841
    %1750 = vmatpush.msra.mxu0 %v833
    %1751 = vmatpush.msra.mxu0 %v825
    %1752 = vmatpush.msra.mxu0 %v817
    %1753 = vmatpush.msra.mxu0 %v809
    %1754 = vmatpush.msra.mxu0 %v801
    %1755 = vmatpush.msra.mxu0 %v793
    %1756 = vmatpush.msra.mxu0 %v785
    %1757 = vmatpush.msra.mxu0 %v777
    %1758 = vmatpush.msra.mxu0 %v769
    %1759 = vmatpush.msra.mxu0 %v761
    %1760 = vmatpush.msra.mxu0 %v753
    %1761 = vmatpush.msra.mxu0 %v745
    %1762 = vmatpush.msra.mxu0 %v737
    %1763 = vmatpush.msra.mxu0 %v729
    %1764 = vmatmul.f32.gmra.mxu0 %v1598
    %v1765 = vpop.f32.mrf.mxu0
    %v1766 = vadd.f32 %v1746, %v1765
    %1767 = vdwg.mxu0
    %1768 = vmatpush.msra.mxu0 %v722
    %1769 = vmatpush.msra.mxu0 %v714
    %1770 = vmatpush.msra.mxu0 %v706
    %1771 = vmatpush.msra.mxu0 %v698
    %1772 = vmatpush.msra.mxu0 %v690
    %1773 = vmatpush.msra.mxu0 %v682
    %1774 = vmatpush.msra.mxu0 %v674
    %1775 = vmatpush.msra.mxu0 %v666
    %1776 = vmatpush.msra.mxu0 %v658
    %1777 = vmatpush.msra.mxu0 %v650
    %1778 = vmatpush.msra.mxu0 %v642
    %1779 = vmatpush.msra.mxu0 %v634
    %1780 = vmatpush.msra.mxu0 %v626
    %1781 = vmatpush.msra.mxu0 %v618
    %1782 = vmatpush.msra.mxu0 %v610
    %1783 = vmatpush.msra.mxu0 %v602
    %1784 = vmatmul.f32.gmra.mxu0 %v1597
    %v1785 = vpop.f32.mrf.mxu0
    %v1786 = vadd.f32 0.0, %v1785
    %1787 = vdwg.mxu0
    %1788 = vmatpush.msra.mxu0 %v850
    %1789 = vmatpush.msra.mxu0 %v842
    %1790 = vmatpush.msra.mxu0 %v834
    %1791 = vmatpush.msra.mxu0 %v826
    %1792 = vmatpush.msra.mxu0 %v818
    %1793 = vmatpush.msra.mxu0 %v810
    %1794 = vmatpush.msra.mxu0 %v802
    %1795 = vmatpush.msra.mxu0 %v794
    %1796 = vmatpush.msra.mxu0 %v786
    %1797 = vmatpush.msra.mxu0 %v778
    %1798 = vmatpush.msra.mxu0 %v770
    %1799 = vmatpush.msra.mxu0 %v762
    %1800 = vmatpush.msra.mxu0 %v754
    %1801 = vmatpush.msra.mxu0 %v746
    %1802 = vmatpush.msra.mxu0 %v738
    %1803 = vmatpush.msra.mxu0 %v730
    %1804 = vmatmul.f32.gmra.mxu0 %v1598
    %v1805 = vpop.f32.mrf.mxu0
    %v1806 = vadd.f32 %v1786, %v1805
    %1807 = vdwg.mxu0
    %1808 = vmatpush.msra.mxu0 %v723
    %1809 = vmatpush.msra.mxu0 %v715
    %1810 = vmatpush.msra.mxu0 %v707
    %1811 = vmatpush.msra.mxu0 %v699
    %1812 = vmatpush.msra.mxu0 %v691
    %1813 = vmatpush.msra.mxu0 %v683
    %1814 = vmatpush.msra.mxu0 %v675
    %1815 = vmatpush.msra.mxu0 %v667
    %1816 = vmatpush.msra.mxu0 %v659
    %1817 = vmatpush.msra.mxu0 %v651
    %1818 = vmatpush.msra.mxu0 %v643
    %1819 = vmatpush.msra.mxu0 %v635
    %1820 = vmatpush.msra.mxu0 %v627
    %1821 = vmatpush.msra.mxu0 %v619
    %1822 = vmatpush.msra.mxu0 %v611
    %1823 = vmatpush.msra.mxu0 %v603
    %1824 = vmatmul.f32.gmra.mxu0 %v1597
    %v1825 = vpop.f32.mrf.mxu0
    %v1826 = vadd.f32 0.0, %v1825
    %1827 = vdwg.mxu0
    %1828 = vmatpush.msra.mxu0 %v851
    %1829 = vmatpush.msra.mxu0 %v843
    %1830 = vmatpush.msra.mxu0 %v835
    %1831 = vmatpush.msra.mxu0 %v827
    %1832 = vmatpush.msra.mxu0 %v819
    %1833 = vmatpush.msra.mxu0 %v811
    %1834 = vmatpush.msra.mxu0 %v803
    %1835 = vmatpush.msra.mxu0 %v795
    %1836 = vmatpush.msra.mxu0 %v787
    %1837 = vmatpush.msra.mxu0 %v779
    %1838 = vmatpush.msra.mxu0 %v771
    %1839 = vmatpush.msra.mxu0 %v763
    %1840 = vmatpush.msra.mxu0 %v755
    %1841 = vmatpush.msra.mxu0 %v747
    %1842 = vmatpush.msra.mxu0 %v739
    %1843 = vmatpush.msra.mxu0 %v731
    %1844 = vmatmul.f32.gmra.mxu0 %v1598
    %v1845 = vpop.f32.mrf.mxu0
    %v1846 = vadd.f32 %v1826, %v1845
    %1847 = vdwg.mxu0
    %1848 = vmatpush.msra.mxu0 %v724
    %1849 = vmatpush.msra.mxu0 %v716
    %1850 = vmatpush.msra.mxu0 %v708
    %1851 = vmatpush.msra.mxu0 %v700
    %1852 = vmatpush.msra.mxu0 %v692
    %1853 = vmatpush.msra.mxu0 %v684
    %1854 = vmatpush.msra.mxu0 %v676
    %1855 = vmatpush.msra.mxu0 %v668
    %1856 = vmatpush.msra.mxu0 %v660
    %1857 = vmatpush.msra.mxu0 %v652
    %1858 = vmatpush.msra.mxu0 %v644
    %1859 = vmatpush.msra.mxu0 %v636
    %1860 = vmatpush.msra.mxu0 %v628
    %1861 = vmatpush.msra.mxu0 %v620
    %1862 = vmatpush.msra.mxu0 %v612
    %1863 = vmatpush.msra.mxu0 %v604
    %1864 = vmatmul.f32.gmra.mxu0 %v1597
    %v1865 = vpop.f32.mrf.mxu0
    %v1866 = vadd.f32 0.0, %v1865
    %1867 = vdwg.mxu0
    %1868 = vmatpush.msra.mxu0 %v852
    %1869 = vmatpush.msra.mxu0 %v844
    %1870 = vmatpush.msra.mxu0 %v836
    %1871 = vmatpush.msra.mxu0 %v828
    %1872 = vmatpush.msra.mxu0 %v820
    %1873 = vmatpush.msra.mxu0 %v812
    %1874 = vmatpush.msra.mxu0 %v804
    %1875 = vmatpush.msra.mxu0 %v796
    %1876 = vmatpush.msra.mxu0 %v788
    %1877 = vmatpush.msra.mxu0 %v780
    %1878 = vmatpush.msra.mxu0 %v772
    %1879 = vmatpush.msra.mxu0 %v764
    %1880 = vmatpush.msra.mxu0 %v756
    %1881 = vmatpush.msra.mxu0 %v748
    %1882 = vmatpush.msra.mxu0 %v740
    %1883 = vmatpush.msra.mxu0 %v732
    %1884 = vmatmul.f32.gmra.mxu0 %v1598
    %v1885 = vpop.f32.mrf.mxu0
    %v1886 = vadd.f32 %v1866, %v1885
    %1887 = vdwg.mxu0
    %1888 = vmatpush.msra.mxu0 %v725
    %1889 = vmatpush.msra.mxu0 %v717
    %1890 = vmatpush.msra.mxu0 %v709
    %1891 = vmatpush.msra.mxu0 %v701
    %1892 = vmatpush.msra.mxu0 %v693
    %1893 = vmatpush.msra.mxu0 %v685
    %1894 = vmatpush.msra.mxu0 %v677
    %1895 = vmatpush.msra.mxu0 %v669
    %1896 = vmatpush.msra.mxu0 %v661
    %1897 = vmatpush.msra.mxu0 %v653
    %1898 = vmatpush.msra.mxu0 %v645
    %1899 = vmatpush.msra.mxu0 %v637
    %1900 = vmatpush.msra.mxu0 %v629
    %1901 = vmatpush.msra.mxu0 %v621
    %1902 = vmatpush.msra.mxu0 %v613
    %1903 = vmatpush.msra.mxu0 %v605
    %1904 = vmatmul.f32.gmra.mxu0 %v1597
    %v1905 = vpop.f32.mrf.mxu0
    %v1906 = vadd.f32 0.0, %v1905
    %1907 = vdwg.mxu0
    %1908 = vmatpush.msra.mxu0 %v853
    %1909 = vmatpush.msra.mxu0 %v845
    %1910 = vmatpush.msra.mxu0 %v837
    %1911 = vmatpush.msra.mxu0 %v829
    %1912 = vmatpush.msra.mxu0 %v821
    %1913 = vmatpush.msra.mxu0 %v813
    %1914 = vmatpush.msra.mxu0 %v805
    %1915 = vmatpush.msra.mxu0 %v797
    %1916 = vmatpush.msra.mxu0 %v789
    %1917 = vmatpush.msra.mxu0 %v781
    %1918 = vmatpush.msra.mxu0 %v773
    %1919 = vmatpush.msra.mxu0 %v765
    %1920 = vmatpush.msra.mxu0 %v757
    %1921 = vmatpush.msra.mxu0 %v749
    %1922 = vmatpush.msra.mxu0 %v741
    %1923 = vmatpush.msra.mxu0 %v733
    %1924 = vmatmul.f32.gmra.mxu0 %v1598
    %v1925 = vpop.f32.mrf.mxu0
    %v1926 = vadd.f32 %v1906, %v1925
    %1927 = vdwg.mxu0
    %v1928 = vadd.f32 %v1600, %v1646
    %v1929 = vadd.f32 %v1601, %v1686
    %v1930 = vadd.f32 %v1602, %v1726
    %v1931 = vadd.f32 %v1603, %v1766
    %v1932 = vadd.f32 %v1604, %v1806
    %v1933 = vadd.f32 %v1605, %v1846
    %v1934 = vadd.f32 %v1606, %v1886
    %v1935 = vadd.f32 %v1607, %v1926
    %v1936 = vmul.f32 %v1928, 0.5
    %v1937 = vmul.f32 %v1929, 0.5
    %v1938 = vtanh.pop %v1936
    %v1939 = vtanh.pop %v1937
    %v1940 = vmul.f32 %v1938, 0.5
    %v1941 = vmul.f32 %v1939, 0.5
    %v1942 = vadd.f32 %v1940, 0.5
    %v1943 = vadd.f32 %v1941, 0.5
    %v1944 = vmul.f32 %v1930, 0.5
    %v1945 = vmul.f32 %v1931, 0.5
    %v1946 = vtanh.pop %v1944
    %v1947 = vtanh.pop %v1945
    %v1948 = vmul.f32 %v1946, 0.5
    %v1949 = vmul.f32 %v1947, 0.5
    %v1950 = vadd.f32 %v1948, 0.5
    %v1951 = vadd.f32 %v1949, 0.5
    %v1952 = vtanh.pop %v1932
    %v1953 = vtanh.pop %v1933
    %v1954 = vmul.f32 %v1934, 0.5
    %v1955 = vmul.f32 %v1935, 0.5
    %v1956 = vtanh.pop %v1954
    %v1957 = vtanh.pop %v1955
    %v1958 = vmul.f32 %v1956, 0.5
    %v1959 = vmul.f32 %v1957, 0.5
    %v1960 = vadd.f32 %v1958, 0.5
    %v1961 = vadd.f32 %v1959, 0.5
    %v1962 = vmul.f32 %v1950, %v1593
    %v1963 = vmul.f32 %v1951, %v1594
    %v1964 = vmul.f32 %v1942, %v1952
    %v1965 = vmul.f32 %v1943, %v1953
    %v1966 = vadd.f32 %v1962, %v1964
    %v1967 = vadd.f32 %v1963, %v1965
    %v1968 = vtanh.pop %v1966
    %v1969 = vtanh.pop %v1967
    %v1970 = vmul.f32 %v1960, %v1968
    %v1971 = vmul.f32 %v1961, %v1969
    %s1972 = scalar_lea.vmem [#allocation2], 192
    %v1973 = vld [vmem:[%s1972] sm:$0xff]
    %v1974 = vld [vmem:[%s1972 + $0x8] sm:$0xff]
    %v1975 = vld [vmem:[%s1972 + $0x10] sm:$0xff]
    %v1976 = vld [vmem:[%s1972 + $0x18] sm:$0xff]
    %v1977 = vld [vmem:[%s1972 + $0x20] sm:$0xff]
    %v1978 = vld [vmem:[%s1972 + $0x28] sm:$0xff]
    %v1979 = vld [vmem:[%s1972 + $0x30] sm:$0xff]
    %v1980 = vld [vmem:[%s1972 + $0x38] sm:$0xff]
    %1981 = vmatpush.msra.mxu0 %v718
    %1982 = vmatpush.msra.mxu0 %v710
    %1983 = vmatpush.msra.mxu0 %v702
    %1984 = vmatpush.msra.mxu0 %v694
    %1985 = vmatpush.msra.mxu0 %v686
    %1986 = vmatpush.msra.mxu0 %v678
    %1987 = vmatpush.msra.mxu0 %v670
    %1988 = vmatpush.msra.mxu0 %v662
    %1989 = vmatpush.msra.mxu0 %v654
    %1990 = vmatpush.msra.mxu0 %v646
    %1991 = vmatpush.msra.mxu0 %v638
    %1992 = vmatpush.msra.mxu0 %v630
    %1993 = vmatpush.msra.mxu0 %v622
    %1994 = vmatpush.msra.mxu0 %v614
    %1995 = vmatpush.msra.mxu0 %v606
    %1996 = vmatpush.msra.mxu0 %v598
    %1997 = vmatmul.f32.gmra.mxu0 %v1970
    %v1998 = vpop.f32.mrf.mxu0
    %v1999 = vadd.f32 0.0, %v1998
    %2000 = vdwg.mxu0
    %2001 = vmatpush.msra.mxu0 %v846
    %2002 = vmatpush.msra.mxu0 %v838
    %2003 = vmatpush.msra.mxu0 %v830
    %2004 = vmatpush.msra.mxu0 %v822
    %2005 = vmatpush.msra.mxu0 %v814
    %2006 = vmatpush.msra.mxu0 %v806
    %2007 = vmatpush.msra.mxu0 %v798
    %2008 = vmatpush.msra.mxu0 %v790
    %2009 = vmatpush.msra.mxu0 %v782
    %2010 = vmatpush.msra.mxu0 %v774
    %2011 = vmatpush.msra.mxu0 %v766
    %2012 = vmatpush.msra.mxu0 %v758
    %2013 = vmatpush.msra.mxu0 %v750
    %2014 = vmatpush.msra.mxu0 %v742
    %2015 = vmatpush.msra.mxu0 %v734
    %2016 = vmatpush.msra.mxu0 %v726
    %2017 = vmatmul.f32.gmra.mxu0 %v1971
    %v2018 = vpop.f32.mrf.mxu0
    %v2019 = vadd.f32 %v1999, %v2018
    %2020 = vdwg.mxu0
    %2021 = vmatpush.msra.mxu0 %v719
    %2022 = vmatpush.msra.mxu0 %v711
    %2023 = vmatpush.msra.mxu0 %v703
    %2024 = vmatpush.msra.mxu0 %v695
    %2025 = vmatpush.msra.mxu0 %v687
    %2026 = vmatpush.msra.mxu0 %v679
    %2027 = vmatpush.msra.mxu0 %v671
    %2028 = vmatpush.msra.mxu0 %v663
    %2029 = vmatpush.msra.mxu0 %v655
    %2030 = vmatpush.msra.mxu0 %v647
    %2031 = vmatpush.msra.mxu0 %v639
    %2032 = vmatpush.msra.mxu0 %v631
    %2033 = vmatpush.msra.mxu0 %v623
    %2034 = vmatpush.msra.mxu0 %v615
    %2035 = vmatpush.msra.mxu0 %v607
    %2036 = vmatpush.msra.mxu0 %v599
    %2037 = vmatmul.f32.gmra.mxu0 %v1970
    %v2038 = vpop.f32.mrf.mxu0
    %v2039 = vadd.f32 0.0, %v2038
    %2040 = vdwg.mxu0
    %2041 = vmatpush.msra.mxu0 %v847
    %2042 = vmatpush.msra.mxu0 %v839
    %2043 = vmatpush.msra.mxu0 %v831
    %2044 = vmatpush.msra.mxu0 %v823
    %2045 = vmatpush.msra.mxu0 %v815
    %2046 = vmatpush.msra.mxu0 %v807
    %2047 = vmatpush.msra.mxu0 %v799
    %2048 = vmatpush.msra.mxu0 %v791
    %2049 = vmatpush.msra.mxu0 %v783
    %2050 = vmatpush.msra.mxu0 %v775
    %2051 = vmatpush.msra.mxu0 %v767
    %2052 = vmatpush.msra.mxu0 %v759
    %2053 = vmatpush.msra.mxu0 %v751
    %2054 = vmatpush.msra.mxu0 %v743
    %2055 = vmatpush.msra.mxu0 %v735
    %2056 = vmatpush.msra.mxu0 %v727
    %2057 = vmatmul.f32.gmra.mxu0 %v1971
    %v2058 = vpop.f32.mrf.mxu0
    %v2059 = vadd.f32 %v2039, %v2058
    %2060 = vdwg.mxu0
    %2061 = vmatpush.msra.mxu0 %v720
    %2062 = vmatpush.msra.mxu0 %v712
    %2063 = vmatpush.msra.mxu0 %v704
    %2064 = vmatpush.msra.mxu0 %v696
    %2065 = vmatpush.msra.mxu0 %v688
    %2066 = vmatpush.msra.mxu0 %v680
    %2067 = vmatpush.msra.mxu0 %v672
    %2068 = vmatpush.msra.mxu0 %v664
    %2069 = vmatpush.msra.mxu0 %v656
    %2070 = vmatpush.msra.mxu0 %v648
    %2071 = vmatpush.msra.mxu0 %v640
    %2072 = vmatpush.msra.mxu0 %v632
    %2073 = vmatpush.msra.mxu0 %v624
    %2074 = vmatpush.msra.mxu0 %v616
    %2075 = vmatpush.msra.mxu0 %v608
    %2076 = vmatpush.msra.mxu0 %v600
    %2077 = vmatmul.f32.gmra.mxu0 %v1970
    %v2078 = vpop.f32.mrf.mxu0
    %v2079 = vadd.f32 0.0, %v2078
    %2080 = vdwg.mxu0
    %2081 = vmatpush.msra.mxu0 %v848
    %2082 = vmatpush.msra.mxu0 %v840
    %2083 = vmatpush.msra.mxu0 %v832
    %2084 = vmatpush.msra.mxu0 %v824
    %2085 = vmatpush.msra.mxu0 %v816
    %2086 = vmatpush.msra.mxu0 %v808
    %2087 = vmatpush.msra.mxu0 %v800
    %2088 = vmatpush.msra.mxu0 %v792
    %2089 = vmatpush.msra.mxu0 %v784
    %2090 = vmatpush.msra.mxu0 %v776
    %2091 = vmatpush.msra.mxu0 %v768
    %2092 = vmatpush.msra.mxu0 %v760
    %2093 = vmatpush.msra.mxu0 %v752
    %2094 = vmatpush.msra.mxu0 %v744
    %2095 = vmatpush.msra.mxu0 %v736
    %2096 = vmatpush.msra.mxu0 %v728
    %2097 = vmatmul.f32.gmra.mxu0 %v1971
    %v2098 = vpop.f32.mrf.mxu0
    %v2099 = vadd.f32 %v2079, %v2098
    %2100 = vdwg.mxu0
    %2101 = vmatpush.msra.mxu0 %v721
    %2102 = vmatpush.msra.mxu0 %v713
    %2103 = vmatpush.msra.mxu0 %v705
    %2104 = vmatpush.msra.mxu0 %v697
    %2105 = vmatpush.msra.mxu0 %v689
    %2106 = vmatpush.msra.mxu0 %v681
    %2107 = vmatpush.msra.mxu0 %v673
    %2108 = vmatpush.msra.mxu0 %v665
    %2109 = vmatpush.msra.mxu0 %v657
    %2110 = vmatpush.msra.mxu0 %v649
    %2111 = vmatpush.msra.mxu0 %v641
    %2112 = vmatpush.msra.mxu0 %v633
    %2113 = vmatpush.msra.mxu0 %v625
    %2114 = vmatpush.msra.mxu0 %v617
    %2115 = vmatpush.msra.mxu0 %v609
    %2116 = vmatpush.msra.mxu0 %v601
    %2117 = vmatmul.f32.gmra.mxu0 %v1970
    %v2118 = vpop.f32.mrf.mxu0
    %v2119 = vadd.f32 0.0, %v2118
    %2120 = vdwg.mxu0
    %2121 = vmatpush.msra.mxu0 %v849
    %2122 = vmatpush.msra.mxu0 %v841
    %2123 = vmatpush.msra.mxu0 %v833
    %2124 = vmatpush.msra.mxu0 %v825
    %2125 = vmatpush.msra.mxu0 %v817
    %2126 = vmatpush.msra.mxu0 %v809
    %2127 = vmatpush.msra.mxu0 %v801
    %2128 = vmatpush.msra.mxu0 %v793
    %2129 = vmatpush.msra.mxu0 %v785
    %2130 = vmatpush.msra.mxu0 %v777
    %2131 = vmatpush.msra.mxu0 %v769
    %2132 = vmatpush.msra.mxu0 %v761
    %2133 = vmatpush.msra.mxu0 %v753
    %2134 = vmatpush.msra.mxu0 %v745
    %2135 = vmatpush.msra.mxu0 %v737
    %2136 = vmatpush.msra.mxu0 %v729
    %2137 = vmatmul.f32.gmra.mxu0 %v1971
    %v2138 = vpop.f32.mrf.mxu0
    %v2139 = vadd.f32 %v2119, %v2138
    %2140 = vdwg.mxu0
    %2141 = vmatpush.msra.mxu0 %v722
    %2142 = vmatpush.msra.mxu0 %v714
    %2143 = vmatpush.msra.mxu0 %v706
    %2144 = vmatpush.msra.mxu0 %v698
    %2145 = vmatpush.msra.mxu0 %v690
    %2146 = vmatpush.msra.mxu0 %v682
    %2147 = vmatpush.msra.mxu0 %v674
    %2148 = vmatpush.msra.mxu0 %v666
    %2149 = vmatpush.msra.mxu0 %v658
    %2150 = vmatpush.msra.mxu0 %v650
    %2151 = vmatpush.msra.mxu0 %v642
    %2152 = vmatpush.msra.mxu0 %v634
    %2153 = vmatpush.msra.mxu0 %v626
    %2154 = vmatpush.msra.mxu0 %v618
    %2155 = vmatpush.msra.mxu0 %v610
    %2156 = vmatpush.msra.mxu0 %v602
    %2157 = vmatmul.f32.gmra.mxu0 %v1970
    %v2158 = vpop.f32.mrf.mxu0
    %v2159 = vadd.f32 0.0, %v2158
    %2160 = vdwg.mxu0
    %2161 = vmatpush.msra.mxu0 %v850
    %2162 = vmatpush.msra.mxu0 %v842
    %2163 = vmatpush.msra.mxu0 %v834
    %2164 = vmatpush.msra.mxu0 %v826
    %2165 = vmatpush.msra.mxu0 %v818
    %2166 = vmatpush.msra.mxu0 %v810
    %2167 = vmatpush.msra.mxu0 %v802
    %2168 = vmatpush.msra.mxu0 %v794
    %2169 = vmatpush.msra.mxu0 %v786
    %2170 = vmatpush.msra.mxu0 %v778
    %2171 = vmatpush.msra.mxu0 %v770
    %2172 = vmatpush.msra.mxu0 %v762
    %2173 = vmatpush.msra.mxu0 %v754
    %2174 = vmatpush.msra.mxu0 %v746
    %2175 = vmatpush.msra.mxu0 %v738
    %2176 = vmatpush.msra.mxu0 %v730
    %2177 = vmatmul.f32.gmra.mxu0 %v1971
    %v2178 = vpop.f32.mrf.mxu0
    %v2179 = vadd.f32 %v2159, %v2178
    %2180 = vdwg.mxu0
    %2181 = vmatpush.msra.mxu0 %v723
    %2182 = vmatpush.msra.mxu0 %v715
    %2183 = vmatpush.msra.mxu0 %v707
    %2184 = vmatpush.msra.mxu0 %v699
    %2185 = vmatpush.msra.mxu0 %v691
    %2186 = vmatpush.msra.mxu0 %v683
    %2187 = vmatpush.msra.mxu0 %v675
    %2188 = vmatpush.msra.mxu0 %v667
    %2189 = vmatpush.msra.mxu0 %v659
    %2190 = vmatpush.msra.mxu0 %v651
    %2191 = vmatpush.msra.mxu0 %v643
    %2192 = vmatpush.msra.mxu0 %v635
    %2193 = vmatpush.msra.mxu0 %v627
    %2194 = vmatpush.msra.mxu0 %v619
    %2195 = vmatpush.msra.mxu0 %v611
    %2196 = vmatpush.msra.mxu0 %v603
    %2197 = vmatmul.f32.gmra.mxu0 %v1970
    %v2198 = vpop.f32.mrf.mxu0
    %v2199 = vadd.f32 0.0, %v2198
    %2200 = vdwg.mxu0
    %2201 = vmatpush.msra.mxu0 %v851
    %2202 = vmatpush.msra.mxu0 %v843
    %2203 = vmatpush.msra.mxu0 %v835
    %2204 = vmatpush.msra.mxu0 %v827
    %2205 = vmatpush.msra.mxu0 %v819
    %2206 = vmatpush.msra.mxu0 %v811
    %2207 = vmatpush.msra.mxu0 %v803
    %2208 = vmatpush.msra.mxu0 %v795
    %2209 = vmatpush.msra.mxu0 %v787
    %2210 = vmatpush.msra.mxu0 %v779
    %2211 = vmatpush.msra.mxu0 %v771
    %2212 = vmatpush.msra.mxu0 %v763
    %2213 = vmatpush.msra.mxu0 %v755
    %2214 = vmatpush.msra.mxu0 %v747
    %2215 = vmatpush.msra.mxu0 %v739
    %2216 = vmatpush.msra.mxu0 %v731
    %2217 = vmatmul.f32.gmra.mxu0 %v1971
    %v2218 = vpop.f32.mrf.mxu0
    %v2219 = vadd.f32 %v2199, %v2218
    %2220 = vdwg.mxu0
    %2221 = vmatpush.msra.mxu0 %v724
    %2222 = vmatpush.msra.mxu0 %v716
    %2223 = vmatpush.msra.mxu0 %v708
    %2224 = vmatpush.msra.mxu0 %v700
    %2225 = vmatpush.msra.mxu0 %v692
    %2226 = vmatpush.msra.mxu0 %v684
    %2227 = vmatpush.msra.mxu0 %v676
    %2228 = vmatpush.msra.mxu0 %v668
    %2229 = vmatpush.msra.mxu0 %v660
    %2230 = vmatpush.msra.mxu0 %v652
    %2231 = vmatpush.msra.mxu0 %v644
    %2232 = vmatpush.msra.mxu0 %v636
    %2233 = vmatpush.msra.mxu0 %v628
    %2234 = vmatpush.msra.mxu0 %v620
    %2235 = vmatpush.msra.mxu0 %v612
    %2236 = vmatpush.msra.mxu0 %v604
    %2237 = vmatmul.f32.gmra.mxu0 %v1970
    %v2238 = vpop.f32.mrf.mxu0
    %v2239 = vadd.f32 0.0, %v2238
    %2240 = vdwg.mxu0
    %2241 = vmatpush.msra.mxu0 %v852
    %2242 = vmatpush.msra.mxu0 %v844
    %2243 = vmatpush.msra.mxu0 %v836
    %2244 = vmatpush.msra.mxu0 %v828
    %2245 = vmatpush.msra.mxu0 %v820
    %2246 = vmatpush.msra.mxu0 %v812
    %2247 = vmatpush.msra.mxu0 %v804
    %2248 = vmatpush.msra.mxu0 %v796
    %2249 = vmatpush.msra.mxu0 %v788
    %2250 = vmatpush.msra.mxu0 %v780
    %2251 = vmatpush.msra.mxu0 %v772
    %2252 = vmatpush.msra.mxu0 %v764
    %2253 = vmatpush.msra.mxu0 %v756
    %2254 = vmatpush.msra.mxu0 %v748
    %2255 = vmatpush.msra.mxu0 %v740
    %2256 = vmatpush.msra.mxu0 %v732
    %2257 = vmatmul.f32.gmra.mxu0 %v1971
    %v2258 = vpop.f32.mrf.mxu0
    %v2259 = vadd.f32 %v2239, %v2258
    %2260 = vdwg.mxu0
    %2261 = vmatpush.msra.mxu0 %v725
    %2262 = vmatpush.msra.mxu0 %v717
    %2263 = vmatpush.msra.mxu0 %v709
    %2264 = vmatpush.msra.mxu0 %v701
    %2265 = vmatpush.msra.mxu0 %v693
    %2266 = vmatpush.msra.mxu0 %v685
    %2267 = vmatpush.msra.mxu0 %v677
    %2268 = vmatpush.msra.mxu0 %v669
    %2269 = vmatpush.msra.mxu0 %v661
    %2270 = vmatpush.msra.mxu0 %v653
    %2271 = vmatpush.msra.mxu0 %v645
    %2272 = vmatpush.msra.mxu0 %v637
    %2273 = vmatpush.msra.mxu0 %v629
    %2274 = vmatpush.msra.mxu0 %v621
    %2275 = vmatpush.msra.mxu0 %v613
    %2276 = vmatpush.msra.mxu0 %v605
    %2277 = vmatmul.f32.gmra.mxu0 %v1970
    %v2278 = vpop.f32.mrf.mxu0
    %v2279 = vadd.f32 0.0, %v2278
    %2280 = vdwg.mxu0
    %2281 = vmatpush.msra.mxu0 %v853
    %2282 = vmatpush.msra.mxu0 %v845
    %2283 = vmatpush.msra.mxu0 %v837
    %2284 = vmatpush.msra.mxu0 %v829
    %2285 = vmatpush.msra.mxu0 %v821
    %2286 = vmatpush.msra.mxu0 %v813
    %2287 = vmatpush.msra.mxu0 %v805
    %2288 = vmatpush.msra.mxu0 %v797
    %2289 = vmatpush.msra.mxu0 %v789
    %2290 = vmatpush.msra.mxu0 %v781
    %2291 = vmatpush.msra.mxu0 %v773
    %2292 = vmatpush.msra.mxu0 %v765
    %2293 = vmatpush.msra.mxu0 %v757
    %2294 = vmatpush.msra.mxu0 %v749
    %2295 = vmatpush.msra.mxu0 %v741
    %2296 = vmatpush.msra.mxu0 %v733
    %2297 = vmatmul.f32.gmra.mxu0 %v1971
    %v2298 = vpop.f32.mrf.mxu0
    %v2299 = vadd.f32 %v2279, %v2298
    %2300 = vdwg.mxu0
    %v2301 = vadd.f32 %v1973, %v2019
    %v2302 = vadd.f32 %v1974, %v2059
    %v2303 = vadd.f32 %v1975, %v2099
    %v2304 = vadd.f32 %v1976, %v2139
    %v2305 = vadd.f32 %v1977, %v2179
    %v2306 = vadd.f32 %v1978, %v2219
    %v2307 = vadd.f32 %v1979, %v2259
    %v2308 = vadd.f32 %v1980, %v2299
    %v2309 = vmul.f32 %v2301, 0.5
    %v2310 = vmul.f32 %v2302, 0.5
    %v2311 = vtanh.pop %v2309
    %v2312 = vtanh.pop %v2310
    %v2313 = vmul.f32 %v2311, 0.5
    %v2314 = vmul.f32 %v2312, 0.5
    %v2315 = vadd.f32 %v2313, 0.5
    %v2316 = vadd.f32 %v2314, 0.5
    %v2317 = vmul.f32 %v2303, 0.5
    %v2318 = vmul.f32 %v2304, 0.5
    %v2319 = vtanh.pop %v2317
    %v2320 = vtanh.pop %v2318
    %v2321 = vmul.f32 %v2319, 0.5
    %v2322 = vmul.f32 %v2320, 0.5
    %v2323 = vadd.f32 %v2321, 0.5
    %v2324 = vadd.f32 %v2322, 0.5
    %v2325 = vtanh.pop %v2305
    %v2326 = vtanh.pop %v2306
    %v2327 = vmul.f32 %v2307, 0.5
    %v2328 = vmul.f32 %v2308, 0.5
    %v2329 = vtanh.pop %v2327
    %v2330 = vtanh.pop %v2328
    %v2331 = vmul.f32 %v2329, 0.5
    %v2332 = vmul.f32 %v2330, 0.5
    %v2333 = vadd.f32 %v2331, 0.5
    %v2334 = vadd.f32 %v2332, 0.5
    %v2335 = vmul.f32 %v2323, %v1966
    %v2336 = vmul.f32 %v2324, %v1967
    %v2337 = vmul.f32 %v2315, %v2325
    %v2338 = vmul.f32 %v2316, %v2326
    %v2339 = vadd.f32 %v2335, %v2337
    %v2340 = vadd.f32 %v2336, %v2338
    %v2341 = vtanh.pop %v2339
    %v2342 = vtanh.pop %v2340
    %v2343 = vmul.f32 %v2333, %v2341
    %v2344 = vmul.f32 %v2334, %v2342
    %s2345 = scalar_lea.vmem [#allocation2], 256
    %v2346 = vld [vmem:[%s2345] sm:$0xff]
    %v2347 = vld [vmem:[%s2345 + $0x8] sm:$0xff]
    %v2348 = vld [vmem:[%s2345 + $0x10] sm:$0xff]
    %v2349 = vld [vmem:[%s2345 + $0x18] sm:$0xff]
    %v2350 = vld [vmem:[%s2345 + $0x20] sm:$0xff]
    %v2351 = vld [vmem:[%s2345 + $0x28] sm:$0xff]
    %v2352 = vld [vmem:[%s2345 + $0x30] sm:$0xff]
    %v2353 = vld [vmem:[%s2345 + $0x38] sm:$0xff]
    %2354 = vmatpush.msra.mxu0 %v718
    %2355 = vmatpush.msra.mxu0 %v710
    %2356 = vmatpush.msra.mxu0 %v702
    %2357 = vmatpush.msra.mxu0 %v694
    %2358 = vmatpush.msra.mxu0 %v686
    %2359 = vmatpush.msra.mxu0 %v678
    %2360 = vmatpush.msra.mxu0 %v670
    %2361 = vmatpush.msra.mxu0 %v662
    %2362 = vmatpush.msra.mxu0 %v654
    %2363 = vmatpush.msra.mxu0 %v646
    %2364 = vmatpush.msra.mxu0 %v638
    %2365 = vmatpush.msra.mxu0 %v630
    %2366 = vmatpush.msra.mxu0 %v622
    %2367 = vmatpush.msra.mxu0 %v614
    %2368 = vmatpush.msra.mxu0 %v606
    %2369 = vmatpush.msra.mxu0 %v598
    %2370 = vmatmul.f32.gmra.mxu0 %v2343
    %v2371 = vpop.f32.mrf.mxu0
    %v2372 = vadd.f32 0.0, %v2371
    %2373 = vdwg.mxu0
    %2374 = vmatpush.msra.mxu0 %v846
    %2375 = vmatpush.msra.mxu0 %v838
    %2376 = vmatpush.msra.mxu0 %v830
    %2377 = vmatpush.msra.mxu0 %v822
    %2378 = vmatpush.msra.mxu0 %v814
    %2379 = vmatpush.msra.mxu0 %v806
    %2380 = vmatpush.msra.mxu0 %v798
    %2381 = vmatpush.msra.mxu0 %v790
    %2382 = vmatpush.msra.mxu0 %v782
    %2383 = vmatpush.msra.mxu0 %v774
    %2384 = vmatpush.msra.mxu0 %v766
    %2385 = vmatpush.msra.mxu0 %v758
    %2386 = vmatpush.msra.mxu0 %v750
    %2387 = vmatpush.msra.mxu0 %v742
    %2388 = vmatpush.msra.mxu0 %v734
    %2389 = vmatpush.msra.mxu0 %v726
    %2390 = vmatmul.f32.gmra.mxu0 %v2344
    %v2391 = vpop.f32.mrf.mxu0
    %v2392 = vadd.f32 %v2372, %v2391
    %2393 = vdwg.mxu0
    %2394 = vmatpush.msra.mxu0 %v719
    %2395 = vmatpush.msra.mxu0 %v711
    %2396 = vmatpush.msra.mxu0 %v703
    %2397 = vmatpush.msra.mxu0 %v695
    %2398 = vmatpush.msra.mxu0 %v687
    %2399 = vmatpush.msra.mxu0 %v679
    %2400 = vmatpush.msra.mxu0 %v671
    %2401 = vmatpush.msra.mxu0 %v663
    %2402 = vmatpush.msra.mxu0 %v655
    %2403 = vmatpush.msra.mxu0 %v647
    %2404 = vmatpush.msra.mxu0 %v639
    %2405 = vmatpush.msra.mxu0 %v631
    %2406 = vmatpush.msra.mxu0 %v623
    %2407 = vmatpush.msra.mxu0 %v615
    %2408 = vmatpush.msra.mxu0 %v607
    %2409 = vmatpush.msra.mxu0 %v599
    %2410 = vmatmul.f32.gmra.mxu0 %v2343
    %v2411 = vpop.f32.mrf.mxu0
    %v2412 = vadd.f32 0.0, %v2411
    %2413 = vdwg.mxu0
    %2414 = vmatpush.msra.mxu0 %v847
    %2415 = vmatpush.msra.mxu0 %v839
    %2416 = vmatpush.msra.mxu0 %v831
    %2417 = vmatpush.msra.mxu0 %v823
    %2418 = vmatpush.msra.mxu0 %v815
    %2419 = vmatpush.msra.mxu0 %v807
    %2420 = vmatpush.msra.mxu0 %v799
    %2421 = vmatpush.msra.mxu0 %v791
    %2422 = vmatpush.msra.mxu0 %v783
    %2423 = vmatpush.msra.mxu0 %v775
    %2424 = vmatpush.msra.mxu0 %v767
    %2425 = vmatpush.msra.mxu0 %v759
    %2426 = vmatpush.msra.mxu0 %v751
    %2427 = vmatpush.msra.mxu0 %v743
    %2428 = vmatpush.msra.mxu0 %v735
    %2429 = vmatpush.msra.mxu0 %v727
    %2430 = vmatmul.f32.gmra.mxu0 %v2344
    %v2431 = vpop.f32.mrf.mxu0
    %v2432 = vadd.f32 %v2412, %v2431
    %2433 = vdwg.mxu0
    %2434 = vmatpush.msra.mxu0 %v720
    %2435 = vmatpush.msra.mxu0 %v712
    %2436 = vmatpush.msra.mxu0 %v704
    %2437 = vmatpush.msra.mxu0 %v696
    %2438 = vmatpush.msra.mxu0 %v688
    %2439 = vmatpush.msra.mxu0 %v680
    %2440 = vmatpush.msra.mxu0 %v672
    %2441 = vmatpush.msra.mxu0 %v664
    %2442 = vmatpush.msra.mxu0 %v656
    %2443 = vmatpush.msra.mxu0 %v648
    %2444 = vmatpush.msra.mxu0 %v640
    %2445 = vmatpush.msra.mxu0 %v632
    %2446 = vmatpush.msra.mxu0 %v624
    %2447 = vmatpush.msra.mxu0 %v616
    %2448 = vmatpush.msra.mxu0 %v608
    %2449 = vmatpush.msra.mxu0 %v600
    %2450 = vmatmul.f32.gmra.mxu0 %v2343
    %v2451 = vpop.f32.mrf.mxu0
    %v2452 = vadd.f32 0.0, %v2451
    %2453 = vdwg.mxu0
    %2454 = vmatpush.msra.mxu0 %v848
    %2455 = vmatpush.msra.mxu0 %v840
    %2456 = vmatpush.msra.mxu0 %v832
    %2457 = vmatpush.msra.mxu0 %v824
    %2458 = vmatpush.msra.mxu0 %v816
    %2459 = vmatpush.msra.mxu0 %v808
    %2460 = vmatpush.msra.mxu0 %v800
    %2461 = vmatpush.msra.mxu0 %v792
    %2462 = vmatpush.msra.mxu0 %v784
    %2463 = vmatpush.msra.mxu0 %v776
    %2464 = vmatpush.msra.mxu0 %v768
    %2465 = vmatpush.msra.mxu0 %v760
    %2466 = vmatpush.msra.mxu0 %v752
    %2467 = vmatpush.msra.mxu0 %v744
    %2468 = vmatpush.msra.mxu0 %v736
    %2469 = vmatpush.msra.mxu0 %v728
    %2470 = vmatmul.f32.gmra.mxu0 %v2344
    %v2471 = vpop.f32.mrf.mxu0
    %v2472 = vadd.f32 %v2452, %v2471
    %2473 = vdwg.mxu0
    %2474 = vmatpush.msra.mxu0 %v721
    %2475 = vmatpush.msra.mxu0 %v713
    %2476 = vmatpush.msra.mxu0 %v705
    %2477 = vmatpush.msra.mxu0 %v697
    %2478 = vmatpush.msra.mxu0 %v689
    %2479 = vmatpush.msra.mxu0 %v681
    %2480 = vmatpush.msra.mxu0 %v673
    %2481 = vmatpush.msra.mxu0 %v665
    %2482 = vmatpush.msra.mxu0 %v657
    %2483 = vmatpush.msra.mxu0 %v649
    %2484 = vmatpush.msra.mxu0 %v641
    %2485 = vmatpush.msra.mxu0 %v633
    %2486 = vmatpush.msra.mxu0 %v625
    %2487 = vmatpush.msra.mxu0 %v617
    %2488 = vmatpush.msra.mxu0 %v609
    %2489 = vmatpush.msra.mxu0 %v601
    %2490 = vmatmul.f32.gmra.mxu0 %v2343
    %v2491 = vpop.f32.mrf.mxu0
    %v2492 = vadd.f32 0.0, %v2491
    %2493 = vdwg.mxu0
    %2494 = vmatpush.msra.mxu0 %v849
    %2495 = vmatpush.msra.mxu0 %v841
    %2496 = vmatpush.msra.mxu0 %v833
    %2497 = vmatpush.msra.mxu0 %v825
    %2498 = vmatpush.msra.mxu0 %v817
    %2499 = vmatpush.msra.mxu0 %v809
    %2500 = vmatpush.msra.mxu0 %v801
    %2501 = vmatpush.msra.mxu0 %v793
    %2502 = vmatpush.msra.mxu0 %v785
    %2503 = vmatpush.msra.mxu0 %v777
    %2504 = vmatpush.msra.mxu0 %v769
    %2505 = vmatpush.msra.mxu0 %v761
    %2506 = vmatpush.msra.mxu0 %v753
    %2507 = vmatpush.msra.mxu0 %v745
    %2508 = vmatpush.msra.mxu0 %v737
    %2509 = vmatpush.msra.mxu0 %v729
    %2510 = vmatmul.f32.gmra.mxu0 %v2344
    %v2511 = vpop.f32.mrf.mxu0
    %v2512 = vadd.f32 %v2492, %v2511
    %2513 = vdwg.mxu0
    %2514 = vmatpush.msra.mxu0 %v722
    %2515 = vmatpush.msra.mxu0 %v714
    %2516 = vmatpush.msra.mxu0 %v706
    %2517 = vmatpush.msra.mxu0 %v698
    %2518 = vmatpush.msra.mxu0 %v690
    %2519 = vmatpush.msra.mxu0 %v682
    %2520 = vmatpush.msra.mxu0 %v674
    %2521 = vmatpush.msra.mxu0 %v666
    %2522 = vmatpush.msra.mxu0 %v658
    %2523 = vmatpush.msra.mxu0 %v650
    %2524 = vmatpush.msra.mxu0 %v642
    %2525 = vmatpush.msra.mxu0 %v634
    %2526 = vmatpush.msra.mxu0 %v626
    %2527 = vmatpush.msra.mxu0 %v618
    %2528 = vmatpush.msra.mxu0 %v610
    %2529 = vmatpush.msra.mxu0 %v602
    %2530 = vmatmul.f32.gmra.mxu0 %v2343
    %v2531 = vpop.f32.mrf.mxu0
    %v2532 = vadd.f32 0.0, %v2531
    %2533 = vdwg.mxu0
    %2534 = vmatpush.msra.mxu0 %v850
    %2535 = vmatpush.msra.mxu0 %v842
    %2536 = vmatpush.msra.mxu0 %v834
    %2537 = vmatpush.msra.mxu0 %v826
    %2538 = vmatpush.msra.mxu0 %v818
    %2539 = vmatpush.msra.mxu0 %v810
    %2540 = vmatpush.msra.mxu0 %v802
    %2541 = vmatpush.msra.mxu0 %v794
    %2542 = vmatpush.msra.mxu0 %v786
    %2543 = vmatpush.msra.mxu0 %v778
    %2544 = vmatpush.msra.mxu0 %v770
    %2545 = vmatpush.msra.mxu0 %v762
    %2546 = vmatpush.msra.mxu0 %v754
    %2547 = vmatpush.msra.mxu0 %v746
    %2548 = vmatpush.msra.mxu0 %v738
    %2549 = vmatpush.msra.mxu0 %v730
    %2550 = vmatmul.f32.gmra.mxu0 %v2344
    %v2551 = vpop.f32.mrf.mxu0
    %v2552 = vadd.f32 %v2532, %v2551
    %2553 = vdwg.mxu0
    %2554 = vmatpush.msra.mxu0 %v723
    %2555 = vmatpush.msra.mxu0 %v715
    %2556 = vmatpush.msra.mxu0 %v707
    %2557 = vmatpush.msra.mxu0 %v699
    %2558 = vmatpush.msra.mxu0 %v691
    %2559 = vmatpush.msra.mxu0 %v683
    %2560 = vmatpush.msra.mxu0 %v675
    %2561 = vmatpush.msra.mxu0 %v667
    %2562 = vmatpush.msra.mxu0 %v659
    %2563 = vmatpush.msra.mxu0 %v651
    %2564 = vmatpush.msra.mxu0 %v643
    %2565 = vmatpush.msra.mxu0 %v635
    %2566 = vmatpush.msra.mxu0 %v627
    %2567 = vmatpush.msra.mxu0 %v619
    %2568 = vmatpush.msra.mxu0 %v611
    %2569 = vmatpush.msra.mxu0 %v603
    %2570 = vmatmul.f32.gmra.mxu0 %v2343
    %v2571 = vpop.f32.mrf.mxu0
    %v2572 = vadd.f32 0.0, %v2571
    %2573 = vdwg.mxu0
    %2574 = vmatpush.msra.mxu0 %v851
    %2575 = vmatpush.msra.mxu0 %v843
    %2576 = vmatpush.msra.mxu0 %v835
    %2577 = vmatpush.msra.mxu0 %v827
    %2578 = vmatpush.msra.mxu0 %v819
    %2579 = vmatpush.msra.mxu0 %v811
    %2580 = vmatpush.msra.mxu0 %v803
    %2581 = vmatpush.msra.mxu0 %v795
    %2582 = vmatpush.msra.mxu0 %v787
    %2583 = vmatpush.msra.mxu0 %v779
    %2584 = vmatpush.msra.mxu0 %v771
    %2585 = vmatpush.msra.mxu0 %v763
    %2586 = vmatpush.msra.mxu0 %v755
    %2587 = vmatpush.msra.mxu0 %v747
    %2588 = vmatpush.msra.mxu0 %v739
    %2589 = vmatpush.msra.mxu0 %v731
    %2590 = vmatmul.f32.gmra.mxu0 %v2344
    %v2591 = vpop.f32.mrf.mxu0
    %v2592 = vadd.f32 %v2572, %v2591
    %2593 = vdwg.mxu0
    %2594 = vmatpush.msra.mxu0 %v724
    %2595 = vmatpush.msra.mxu0 %v716
    %2596 = vmatpush.msra.mxu0 %v708
    %2597 = vmatpush.msra.mxu0 %v700
    %2598 = vmatpush.msra.mxu0 %v692
    %2599 = vmatpush.msra.mxu0 %v684
    %2600 = vmatpush.msra.mxu0 %v676
    %2601 = vmatpush.msra.mxu0 %v668
    %2602 = vmatpush.msra.mxu0 %v660
    %2603 = vmatpush.msra.mxu0 %v652
    %2604 = vmatpush.msra.mxu0 %v644
    %2605 = vmatpush.msra.mxu0 %v636
    %2606 = vmatpush.msra.mxu0 %v628
    %2607 = vmatpush.msra.mxu0 %v620
    %2608 = vmatpush.msra.mxu0 %v612
    %2609 = vmatpush.msra.mxu0 %v604
    %2610 = vmatmul.f32.gmra.mxu0 %v2343
    %v2611 = vpop.f32.mrf.mxu0
    %v2612 = vadd.f32 0.0, %v2611
    %2613 = vdwg.mxu0
    %2614 = vmatpush.msra.mxu0 %v852
    %2615 = vmatpush.msra.mxu0 %v844
    %2616 = vmatpush.msra.mxu0 %v836
    %2617 = vmatpush.msra.mxu0 %v828
    %2618 = vmatpush.msra.mxu0 %v820
    %2619 = vmatpush.msra.mxu0 %v812
    %2620 = vmatpush.msra.mxu0 %v804
    %2621 = vmatpush.msra.mxu0 %v796
    %2622 = vmatpush.msra.mxu0 %v788
    %2623 = vmatpush.msra.mxu0 %v780
    %2624 = vmatpush.msra.mxu0 %v772
    %2625 = vmatpush.msra.mxu0 %v764
    %2626 = vmatpush.msra.mxu0 %v756
    %2627 = vmatpush.msra.mxu0 %v748
    %2628 = vmatpush.msra.mxu0 %v740
    %2629 = vmatpush.msra.mxu0 %v732
    %2630 = vmatmul.f32.gmra.mxu0 %v2344
    %v2631 = vpop.f32.mrf.mxu0
    %v2632 = vadd.f32 %v2612, %v2631
    %2633 = vdwg.mxu0
    %2634 = vmatpush.msra.mxu0 %v725
    %2635 = vmatpush.msra.mxu0 %v717
    %2636 = vmatpush.msra.mxu0 %v709
    %2637 = vmatpush.msra.mxu0 %v701
    %2638 = vmatpush.msra.mxu0 %v693
    %2639 = vmatpush.msra.mxu0 %v685
    %2640 = vmatpush.msra.mxu0 %v677
    %2641 = vmatpush.msra.mxu0 %v669
    %2642 = vmatpush.msra.mxu0 %v661
    %2643 = vmatpush.msra.mxu0 %v653
    %2644 = vmatpush.msra.mxu0 %v645
    %2645 = vmatpush.msra.mxu0 %v637
    %2646 = vmatpush.msra.mxu0 %v629
    %2647 = vmatpush.msra.mxu0 %v621
    %2648 = vmatpush.msra.mxu0 %v613
    %2649 = vmatpush.msra.mxu0 %v605
    %2650 = vmatmul.f32.gmra.mxu0 %v2343
    %v2651 = vpop.f32.mrf.mxu0
    %v2652 = vadd.f32 0.0, %v2651
    %2653 = vdwg.mxu0
    %2654 = vmatpush.msra.mxu0 %v853
    %2655 = vmatpush.msra.mxu0 %v845
    %2656 = vmatpush.msra.mxu0 %v837
    %2657 = vmatpush.msra.mxu0 %v829
    %2658 = vmatpush.msra.mxu0 %v821
    %2659 = vmatpush.msra.mxu0 %v813
    %2660 = vmatpush.msra.mxu0 %v805
    %2661 = vmatpush.msra.mxu0 %v797
    %2662 = vmatpush.msra.mxu0 %v789
    %2663 = vmatpush.msra.mxu0 %v781
    %2664 = vmatpush.msra.mxu0 %v773
    %2665 = vmatpush.msra.mxu0 %v765
    %2666 = vmatpush.msra.mxu0 %v757
    %2667 = vmatpush.msra.mxu0 %v749
    %2668 = vmatpush.msra.mxu0 %v741
    %2669 = vmatpush.msra.mxu0 %v733
    %2670 = vmatmul.f32.gmra.mxu0 %v2344
    %v2671 = vpop.f32.mrf.mxu0
    %v2672 = vadd.f32 %v2652, %v2671
    %2673 = vdwg.mxu0
    %v2674 = vadd.f32 %v2346, %v2392
    %v2675 = vadd.f32 %v2347, %v2432
    %v2676 = vadd.f32 %v2348, %v2472
    %v2677 = vadd.f32 %v2349, %v2512
    %v2678 = vadd.f32 %v2350, %v2552
    %v2679 = vadd.f32 %v2351, %v2592
    %v2680 = vadd.f32 %v2352, %v2632
    %v2681 = vadd.f32 %v2353, %v2672
    %v2682 = vmul.f32 %v2674, 0.5
    %v2683 = vmul.f32 %v2675, 0.5
    %v2684 = vtanh.pop %v2682
    %v2685 = vtanh.pop %v2683
    %v2686 = vmul.f32 %v2684, 0.5
    %v2687 = vmul.f32 %v2685, 0.5
    %v2688 = vadd.f32 %v2686, 0.5
    %v2689 = vadd.f32 %v2687, 0.5
    %v2690 = vmul.f32 %v2676, 0.5
    %v2691 = vmul.f32 %v2677, 0.5
    %v2692 = vtanh.pop %v2690
    %v2693 = vtanh.pop %v2691
    %v2694 = vmul.f32 %v2692, 0.5
    %v2695 = vmul.f32 %v2693, 0.5
    %v2696 = vadd.f32 %v2694, 0.5
    %v2697 = vadd.f32 %v2695, 0.5
    %v2698 = vtanh.pop %v2678
    %v2699 = vtanh.pop %v2679
    %v2700 = vmul.f32 %v2680, 0.5
    %v2701 = vmul.f32 %v2681, 0.5
    %v2702 = vtanh.pop %v2700
    %v2703 = vtanh.pop %v2701
    %v2704 = vmul.f32 %v2702, 0.5
    %v2705 = vmul.f32 %v2703, 0.5
    %v2706 = vadd.f32 %v2704, 0.5
    %v2707 = vadd.f32 %v2705, 0.5
    %v2708 = vmul.f32 %v2696, %v2339
    %v2709 = vmul.f32 %v2697, %v2340
    %v2710 = vmul.f32 %v2688, %v2698
    %v2711 = vmul.f32 %v2689, %v2699
    %v2712 = vadd.f32 %v2708, %v2710
    %v2713 = vadd.f32 %v2709, %v2711
    %v2714 = vtanh.pop %v2712
    %v2715 = vtanh.pop %v2713
    %v2716 = vmul.f32 %v2706, %v2714
    %v2717 = vmul.f32 %v2707, %v2715
    %s2718 = scalar_lea.vmem [#allocation2], 320
    %v2719 = vld [vmem:[%s2718] sm:$0xff]
    %v2720 = vld [vmem:[%s2718 + $0x8] sm:$0xff]
    %v2721 = vld [vmem:[%s2718 + $0x10] sm:$0xff]
    %v2722 = vld [vmem:[%s2718 + $0x18] sm:$0xff]
    %v2723 = vld [vmem:[%s2718 + $0x20] sm:$0xff]
    %v2724 = vld [vmem:[%s2718 + $0x28] sm:$0xff]
    %v2725 = vld [vmem:[%s2718 + $0x30] sm:$0xff]
    %v2726 = vld [vmem:[%s2718 + $0x38] sm:$0xff]
    %2727 = vmatpush.msra.mxu0 %v718
    %2728 = vmatpush.msra.mxu0 %v710
    %2729 = vmatpush.msra.mxu0 %v702
    %2730 = vmatpush.msra.mxu0 %v694
    %2731 = vmatpush.msra.mxu0 %v686
    %2732 = vmatpush.msra.mxu0 %v678
    %2733 = vmatpush.msra.mxu0 %v670
    %2734 = vmatpush.msra.mxu0 %v662
    %2735 = vmatpush.msra.mxu0 %v654
    %2736 = vmatpush.msra.mxu0 %v646
    %2737 = vmatpush.msra.mxu0 %v638
    %2738 = vmatpush.msra.mxu0 %v630
    %2739 = vmatpush.msra.mxu0 %v622
    %2740 = vmatpush.msra.mxu0 %v614
    %2741 = vmatpush.msra.mxu0 %v606
    %2742 = vmatpush.msra.mxu0 %v598
    %2743 = vmatmul.f32.gmra.mxu0 %v2716
    %v2744 = vpop.f32.mrf.mxu0
    %v2745 = vadd.f32 0.0, %v2744
    %2746 = vdwg.mxu0
    %2747 = vmatpush.msra.mxu0 %v846
    %2748 = vmatpush.msra.mxu0 %v838
    %2749 = vmatpush.msra.mxu0 %v830
    %2750 = vmatpush.msra.mxu0 %v822
    %2751 = vmatpush.msra.mxu0 %v814
    %2752 = vmatpush.msra.mxu0 %v806
    %2753 = vmatpush.msra.mxu0 %v798
    %2754 = vmatpush.msra.mxu0 %v790
    %2755 = vmatpush.msra.mxu0 %v782
    %2756 = vmatpush.msra.mxu0 %v774
    %2757 = vmatpush.msra.mxu0 %v766
    %2758 = vmatpush.msra.mxu0 %v758
    %2759 = vmatpush.msra.mxu0 %v750
    %2760 = vmatpush.msra.mxu0 %v742
    %2761 = vmatpush.msra.mxu0 %v734
    %2762 = vmatpush.msra.mxu0 %v726
    %2763 = vmatmul.f32.gmra.mxu0 %v2717
    %v2764 = vpop.f32.mrf.mxu0
    %v2765 = vadd.f32 %v2745, %v2764
    %2766 = vdwg.mxu0
    %2767 = vmatpush.msra.mxu0 %v719
    %2768 = vmatpush.msra.mxu0 %v711
    %2769 = vmatpush.msra.mxu0 %v703
    %2770 = vmatpush.msra.mxu0 %v695
    %2771 = vmatpush.msra.mxu0 %v687
    %2772 = vmatpush.msra.mxu0 %v679
    %2773 = vmatpush.msra.mxu0 %v671
    %2774 = vmatpush.msra.mxu0 %v663
    %2775 = vmatpush.msra.mxu0 %v655
    %2776 = vmatpush.msra.mxu0 %v647
    %2777 = vmatpush.msra.mxu0 %v639
    %2778 = vmatpush.msra.mxu0 %v631
    %2779 = vmatpush.msra.mxu0 %v623
    %2780 = vmatpush.msra.mxu0 %v615
    %2781 = vmatpush.msra.mxu0 %v607
    %2782 = vmatpush.msra.mxu0 %v599
    %2783 = vmatmul.f32.gmra.mxu0 %v2716
    %v2784 = vpop.f32.mrf.mxu0
    %v2785 = vadd.f32 0.0, %v2784
    %2786 = vdwg.mxu0
    %2787 = vmatpush.msra.mxu0 %v847
    %2788 = vmatpush.msra.mxu0 %v839
    %2789 = vmatpush.msra.mxu0 %v831
    %2790 = vmatpush.msra.mxu0 %v823
    %2791 = vmatpush.msra.mxu0 %v815
    %2792 = vmatpush.msra.mxu0 %v807
    %2793 = vmatpush.msra.mxu0 %v799
    %2794 = vmatpush.msra.mxu0 %v791
    %2795 = vmatpush.msra.mxu0 %v783
    %2796 = vmatpush.msra.mxu0 %v775
    %2797 = vmatpush.msra.mxu0 %v767
    %2798 = vmatpush.msra.mxu0 %v759
    %2799 = vmatpush.msra.mxu0 %v751
    %2800 = vmatpush.msra.mxu0 %v743
    %2801 = vmatpush.msra.mxu0 %v735
    %2802 = vmatpush.msra.mxu0 %v727
    %2803 = vmatmul.f32.gmra.mxu0 %v2717
    %v2804 = vpop.f32.mrf.mxu0
    %v2805 = vadd.f32 %v2785, %v2804
    %2806 = vdwg.mxu0
    %2807 = vmatpush.msra.mxu0 %v720
    %2808 = vmatpush.msra.mxu0 %v712
    %2809 = vmatpush.msra.mxu0 %v704
    %2810 = vmatpush.msra.mxu0 %v696
    %2811 = vmatpush.msra.mxu0 %v688
    %2812 = vmatpush.msra.mxu0 %v680
    %2813 = vmatpush.msra.mxu0 %v672
    %2814 = vmatpush.msra.mxu0 %v664
    %2815 = vmatpush.msra.mxu0 %v656
    %2816 = vmatpush.msra.mxu0 %v648
    %2817 = vmatpush.msra.mxu0 %v640
    %2818 = vmatpush.msra.mxu0 %v632
    %2819 = vmatpush.msra.mxu0 %v624
    %2820 = vmatpush.msra.mxu0 %v616
    %2821 = vmatpush.msra.mxu0 %v608
    %2822 = vmatpush.msra.mxu0 %v600
    %2823 = vmatmul.f32.gmra.mxu0 %v2716
    %v2824 = vpop.f32.mrf.mxu0
    %v2825 = vadd.f32 0.0, %v2824
    %2826 = vdwg.mxu0
    %2827 = vmatpush.msra.mxu0 %v848
    %2828 = vmatpush.msra.mxu0 %v840
    %2829 = vmatpush.msra.mxu0 %v832
    %2830 = vmatpush.msra.mxu0 %v824
    %2831 = vmatpush.msra.mxu0 %v816
    %2832 = vmatpush.msra.mxu0 %v808
    %2833 = vmatpush.msra.mxu0 %v800
    %2834 = vmatpush.msra.mxu0 %v792
    %2835 = vmatpush.msra.mxu0 %v784
    %2836 = vmatpush.msra.mxu0 %v776
    %2837 = vmatpush.msra.mxu0 %v768
    %2838 = vmatpush.msra.mxu0 %v760
    %2839 = vmatpush.msra.mxu0 %v752
    %2840 = vmatpush.msra.mxu0 %v744
    %2841 = vmatpush.msra.mxu0 %v736
    %2842 = vmatpush.msra.mxu0 %v728
    %2843 = vmatmul.f32.gmra.mxu0 %v2717
    %v2844 = vpop.f32.mrf.mxu0
    %v2845 = vadd.f32 %v2825, %v2844
    %2846 = vdwg.mxu0
    %2847 = vmatpush.msra.mxu0 %v721
    %2848 = vmatpush.msra.mxu0 %v713
    %2849 = vmatpush.msra.mxu0 %v705
    %2850 = vmatpush.msra.mxu0 %v697
    %2851 = vmatpush.msra.mxu0 %v689
    %2852 = vmatpush.msra.mxu0 %v681
    %2853 = vmatpush.msra.mxu0 %v673
    %2854 = vmatpush.msra.mxu0 %v665
    %2855 = vmatpush.msra.mxu0 %v657
    %2856 = vmatpush.msra.mxu0 %v649
    %2857 = vmatpush.msra.mxu0 %v641
    %2858 = vmatpush.msra.mxu0 %v633
    %2859 = vmatpush.msra.mxu0 %v625
    %2860 = vmatpush.msra.mxu0 %v617
    %2861 = vmatpush.msra.mxu0 %v609
    %2862 = vmatpush.msra.mxu0 %v601
    %2863 = vmatmul.f32.gmra.mxu0 %v2716
    %v2864 = vpop.f32.mrf.mxu0
    %v2865 = vadd.f32 0.0, %v2864
    %2866 = vdwg.mxu0
    %2867 = vmatpush.msra.mxu0 %v849
    %2868 = vmatpush.msra.mxu0 %v841
    %2869 = vmatpush.msra.mxu0 %v833
    %2870 = vmatpush.msra.mxu0 %v825
    %2871 = vmatpush.msra.mxu0 %v817
    %2872 = vmatpush.msra.mxu0 %v809
    %2873 = vmatpush.msra.mxu0 %v801
    %2874 = vmatpush.msra.mxu0 %v793
    %2875 = vmatpush.msra.mxu0 %v785
    %2876 = vmatpush.msra.mxu0 %v777
    %2877 = vmatpush.msra.mxu0 %v769
    %2878 = vmatpush.msra.mxu0 %v761
    %2879 = vmatpush.msra.mxu0 %v753
    %2880 = vmatpush.msra.mxu0 %v745
    %2881 = vmatpush.msra.mxu0 %v737
    %2882 = vmatpush.msra.mxu0 %v729
    %2883 = vmatmul.f32.gmra.mxu0 %v2717
    %v2884 = vpop.f32.mrf.mxu0
    %v2885 = vadd.f32 %v2865, %v2884
    %2886 = vdwg.mxu0
    %2887 = vmatpush.msra.mxu0 %v722
    %2888 = vmatpush.msra.mxu0 %v714
    %2889 = vmatpush.msra.mxu0 %v706
    %2890 = vmatpush.msra.mxu0 %v698
    %2891 = vmatpush.msra.mxu0 %v690
    %2892 = vmatpush.msra.mxu0 %v682
    %2893 = vmatpush.msra.mxu0 %v674
    %2894 = vmatpush.msra.mxu0 %v666
    %2895 = vmatpush.msra.mxu0 %v658
    %2896 = vmatpush.msra.mxu0 %v650
    %2897 = vmatpush.msra.mxu0 %v642
    %2898 = vmatpush.msra.mxu0 %v634
    %2899 = vmatpush.msra.mxu0 %v626
    %2900 = vmatpush.msra.mxu0 %v618
    %2901 = vmatpush.msra.mxu0 %v610
    %2902 = vmatpush.msra.mxu0 %v602
    %2903 = vmatmul.f32.gmra.mxu0 %v2716
    %v2904 = vpop.f32.mrf.mxu0
    %v2905 = vadd.f32 0.0, %v2904
    %2906 = vdwg.mxu0
    %2907 = vmatpush.msra.mxu0 %v850
    %2908 = vmatpush.msra.mxu0 %v842
    %2909 = vmatpush.msra.mxu0 %v834
    %2910 = vmatpush.msra.mxu0 %v826
    %2911 = vmatpush.msra.mxu0 %v818
    %2912 = vmatpush.msra.mxu0 %v810
    %2913 = vmatpush.msra.mxu0 %v802
    %2914 = vmatpush.msra.mxu0 %v794
    %2915 = vmatpush.msra.mxu0 %v786
    %2916 = vmatpush.msra.mxu0 %v778
    %2917 = vmatpush.msra.mxu0 %v770
    %2918 = vmatpush.msra.mxu0 %v762
    %2919 = vmatpush.msra.mxu0 %v754
    %2920 = vmatpush.msra.mxu0 %v746
    %2921 = vmatpush.msra.mxu0 %v738
    %2922 = vmatpush.msra.mxu0 %v730
    %2923 = vmatmul.f32.gmra.mxu0 %v2717
    %v2924 = vpop.f32.mrf.mxu0
    %v2925 = vadd.f32 %v2905, %v2924
    %2926 = vdwg.mxu0
    %2927 = vmatpush.msra.mxu0 %v723
    %2928 = vmatpush.msra.mxu0 %v715
    %2929 = vmatpush.msra.mxu0 %v707
    %2930 = vmatpush.msra.mxu0 %v699
    %2931 = vmatpush.msra.mxu0 %v691
    %2932 = vmatpush.msra.mxu0 %v683
    %2933 = vmatpush.msra.mxu0 %v675
    %2934 = vmatpush.msra.mxu0 %v667
    %2935 = vmatpush.msra.mxu0 %v659
    %2936 = vmatpush.msra.mxu0 %v651
    %2937 = vmatpush.msra.mxu0 %v643
    %2938 = vmatpush.msra.mxu0 %v635
    %2939 = vmatpush.msra.mxu0 %v627
    %2940 = vmatpush.msra.mxu0 %v619
    %2941 = vmatpush.msra.mxu0 %v611
    %2942 = vmatpush.msra.mxu0 %v603
    %2943 = vmatmul.f32.gmra.mxu0 %v2716
    %v2944 = vpop.f32.mrf.mxu0
    %v2945 = vadd.f32 0.0, %v2944
    %2946 = vdwg.mxu0
    %2947 = vmatpush.msra.mxu0 %v851
    %2948 = vmatpush.msra.mxu0 %v843
    %2949 = vmatpush.msra.mxu0 %v835
    %2950 = vmatpush.msra.mxu0 %v827
    %2951 = vmatpush.msra.mxu0 %v819
    %2952 = vmatpush.msra.mxu0 %v811
    %2953 = vmatpush.msra.mxu0 %v803
    %2954 = vmatpush.msra.mxu0 %v795
    %2955 = vmatpush.msra.mxu0 %v787
    %2956 = vmatpush.msra.mxu0 %v779
    %2957 = vmatpush.msra.mxu0 %v771
    %2958 = vmatpush.msra.mxu0 %v763
    %2959 = vmatpush.msra.mxu0 %v755
    %2960 = vmatpush.msra.mxu0 %v747
    %2961 = vmatpush.msra.mxu0 %v739
    %2962 = vmatpush.msra.mxu0 %v731
    %2963 = vmatmul.f32.gmra.mxu0 %v2717
    %v2964 = vpop.f32.mrf.mxu0
    %v2965 = vadd.f32 %v2945, %v2964
    %2966 = vdwg.mxu0
    %2967 = vmatpush.msra.mxu0 %v724
    %2968 = vmatpush.msra.mxu0 %v716
    %2969 = vmatpush.msra.mxu0 %v708
    %2970 = vmatpush.msra.mxu0 %v700
    %2971 = vmatpush.msra.mxu0 %v692
    %2972 = vmatpush.msra.mxu0 %v684
    %2973 = vmatpush.msra.mxu0 %v676
    %2974 = vmatpush.msra.mxu0 %v668
    %2975 = vmatpush.msra.mxu0 %v660
    %2976 = vmatpush.msra.mxu0 %v652
    %2977 = vmatpush.msra.mxu0 %v644
    %2978 = vmatpush.msra.mxu0 %v636
    %2979 = vmatpush.msra.mxu0 %v628
    %2980 = vmatpush.msra.mxu0 %v620
    %2981 = vmatpush.msra.mxu0 %v612
    %2982 = vmatpush.msra.mxu0 %v604
    %2983 = vmatmul.f32.gmra.mxu0 %v2716
    %v2984 = vpop.f32.mrf.mxu0
    %v2985 = vadd.f32 0.0, %v2984
    %2986 = vdwg.mxu0
    %2987 = vmatpush.msra.mxu0 %v852
    %2988 = vmatpush.msra.mxu0 %v844
    %2989 = vmatpush.msra.mxu0 %v836
    %2990 = vmatpush.msra.mxu0 %v828
    %2991 = vmatpush.msra.mxu0 %v820
    %2992 = vmatpush.msra.mxu0 %v812
    %2993 = vmatpush.msra.mxu0 %v804
    %2994 = vmatpush.msra.mxu0 %v796
    %2995 = vmatpush.msra.mxu0 %v788
    %2996 = vmatpush.msra.mxu0 %v780
    %2997 = vmatpush.msra.mxu0 %v772
    %2998 = vmatpush.msra.mxu0 %v764
    %2999 = vmatpush.msra.mxu0 %v756
    %3000 = vmatpush.msra.mxu0 %v748
    %3001 = vmatpush.msra.mxu0 %v740
    %3002 = vmatpush.msra.mxu0 %v732
    %3003 = vmatmul.f32.gmra.mxu0 %v2717
    %v3004 = vpop.f32.mrf.mxu0
    %v3005 = vadd.f32 %v2985, %v3004
    %3006 = vdwg.mxu0
    %3007 = vmatpush.msra.mxu0 %v725
    %3008 = vmatpush.msra.mxu0 %v717
    %3009 = vmatpush.msra.mxu0 %v709
    %3010 = vmatpush.msra.mxu0 %v701
    %3011 = vmatpush.msra.mxu0 %v693
    %3012 = vmatpush.msra.mxu0 %v685
    %3013 = vmatpush.msra.mxu0 %v677
    %3014 = vmatpush.msra.mxu0 %v669
    %3015 = vmatpush.msra.mxu0 %v661
    %3016 = vmatpush.msra.mxu0 %v653
    %3017 = vmatpush.msra.mxu0 %v645
    %3018 = vmatpush.msra.mxu0 %v637
    %3019 = vmatpush.msra.mxu0 %v629
    %3020 = vmatpush.msra.mxu0 %v621
    %3021 = vmatpush.msra.mxu0 %v613
    %3022 = vmatpush.msra.mxu0 %v605
    %3023 = vmatmul.f32.gmra.mxu0 %v2716
    %v3024 = vpop.f32.mrf.mxu0
    %v3025 = vadd.f32 0.0, %v3024
    %3026 = vdwg.mxu0
    %3027 = vmatpush.msra.mxu0 %v853
    %3028 = vmatpush.msra.mxu0 %v845
    %3029 = vmatpush.msra.mxu0 %v837
    %3030 = vmatpush.msra.mxu0 %v829
    %3031 = vmatpush.msra.mxu0 %v821
    %3032 = vmatpush.msra.mxu0 %v813
    %3033 = vmatpush.msra.mxu0 %v805
    %3034 = vmatpush.msra.mxu0 %v797
    %3035 = vmatpush.msra.mxu0 %v789
    %3036 = vmatpush.msra.mxu0 %v781
    %3037 = vmatpush.msra.mxu0 %v773
    %3038 = vmatpush.msra.mxu0 %v765
    %3039 = vmatpush.msra.mxu0 %v757
    %3040 = vmatpush.msra.mxu0 %v749
    %3041 = vmatpush.msra.mxu0 %v741
    %3042 = vmatpush.msra.mxu0 %v733
    %3043 = vmatmul.f32.gmra.mxu0 %v2717
    %v3044 = vpop.f32.mrf.mxu0
    %v3045 = vadd.f32 %v3025, %v3044
    %3046 = vdwg.mxu0
    %v3047 = vadd.f32 %v2719, %v2765
    %v3048 = vadd.f32 %v2720, %v2805
    %v3049 = vadd.f32 %v2721, %v2845
    %v3050 = vadd.f32 %v2722, %v2885
    %v3051 = vadd.f32 %v2723, %v2925
    %v3052 = vadd.f32 %v2724, %v2965
    %v3053 = vadd.f32 %v2725, %v3005
    %v3054 = vadd.f32 %v2726, %v3045
    %v3055 = vmul.f32 %v3047, 0.5
    %v3056 = vmul.f32 %v3048, 0.5
    %v3057 = vtanh.pop %v3055
    %v3058 = vtanh.pop %v3056
    %v3059 = vmul.f32 %v3057, 0.5
    %v3060 = vmul.f32 %v3058, 0.5
    %v3061 = vadd.f32 %v3059, 0.5
    %v3062 = vadd.f32 %v3060, 0.5
    %v3063 = vmul.f32 %v3049, 0.5
    %v3064 = vmul.f32 %v3050, 0.5
    %v3065 = vtanh.pop %v3063
    %v3066 = vtanh.pop %v3064
    %v3067 = vmul.f32 %v3065, 0.5
    %v3068 = vmul.f32 %v3066, 0.5
    %v3069 = vadd.f32 %v3067, 0.5
    %v3070 = vadd.f32 %v3068, 0.5
    %v3071 = vtanh.pop %v3051
    %v3072 = vtanh.pop %v3052
    %v3073 = vmul.f32 %v3053, 0.5
    %v3074 = vmul.f32 %v3054, 0.5
    %v3075 = vtanh.pop %v3073
    %v3076 = vtanh.pop %v3074
    %v3077 = vmul.f32 %v3075, 0.5
    %v3078 = vmul.f32 %v3076, 0.5
    %v3079 = vadd.f32 %v3077, 0.5
    %v3080 = vadd.f32 %v3078, 0.5
    %v3081 = vmul.f32 %v3069, %v2712
    %v3082 = vmul.f32 %v3070, %v2713
    %v3083 = vmul.f32 %v3061, %v3071
    %v3084 = vmul.f32 %v3062, %v3072
    %v3085 = vadd.f32 %v3081, %v3083
    %v3086 = vadd.f32 %v3082, %v3084
    %v3087 = vtanh.pop %v3085
    %v3088 = vtanh.pop %v3086
    %v3089 = vmul.f32 %v3079, %v3087
    %v3090 = vmul.f32 %v3080, %v3088
    %s3091 = scalar_lea.vmem [#allocation2], 384
    %v3092 = vld [vmem:[%s3091] sm:$0xff]
    %v3093 = vld [vmem:[%s3091 + $0x8] sm:$0xff]
    %v3094 = vld [vmem:[%s3091 + $0x10] sm:$0xff]
    %v3095 = vld [vmem:[%s3091 + $0x18] sm:$0xff]
    %v3096 = vld [vmem:[%s3091 + $0x20] sm:$0xff]
    %v3097 = vld [vmem:[%s3091 + $0x28] sm:$0xff]
    %v3098 = vld [vmem:[%s3091 + $0x30] sm:$0xff]
    %v3099 = vld [vmem:[%s3091 + $0x38] sm:$0xff]
    %3100 = vmatpush.msra.mxu0 %v718
    %3101 = vmatpush.msra.mxu0 %v710
    %3102 = vmatpush.msra.mxu0 %v702
    %3103 = vmatpush.msra.mxu0 %v694
    %3104 = vmatpush.msra.mxu0 %v686
    %3105 = vmatpush.msra.mxu0 %v678
    %3106 = vmatpush.msra.mxu0 %v670
    %3107 = vmatpush.msra.mxu0 %v662
    %3108 = vmatpush.msra.mxu0 %v654
    %3109 = vmatpush.msra.mxu0 %v646
    %3110 = vmatpush.msra.mxu0 %v638
    %3111 = vmatpush.msra.mxu0 %v630
    %3112 = vmatpush.msra.mxu0 %v622
    %3113 = vmatpush.msra.mxu0 %v614
    %3114 = vmatpush.msra.mxu0 %v606
    %3115 = vmatpush.msra.mxu0 %v598
    %3116 = vmatmul.f32.gmra.mxu0 %v3089
    %v3117 = vpop.f32.mrf.mxu0
    %v3118 = vadd.f32 0.0, %v3117
    %3119 = vdwg.mxu0
    %3120 = vmatpush.msra.mxu0 %v846
    %3121 = vmatpush.msra.mxu0 %v838
    %3122 = vmatpush.msra.mxu0 %v830
    %3123 = vmatpush.msra.mxu0 %v822
    %3124 = vmatpush.msra.mxu0 %v814
    %3125 = vmatpush.msra.mxu0 %v806
    %3126 = vmatpush.msra.mxu0 %v798
    %3127 = vmatpush.msra.mxu0 %v790
    %3128 = vmatpush.msra.mxu0 %v782
    %3129 = vmatpush.msra.mxu0 %v774
    %3130 = vmatpush.msra.mxu0 %v766
    %3131 = vmatpush.msra.mxu0 %v758
    %3132 = vmatpush.msra.mxu0 %v750
    %3133 = vmatpush.msra.mxu0 %v742
    %3134 = vmatpush.msra.mxu0 %v734
    %3135 = vmatpush.msra.mxu0 %v726
    %3136 = vmatmul.f32.gmra.mxu0 %v3090
    %v3137 = vpop.f32.mrf.mxu0
    %v3138 = vadd.f32 %v3118, %v3137
    %3139 = vdwg.mxu0
    %3140 = vmatpush.msra.mxu0 %v719
    %3141 = vmatpush.msra.mxu0 %v711
    %3142 = vmatpush.msra.mxu0 %v703
    %3143 = vmatpush.msra.mxu0 %v695
    %3144 = vmatpush.msra.mxu0 %v687
    %3145 = vmatpush.msra.mxu0 %v679
    %3146 = vmatpush.msra.mxu0 %v671
    %3147 = vmatpush.msra.mxu0 %v663
    %3148 = vmatpush.msra.mxu0 %v655
    %3149 = vmatpush.msra.mxu0 %v647
    %3150 = vmatpush.msra.mxu0 %v639
    %3151 = vmatpush.msra.mxu0 %v631
    %3152 = vmatpush.msra.mxu0 %v623
    %3153 = vmatpush.msra.mxu0 %v615
    %3154 = vmatpush.msra.mxu0 %v607
    %3155 = vmatpush.msra.mxu0 %v599
    %3156 = vmatmul.f32.gmra.mxu0 %v3089
    %v3157 = vpop.f32.mrf.mxu0
    %v3158 = vadd.f32 0.0, %v3157
    %3159 = vdwg.mxu0
    %3160 = vmatpush.msra.mxu0 %v847
    %3161 = vmatpush.msra.mxu0 %v839
    %3162 = vmatpush.msra.mxu0 %v831
    %3163 = vmatpush.msra.mxu0 %v823
    %3164 = vmatpush.msra.mxu0 %v815
    %3165 = vmatpush.msra.mxu0 %v807
    %3166 = vmatpush.msra.mxu0 %v799
    %3167 = vmatpush.msra.mxu0 %v791
    %3168 = vmatpush.msra.mxu0 %v783
    %3169 = vmatpush.msra.mxu0 %v775
    %3170 = vmatpush.msra.mxu0 %v767
    %3171 = vmatpush.msra.mxu0 %v759
    %3172 = vmatpush.msra.mxu0 %v751
    %3173 = vmatpush.msra.mxu0 %v743
    %3174 = vmatpush.msra.mxu0 %v735
    %3175 = vmatpush.msra.mxu0 %v727
    %3176 = vmatmul.f32.gmra.mxu0 %v3090
    %v3177 = vpop.f32.mrf.mxu0
    %v3178 = vadd.f32 %v3158, %v3177
    %3179 = vdwg.mxu0
    %3180 = vmatpush.msra.mxu0 %v720
    %3181 = vmatpush.msra.mxu0 %v712
    %3182 = vmatpush.msra.mxu0 %v704
    %3183 = vmatpush.msra.mxu0 %v696
    %3184 = vmatpush.msra.mxu0 %v688
    %3185 = vmatpush.msra.mxu0 %v680
    %3186 = vmatpush.msra.mxu0 %v672
    %3187 = vmatpush.msra.mxu0 %v664
    %3188 = vmatpush.msra.mxu0 %v656
    %3189 = vmatpush.msra.mxu0 %v648
    %3190 = vmatpush.msra.mxu0 %v640
    %3191 = vmatpush.msra.mxu0 %v632
    %3192 = vmatpush.msra.mxu0 %v624
    %3193 = vmatpush.msra.mxu0 %v616
    %3194 = vmatpush.msra.mxu0 %v608
    %3195 = vmatpush.msra.mxu0 %v600
    %3196 = vmatmul.f32.gmra.mxu0 %v3089
    %v3197 = vpop.f32.mrf.mxu0
    %v3198 = vadd.f32 0.0, %v3197
    %3199 = vdwg.mxu0
    %3200 = vmatpush.msra.mxu0 %v848
    %3201 = vmatpush.msra.mxu0 %v840
    %3202 = vmatpush.msra.mxu0 %v832
    %3203 = vmatpush.msra.mxu0 %v824
    %3204 = vmatpush.msra.mxu0 %v816
    %3205 = vmatpush.msra.mxu0 %v808
    %3206 = vmatpush.msra.mxu0 %v800
    %3207 = vmatpush.msra.mxu0 %v792
    %3208 = vmatpush.msra.mxu0 %v784
    %3209 = vmatpush.msra.mxu0 %v776
    %3210 = vmatpush.msra.mxu0 %v768
    %3211 = vmatpush.msra.mxu0 %v760
    %3212 = vmatpush.msra.mxu0 %v752
    %3213 = vmatpush.msra.mxu0 %v744
    %3214 = vmatpush.msra.mxu0 %v736
    %3215 = vmatpush.msra.mxu0 %v728
    %3216 = vmatmul.f32.gmra.mxu0 %v3090
    %v3217 = vpop.f32.mrf.mxu0
    %v3218 = vadd.f32 %v3198, %v3217
    %3219 = vdwg.mxu0
    %3220 = vmatpush.msra.mxu0 %v721
    %3221 = vmatpush.msra.mxu0 %v713
    %3222 = vmatpush.msra.mxu0 %v705
    %3223 = vmatpush.msra.mxu0 %v697
    %3224 = vmatpush.msra.mxu0 %v689
    %3225 = vmatpush.msra.mxu0 %v681
    %3226 = vmatpush.msra.mxu0 %v673
    %3227 = vmatpush.msra.mxu0 %v665
    %3228 = vmatpush.msra.mxu0 %v657
    %3229 = vmatpush.msra.mxu0 %v649
    %3230 = vmatpush.msra.mxu0 %v641
    %3231 = vmatpush.msra.mxu0 %v633
    %3232 = vmatpush.msra.mxu0 %v625
    %3233 = vmatpush.msra.mxu0 %v617
    %3234 = vmatpush.msra.mxu0 %v609
    %3235 = vmatpush.msra.mxu0 %v601
    %3236 = vmatmul.f32.gmra.mxu0 %v3089
    %v3237 = vpop.f32.mrf.mxu0
    %v3238 = vadd.f32 0.0, %v3237
    %3239 = vdwg.mxu0
    %3240 = vmatpush.msra.mxu0 %v849
    %3241 = vmatpush.msra.mxu0 %v841
    %3242 = vmatpush.msra.mxu0 %v833
    %3243 = vmatpush.msra.mxu0 %v825
    %3244 = vmatpush.msra.mxu0 %v817
    %3245 = vmatpush.msra.mxu0 %v809
    %3246 = vmatpush.msra.mxu0 %v801
    %3247 = vmatpush.msra.mxu0 %v793
    %3248 = vmatpush.msra.mxu0 %v785
    %3249 = vmatpush.msra.mxu0 %v777
    %3250 = vmatpush.msra.mxu0 %v769
    %3251 = vmatpush.msra.mxu0 %v761
    %3252 = vmatpush.msra.mxu0 %v753
    %3253 = vmatpush.msra.mxu0 %v745
    %3254 = vmatpush.msra.mxu0 %v737
    %3255 = vmatpush.msra.mxu0 %v729
    %3256 = vmatmul.f32.gmra.mxu0 %v3090
    %v3257 = vpop.f32.mrf.mxu0
    %v3258 = vadd.f32 %v3238, %v3257
    %3259 = vdwg.mxu0
    %3260 = vmatpush.msra.mxu0 %v722
    %3261 = vmatpush.msra.mxu0 %v714
    %3262 = vmatpush.msra.mxu0 %v706
    %3263 = vmatpush.msra.mxu0 %v698
    %3264 = vmatpush.msra.mxu0 %v690
    %3265 = vmatpush.msra.mxu0 %v682
    %3266 = vmatpush.msra.mxu0 %v674
    %3267 = vmatpush.msra.mxu0 %v666
    %3268 = vmatpush.msra.mxu0 %v658
    %3269 = vmatpush.msra.mxu0 %v650
    %3270 = vmatpush.msra.mxu0 %v642
    %3271 = vmatpush.msra.mxu0 %v634
    %3272 = vmatpush.msra.mxu0 %v626
    %3273 = vmatpush.msra.mxu0 %v618
    %3274 = vmatpush.msra.mxu0 %v610
    %3275 = vmatpush.msra.mxu0 %v602
    %3276 = vmatmul.f32.gmra.mxu0 %v3089
    %v3277 = vpop.f32.mrf.mxu0
    %v3278 = vadd.f32 0.0, %v3277
    %3279 = vdwg.mxu0
    %3280 = vmatpush.msra.mxu0 %v850
    %3281 = vmatpush.msra.mxu0 %v842
    %3282 = vmatpush.msra.mxu0 %v834
    %3283 = vmatpush.msra.mxu0 %v826
    %3284 = vmatpush.msra.mxu0 %v818
    %3285 = vmatpush.msra.mxu0 %v810
    %3286 = vmatpush.msra.mxu0 %v802
    %3287 = vmatpush.msra.mxu0 %v794
    %3288 = vmatpush.msra.mxu0 %v786
    %3289 = vmatpush.msra.mxu0 %v778
    %3290 = vmatpush.msra.mxu0 %v770
    %3291 = vmatpush.msra.mxu0 %v762
    %3292 = vmatpush.msra.mxu0 %v754
    %3293 = vmatpush.msra.mxu0 %v746
    %3294 = vmatpush.msra.mxu0 %v738
    %3295 = vmatpush.msra.mxu0 %v730
    %3296 = vmatmul.f32.gmra.mxu0 %v3090
    %v3297 = vpop.f32.mrf.mxu0
    %v3298 = vadd.f32 %v3278, %v3297
    %3299 = vdwg.mxu0
    %3300 = vmatpush.msra.mxu0 %v723
    %3301 = vmatpush.msra.mxu0 %v715
    %3302 = vmatpush.msra.mxu0 %v707
    %3303 = vmatpush.msra.mxu0 %v699
    %3304 = vmatpush.msra.mxu0 %v691
    %3305 = vmatpush.msra.mxu0 %v683
    %3306 = vmatpush.msra.mxu0 %v675
    %3307 = vmatpush.msra.mxu0 %v667
    %3308 = vmatpush.msra.mxu0 %v659
    %3309 = vmatpush.msra.mxu0 %v651
    %3310 = vmatpush.msra.mxu0 %v643
    %3311 = vmatpush.msra.mxu0 %v635
    %3312 = vmatpush.msra.mxu0 %v627
    %3313 = vmatpush.msra.mxu0 %v619
    %3314 = vmatpush.msra.mxu0 %v611
    %3315 = vmatpush.msra.mxu0 %v603
    %3316 = vmatmul.f32.gmra.mxu0 %v3089
    %v3317 = vpop.f32.mrf.mxu0
    %v3318 = vadd.f32 0.0, %v3317
    %3319 = vdwg.mxu0
    %3320 = vmatpush.msra.mxu0 %v851
    %3321 = vmatpush.msra.mxu0 %v843
    %3322 = vmatpush.msra.mxu0 %v835
    %3323 = vmatpush.msra.mxu0 %v827
    %3324 = vmatpush.msra.mxu0 %v819
    %3325 = vmatpush.msra.mxu0 %v811
    %3326 = vmatpush.msra.mxu0 %v803
    %3327 = vmatpush.msra.mxu0 %v795
    %3328 = vmatpush.msra.mxu0 %v787
    %3329 = vmatpush.msra.mxu0 %v779
    %3330 = vmatpush.msra.mxu0 %v771
    %3331 = vmatpush.msra.mxu0 %v763
    %3332 = vmatpush.msra.mxu0 %v755
    %3333 = vmatpush.msra.mxu0 %v747
    %3334 = vmatpush.msra.mxu0 %v739
    %3335 = vmatpush.msra.mxu0 %v731
    %3336 = vmatmul.f32.gmra.mxu0 %v3090
    %v3337 = vpop.f32.mrf.mxu0
    %v3338 = vadd.f32 %v3318, %v3337
    %3339 = vdwg.mxu0
    %3340 = vmatpush.msra.mxu0 %v724
    %3341 = vmatpush.msra.mxu0 %v716
    %3342 = vmatpush.msra.mxu0 %v708
    %3343 = vmatpush.msra.mxu0 %v700
    %3344 = vmatpush.msra.mxu0 %v692
    %3345 = vmatpush.msra.mxu0 %v684
    %3346 = vmatpush.msra.mxu0 %v676
    %3347 = vmatpush.msra.mxu0 %v668
    %3348 = vmatpush.msra.mxu0 %v660
    %3349 = vmatpush.msra.mxu0 %v652
    %3350 = vmatpush.msra.mxu0 %v644
    %3351 = vmatpush.msra.mxu0 %v636
    %3352 = vmatpush.msra.mxu0 %v628
    %3353 = vmatpush.msra.mxu0 %v620
    %3354 = vmatpush.msra.mxu0 %v612
    %3355 = vmatpush.msra.mxu0 %v604
    %3356 = vmatmul.f32.gmra.mxu0 %v3089
    %v3357 = vpop.f32.mrf.mxu0
    %v3358 = vadd.f32 0.0, %v3357
    %3359 = vdwg.mxu0
    %3360 = vmatpush.msra.mxu0 %v852
    %3361 = vmatpush.msra.mxu0 %v844
    %3362 = vmatpush.msra.mxu0 %v836
    %3363 = vmatpush.msra.mxu0 %v828
    %3364 = vmatpush.msra.mxu0 %v820
    %3365 = vmatpush.msra.mxu0 %v812
    %3366 = vmatpush.msra.mxu0 %v804
    %3367 = vmatpush.msra.mxu0 %v796
    %3368 = vmatpush.msra.mxu0 %v788
    %3369 = vmatpush.msra.mxu0 %v780
    %3370 = vmatpush.msra.mxu0 %v772
    %3371 = vmatpush.msra.mxu0 %v764
    %3372 = vmatpush.msra.mxu0 %v756
    %3373 = vmatpush.msra.mxu0 %v748
    %3374 = vmatpush.msra.mxu0 %v740
    %3375 = vmatpush.msra.mxu0 %v732
    %3376 = vmatmul.f32.gmra.mxu0 %v3090
    %v3377 = vpop.f32.mrf.mxu0
    %v3378 = vadd.f32 %v3358, %v3377
    %3379 = vdwg.mxu0
    %3380 = vmatpush.msra.mxu0 %v725
    %3381 = vmatpush.msra.mxu0 %v717
    %3382 = vmatpush.msra.mxu0 %v709
    %3383 = vmatpush.msra.mxu0 %v701
    %3384 = vmatpush.msra.mxu0 %v693
    %3385 = vmatpush.msra.mxu0 %v685
    %3386 = vmatpush.msra.mxu0 %v677
    %3387 = vmatpush.msra.mxu0 %v669
    %3388 = vmatpush.msra.mxu0 %v661
    %3389 = vmatpush.msra.mxu0 %v653
    %3390 = vmatpush.msra.mxu0 %v645
    %3391 = vmatpush.msra.mxu0 %v637
    %3392 = vmatpush.msra.mxu0 %v629
    %3393 = vmatpush.msra.mxu0 %v621
    %3394 = vmatpush.msra.mxu0 %v613
    %3395 = vmatpush.msra.mxu0 %v605
    %3396 = vmatmul.f32.gmra.mxu0 %v3089
    %v3397 = vpop.f32.mrf.mxu0
    %v3398 = vadd.f32 0.0, %v3397
    %3399 = vdwg.mxu0
    %3400 = vmatpush.msra.mxu0 %v853
    %3401 = vmatpush.msra.mxu0 %v845
    %3402 = vmatpush.msra.mxu0 %v837
    %3403 = vmatpush.msra.mxu0 %v829
    %3404 = vmatpush.msra.mxu0 %v821
    %3405 = vmatpush.msra.mxu0 %v813
    %3406 = vmatpush.msra.mxu0 %v805
    %3407 = vmatpush.msra.mxu0 %v797
    %3408 = vmatpush.msra.mxu0 %v789
    %3409 = vmatpush.msra.mxu0 %v781
    %3410 = vmatpush.msra.mxu0 %v773
    %3411 = vmatpush.msra.mxu0 %v765
    %3412 = vmatpush.msra.mxu0 %v757
    %3413 = vmatpush.msra.mxu0 %v749
    %3414 = vmatpush.msra.mxu0 %v741
    %3415 = vmatpush.msra.mxu0 %v733
    %3416 = vmatmul.f32.gmra.mxu0 %v3090
    %v3417 = vpop.f32.mrf.mxu0
    %v3418 = vadd.f32 %v3398, %v3417
    %3419 = vdwg.mxu0
    %v3420 = vadd.f32 %v3092, %v3138
    %v3421 = vadd.f32 %v3093, %v3178
    %v3422 = vadd.f32 %v3094, %v3218
    %v3423 = vadd.f32 %v3095, %v3258
    %v3424 = vadd.f32 %v3096, %v3298
    %v3425 = vadd.f32 %v3097, %v3338
    %v3426 = vadd.f32 %v3098, %v3378
    %v3427 = vadd.f32 %v3099, %v3418
    %v3428 = vmul.f32 %v3420, 0.5
    %v3429 = vmul.f32 %v3421, 0.5
    %v3430 = vtanh.pop %v3428
    %v3431 = vtanh.pop %v3429
    %v3432 = vmul.f32 %v3430, 0.5
    %v3433 = vmul.f32 %v3431, 0.5
    %v3434 = vadd.f32 %v3432, 0.5
    %v3435 = vadd.f32 %v3433, 0.5
    %v3436 = vmul.f32 %v3422, 0.5
    %v3437 = vmul.f32 %v3423, 0.5
    %v3438 = vtanh.pop %v3436
    %v3439 = vtanh.pop %v3437
    %v3440 = vmul.f32 %v3438, 0.5
    %v3441 = vmul.f32 %v3439, 0.5
    %v3442 = vadd.f32 %v3440, 0.5
    %v3443 = vadd.f32 %v3441, 0.5
    %v3444 = vtanh.pop %v3424
    %v3445 = vtanh.pop %v3425
    %v3446 = vmul.f32 %v3426, 0.5
    %v3447 = vmul.f32 %v3427, 0.5
    %v3448 = vtanh.pop %v3446
    %v3449 = vtanh.pop %v3447
    %v3450 = vmul.f32 %v3448, 0.5
    %v3451 = vmul.f32 %v3449, 0.5
    %v3452 = vadd.f32 %v3450, 0.5
    %v3453 = vadd.f32 %v3451, 0.5
    %v3454 = vmul.f32 %v3442, %v3085
    %v3455 = vmul.f32 %v3443, %v3086
    %v3456 = vmul.f32 %v3434, %v3444
    %v3457 = vmul.f32 %v3435, %v3445
    %v3458 = vadd.f32 %v3454, %v3456
    %v3459 = vadd.f32 %v3455, %v3457
    %v3460 = vtanh.pop %v3458
    %v3461 = vtanh.pop %v3459
    %v3462 = vmul.f32 %v3452, %v3460
    %v3463 = vmul.f32 %v3453, %v3461
    %s3464 = scalar_lea.vmem [#allocation2], 448
    %v3465 = vld [vmem:[%s3464] sm:$0xff]
    %v3466 = vld [vmem:[%s3464 + $0x8] sm:$0xff]
    %v3467 = vld [vmem:[%s3464 + $0x10] sm:$0xff]
    %v3468 = vld [vmem:[%s3464 + $0x18] sm:$0xff]
    %v3469 = vld [vmem:[%s3464 + $0x20] sm:$0xff]
    %v3470 = vld [vmem:[%s3464 + $0x28] sm:$0xff]
    %v3471 = vld [vmem:[%s3464 + $0x30] sm:$0xff]
    %v3472 = vld [vmem:[%s3464 + $0x38] sm:$0xff]
    %3473 = vmatpush.msra.mxu0 %v718
    %3474 = vmatpush.msra.mxu0 %v710
    %3475 = vmatpush.msra.mxu0 %v702
    %3476 = vmatpush.msra.mxu0 %v694
    %3477 = vmatpush.msra.mxu0 %v686
    %3478 = vmatpush.msra.mxu0 %v678
    %3479 = vmatpush.msra.mxu0 %v670
    %3480 = vmatpush.msra.mxu0 %v662
    %3481 = vmatpush.msra.mxu0 %v654
    %3482 = vmatpush.msra.mxu0 %v646
    %3483 = vmatpush.msra.mxu0 %v638
    %3484 = vmatpush.msra.mxu0 %v630
    %3485 = vmatpush.msra.mxu0 %v622
    %3486 = vmatpush.msra.mxu0 %v614
    %3487 = vmatpush.msra.mxu0 %v606
    %3488 = vmatpush.msra.mxu0 %v598
    %3489 = vmatmul.f32.gmra.mxu0 %v3462
    %v3490 = vpop.f32.mrf.mxu0
    %v3491 = vadd.f32 0.0, %v3490
    %3492 = vdwg.mxu0
    %3493 = vmatpush.msra.mxu0 %v846
    %3494 = vmatpush.msra.mxu0 %v838
    %3495 = vmatpush.msra.mxu0 %v830
    %3496 = vmatpush.msra.mxu0 %v822
    %3497 = vmatpush.msra.mxu0 %v814
    %3498 = vmatpush.msra.mxu0 %v806
    %3499 = vmatpush.msra.mxu0 %v798
    %3500 = vmatpush.msra.mxu0 %v790
    %3501 = vmatpush.msra.mxu0 %v782
    %3502 = vmatpush.msra.mxu0 %v774
    %3503 = vmatpush.msra.mxu0 %v766
    %3504 = vmatpush.msra.mxu0 %v758
    %3505 = vmatpush.msra.mxu0 %v750
    %3506 = vmatpush.msra.mxu0 %v742
    %3507 = vmatpush.msra.mxu0 %v734
    %3508 = vmatpush.msra.mxu0 %v726
    %3509 = vmatmul.f32.gmra.mxu0 %v3463
    %v3510 = vpop.f32.mrf.mxu0
    %v3511 = vadd.f32 %v3491, %v3510
    %3512 = vdwg.mxu0
    %3513 = vmatpush.msra.mxu0 %v719
    %3514 = vmatpush.msra.mxu0 %v711
    %3515 = vmatpush.msra.mxu0 %v703
    %3516 = vmatpush.msra.mxu0 %v695
    %3517 = vmatpush.msra.mxu0 %v687
    %3518 = vmatpush.msra.mxu0 %v679
    %3519 = vmatpush.msra.mxu0 %v671
    %3520 = vmatpush.msra.mxu0 %v663
    %3521 = vmatpush.msra.mxu0 %v655
    %3522 = vmatpush.msra.mxu0 %v647
    %3523 = vmatpush.msra.mxu0 %v639
    %3524 = vmatpush.msra.mxu0 %v631
    %3525 = vmatpush.msra.mxu0 %v623
    %3526 = vmatpush.msra.mxu0 %v615
    %3527 = vmatpush.msra.mxu0 %v607
    %3528 = vmatpush.msra.mxu0 %v599
    %3529 = vmatmul.f32.gmra.mxu0 %v3462
    %v3530 = vpop.f32.mrf.mxu0
    %v3531 = vadd.f32 0.0, %v3530
    %3532 = vdwg.mxu0
    %3533 = vmatpush.msra.mxu0 %v847
    %3534 = vmatpush.msra.mxu0 %v839
    %3535 = vmatpush.msra.mxu0 %v831
    %3536 = vmatpush.msra.mxu0 %v823
    %3537 = vmatpush.msra.mxu0 %v815
    %3538 = vmatpush.msra.mxu0 %v807
    %3539 = vmatpush.msra.mxu0 %v799
    %3540 = vmatpush.msra.mxu0 %v791
    %3541 = vmatpush.msra.mxu0 %v783
    %3542 = vmatpush.msra.mxu0 %v775
    %3543 = vmatpush.msra.mxu0 %v767
    %3544 = vmatpush.msra.mxu0 %v759
    %3545 = vmatpush.msra.mxu0 %v751
    %3546 = vmatpush.msra.mxu0 %v743
    %3547 = vmatpush.msra.mxu0 %v735
    %3548 = vmatpush.msra.mxu0 %v727
    %3549 = vmatmul.f32.gmra.mxu0 %v3463
    %v3550 = vpop.f32.mrf.mxu0
    %v3551 = vadd.f32 %v3531, %v3550
    %3552 = vdwg.mxu0
    %3553 = vmatpush.msra.mxu0 %v720
    %3554 = vmatpush.msra.mxu0 %v712
    %3555 = vmatpush.msra.mxu0 %v704
    %3556 = vmatpush.msra.mxu0 %v696
    %3557 = vmatpush.msra.mxu0 %v688
    %3558 = vmatpush.msra.mxu0 %v680
    %3559 = vmatpush.msra.mxu0 %v672
    %3560 = vmatpush.msra.mxu0 %v664
    %3561 = vmatpush.msra.mxu0 %v656
    %3562 = vmatpush.msra.mxu0 %v648
    %3563 = vmatpush.msra.mxu0 %v640
    %3564 = vmatpush.msra.mxu0 %v632
    %3565 = vmatpush.msra.mxu0 %v624
    %3566 = vmatpush.msra.mxu0 %v616
    %3567 = vmatpush.msra.mxu0 %v608
    %3568 = vmatpush.msra.mxu0 %v600
    %3569 = vmatmul.f32.gmra.mxu0 %v3462
    %v3570 = vpop.f32.mrf.mxu0
    %v3571 = vadd.f32 0.0, %v3570
    %3572 = vdwg.mxu0
    %3573 = vmatpush.msra.mxu0 %v848
    %3574 = vmatpush.msra.mxu0 %v840
    %3575 = vmatpush.msra.mxu0 %v832
    %3576 = vmatpush.msra.mxu0 %v824
    %3577 = vmatpush.msra.mxu0 %v816
    %3578 = vmatpush.msra.mxu0 %v808
    %3579 = vmatpush.msra.mxu0 %v800
    %3580 = vmatpush.msra.mxu0 %v792
    %3581 = vmatpush.msra.mxu0 %v784
    %3582 = vmatpush.msra.mxu0 %v776
    %3583 = vmatpush.msra.mxu0 %v768
    %3584 = vmatpush.msra.mxu0 %v760
    %3585 = vmatpush.msra.mxu0 %v752
    %3586 = vmatpush.msra.mxu0 %v744
    %3587 = vmatpush.msra.mxu0 %v736
    %3588 = vmatpush.msra.mxu0 %v728
    %3589 = vmatmul.f32.gmra.mxu0 %v3463
    %v3590 = vpop.f32.mrf.mxu0
    %v3591 = vadd.f32 %v3571, %v3590
    %3592 = vdwg.mxu0
    %3593 = vmatpush.msra.mxu0 %v721
    %3594 = vmatpush.msra.mxu0 %v713
    %3595 = vmatpush.msra.mxu0 %v705
    %3596 = vmatpush.msra.mxu0 %v697
    %3597 = vmatpush.msra.mxu0 %v689
    %3598 = vmatpush.msra.mxu0 %v681
    %3599 = vmatpush.msra.mxu0 %v673
    %3600 = vmatpush.msra.mxu0 %v665
    %3601 = vmatpush.msra.mxu0 %v657
    %3602 = vmatpush.msra.mxu0 %v649
    %3603 = vmatpush.msra.mxu0 %v641
    %3604 = vmatpush.msra.mxu0 %v633
    %3605 = vmatpush.msra.mxu0 %v625
    %3606 = vmatpush.msra.mxu0 %v617
    %3607 = vmatpush.msra.mxu0 %v609
    %3608 = vmatpush.msra.mxu0 %v601
    %3609 = vmatmul.f32.gmra.mxu0 %v3462
    %v3610 = vpop.f32.mrf.mxu0
    %v3611 = vadd.f32 0.0, %v3610
    %3612 = vdwg.mxu0
    %3613 = vmatpush.msra.mxu0 %v849
    %3614 = vmatpush.msra.mxu0 %v841
    %3615 = vmatpush.msra.mxu0 %v833
    %3616 = vmatpush.msra.mxu0 %v825
    %3617 = vmatpush.msra.mxu0 %v817
    %3618 = vmatpush.msra.mxu0 %v809
    %3619 = vmatpush.msra.mxu0 %v801
    %3620 = vmatpush.msra.mxu0 %v793
    %3621 = vmatpush.msra.mxu0 %v785
    %3622 = vmatpush.msra.mxu0 %v777
    %3623 = vmatpush.msra.mxu0 %v769
    %3624 = vmatpush.msra.mxu0 %v761
    %3625 = vmatpush.msra.mxu0 %v753
    %3626 = vmatpush.msra.mxu0 %v745
    %3627 = vmatpush.msra.mxu0 %v737
    %3628 = vmatpush.msra.mxu0 %v729
    %3629 = vmatmul.f32.gmra.mxu0 %v3463
    %v3630 = vpop.f32.mrf.mxu0
    %v3631 = vadd.f32 %v3611, %v3630
    %3632 = vdwg.mxu0
    %3633 = vmatpush.msra.mxu0 %v722
    %3634 = vmatpush.msra.mxu0 %v714
    %3635 = vmatpush.msra.mxu0 %v706
    %3636 = vmatpush.msra.mxu0 %v698
    %3637 = vmatpush.msra.mxu0 %v690
    %3638 = vmatpush.msra.mxu0 %v682
    %3639 = vmatpush.msra.mxu0 %v674
    %3640 = vmatpush.msra.mxu0 %v666
    %3641 = vmatpush.msra.mxu0 %v658
    %3642 = vmatpush.msra.mxu0 %v650
    %3643 = vmatpush.msra.mxu0 %v642
    %3644 = vmatpush.msra.mxu0 %v634
    %3645 = vmatpush.msra.mxu0 %v626
    %3646 = vmatpush.msra.mxu0 %v618
    %3647 = vmatpush.msra.mxu0 %v610
    %3648 = vmatpush.msra.mxu0 %v602
    %3649 = vmatmul.f32.gmra.mxu0 %v3462
    %v3650 = vpop.f32.mrf.mxu0
    %v3651 = vadd.f32 0.0, %v3650
    %3652 = vdwg.mxu0
    %3653 = vmatpush.msra.mxu0 %v850
    %3654 = vmatpush.msra.mxu0 %v842
    %3655 = vmatpush.msra.mxu0 %v834
    %3656 = vmatpush.msra.mxu0 %v826
    %3657 = vmatpush.msra.mxu0 %v818
    %3658 = vmatpush.msra.mxu0 %v810
    %3659 = vmatpush.msra.mxu0 %v802
    %3660 = vmatpush.msra.mxu0 %v794
    %3661 = vmatpush.msra.mxu0 %v786
    %3662 = vmatpush.msra.mxu0 %v778
    %3663 = vmatpush.msra.mxu0 %v770
    %3664 = vmatpush.msra.mxu0 %v762
    %3665 = vmatpush.msra.mxu0 %v754
    %3666 = vmatpush.msra.mxu0 %v746
    %3667 = vmatpush.msra.mxu0 %v738
    %3668 = vmatpush.msra.mxu0 %v730
    %3669 = vmatmul.f32.gmra.mxu0 %v3463
    %v3670 = vpop.f32.mrf.mxu0
    %v3671 = vadd.f32 %v3651, %v3670
    %3672 = vdwg.mxu0
    %3673 = vmatpush.msra.mxu0 %v723
    %3674 = vmatpush.msra.mxu0 %v715
    %3675 = vmatpush.msra.mxu0 %v707
    %3676 = vmatpush.msra.mxu0 %v699
    %3677 = vmatpush.msra.mxu0 %v691
    %3678 = vmatpush.msra.mxu0 %v683
    %3679 = vmatpush.msra.mxu0 %v675
    %3680 = vmatpush.msra.mxu0 %v667
    %3681 = vmatpush.msra.mxu0 %v659
    %3682 = vmatpush.msra.mxu0 %v651
    %3683 = vmatpush.msra.mxu0 %v643
    %3684 = vmatpush.msra.mxu0 %v635
    %3685 = vmatpush.msra.mxu0 %v627
    %3686 = vmatpush.msra.mxu0 %v619
    %3687 = vmatpush.msra.mxu0 %v611
    %3688 = vmatpush.msra.mxu0 %v603
    %3689 = vmatmul.f32.gmra.mxu0 %v3462
    %v3690 = vpop.f32.mrf.mxu0
    %v3691 = vadd.f32 0.0, %v3690
    %3692 = vdwg.mxu0
    %3693 = vmatpush.msra.mxu0 %v851
    %3694 = vmatpush.msra.mxu0 %v843
    %3695 = vmatpush.msra.mxu0 %v835
    %3696 = vmatpush.msra.mxu0 %v827
    %3697 = vmatpush.msra.mxu0 %v819
    %3698 = vmatpush.msra.mxu0 %v811
    %3699 = vmatpush.msra.mxu0 %v803
    %3700 = vmatpush.msra.mxu0 %v795
    %3701 = vmatpush.msra.mxu0 %v787
    %3702 = vmatpush.msra.mxu0 %v779
    %3703 = vmatpush.msra.mxu0 %v771
    %3704 = vmatpush.msra.mxu0 %v763
    %3705 = vmatpush.msra.mxu0 %v755
    %3706 = vmatpush.msra.mxu0 %v747
    %3707 = vmatpush.msra.mxu0 %v739
    %3708 = vmatpush.msra.mxu0 %v731
    %3709 = vmatmul.f32.gmra.mxu0 %v3463
    %v3710 = vpop.f32.mrf.mxu0
    %v3711 = vadd.f32 %v3691, %v3710
    %3712 = vdwg.mxu0
    %3713 = vmatpush.msra.mxu0 %v724
    %3714 = vmatpush.msra.mxu0 %v716
    %3715 = vmatpush.msra.mxu0 %v708
    %3716 = vmatpush.msra.mxu0 %v700
    %3717 = vmatpush.msra.mxu0 %v692
    %3718 = vmatpush.msra.mxu0 %v684
    %3719 = vmatpush.msra.mxu0 %v676
    %3720 = vmatpush.msra.mxu0 %v668
    %3721 = vmatpush.msra.mxu0 %v660
    %3722 = vmatpush.msra.mxu0 %v652
    %3723 = vmatpush.msra.mxu0 %v644
    %3724 = vmatpush.msra.mxu0 %v636
    %3725 = vmatpush.msra.mxu0 %v628
    %3726 = vmatpush.msra.mxu0 %v620
    %3727 = vmatpush.msra.mxu0 %v612
    %3728 = vmatpush.msra.mxu0 %v604
    %3729 = vmatmul.f32.gmra.mxu0 %v3462
    %v3730 = vpop.f32.mrf.mxu0
    %v3731 = vadd.f32 0.0, %v3730
    %3732 = vdwg.mxu0
    %3733 = vmatpush.msra.mxu0 %v852
    %3734 = vmatpush.msra.mxu0 %v844
    %3735 = vmatpush.msra.mxu0 %v836
    %3736 = vmatpush.msra.mxu0 %v828
    %3737 = vmatpush.msra.mxu0 %v820
    %3738 = vmatpush.msra.mxu0 %v812
    %3739 = vmatpush.msra.mxu0 %v804
    %3740 = vmatpush.msra.mxu0 %v796
    %3741 = vmatpush.msra.mxu0 %v788
    %3742 = vmatpush.msra.mxu0 %v780
    %3743 = vmatpush.msra.mxu0 %v772
    %3744 = vmatpush.msra.mxu0 %v764
    %3745 = vmatpush.msra.mxu0 %v756
    %3746 = vmatpush.msra.mxu0 %v748
    %3747 = vmatpush.msra.mxu0 %v740
    %3748 = vmatpush.msra.mxu0 %v732
    %3749 = vmatmul.f32.gmra.mxu0 %v3463
    %v3750 = vpop.f32.mrf.mxu0
    %v3751 = vadd.f32 %v3731, %v3750
    %3752 = vdwg.mxu0
    %3753 = vmatpush.msra.mxu0 %v725
    %3754 = vmatpush.msra.mxu0 %v717
    %3755 = vmatpush.msra.mxu0 %v709
    %3756 = vmatpush.msra.mxu0 %v701
    %3757 = vmatpush.msra.mxu0 %v693
    %3758 = vmatpush.msra.mxu0 %v685
    %3759 = vmatpush.msra.mxu0 %v677
    %3760 = vmatpush.msra.mxu0 %v669
    %3761 = vmatpush.msra.mxu0 %v661
    %3762 = vmatpush.msra.mxu0 %v653
    %3763 = vmatpush.msra.mxu0 %v645
    %3764 = vmatpush.msra.mxu0 %v637
    %3765 = vmatpush.msra.mxu0 %v629
    %3766 = vmatpush.msra.mxu0 %v621
    %3767 = vmatpush.msra.mxu0 %v613
    %3768 = vmatpush.msra.mxu0 %v605
    %3769 = vmatmul.f32.gmra.mxu0 %v3462
    %v3770 = vpop.f32.mrf.mxu0
    %v3771 = vadd.f32 0.0, %v3770
    %3772 = vdwg.mxu0
    %3773 = vmatpush.msra.mxu0 %v853
    %3774 = vmatpush.msra.mxu0 %v845
    %3775 = vmatpush.msra.mxu0 %v837
    %3776 = vmatpush.msra.mxu0 %v829
    %3777 = vmatpush.msra.mxu0 %v821
    %3778 = vmatpush.msra.mxu0 %v813
    %3779 = vmatpush.msra.mxu0 %v805
    %3780 = vmatpush.msra.mxu0 %v797
    %3781 = vmatpush.msra.mxu0 %v789
    %3782 = vmatpush.msra.mxu0 %v781
    %3783 = vmatpush.msra.mxu0 %v773
    %3784 = vmatpush.msra.mxu0 %v765
    %3785 = vmatpush.msra.mxu0 %v757
    %3786 = vmatpush.msra.mxu0 %v749
    %3787 = vmatpush.msra.mxu0 %v741
    %3788 = vmatpush.msra.mxu0 %v733
    %3789 = vmatmul.f32.gmra.mxu0 %v3463
    %v3790 = vpop.f32.mrf.mxu0
    %v3791 = vadd.f32 %v3771, %v3790
    %3792 = vdwg.mxu0
    %v3793 = vadd.f32 %v3465, %v3511
    %v3794 = vadd.f32 %v3466, %v3551
    %v3795 = vadd.f32 %v3467, %v3591
    %v3796 = vadd.f32 %v3468, %v3631
    %v3797 = vadd.f32 %v3469, %v3671
    %v3798 = vadd.f32 %v3470, %v3711
    %v3799 = vadd.f32 %v3471, %v3751
    %v3800 = vadd.f32 %v3472, %v3791
    %v3801 = vmul.f32 %v3793, 0.5
    %v3802 = vmul.f32 %v3794, 0.5
    %v3803 = vtanh.pop %v3801
    %v3804 = vtanh.pop %v3802
    %v3805 = vmul.f32 %v3803, 0.5
    %v3806 = vmul.f32 %v3804, 0.5
    %v3807 = vadd.f32 %v3805, 0.5
    %v3808 = vadd.f32 %v3806, 0.5
    %v3809 = vmul.f32 %v3795, 0.5
    %v3810 = vmul.f32 %v3796, 0.5
    %v3811 = vtanh.pop %v3809
    %v3812 = vtanh.pop %v3810
    %v3813 = vmul.f32 %v3811, 0.5
    %v3814 = vmul.f32 %v3812, 0.5
    %v3815 = vadd.f32 %v3813, 0.5
    %v3816 = vadd.f32 %v3814, 0.5
    %v3817 = vtanh.pop %v3797
    %v3818 = vtanh.pop %v3798
    %v3819 = vmul.f32 %v3799, 0.5
    %v3820 = vmul.f32 %v3800, 0.5
    %v3821 = vtanh.pop %v3819
    %v3822 = vtanh.pop %v3820
    %v3823 = vmul.f32 %v3821, 0.5
    %v3824 = vmul.f32 %v3822, 0.5
    %v3825 = vadd.f32 %v3823, 0.5
    %v3826 = vadd.f32 %v3824, 0.5
    %v3827 = vmul.f32 %v3815, %v3458
    %v3828 = vmul.f32 %v3816, %v3459
    %v3829 = vmul.f32 %v3807, %v3817
    %v3830 = vmul.f32 %v3808, %v3818
    %v3831 = vadd.f32 %v3827, %v3829
    %v3832 = vadd.f32 %v3828, %v3830
    %v3833 = vtanh.pop %v3831
    %v3834 = vtanh.pop %v3832
    %v3835 = vmul.f32 %v3825, %v3833
    %v3836 = vmul.f32 %v3826, %v3834
    %3837 = vst [vmem:[#allocation8] sm:$0xff] %v3835
    %3838 = vst [vmem:[#allocation8 + $0x8] sm:$0xff] %v3836
    // Predicated region
    $region34: #{tpu_custom_call.1} parent=1 // pred_check
      _
    $region35: #{tpu_custom_call.1} parent=1 // pred_check_branch
      %3840 = sbr.rel (0) target = $region37
    $region36: #{tpu_custom_call.1} parent=1 // pred_region
      %3842 = vsyncadd [#allocation5], 0
      %s3844 = sshll.u32 [#allocation8], 4
      %s3845 = int_to_ptr.vmem [resolvable:$true] %s3844
      %s3846 = sshll.u32 %s6, 4
      %s3847 = int_to_ptr.hbm [resolvable:$true] %s3846
      %3849 = dma.vmem_to_hbm [thread:$0]  %s3845, 256, %s3847, [#allocation5]
    $region37: #{tpu_custom_call.1} parent=1 // pred_fallthru
      _
    // Predicated region
    $region38: #{tpu_custom_call.1} parent=1 // pred_check
      _
    $region39: #{tpu_custom_call.1} parent=1 // pred_check_branch
      %3851 = sbr.rel (0) target = $region41
    $region40: #{tpu_custom_call.1} parent=1 // pred_region
      %3853 = dma.done [#allocation5], 256
    $region41: #{tpu_custom_call.1} parent=1 // pred_fallthru
      _
    %3854 = vsyncpa [#allocation4], 1
    %3855 = vsyncpa [#allocation7], 1
    %3856 = vsyncpa [#allocation5], 1

</llo_original>
